<compile_context>
chip_gen: v6e
topology: v6e:2x2x1
jax: 0.10.0
libtpu: 0.0.40
codegen_flags: <defaults>
</compile_context>

<pallas_src>
import functools

import jax
import jax.numpy as jnp
from jax.experimental import pallas as pl
from jax.experimental.pallas import tpu as pltpu


# ----------------------------- kernel helpers ------------------------------


def _zero_halo(ref, pad, hv, wv):
    """Zero the `pad`-wide border of a (Hp, Wp, C) VMEM ref.

    Only the halo strips are written (O(perimeter), not O(area)).  Done every
    grid step instead of once, because with a "parallel" batch axis the grid
    may be split across TensorCores and each core has its own scratch, so a
    program_id==0 guard would leave the second core's halo uninitialized.
    """
    if pad == 0:
        return
    Hp, Wp, C = ref.shape
    dt = ref.dtype
    ref[0:pad, :, :] = jnp.zeros((pad, Wp, C), dt)                       # top
    ref[pad + hv:Hp, :, :] = jnp.zeros((Hp - pad - hv, Wp, C), dt)       # bottom
    ref[pad:pad + hv, 0:pad, :] = jnp.zeros((hv, pad, C), dt)            # left
    ref[pad:pad + hv, pad + wv:Wp, :] = (                                # right
        jnp.zeros((hv, Wp - pad - wv, C), dt))


def _conv_taps(src_ref, w_ref, hv, wv, K, D):
    """Dilated KxK conv as K*K per-tap matmuls into one f32 accumulator.

    src_ref : (Hp, Wp, Cin)   zero-padded input (matmul dtype)
    w_ref   : (K*K, Cin, Cout) per-tap weight slabs (matmul dtype)
    returns : (hv*wv, Cout)    f32 accumulator
    """
    Cin = src_ref.shape[-1]
    Cout = w_ref.shape[-1]
    acc = jnp.zeros((hv * wv, Cout), jnp.float32)
    for dy in range(K):
        for dx in range(K):
            t = dy * K + dx
            tap = src_ref[dy * D:dy * D + hv, dx * D:dx * D + wv, :]
            tap = tap.reshape(hv * wv, Cin)
            acc = acc + jnp.dot(tap, w_ref[t],
                                preferred_element_type=jnp.float32)
    return acc
    # TODO(synk): for large frames, extract taps from a row-flattened padded
    # buffer (contiguous sublane slices / pltpu.roll) to avoid the per-tap
    # window relayout, and strip-tile H with two-pass GN stats.


def _group_norm_relu(acc, gamma, beta, same, group_size, eps):
    """GroupNorm (biased var, torch semantics) + ReLU on an (M, C) f32 array.

    Per-channel sum / sum-of-squares (one sublane reduction each) followed by
    a (1,C)x(C,C) same-group indicator matmul (precomputed in the wrapper)
    that yields per-channel group statistics.  All math in f32.
    """
    M, C = acc.shape
    n = jnp.float32(M * group_size)
    s = jnp.sum(acc, axis=0, keepdims=True)                       # (1, C)
    ss = jnp.sum(acc * acc, axis=0, keepdims=True)                # (1, C)
    sum_g = jnp.dot(s, same, preferred_element_type=jnp.float32)   # (1, C)
    sumsq_g = jnp.dot(ss, same, preferred_element_type=jnp.float32)
    mean = sum_g / n
    var = sumsq_g / n - mean * mean        # E[x^2]-mean^2; OK at UNet scales
    inv = jax.lax.rsqrt(var + eps)
    y = (acc - mean) * inv * gamma + beta
    return jnp.maximum(y, 0.0)


# --------------------------------- kernel ----------------------------------


def _double_conv_kernel(x_ref, w1_ref, g1_ref, b1_ref, same1_ref,
                        w2_ref, g2_ref, b2_ref, same2_ref,
                        out_ref, xpad_ref, mid_ref, *,
                        Hi, Wi, H1, W1, H2, W2, K, D, pad, cg1, cg2, eps):
    """One grid step = one batch element. Fused (conv -> GN -> ReLU) x 2.

    x_ref    : (1, Hi, Wi, Cin)     unpadded NHWC input (matmul dtype)
    w1_ref   : (K*K, Cin,  Cmid)    per-tap weights, stage 1
    w2_ref   : (K*K, Cmid, Cout)    per-tap weights, stage 2
    g*/b*    : (1, C)               GroupNorm affine params (f32)
    same*    : (C, C)               same-group indicator (f32, precomputed)
    out_ref  : (1, H2*W2, Cout)
    xpad_ref : (Hi+2p, Wi+2p, Cin)  VMEM scratch, padded stage-1 input
    mid_ref  : (H1+2p, W1+2p, Cmid) VMEM scratch, padded mid activation (bf16)
    """
    Cmid = w1_ref.shape[-1]
    Cout = w2_ref.shape[-1]

    # ---- stage 0: build the zero-padded stage-1 input on-chip -------------
    _zero_halo(xpad_ref, pad, Hi, Wi)
    xpad_ref[pad:pad + Hi, pad:pad + Wi, :] = x_ref[0]

    # ---- stage 1: conv -> GroupNorm -> ReLU --------------------------------
    acc1 = _conv_taps(xpad_ref, w1_ref, H1, W1, K, D)             # f32
    y1 = _group_norm_relu(acc1, g1_ref[...], b1_ref[...], same1_ref[...],
                          cg1, eps)

    # Keep the mid activation on-chip (matmul dtype), zero-padded for conv 2.
    _zero_halo(mid_ref, pad, H1, W1)
    mid_ref[pad:pad + H1, pad:pad + W1, :] = (
        y1.reshape(H1, W1, Cmid).astype(mid_ref.dtype))

    # ---- stage 2: conv -> GroupNorm -> ReLU --------------------------------
    acc2 = _conv_taps(mid_ref, w2_ref, H2, W2, K, D)              # f32
    # NB: reference module declares the 2nd GroupNorm with
    # num_channels=mid_channels; only valid when mid == out (reproduced).
    y2 = _group_norm_relu(acc2, g2_ref[...], b2_ref[...], same2_ref[...],
                          cg2, eps)
    out_ref[...] = y2.reshape(1, H2 * W2, Cout).astype(out_ref.dtype)


# -------------------------------- wrapper -----------------------------------


def _round_up(x, m):
    return (x + m - 1) // m * m


def _tile_bytes(shape, itemsize):
    """VMEM bytes for an array after (8,128) tiling of the last two dims."""
    s = list(shape)
    if len(s) >= 1:
        s[-1] = _round_up(max(s[-1], 1), 128)
    if len(s) >= 2:
        s[-2] = _round_up(max(s[-2], 1), 8)
    n = 1
    for d in s:
        n *= d
    return n * itemsize


def _group_indicator(C, group_size):
    """same[c, c'] = 1.0 iff channels c, c' belong to the same GN group."""
    g = jnp.arange(C, dtype=jnp.int32) // group_size      # integer: no f32 floor
    return (g[:, None] == g[None, :]).astype(jnp.float32)


def double_conv_forward(x_nchw, w1, g1, b1, w2, g2, b2, *, num_groups,
                        dilation=1, padding=1, eps=1e-5, use_bf16_matmul=True):
    """(Conv2d(bias=False) -> GroupNorm -> ReLU) * 2, NCHW in / NCHW out.

    use_bf16_matmul=True rounds conv operands to bf16 (f32 accumulation);
    expect small deviations vs. an f32 reference.
    """
    N, Cin, Hi, Wi = x_nchw.shape
    Cmid, _, K, _ = w1.shape
    Cout = w2.shape[0]
    D, P = dilation, padding
    H1 = Hi + 2 * P - D * (K - 1)
    W1 = Wi + 2 * P - D * (K - 1)
    H2 = H1 + 2 * P - D * (K - 1)
    W2 = W1 + 2 * P - D * (K - 1)
    Hp1, Wp1 = Hi + 2 * P, Wi + 2 * P
    Hp2, Wp2 = H1 + 2 * P, W1 + 2 * P

    mm_dtype = jnp.bfloat16 if use_bf16_matmul else jnp.float32
    mm_bytes = 2 if use_bf16_matmul else 4
    out_dtype = x_nchw.dtype
    out_bytes = jnp.dtype(out_dtype).itemsize

    # NHWC, matmul dtype.  Zero-padding happens inside the kernel (VMEM halo),
    # so no padded copy of the input is materialized in HBM.
    # TODO(synk): accept NHWC activations end-to-end to drop the two wrapper
    # transposes (extra HBM passes) once the surrounding model is NHWC.
    x = jnp.transpose(x_nchw, (0, 2, 3, 1)).astype(mm_dtype)

    # (Cout, Cin, K, K) -> (K*K, Cin, Cout): one (Cin, Cout) slab per tap.
    wk1 = jnp.transpose(w1, (2, 3, 1, 0)).reshape(K * K, Cin, Cmid)
    wk1 = wk1.astype(mm_dtype)
    wk2 = jnp.transpose(w2, (2, 3, 1, 0)).reshape(K * K, Cmid, Cout)
    wk2 = wk2.astype(mm_dtype)
    g1_2 = g1.reshape(1, -1).astype(jnp.float32)
    b1_2 = b1.reshape(1, -1).astype(jnp.float32)
    g2_2 = g2.reshape(1, -1).astype(jnp.float32)
    b2_2 = b2.reshape(1, -1).astype(jnp.float32)

    cg1 = Cmid // num_groups
    cg2 = g2.shape[0] // num_groups           # reference uses mid_channels here
    same1 = _group_indicator(Cmid, cg1)
    same2 = _group_indicator(Cout, cg2)

    kernel = functools.partial(
        _double_conv_kernel, Hi=Hi, Wi=Wi, H1=H1, W1=W1, H2=H2, W2=W2,
        K=K, D=D, pad=P, cg1=cg1, cg2=cg2, eps=eps)

    # ---- VMEM budget: double-buffered blocks + constants + scratch + temps.
    need = 0
    need += 2 * _tile_bytes((1, Hi, Wi, Cin), mm_bytes)            # x block
    need += 2 * _tile_bytes((1, H2 * W2, Cout), out_bytes)         # out block
    for shp, ib in (((K * K, Cin, Cmid), mm_bytes),
                    ((K * K, Cmid, Cout), mm_bytes),
                    ((1, Cmid), 4), ((1, Cmid), 4), ((Cmid, Cmid), 4),
                    ((1, g2_2.shape[1]), 4), ((1, b2_2.shape[1]), 4),
                    ((Cout, Cout), 4)):
        need += 2 * _tile_bytes(shp, ib)                           # const operands
    need += _tile_bytes((Hp1, Wp1, Cin), mm_bytes)                 # xpad scratch
    need += _tile_bytes((Hp2, Wp2, Cmid), mm_bytes)                # mid scratch
    need += 8 * max(_tile_bytes((H1 * W1, Cmid), 4),
                    _tile_bytes((H2 * W2, Cout), 4))               # f32 temporaries
    try:
        phys_vmem = getattr(pltpu.get_tpu_info(), "vmem_capacity_bytes",
                            64 * 1024 * 1024)
    except Exception:  # conservative fallback (v7x-safe)
        phys_vmem = 64 * 1024 * 1024
    vmem_limit = int(min(max(need * 1.25, 32 * 1024 * 1024),
                         int(phys_vmem * 0.9)))

    out = pl.pallas_call(
        kernel,
        out_shape=jax.ShapeDtypeStruct((N, H2 * W2, Cout), out_dtype),
        grid_spec=pltpu.PrefetchScalarGridSpec(
            num_scalar_prefetch=0,
            grid=(N,),
            in_specs=[
                pl.BlockSpec((1, Hi, Wi, Cin), lambda n: (n, 0, 0, 0)),
                # Constant-index-map operands (fetched once, not re-DMA'd).
                # TODO(synk): single-buffer these via pipeline_mode=
                # pl.Buffered(1) once validated on the target jaxlib (saves a
                # few MiB of VMEM for large-channel layers on v7x).
                pl.BlockSpec((K * K, Cin, Cmid), lambda n: (0, 0, 0)),
                pl.BlockSpec((1, Cmid), lambda n: (0, 0)),
                pl.BlockSpec((1, Cmid), lambda n: (0, 0)),
                pl.BlockSpec((Cmid, Cmid), lambda n: (0, 0)),
                pl.BlockSpec((K * K, Cmid, Cout), lambda n: (0, 0, 0)),
                pl.BlockSpec((1, g2_2.shape[1]), lambda n: (0, 0)),
                pl.BlockSpec((1, b2_2.shape[1]), lambda n: (0, 0)),
                pl.BlockSpec((Cout, Cout), lambda n: (0, 0)),
            ],
            out_specs=pl.BlockSpec((1, H2 * W2, Cout), lambda n: (n, 0, 0)),
            scratch_shapes=[
                pltpu.VMEM((Hp1, Wp1, Cin), mm_dtype),   # padded stage-1 input
                pltpu.VMEM((Hp2, Wp2, Cmid), mm_dtype),  # padded mid activation
            ],
        ),
        # Batch axis "parallel": v7x's two TensorCores split the batch.
        # TODO(synk): strip-tile H (two-pass GroupNorm stats) for frames whose
        # per-image footprint exceeds VMEM, and to feed both v7x cores at
        # batch=1.
        compiler_params=pltpu.CompilerParams(
            dimension_semantics=("parallel",),
            vmem_limit_bytes=vmem_limit),
    )(x, wk1, g1_2, b1_2, same1, wk2, g2_2, b2_2, same2)

    out = out.reshape(N, H2, W2, Cout)
    return jnp.transpose(out, (0, 3, 1, 2))                        # -> NCHW


class DoubleConvPallas:
    """(Conv2d => GroupNorm => ReLU) * 2, matching the PyTorch DoubleConv."""

    def __init__(self, key, in_channels, out_channels, mid_channels=None,
                 d=1, k=3, p=1, ng=32):
        if not mid_channels:
            mid_channels = out_channels
        self.d, self.k, self.p, self.ng = d, k, p, ng
        k1, k2 = jax.random.split(key)
        # kaiming_normal_: std = sqrt(2 / fan_in), fan_in = Cin * k * k
        std1 = (2.0 / (in_channels * k * k)) ** 0.5
        std2 = (2.0 / (mid_channels * k * k)) ** 0.5
        self.w1 = (jax.random.normal(k1, (mid_channels, in_channels, k, k),
                                     jnp.float32) * std1)
        self.w2 = (jax.random.normal(k2, (out_channels, mid_channels, k, k),
                                     jnp.float32) * std2)
        # GroupNorm affine params: ones / zeros (torch default init).
        self.g1 = jnp.ones((mid_channels,), jnp.float32)
        self.b1 = jnp.zeros((mid_channels,), jnp.float32)
        # NB: the reference module declares the 2nd GroupNorm with
        # num_channels=mid_channels (only valid when mid == out); kept as-is.
        self.g2 = jnp.ones((mid_channels,), jnp.float32)
        self.b2 = jnp.zeros((mid_channels,), jnp.float32)

    def __call__(self, x_nchw):
        return double_conv_forward(
            x_nchw, self.w1, self.g1, self.b1, self.w2, self.g2, self.b2,
            num_groups=self.ng, dilation=self.d, padding=self.p)


if __name__ == "__main__":
    key = jax.random.PRNGKey(0)
    kx, kp = jax.random.split(key)

    # Small shapes: batch=2, in_channels=4, out_channels=8, spatial=16x16,
    # ng=2 groups (ng must divide the channel counts).
    N, Cin, Cout, H, W = 2, 4, 8, 16, 16
    x = jax.random.normal(kx, (N, Cin, H, W), jnp.float32)

    model = DoubleConvPallas(kp, in_channels=Cin, out_channels=Cout, ng=2)
    out = model(x)
    out = jax.block_until_ready(out)
    assert out.shape == (N, Cout, H, W), out.shape
    assert bool(jnp.all(jnp.isfinite(out)))
    print("KERNEL_OK")
</pallas_src>

<mosaic_0001>
module attributes {stable_mosaic.version = 11 : i64} {
  func.func @_double_conv_kernel(%arg0: i32, %arg1: memref<1x16x16x4xbf16, #tpu.memory_space<vmem>>, %arg2: memref<9x4x8xbf16, #tpu.memory_space<vmem>>, %arg3: memref<1x8xf32, #tpu.memory_space<vmem>>, %arg4: memref<1x8xf32, #tpu.memory_space<vmem>>, %arg5: memref<8x8xf32, #tpu.memory_space<vmem>>, %arg6: memref<9x8x8xbf16, #tpu.memory_space<vmem>>, %arg7: memref<1x8xf32, #tpu.memory_space<vmem>>, %arg8: memref<1x8xf32, #tpu.memory_space<vmem>>, %arg9: memref<8x8xf32, #tpu.memory_space<vmem>>, %arg10: memref<1x256x8xf32, #tpu.memory_space<vmem>>, %arg11: memref<18x18x4xbf16, #tpu.memory_space<vmem>>, %arg12: memref<18x18x8xbf16, #tpu.memory_space<vmem>>) attributes {dimension_semantics = [#tpu.dimension_semantics<parallel>], iteration_bounds = array<i64: 2>, scalar_prefetch = 0 : i64, scratch_operands = 2 : i64, tpu.core_type = #tpu.core_type<tc>, window_params = [{transform_indices = @transform_0, window_bounds = array<i64: 1, 16, 16, 4>}, {pipeline_mode = #tpu.pipeline_mode<synchronous>, transform_indices = @transform_1, window_bounds = array<i64: 9, 4, 8>}, {pipeline_mode = #tpu.pipeline_mode<synchronous>, transform_indices = @transform_2, window_bounds = array<i64: 1, 8>}, {pipeline_mode = #tpu.pipeline_mode<synchronous>, transform_indices = @transform_3, window_bounds = array<i64: 1, 8>}, {pipeline_mode = #tpu.pipeline_mode<synchronous>, transform_indices = @transform_4, window_bounds = array<i64: 8, 8>}, {pipeline_mode = #tpu.pipeline_mode<synchronous>, transform_indices = @transform_5, window_bounds = array<i64: 9, 8, 8>}, {pipeline_mode = #tpu.pipeline_mode<synchronous>, transform_indices = @transform_6, window_bounds = array<i64: 1, 8>}, {pipeline_mode = #tpu.pipeline_mode<synchronous>, transform_indices = @transform_7, window_bounds = array<i64: 1, 8>}, {pipeline_mode = #tpu.pipeline_mode<synchronous>, transform_indices = @transform_8, window_bounds = array<i64: 8, 8>}, {transform_indices = @transform_9, window_bounds = array<i64: 1, 256, 8>}]} {
    %cst = arith.constant 0.000000e+00 : bf16
    %0 = vector.broadcast %cst : bf16 to vector<1x18x4xbf16>
    %c0 = arith.constant 0 : index
    %c0_0 = arith.constant 0 : index
    %c0_1 = arith.constant 0 : index
    %1 = vector.load %arg11[%c0, %c0_0, %c0_1] : memref<18x18x4xbf16, #tpu.memory_space<vmem>>, vector<1x18x4xbf16>
    tpu.vector_store %arg11[%c0, %c0_0, %c0_1], %0 {strides = array<i32>} : memref<18x18x4xbf16, #tpu.memory_space<vmem>>, vector<1x18x4xbf16>,
    %cst_2 = arith.constant 0.000000e+00 : bf16
    %2 = vector.broadcast %cst_2 : bf16 to vector<1x18x4xbf16>
    %c17 = arith.constant 17 : index
    %c0_3 = arith.constant 0 : index
    %c0_4 = arith.constant 0 : index
    %3 = vector.load %arg11[%c17, %c0_3, %c0_4] : memref<18x18x4xbf16, #tpu.memory_space<vmem>>, vector<1x18x4xbf16>
    tpu.vector_store %arg11[%c17, %c0_3, %c0_4], %2 {strides = array<i32>} : memref<18x18x4xbf16, #tpu.memory_space<vmem>>, vector<1x18x4xbf16>,
    %cst_5 = arith.constant 0.000000e+00 : bf16
    %4 = vector.broadcast %cst_5 : bf16 to vector<16x1x4xbf16>
    %c1 = arith.constant 1 : index
    %c0_6 = arith.constant 0 : index
    %c0_7 = arith.constant 0 : index
    %5 = vector.load %arg11[%c1, %c0_6, %c0_7] : memref<18x18x4xbf16, #tpu.memory_space<vmem>>, vector<16x1x4xbf16>
    tpu.vector_store %arg11[%c1, %c0_6, %c0_7], %4 {strides = array<i32>} : memref<18x18x4xbf16, #tpu.memory_space<vmem>>, vector<16x1x4xbf16>,
    %cst_8 = arith.constant 0.000000e+00 : bf16
    %6 = vector.broadcast %cst_8 : bf16 to vector<16x1x4xbf16>
    %c1_9 = arith.constant 1 : index
    %c17_10 = arith.constant 17 : index
    %c0_11 = arith.constant 0 : index
    %7 = vector.load %arg11[%c1_9, %c17_10, %c0_11] : memref<18x18x4xbf16, #tpu.memory_space<vmem>>, vector<16x1x4xbf16>
    tpu.vector_store %arg11[%c1_9, %c17_10, %c0_11], %6 {strides = array<i32>} : memref<18x18x4xbf16, #tpu.memory_space<vmem>>, vector<16x1x4xbf16>,
    %c0_12 = arith.constant 0 : index
    %c0_13 = arith.constant 0 : index
    %c0_14 = arith.constant 0 : index
    %c0_15 = arith.constant 0 : index
    %8 = vector.load %arg1[%c0_12, %c0_13, %c0_14, %c0_15] : memref<1x16x16x4xbf16, #tpu.memory_space<vmem>>, vector<1x16x16x4xbf16>
    %9 = vector.shape_cast %8 : vector<1x16x16x4xbf16> to vector<16x16x4xbf16>
    %c1_16 = arith.constant 1 : index
    %c1_17 = arith.constant 1 : index
    %c0_18 = arith.constant 0 : index
    %10 = vector.load %arg11[%c1_16, %c1_17, %c0_18] : memref<18x18x4xbf16, #tpu.memory_space<vmem>>, vector<16x16x4xbf16>
    tpu.vector_store %arg11[%c1_16, %c1_17, %c0_18], %9 {strides = array<i32>} : memref<18x18x4xbf16, #tpu.memory_space<vmem>>, vector<16x16x4xbf16>,
    %cst_19 = arith.constant 0.000000e+00 : f32
    %11 = vector.broadcast %cst_19 : f32 to vector<256x8xf32>
    %c0_20 = arith.constant 0 : index
    %c0_21 = arith.constant 0 : index
    %c0_22 = arith.constant 0 : index
    %12 = vector.load %arg11[%c0_20, %c0_21, %c0_22] : memref<18x18x4xbf16, #tpu.memory_space<vmem>>, vector<16x16x4xbf16>
    %13 = vector.shape_cast %12 : vector<16x16x4xbf16> to vector<256x4xbf16>
    %c0_23 = arith.constant 0 : index
    %c0_24 = arith.constant 0 : index
    %c0_25 = arith.constant 0 : index
    %14 = vector.load %arg2[%c0_23, %c0_24, %c0_25] : memref<9x4x8xbf16, #tpu.memory_space<vmem>>, vector<1x4x8xbf16>
    %15 = vector.shape_cast %14 : vector<1x4x8xbf16> to vector<4x8xbf16>
    %cst_26 = arith.constant dense<0.000000e+00> : vector<256x8xf32>
    %16 = tpu.matmul %13, %15, %cst_26 {dimension_numbers = #tpu.dot_dimension_numbers<[1], [0], [0], [1], [0, 0, 1, 1], [], []>} : vector<256x4xbf16>, vector<4x8xbf16>, vector<256x8xf32> -> vector<256x8xf32>
    %17 = arith.addf %11, %16 : vector<256x8xf32>
    %c0_27 = arith.constant 0 : index
    %c1_28 = arith.constant 1 : index
    %c0_29 = arith.constant 0 : index
    %18 = vector.load %arg11[%c0_27, %c1_28, %c0_29] : memref<18x18x4xbf16, #tpu.memory_space<vmem>>, vector<16x16x4xbf16>
    %19 = vector.shape_cast %18 : vector<16x16x4xbf16> to vector<256x4xbf16>
    %c1_30 = arith.constant 1 : index
    %c0_31 = arith.constant 0 : index
    %c0_32 = arith.constant 0 : index
    %20 = vector.load %arg2[%c1_30, %c0_31, %c0_32] : memref<9x4x8xbf16, #tpu.memory_space<vmem>>, vector<1x4x8xbf16>
    %21 = vector.shape_cast %20 : vector<1x4x8xbf16> to vector<4x8xbf16>
    %cst_33 = arith.constant dense<0.000000e+00> : vector<256x8xf32>
    %22 = tpu.matmul %19, %21, %cst_33 {dimension_numbers = #tpu.dot_dimension_numbers<[1], [0], [0], [1], [0, 0, 1, 1], [], []>} : vector<256x4xbf16>, vector<4x8xbf16>, vector<256x8xf32> -> vector<256x8xf32>
    %23 = arith.addf %17, %22 : vector<256x8xf32>
    %c0_34 = arith.constant 0 : index
    %c2 = arith.constant 2 : index
    %c0_35 = arith.constant 0 : index
    %24 = vector.load %arg11[%c0_34, %c2, %c0_35] : memref<18x18x4xbf16, #tpu.memory_space<vmem>>, vector<16x16x4xbf16>
    %25 = vector.shape_cast %24 : vector<16x16x4xbf16> to vector<256x4xbf16>
    %c2_36 = arith.constant 2 : index
    %c0_37 = arith.constant 0 : index
    %c0_38 = arith.constant 0 : index
    %26 = vector.load %arg2[%c2_36, %c0_37, %c0_38] : memref<9x4x8xbf16, #tpu.memory_space<vmem>>, vector<1x4x8xbf16>
    %27 = vector.shape_cast %26 : vector<1x4x8xbf16> to vector<4x8xbf16>
    %cst_39 = arith.constant dense<0.000000e+00> : vector<256x8xf32>
    %28 = tpu.matmul %25, %27, %cst_39 {dimension_numbers = #tpu.dot_dimension_numbers<[1], [0], [0], [1], [0, 0, 1, 1], [], []>} : vector<256x4xbf16>, vector<4x8xbf16>, vector<256x8xf32> -> vector<256x8xf32>
    %29 = arith.addf %23, %28 : vector<256x8xf32>
    %c1_40 = arith.constant 1 : index
    %c0_41 = arith.constant 0 : index
    %c0_42 = arith.constant 0 : index
    %30 = vector.load %arg11[%c1_40, %c0_41, %c0_42] : memref<18x18x4xbf16, #tpu.memory_space<vmem>>, vector<16x16x4xbf16>
    %31 = vector.shape_cast %30 : vector<16x16x4xbf16> to vector<256x4xbf16>
    %c3 = arith.constant 3 : index
    %c0_43 = arith.constant 0 : index
    %c0_44 = arith.constant 0 : index
    %32 = vector.load %arg2[%c3, %c0_43, %c0_44] : memref<9x4x8xbf16, #tpu.memory_space<vmem>>, vector<1x4x8xbf16>
    %33 = vector.shape_cast %32 : vector<1x4x8xbf16> to vector<4x8xbf16>
    %cst_45 = arith.constant dense<0.000000e+00> : vector<256x8xf32>
    %34 = tpu.matmul %31, %33, %cst_45 {dimension_numbers = #tpu.dot_dimension_numbers<[1], [0], [0], [1], [0, 0, 1, 1], [], []>} : vector<256x4xbf16>, vector<4x8xbf16>, vector<256x8xf32> -> vector<256x8xf32>
    %35 = arith.addf %29, %34 : vector<256x8xf32>
    %c1_46 = arith.constant 1 : index
    %c1_47 = arith.constant 1 : index
    %c0_48 = arith.constant 0 : index
    %36 = vector.load %arg11[%c1_46, %c1_47, %c0_48] : memref<18x18x4xbf16, #tpu.memory_space<vmem>>, vector<16x16x4xbf16>
    %37 = vector.shape_cast %36 : vector<16x16x4xbf16> to vector<256x4xbf16>
    %c4 = arith.constant 4 : index
    %c0_49 = arith.constant 0 : index
    %c0_50 = arith.constant 0 : index
    %38 = vector.load %arg2[%c4, %c0_49, %c0_50] : memref<9x4x8xbf16, #tpu.memory_space<vmem>>, vector<1x4x8xbf16>
    %39 = vector.shape_cast %38 : vector<1x4x8xbf16> to vector<4x8xbf16>
    %cst_51 = arith.constant dense<0.000000e+00> : vector<256x8xf32>
    %40 = tpu.matmul %37, %39, %cst_51 {dimension_numbers = #tpu.dot_dimension_numbers<[1], [0], [0], [1], [0, 0, 1, 1], [], []>} : vector<256x4xbf16>, vector<4x8xbf16>, vector<256x8xf32> -> vector<256x8xf32>
    %41 = arith.addf %35, %40 : vector<256x8xf32>
    %c1_52 = arith.constant 1 : index
    %c2_53 = arith.constant 2 : index
    %c0_54 = arith.constant 0 : index
    %42 = vector.load %arg11[%c1_52, %c2_53, %c0_54] : memref<18x18x4xbf16, #tpu.memory_space<vmem>>, vector<16x16x4xbf16>
    %43 = vector.shape_cast %42 : vector<16x16x4xbf16> to vector<256x4xbf16>
    %c5 = arith.constant 5 : index
    %c0_55 = arith.constant 0 : index
    %c0_56 = arith.constant 0 : index
    %44 = vector.load %arg2[%c5, %c0_55, %c0_56] : memref<9x4x8xbf16, #tpu.memory_space<vmem>>, vector<1x4x8xbf16>
    %45 = vector.shape_cast %44 : vector<1x4x8xbf16> to vector<4x8xbf16>
    %cst_57 = arith.constant dense<0.000000e+00> : vector<256x8xf32>
    %46 = tpu.matmul %43, %45, %cst_57 {dimension_numbers = #tpu.dot_dimension_numbers<[1], [0], [0], [1], [0, 0, 1, 1], [], []>} : vector<256x4xbf16>, vector<4x8xbf16>, vector<256x8xf32> -> vector<256x8xf32>
    %47 = arith.addf %41, %46 : vector<256x8xf32>
    %c2_58 = arith.constant 2 : index
    %c0_59 = arith.constant 0 : index
    %c0_60 = arith.constant 0 : index
    %48 = vector.load %arg11[%c2_58, %c0_59, %c0_60] : memref<18x18x4xbf16, #tpu.memory_space<vmem>>, vector<16x16x4xbf16>
    %49 = vector.shape_cast %48 : vector<16x16x4xbf16> to vector<256x4xbf16>
    %c6 = arith.constant 6 : index
    %c0_61 = arith.constant 0 : index
    %c0_62 = arith.constant 0 : index
    %50 = vector.load %arg2[%c6, %c0_61, %c0_62] : memref<9x4x8xbf16, #tpu.memory_space<vmem>>, vector<1x4x8xbf16>
    %51 = vector.shape_cast %50 : vector<1x4x8xbf16> to vector<4x8xbf16>
    %cst_63 = arith.constant dense<0.000000e+00> : vector<256x8xf32>
    %52 = tpu.matmul %49, %51, %cst_63 {dimension_numbers = #tpu.dot_dimension_numbers<[1], [0], [0], [1], [0, 0, 1, 1], [], []>} : vector<256x4xbf16>, vector<4x8xbf16>, vector<256x8xf32> -> vector<256x8xf32>
    %53 = arith.addf %47, %52 : vector<256x8xf32>
    %c2_64 = arith.constant 2 : index
    %c1_65 = arith.constant 1 : index
    %c0_66 = arith.constant 0 : index
    %54 = vector.load %arg11[%c2_64, %c1_65, %c0_66] : memref<18x18x4xbf16, #tpu.memory_space<vmem>>, vector<16x16x4xbf16>
    %55 = vector.shape_cast %54 : vector<16x16x4xbf16> to vector<256x4xbf16>
    %c7 = arith.constant 7 : index
    %c0_67 = arith.constant 0 : index
    %c0_68 = arith.constant 0 : index
    %56 = vector.load %arg2[%c7, %c0_67, %c0_68] : memref<9x4x8xbf16, #tpu.memory_space<vmem>>, vector<1x4x8xbf16>
    %57 = vector.shape_cast %56 : vector<1x4x8xbf16> to vector<4x8xbf16>
    %cst_69 = arith.constant dense<0.000000e+00> : vector<256x8xf32>
    %58 = tpu.matmul %55, %57, %cst_69 {dimension_numbers = #tpu.dot_dimension_numbers<[1], [0], [0], [1], [0, 0, 1, 1], [], []>} : vector<256x4xbf16>, vector<4x8xbf16>, vector<256x8xf32> -> vector<256x8xf32>
    %59 = arith.addf %53, %58 : vector<256x8xf32>
    %c2_70 = arith.constant 2 : index
    %c2_71 = arith.constant 2 : index
    %c0_72 = arith.constant 0 : index
    %60 = vector.load %arg11[%c2_70, %c2_71, %c0_72] : memref<18x18x4xbf16, #tpu.memory_space<vmem>>, vector<16x16x4xbf16>
    %61 = vector.shape_cast %60 : vector<16x16x4xbf16> to vector<256x4xbf16>
    %c8 = arith.constant 8 : index
    %c0_73 = arith.constant 0 : index
    %c0_74 = arith.constant 0 : index
    %62 = vector.load %arg2[%c8, %c0_73, %c0_74] : memref<9x4x8xbf16, #tpu.memory_space<vmem>>, vector<1x4x8xbf16>
    %63 = vector.shape_cast %62 : vector<1x4x8xbf16> to vector<4x8xbf16>
    %cst_75 = arith.constant dense<0.000000e+00> : vector<256x8xf32>
    %64 = tpu.matmul %61, %63, %cst_75 {dimension_numbers = #tpu.dot_dimension_numbers<[1], [0], [0], [1], [0, 0, 1, 1], [], []>} : vector<256x4xbf16>, vector<4x8xbf16>, vector<256x8xf32> -> vector<256x8xf32>
    %65 = arith.addf %59, %64 : vector<256x8xf32>
    %c0_76 = arith.constant 0 : index
    %c0_77 = arith.constant 0 : index
    %66 = vector.load %arg3[%c0_76, %c0_77] : memref<1x8xf32, #tpu.memory_space<vmem>>, vector<1x8xf32>
    %c0_78 = arith.constant 0 : index
    %c0_79 = arith.constant 0 : index
    %67 = vector.load %arg4[%c0_78, %c0_79] : memref<1x8xf32, #tpu.memory_space<vmem>>, vector<1x8xf32>
    %c0_80 = arith.constant 0 : index
    %c0_81 = arith.constant 0 : index
    %68 = vector.load %arg5[%c0_80, %c0_81] : memref<8x8xf32, #tpu.memory_space<vmem>>, vector<8x8xf32>
    %cst_82 = arith.constant dense<0.000000e+00> : vector<8xf32>
    %69 = vector.multi_reduction <add>, %65, %cst_82 [0] : vector<256x8xf32> to vector<8xf32>
    %70 = vector.shape_cast %69 : vector<8xf32> to vector<1x8xf32>
    %71 = arith.mulf %65, %65 : vector<256x8xf32>
    %cst_83 = arith.constant dense<0.000000e+00> : vector<8xf32>
    %72 = vector.multi_reduction <add>, %71, %cst_83 [0] : vector<256x8xf32> to vector<8xf32>
    %73 = vector.shape_cast %72 : vector<8xf32> to vector<1x8xf32>
    %cst_84 = arith.constant dense<0.000000e+00> : vector<1x8xf32>
    %74 = tpu.matmul %70, %68, %cst_84 {dimension_numbers = #tpu.dot_dimension_numbers<[1], [0], [0], [1], [0, 0, 1, 1], [], []>} : vector<1x8xf32>, vector<8x8xf32>, vector<1x8xf32> -> vector<1x8xf32>
    %cst_85 = arith.constant dense<0.000000e+00> : vector<1x8xf32>
    %75 = tpu.matmul %73, %68, %cst_85 {dimension_numbers = #tpu.dot_dimension_numbers<[1], [0], [0], [1], [0, 0, 1, 1], [], []>} : vector<1x8xf32>, vector<8x8xf32>, vector<1x8xf32> -> vector<1x8xf32>
    %cst_86 = arith.constant 1.024000e+03 : f32
    %76 = vector.broadcast %cst_86 : f32 to vector<1x8xf32>
    %77 = arith.divf %74, %76 : vector<1x8xf32>
    %cst_87 = arith.constant 1.024000e+03 : f32
    %78 = vector.broadcast %cst_87 : f32 to vector<1x8xf32>
    %79 = arith.divf %75, %78 : vector<1x8xf32>
    %80 = arith.mulf %77, %77 : vector<1x8xf32>
    %81 = arith.subf %79, %80 : vector<1x8xf32>
    %cst_88 = arith.constant 9.99999974E-6 : f32
    %82 = vector.broadcast %cst_88 : f32 to vector<1x8xf32>
    %83 = arith.addf %81, %82 : vector<1x8xf32>
    %84 = math.rsqrt %83 : vector<1x8xf32>
    %85 = vector.broadcast %77 : vector<1x8xf32> to vector<256x8xf32>
    %86 = arith.subf %65, %85 : vector<256x8xf32>
    %87 = vector.broadcast %84 : vector<1x8xf32> to vector<256x8xf32>
    %88 = arith.mulf %86, %87 : vector<256x8xf32>
    %89 = vector.broadcast %66 : vector<1x8xf32> to vector<256x8xf32>
    %90 = arith.mulf %88, %89 : vector<256x8xf32>
    %91 = vector.broadcast %67 : vector<1x8xf32> to vector<256x8xf32>
    %92 = arith.addf %90, %91 : vector<256x8xf32>
    %cst_89 = arith.constant 0.000000e+00 : f32
    %93 = vector.broadcast %cst_89 : f32 to vector<256x8xf32>
    %94 = arith.maximumf %92, %93 : vector<256x8xf32>
    %cst_90 = arith.constant 0.000000e+00 : bf16
    %95 = vector.broadcast %cst_90 : bf16 to vector<1x18x8xbf16>
    %c0_91 = arith.constant 0 : index
    %c0_92 = arith.constant 0 : index
    %c0_93 = arith.constant 0 : index
    %96 = vector.load %arg12[%c0_91, %c0_92, %c0_93] : memref<18x18x8xbf16, #tpu.memory_space<vmem>>, vector<1x18x8xbf16>
    tpu.vector_store %arg12[%c0_91, %c0_92, %c0_93], %95 {strides = array<i32>} : memref<18x18x8xbf16, #tpu.memory_space<vmem>>, vector<1x18x8xbf16>,
    %cst_94 = arith.constant 0.000000e+00 : bf16
    %97 = vector.broadcast %cst_94 : bf16 to vector<1x18x8xbf16>
    %c17_95 = arith.constant 17 : index
    %c0_96 = arith.constant 0 : index
    %c0_97 = arith.constant 0 : index
    %98 = vector.load %arg12[%c17_95, %c0_96, %c0_97] : memref<18x18x8xbf16, #tpu.memory_space<vmem>>, vector<1x18x8xbf16>
    tpu.vector_store %arg12[%c17_95, %c0_96, %c0_97], %97 {strides = array<i32>} : memref<18x18x8xbf16, #tpu.memory_space<vmem>>, vector<1x18x8xbf16>,
    %cst_98 = arith.constant 0.000000e+00 : bf16
    %99 = vector.broadcast %cst_98 : bf16 to vector<16x1x8xbf16>
    %c1_99 = arith.constant 1 : index
    %c0_100 = arith.constant 0 : index
    %c0_101 = arith.constant 0 : index
    %100 = vector.load %arg12[%c1_99, %c0_100, %c0_101] : memref<18x18x8xbf16, #tpu.memory_space<vmem>>, vector<16x1x8xbf16>
    tpu.vector_store %arg12[%c1_99, %c0_100, %c0_101], %99 {strides = array<i32>} : memref<18x18x8xbf16, #tpu.memory_space<vmem>>, vector<16x1x8xbf16>,
    %cst_102 = arith.constant 0.000000e+00 : bf16
    %101 = vector.broadcast %cst_102 : bf16 to vector<16x1x8xbf16>
    %c1_103 = arith.constant 1 : index
    %c17_104 = arith.constant 17 : index
    %c0_105 = arith.constant 0 : index
    %102 = vector.load %arg12[%c1_103, %c17_104, %c0_105] : memref<18x18x8xbf16, #tpu.memory_space<vmem>>, vector<16x1x8xbf16>
    tpu.vector_store %arg12[%c1_103, %c17_104, %c0_105], %101 {strides = array<i32>} : memref<18x18x8xbf16, #tpu.memory_space<vmem>>, vector<16x1x8xbf16>,
    %103 = vector.shape_cast %94 : vector<256x8xf32> to vector<16x16x8xf32>
    %104 = arith.truncf %103 : vector<16x16x8xf32> to vector<16x16x8xbf16>
    %c1_106 = arith.constant 1 : index
    %c1_107 = arith.constant 1 : index
    %c0_108 = arith.constant 0 : index
    %105 = vector.load %arg12[%c1_106, %c1_107, %c0_108] : memref<18x18x8xbf16, #tpu.memory_space<vmem>>, vector<16x16x8xbf16>
    tpu.vector_store %arg12[%c1_106, %c1_107, %c0_108], %104 {strides = array<i32>} : memref<18x18x8xbf16, #tpu.memory_space<vmem>>, vector<16x16x8xbf16>,
    %cst_109 = arith.constant 0.000000e+00 : f32
    %106 = vector.broadcast %cst_109 : f32 to vector<256x8xf32>
    %c0_110 = arith.constant 0 : index
    %c0_111 = arith.constant 0 : index
    %c0_112 = arith.constant 0 : index
    %107 = vector.load %arg12[%c0_110, %c0_111, %c0_112] : memref<18x18x8xbf16, #tpu.memory_space<vmem>>, vector<16x16x8xbf16>
    %108 = vector.shape_cast %107 : vector<16x16x8xbf16> to vector<256x8xbf16>
    %c0_113 = arith.constant 0 : index
    %c0_114 = arith.constant 0 : index
    %c0_115 = arith.constant 0 : index
    %109 = vector.load %arg6[%c0_113, %c0_114, %c0_115] : memref<9x8x8xbf16, #tpu.memory_space<vmem>>, vector<1x8x8xbf16>
    %110 = vector.shape_cast %109 : vector<1x8x8xbf16> to vector<8x8xbf16>
    %cst_116 = arith.constant dense<0.000000e+00> : vector<256x8xf32>
    %111 = tpu.matmul %108, %110, %cst_116 {dimension_numbers = #tpu.dot_dimension_numbers<[1], [0], [0], [1], [0, 0, 1, 1], [], []>} : vector<256x8xbf16>, vector<8x8xbf16>, vector<256x8xf32> -> vector<256x8xf32>
    %112 = arith.addf %106, %111 : vector<256x8xf32>
    %c0_117 = arith.constant 0 : index
    %c1_118 = arith.constant 1 : index
    %c0_119 = arith.constant 0 : index
    %113 = vector.load %arg12[%c0_117, %c1_118, %c0_119] : memref<18x18x8xbf16, #tpu.memory_space<vmem>>, vector<16x16x8xbf16>
    %114 = vector.shape_cast %113 : vector<16x16x8xbf16> to vector<256x8xbf16>
    %c1_120 = arith.constant 1 : index
    %c0_121 = arith.constant 0 : index
    %c0_122 = arith.constant 0 : index
    %115 = vector.load %arg6[%c1_120, %c0_121, %c0_122] : memref<9x8x8xbf16, #tpu.memory_space<vmem>>, vector<1x8x8xbf16>
    %116 = vector.shape_cast %115 : vector<1x8x8xbf16> to vector<8x8xbf16>
    %cst_123 = arith.constant dense<0.000000e+00> : vector<256x8xf32>
    %117 = tpu.matmul %114, %116, %cst_123 {dimension_numbers = #tpu.dot_dimension_numbers<[1], [0], [0], [1], [0, 0, 1, 1], [], []>} : vector<256x8xbf16>, vector<8x8xbf16>, vector<256x8xf32> -> vector<256x8xf32>
    %118 = arith.addf %112, %117 : vector<256x8xf32>
    %c0_124 = arith.constant 0 : index
    %c2_125 = arith.constant 2 : index
    %c0_126 = arith.constant 0 : index
    %119 = vector.load %arg12[%c0_124, %c2_125, %c0_126] : memref<18x18x8xbf16, #tpu.memory_space<vmem>>, vector<16x16x8xbf16>
    %120 = vector.shape_cast %119 : vector<16x16x8xbf16> to vector<256x8xbf16>
    %c2_127 = arith.constant 2 : index
    %c0_128 = arith.constant 0 : index
    %c0_129 = arith.constant 0 : index
    %121 = vector.load %arg6[%c2_127, %c0_128, %c0_129] : memref<9x8x8xbf16, #tpu.memory_space<vmem>>, vector<1x8x8xbf16>
    %122 = vector.shape_cast %121 : vector<1x8x8xbf16> to vector<8x8xbf16>
    %cst_130 = arith.constant dense<0.000000e+00> : vector<256x8xf32>
    %123 = tpu.matmul %120, %122, %cst_130 {dimension_numbers = #tpu.dot_dimension_numbers<[1], [0], [0], [1], [0, 0, 1, 1], [], []>} : vector<256x8xbf16>, vector<8x8xbf16>, vector<256x8xf32> -> vector<256x8xf32>
    %124 = arith.addf %118, %123 : vector<256x8xf32>
    %c1_131 = arith.constant 1 : index
    %c0_132 = arith.constant 0 : index
    %c0_133 = arith.constant 0 : index
    %125 = vector.load %arg12[%c1_131, %c0_132, %c0_133] : memref<18x18x8xbf16, #tpu.memory_space<vmem>>, vector<16x16x8xbf16>
    %126 = vector.shape_cast %125 : vector<16x16x8xbf16> to vector<256x8xbf16>
    %c3_134 = arith.constant 3 : index
    %c0_135 = arith.constant 0 : index
    %c0_136 = arith.constant 0 : index
    %127 = vector.load %arg6[%c3_134, %c0_135, %c0_136] : memref<9x8x8xbf16, #tpu.memory_space<vmem>>, vector<1x8x8xbf16>
    %128 = vector.shape_cast %127 : vector<1x8x8xbf16> to vector<8x8xbf16>
    %cst_137 = arith.constant dense<0.000000e+00> : vector<256x8xf32>
    %129 = tpu.matmul %126, %128, %cst_137 {dimension_numbers = #tpu.dot_dimension_numbers<[1], [0], [0], [1], [0, 0, 1, 1], [], []>} : vector<256x8xbf16>, vector<8x8xbf16>, vector<256x8xf32> -> vector<256x8xf32>
    %130 = arith.addf %124, %129 : vector<256x8xf32>
    %c1_138 = arith.constant 1 : index
    %c1_139 = arith.constant 1 : index
    %c0_140 = arith.constant 0 : index
    %131 = vector.load %arg12[%c1_138, %c1_139, %c0_140] : memref<18x18x8xbf16, #tpu.memory_space<vmem>>, vector<16x16x8xbf16>
    %132 = vector.shape_cast %131 : vector<16x16x8xbf16> to vector<256x8xbf16>
    %c4_141 = arith.constant 4 : index
    %c0_142 = arith.constant 0 : index
    %c0_143 = arith.constant 0 : index
    %133 = vector.load %arg6[%c4_141, %c0_142, %c0_143] : memref<9x8x8xbf16, #tpu.memory_space<vmem>>, vector<1x8x8xbf16>
    %134 = vector.shape_cast %133 : vector<1x8x8xbf16> to vector<8x8xbf16>
    %cst_144 = arith.constant dense<0.000000e+00> : vector<256x8xf32>
    %135 = tpu.matmul %132, %134, %cst_144 {dimension_numbers = #tpu.dot_dimension_numbers<[1], [0], [0], [1], [0, 0, 1, 1], [], []>} : vector<256x8xbf16>, vector<8x8xbf16>, vector<256x8xf32> -> vector<256x8xf32>
    %136 = arith.addf %130, %135 : vector<256x8xf32>
    %c1_145 = arith.constant 1 : index
    %c2_146 = arith.constant 2 : index
    %c0_147 = arith.constant 0 : index
    %137 = vector.load %arg12[%c1_145, %c2_146, %c0_147] : memref<18x18x8xbf16, #tpu.memory_space<vmem>>, vector<16x16x8xbf16>
    %138 = vector.shape_cast %137 : vector<16x16x8xbf16> to vector<256x8xbf16>
    %c5_148 = arith.constant 5 : index
    %c0_149 = arith.constant 0 : index
    %c0_150 = arith.constant 0 : index
    %139 = vector.load %arg6[%c5_148, %c0_149, %c0_150] : memref<9x8x8xbf16, #tpu.memory_space<vmem>>, vector<1x8x8xbf16>
    %140 = vector.shape_cast %139 : vector<1x8x8xbf16> to vector<8x8xbf16>
    %cst_151 = arith.constant dense<0.000000e+00> : vector<256x8xf32>
    %141 = tpu.matmul %138, %140, %cst_151 {dimension_numbers = #tpu.dot_dimension_numbers<[1], [0], [0], [1], [0, 0, 1, 1], [], []>} : vector<256x8xbf16>, vector<8x8xbf16>, vector<256x8xf32> -> vector<256x8xf32>
    %142 = arith.addf %136, %141 : vector<256x8xf32>
    %c2_152 = arith.constant 2 : index
    %c0_153 = arith.constant 0 : index
    %c0_154 = arith.constant 0 : index
    %143 = vector.load %arg12[%c2_152, %c0_153, %c0_154] : memref<18x18x8xbf16, #tpu.memory_space<vmem>>, vector<16x16x8xbf16>
    %144 = vector.shape_cast %143 : vector<16x16x8xbf16> to vector<256x8xbf16>
    %c6_155 = arith.constant 6 : index
    %c0_156 = arith.constant 0 : index
    %c0_157 = arith.constant 0 : index
    %145 = vector.load %arg6[%c6_155, %c0_156, %c0_157] : memref<9x8x8xbf16, #tpu.memory_space<vmem>>, vector<1x8x8xbf16>
    %146 = vector.shape_cast %145 : vector<1x8x8xbf16> to vector<8x8xbf16>
    %cst_158 = arith.constant dense<0.000000e+00> : vector<256x8xf32>
    %147 = tpu.matmul %144, %146, %cst_158 {dimension_numbers = #tpu.dot_dimension_numbers<[1], [0], [0], [1], [0, 0, 1, 1], [], []>} : vector<256x8xbf16>, vector<8x8xbf16>, vector<256x8xf32> -> vector<256x8xf32>
    %148 = arith.addf %142, %147 : vector<256x8xf32>
    %c2_159 = arith.constant 2 : index
    %c1_160 = arith.constant 1 : index
    %c0_161 = arith.constant 0 : index
    %149 = vector.load %arg12[%c2_159, %c1_160, %c0_161] : memref<18x18x8xbf16, #tpu.memory_space<vmem>>, vector<16x16x8xbf16>
    %150 = vector.shape_cast %149 : vector<16x16x8xbf16> to vector<256x8xbf16>
    %c7_162 = arith.constant 7 : index
    %c0_163 = arith.constant 0 : index
    %c0_164 = arith.constant 0 : index
    %151 = vector.load %arg6[%c7_162, %c0_163, %c0_164] : memref<9x8x8xbf16, #tpu.memory_space<vmem>>, vector<1x8x8xbf16>
    %152 = vector.shape_cast %151 : vector<1x8x8xbf16> to vector<8x8xbf16>
    %cst_165 = arith.constant dense<0.000000e+00> : vector<256x8xf32>
    %153 = tpu.matmul %150, %152, %cst_165 {dimension_numbers = #tpu.dot_dimension_numbers<[1], [0], [0], [1], [0, 0, 1, 1], [], []>} : vector<256x8xbf16>, vector<8x8xbf16>, vector<256x8xf32> -> vector<256x8xf32>
    %154 = arith.addf %148, %153 : vector<256x8xf32>
    %c2_166 = arith.constant 2 : index
    %c2_167 = arith.constant 2 : index
    %c0_168 = arith.constant 0 : index
    %155 = vector.load %arg12[%c2_166, %c2_167, %c0_168] : memref<18x18x8xbf16, #tpu.memory_space<vmem>>, vector<16x16x8xbf16>
    %156 = vector.shape_cast %155 : vector<16x16x8xbf16> to vector<256x8xbf16>
    %c8_169 = arith.constant 8 : index
    %c0_170 = arith.constant 0 : index
    %c0_171 = arith.constant 0 : index
    %157 = vector.load %arg6[%c8_169, %c0_170, %c0_171] : memref<9x8x8xbf16, #tpu.memory_space<vmem>>, vector<1x8x8xbf16>
    %158 = vector.shape_cast %157 : vector<1x8x8xbf16> to vector<8x8xbf16>
    %cst_172 = arith.constant dense<0.000000e+00> : vector<256x8xf32>
    %159 = tpu.matmul %156, %158, %cst_172 {dimension_numbers = #tpu.dot_dimension_numbers<[1], [0], [0], [1], [0, 0, 1, 1], [], []>} : vector<256x8xbf16>, vector<8x8xbf16>, vector<256x8xf32> -> vector<256x8xf32>
    %160 = arith.addf %154, %159 : vector<256x8xf32>
    %c0_173 = arith.constant 0 : index
    %c0_174 = arith.constant 0 : index
    %161 = vector.load %arg7[%c0_173, %c0_174] : memref<1x8xf32, #tpu.memory_space<vmem>>, vector<1x8xf32>
    %c0_175 = arith.constant 0 : index
    %c0_176 = arith.constant 0 : index
    %162 = vector.load %arg8[%c0_175, %c0_176] : memref<1x8xf32, #tpu.memory_space<vmem>>, vector<1x8xf32>
    %c0_177 = arith.constant 0 : index
    %c0_178 = arith.constant 0 : index
    %163 = vector.load %arg9[%c0_177, %c0_178] : memref<8x8xf32, #tpu.memory_space<vmem>>, vector<8x8xf32>
    %cst_179 = arith.constant dense<0.000000e+00> : vector<8xf32>
    %164 = vector.multi_reduction <add>, %160, %cst_179 [0] : vector<256x8xf32> to vector<8xf32>
    %165 = vector.shape_cast %164 : vector<8xf32> to vector<1x8xf32>
    %166 = arith.mulf %160, %160 : vector<256x8xf32>
    %cst_180 = arith.constant dense<0.000000e+00> : vector<8xf32>
    %167 = vector.multi_reduction <add>, %166, %cst_180 [0] : vector<256x8xf32> to vector<8xf32>
    %168 = vector.shape_cast %167 : vector<8xf32> to vector<1x8xf32>
    %cst_181 = arith.constant dense<0.000000e+00> : vector<1x8xf32>
    %169 = tpu.matmul %165, %163, %cst_181 {dimension_numbers = #tpu.dot_dimension_numbers<[1], [0], [0], [1], [0, 0, 1, 1], [], []>} : vector<1x8xf32>, vector<8x8xf32>, vector<1x8xf32> -> vector<1x8xf32>
    %cst_182 = arith.constant dense<0.000000e+00> : vector<1x8xf32>
    %170 = tpu.matmul %168, %163, %cst_182 {dimension_numbers = #tpu.dot_dimension_numbers<[1], [0], [0], [1], [0, 0, 1, 1], [], []>} : vector<1x8xf32>, vector<8x8xf32>, vector<1x8xf32> -> vector<1x8xf32>
    %cst_183 = arith.constant 1.024000e+03 : f32
    %171 = vector.broadcast %cst_183 : f32 to vector<1x8xf32>
    %172 = arith.divf %169, %171 : vector<1x8xf32>
    %cst_184 = arith.constant 1.024000e+03 : f32
    %173 = vector.broadcast %cst_184 : f32 to vector<1x8xf32>
    %174 = arith.divf %170, %173 : vector<1x8xf32>
    %175 = arith.mulf %172, %172 : vector<1x8xf32>
    %176 = arith.subf %174, %175 : vector<1x8xf32>
    %cst_185 = arith.constant 9.99999974E-6 : f32
    %177 = vector.broadcast %cst_185 : f32 to vector<1x8xf32>
    %178 = arith.addf %176, %177 : vector<1x8xf32>
    %179 = math.rsqrt %178 : vector<1x8xf32>
    %180 = vector.broadcast %172 : vector<1x8xf32> to vector<256x8xf32>
    %181 = arith.subf %160, %180 : vector<256x8xf32>
    %182 = vector.broadcast %179 : vector<1x8xf32> to vector<256x8xf32>
    %183 = arith.mulf %181, %182 : vector<256x8xf32>
    %184 = vector.broadcast %161 : vector<1x8xf32> to vector<256x8xf32>
    %185 = arith.mulf %183, %184 : vector<256x8xf32>
    %186 = vector.broadcast %162 : vector<1x8xf32> to vector<256x8xf32>
    %187 = arith.addf %185, %186 : vector<256x8xf32>
    %cst_186 = arith.constant 0.000000e+00 : f32
    %188 = vector.broadcast %cst_186 : f32 to vector<256x8xf32>
    %189 = arith.maximumf %187, %188 : vector<256x8xf32>
    %190 = vector.shape_cast %189 : vector<256x8xf32> to vector<1x256x8xf32>
    %c0_187 = arith.constant 0 : index
    %c0_188 = arith.constant 0 : index
    %c0_189 = arith.constant 0 : index
    %191 = vector.load %arg10[%c0_187, %c0_188, %c0_189] : memref<1x256x8xf32, #tpu.memory_space<vmem>>, vector<1x256x8xf32>
    tpu.vector_store %arg10[%c0_187, %c0_188, %c0_189], %190 {strides = array<i32>} : memref<1x256x8xf32, #tpu.memory_space<vmem>>, vector<1x256x8xf32>,
    return
  }
  func.func @transform_0(%arg0: i32) -> (i32, i32, i32, i32) {
    %c0_i32 = arith.constant 0 : i32
    %c0_i32_0 = arith.constant 0 : i32
    %c0_i32_1 = arith.constant 0 : i32
    %c0_i32_2 = arith.constant 0 : i32
    return %arg0, %c0_i32, %c0_i32_0, %c0_i32_1 : i32, i32, i32, i32
  }
  func.func @transform_1(%arg0: i32) -> (i32, i32, i32) {
    %c0_i32 = arith.constant 0 : i32
    %c0_i32_0 = arith.constant 0 : i32
    %c0_i32_1 = arith.constant 0 : i32
    %c0_i32_2 = arith.constant 0 : i32
    return %c0_i32, %c0_i32_0, %c0_i32_1 : i32, i32, i32
  }
  func.func @transform_2(%arg0: i32) -> (i32, i32) {
    %c0_i32 = arith.constant 0 : i32
    %c0_i32_0 = arith.constant 0 : i32
    %c0_i32_1 = arith.constant 0 : i32
    return %c0_i32, %c0_i32_0 : i32, i32
  }
  func.func @transform_3(%arg0: i32) -> (i32, i32) {
    %c0_i32 = arith.constant 0 : i32
    %c0_i32_0 = arith.constant 0 : i32
    %c0_i32_1 = arith.constant 0 : i32
    return %c0_i32, %c0_i32_0 : i32, i32
  }
  func.func @transform_4(%arg0: i32) -> (i32, i32) {
    %c0_i32 = arith.constant 0 : i32
    %c0_i32_0 = arith.constant 0 : i32
    %c0_i32_1 = arith.constant 0 : i32
    return %c0_i32, %c0_i32_0 : i32, i32
  }
  func.func @transform_5(%arg0: i32) -> (i32, i32, i32) {
    %c0_i32 = arith.constant 0 : i32
    %c0_i32_0 = arith.constant 0 : i32
    %c0_i32_1 = arith.constant 0 : i32
    %c0_i32_2 = arith.constant 0 : i32
    return %c0_i32, %c0_i32_0, %c0_i32_1 : i32, i32, i32
  }
  func.func @transform_6(%arg0: i32) -> (i32, i32) {
    %c0_i32 = arith.constant 0 : i32
    %c0_i32_0 = arith.constant 0 : i32
    %c0_i32_1 = arith.constant 0 : i32
    return %c0_i32, %c0_i32_0 : i32, i32
  }
  func.func @transform_7(%arg0: i32) -> (i32, i32) {
    %c0_i32 = arith.constant 0 : i32
    %c0_i32_0 = arith.constant 0 : i32
    %c0_i32_1 = arith.constant 0 : i32
    return %c0_i32, %c0_i32_0 : i32, i32
  }
  func.func @transform_8(%arg0: i32) -> (i32, i32) {
    %c0_i32 = arith.constant 0 : i32
    %c0_i32_0 = arith.constant 0 : i32
    %c0_i32_1 = arith.constant 0 : i32
    return %c0_i32, %c0_i32_0 : i32, i32
  }
  func.func @transform_9(%arg0: i32) -> (i32, i32, i32) {
    %c0_i32 = arith.constant 0 : i32
    %c0_i32_0 = arith.constant 0 : i32
    %c0_i32_1 = arith.constant 0 : i32
    return %arg0, %c0_i32, %c0_i32_0 : i32, i32, i32
  }
}

</mosaic_0001>

<llo_original>
// kernel: tpu_custom_call.1
$region0: #{tpu_custom_call.1}
  #allocation0 [shape = 'u32[]', space=smem, size = 0x4, offset = 0x4, fixed_abs, tag = 'smem constant byte address 0x4 - core index']
  #allocation1 [shape = 'u32[144,128]{1,0:T(1,128)}', space=vmem, size = 0x12000, scoped, tag = 'internal scratch']
  #allocation2 [shape = 'bf16[18,18,4]{2,1,0:T(8,128)(2,1)}', space=vmem, size = 0x1b000, scoped, tag = 'scratch operand']
  #allocation3 [shape = 'bf16[18,18,8]{2,1,0:T(8,128)(2,1)}', space=vmem, size = 0x1b000, scoped, tag = 'scratch operand']
  %s0 = inlined_call_operand.vmem [shape: bf16[2,16,16,4], index: 0, kind: input, shape index: {}]
  %s1 = inlined_call_operand.vmem [shape: bf16[9,4,8], index: 1, kind: input, shape index: {}]
  %s2 = inlined_call_operand.vmem [shape: f32[1,8], index: 2, kind: input, shape index: {}]
  %s3 = inlined_call_operand.vmem [shape: f32[1,8], index: 3, kind: input, shape index: {}]
  %s4 = inlined_call_operand.vmem [shape: f32[8,8], index: 4, kind: input, shape index: {}]
  %s5 = inlined_call_operand.vmem [shape: bf16[9,8,8], index: 5, kind: input, shape index: {}]
  %s6 = inlined_call_operand.vmem [shape: f32[1,8], index: 6, kind: input, shape index: {}]
  %s7 = inlined_call_operand.vmem [shape: f32[1,8], index: 7, kind: input, shape index: {}]
  %s8 = inlined_call_operand.vmem [shape: f32[8,8], index: 8, kind: input, shape index: {}]
  %s9 = inlined_call_operand.vmem [shape: f32[2,256,8], index: 9, kind: output, shape index: {}]
  %s10 = sld [smem:[#allocation0]]
  $region69: #{tpu_custom_call.1} parent=0
    _
  %s12 = ssub.s32 1, %s10
  %s13 = scalar_select 0, %s12, %s10
  loop: start=0, step=1, limit=4
  $region2: #{tpu_custom_call.1} parent=0 // loop_pre_header
    _
  $region3: #{tpu_custom_call.1} parent=0 // loop_header
    %s15 = sphi 0, %s19
    %p16 = scmp.ge.s32.totalorder %s15, 4
    %s25 = sphi 0, %s27
    %s28 = sphi 0, %s25
    %s29 = sphi 0, %s28
    %s45 = sphi 0, %s29
    %s49 = sphi 0, %s49
    %s51 = sphi 0, %s49
    %s52 = sphi 0, %s51
    %s66 = sphi 0, %s52
    %s70 = sphi 0, %s70
    %s72 = sphi 0, %s70
    %s73 = sphi 0, %s72
    %s87 = sphi 0, %s73
    %s91 = sphi 0, %s91
    %s93 = sphi 0, %s91
    %s94 = sphi 0, %s93
    %s108 = sphi 0, %s94
    %s112 = sphi 0, %s112
    %s114 = sphi 0, %s112
    %s115 = sphi 0, %s114
    %s129 = sphi 0, %s115
    %s133 = sphi 0, %s133
    %s135 = sphi 0, %s133
    %s136 = sphi 0, %s135
    %s150 = sphi 0, %s136
    %s154 = sphi 0, %s154
    %s156 = sphi 0, %s154
    %s157 = sphi 0, %s156
    %s171 = sphi 0, %s157
    %s175 = sphi 0, %s175
    %s177 = sphi 0, %s175
    %s178 = sphi 0, %s177
    %s192 = sphi 0, %s178
    %s196 = sphi 0, %s196
    %s198 = sphi 0, %s196
    %s199 = sphi 0, %s198
    %s213 = sphi 0, %s199
    %s219 = sphi 0, %s221
    %s222 = sphi 0, %s219
    %s223 = sphi 0, %s222
    %s239 = sphi 0, %s223
  $region4: #{tpu_custom_call.1} parent=0 // loop_header_branch
    %18 = sbr.rel (%p16) target = $region8
  $region5: #{tpu_custom_call.1} parent=0 // loop_body
    %s20 = ssub.s32 %s15, 1
    %s21 = ssub.s32 %s15, 2
    %s22 = sadd.s32 %s15, 1
    %s23 = ssub.s32 %s15, %s22
    %p24 = scmp.eq.s32.totalorder %s23, 0
    %s26 = sadd.s32 %s25, 1
    %s27 = scalar_select %p24, %s25, %s26
    %p30 = pneg %p24
    %p31 = scmp.eq.s32.totalorder %s15, 1
    %p32 = por %p30, %p31
    %p33 = scmp.ne.s32.totalorder %s25, %s28
    %p34 = scmp.eq.s32.totalorder %s15, 0
    %p35 = por %p33, %p34
    %p36 = scmp.ne.s32.totalorder %s25, %s28
    %p37 = scmp.eq.s32.totalorder %s20, 1
    %p38 = por %p36, %p37
    %p39 = scmp.ne.s32.totalorder %s28, %s29
    %p40 = scmp.eq.s32.totalorder %s20, 0
    %p41 = por %p39, %p40
    %p42 = scmp.ne.s32.totalorder %s28, %s29
    %p43 = scmp.eq.s32.totalorder %s21, 1
    %p44 = por %p42, %p43
    %p46 = scmp.ne.s32.totalorder %s29, %s45
    %p47 = scmp.eq.s32.totalorder %s21, 0
    %p48 = por %p46, %p47
    %s50 = sadd.s32 %s49, 1
    %p53 = scmp.eq.s32.totalorder %s15, 1
    %p54 = scmp.ne.s32.totalorder %s49, %s51
    %p55 = scmp.eq.s32.totalorder %s15, 0
    %p56 = por %p54, %p55
    %p57 = scmp.ne.s32.totalorder %s49, %s51
    %p58 = scmp.eq.s32.totalorder %s20, 1
    %p59 = por %p57, %p58
    %p60 = scmp.ne.s32.totalorder %s51, %s52
    %p61 = scmp.eq.s32.totalorder %s20, 0
    %p62 = por %p60, %p61
    %p63 = scmp.ne.s32.totalorder %s51, %s52
    %p64 = scmp.eq.s32.totalorder %s21, 1
    %p65 = por %p63, %p64
    %p67 = scmp.ne.s32.totalorder %s52, %s66
    %p68 = scmp.eq.s32.totalorder %s21, 0
    %p69 = por %p67, %p68
    %s71 = sadd.s32 %s70, 1
    %p74 = scmp.eq.s32.totalorder %s15, 1
    %p75 = scmp.ne.s32.totalorder %s70, %s72
    %p76 = scmp.eq.s32.totalorder %s15, 0
    %p77 = por %p75, %p76
    %p78 = scmp.ne.s32.totalorder %s70, %s72
    %p79 = scmp.eq.s32.totalorder %s20, 1
    %p80 = por %p78, %p79
    %p81 = scmp.ne.s32.totalorder %s72, %s73
    %p82 = scmp.eq.s32.totalorder %s20, 0
    %p83 = por %p81, %p82
    %p84 = scmp.ne.s32.totalorder %s72, %s73
    %p85 = scmp.eq.s32.totalorder %s21, 1
    %p86 = por %p84, %p85
    %p88 = scmp.ne.s32.totalorder %s73, %s87
    %p89 = scmp.eq.s32.totalorder %s21, 0
    %p90 = por %p88, %p89
    %s92 = sadd.s32 %s91, 1
    %p95 = scmp.eq.s32.totalorder %s15, 1
    %p96 = scmp.ne.s32.totalorder %s91, %s93
    %p97 = scmp.eq.s32.totalorder %s15, 0
    %p98 = por %p96, %p97
    %p99 = scmp.ne.s32.totalorder %s91, %s93
    %p100 = scmp.eq.s32.totalorder %s20, 1
    %p101 = por %p99, %p100
    %p102 = scmp.ne.s32.totalorder %s93, %s94
    %p103 = scmp.eq.s32.totalorder %s20, 0
    %p104 = por %p102, %p103
    %p105 = scmp.ne.s32.totalorder %s93, %s94
    %p106 = scmp.eq.s32.totalorder %s21, 1
    %p107 = por %p105, %p106
    %p109 = scmp.ne.s32.totalorder %s94, %s108
    %p110 = scmp.eq.s32.totalorder %s21, 0
    %p111 = por %p109, %p110
    %s113 = sadd.s32 %s112, 1
    %p116 = scmp.eq.s32.totalorder %s15, 1
    %p117 = scmp.ne.s32.totalorder %s112, %s114
    %p118 = scmp.eq.s32.totalorder %s15, 0
    %p119 = por %p117, %p118
    %p120 = scmp.ne.s32.totalorder %s112, %s114
    %p121 = scmp.eq.s32.totalorder %s20, 1
    %p122 = por %p120, %p121
    %p123 = scmp.ne.s32.totalorder %s114, %s115
    %p124 = scmp.eq.s32.totalorder %s20, 0
    %p125 = por %p123, %p124
    %p126 = scmp.ne.s32.totalorder %s114, %s115
    %p127 = scmp.eq.s32.totalorder %s21, 1
    %p128 = por %p126, %p127
    %p130 = scmp.ne.s32.totalorder %s115, %s129
    %p131 = scmp.eq.s32.totalorder %s21, 0
    %p132 = por %p130, %p131
    %s134 = sadd.s32 %s133, 1
    %p137 = scmp.eq.s32.totalorder %s15, 1
    %p138 = scmp.ne.s32.totalorder %s133, %s135
    %p139 = scmp.eq.s32.totalorder %s15, 0
    %p140 = por %p138, %p139
    %p141 = scmp.ne.s32.totalorder %s133, %s135
    %p142 = scmp.eq.s32.totalorder %s20, 1
    %p143 = por %p141, %p142
    %p144 = scmp.ne.s32.totalorder %s135, %s136
    %p145 = scmp.eq.s32.totalorder %s20, 0
    %p146 = por %p144, %p145
    %p147 = scmp.ne.s32.totalorder %s135, %s136
    %p148 = scmp.eq.s32.totalorder %s21, 1
    %p149 = por %p147, %p148
    %p151 = scmp.ne.s32.totalorder %s136, %s150
    %p152 = scmp.eq.s32.totalorder %s21, 0
    %p153 = por %p151, %p152
    %s155 = sadd.s32 %s154, 1
    %p158 = scmp.eq.s32.totalorder %s15, 1
    %p159 = scmp.ne.s32.totalorder %s154, %s156
    %p160 = scmp.eq.s32.totalorder %s15, 0
    %p161 = por %p159, %p160
    %p162 = scmp.ne.s32.totalorder %s154, %s156
    %p163 = scmp.eq.s32.totalorder %s20, 1
    %p164 = por %p162, %p163
    %p165 = scmp.ne.s32.totalorder %s156, %s157
    %p166 = scmp.eq.s32.totalorder %s20, 0
    %p167 = por %p165, %p166
    %p168 = scmp.ne.s32.totalorder %s156, %s157
    %p169 = scmp.eq.s32.totalorder %s21, 1
    %p170 = por %p168, %p169
    %p172 = scmp.ne.s32.totalorder %s157, %s171
    %p173 = scmp.eq.s32.totalorder %s21, 0
    %p174 = por %p172, %p173
    %s176 = sadd.s32 %s175, 1
    %p179 = scmp.eq.s32.totalorder %s15, 1
    %p180 = scmp.ne.s32.totalorder %s175, %s177
    %p181 = scmp.eq.s32.totalorder %s15, 0
    %p182 = por %p180, %p181
    %p183 = scmp.ne.s32.totalorder %s175, %s177
    %p184 = scmp.eq.s32.totalorder %s20, 1
    %p185 = por %p183, %p184
    %p186 = scmp.ne.s32.totalorder %s177, %s178
    %p187 = scmp.eq.s32.totalorder %s20, 0
    %p188 = por %p186, %p187
    %p189 = scmp.ne.s32.totalorder %s177, %s178
    %p190 = scmp.eq.s32.totalorder %s21, 1
    %p191 = por %p189, %p190
    %p193 = scmp.ne.s32.totalorder %s178, %s192
    %p194 = scmp.eq.s32.totalorder %s21, 0
    %p195 = por %p193, %p194
    %s197 = sadd.s32 %s196, 1
    %p200 = scmp.eq.s32.totalorder %s15, 1
    %p201 = scmp.ne.s32.totalorder %s196, %s198
    %p202 = scmp.eq.s32.totalorder %s15, 0
    %p203 = por %p201, %p202
    %p204 = scmp.ne.s32.totalorder %s196, %s198
    %p205 = scmp.eq.s32.totalorder %s20, 1
    %p206 = por %p204, %p205
    %p207 = scmp.ne.s32.totalorder %s198, %s199
    %p208 = scmp.eq.s32.totalorder %s20, 0
    %p209 = por %p207, %p208
    %p210 = scmp.ne.s32.totalorder %s198, %s199
    %p211 = scmp.eq.s32.totalorder %s21, 1
    %p212 = por %p210, %p211
    %p214 = scmp.ne.s32.totalorder %s199, %s213
    %p215 = scmp.eq.s32.totalorder %s21, 0
    %p216 = por %p214, %p215
    %s217 = ssub.s32 %s15, %s22
    %p218 = scmp.eq.s32.totalorder %s217, 0
    %s220 = sadd.s32 %s219, 1
    %s221 = scalar_select %p218, %s219, %s220
    %p224 = pneg %p218
    %p225 = scmp.eq.s32.totalorder %s15, 1
    %p226 = por %p224, %p225
    %p227 = scmp.ne.s32.totalorder %s219, %s222
    %p228 = scmp.eq.s32.totalorder %s15, 0
    %p229 = por %p227, %p228
    %p230 = scmp.ne.s32.totalorder %s219, %s222
    %p231 = scmp.eq.s32.totalorder %s20, 1
    %p232 = por %p230, %p231
    %p233 = scmp.ne.s32.totalorder %s222, %s223
    %p234 = scmp.eq.s32.totalorder %s20, 0
    %p235 = por %p233, %p234
    %p236 = scmp.ne.s32.totalorder %s222, %s223
    %p237 = scmp.eq.s32.totalorder %s21, 1
    %p238 = por %p236, %p237
    %p240 = scmp.ne.s32.totalorder %s223, %s239
    %p241 = scmp.eq.s32.totalorder %s21, 0
    %p242 = por %p240, %p241
    %p243 = scmp.le.s32.totalorder 1, %s15
    %p244 = scmp.lt.s32.totalorder %s15, 3
    %p245 = pnand %p243, %p244
    %p246 = pneg %p245
    // Predicated region
    $region9: #{tpu_custom_call.1} parent=5 // pred_check
      _
    $region10: #{tpu_custom_call.1} parent=5 // pred_check_branch
      %248 = sbr.rel (%p245) target = $region12
    $region11: #{tpu_custom_call.1} parent=5 // pred_region
      %s249 = ssub.s32 %s15, 1
      // Predicated region
      $region13: #{tpu_custom_call.1} parent=11 // pred_check
        %p250 = pneg %p62
      $region14: #{tpu_custom_call.1} parent=11 // pred_check_branch
        %252 = sbr.rel (%p250) target = $region16
      $region15: #{tpu_custom_call.1} parent=11 // pred_region
        _
      $region16: #{tpu_custom_call.1} parent=11 // pred_fallthru
        _
      // Predicated region
      $region17: #{tpu_custom_call.1} parent=11 // pred_check
        %p253 = pneg %p83
      $region18: #{tpu_custom_call.1} parent=11 // pred_check_branch
        %255 = sbr.rel (%p253) target = $region20
      $region19: #{tpu_custom_call.1} parent=11 // pred_region
        _
      $region20: #{tpu_custom_call.1} parent=11 // pred_fallthru
        _
      // Predicated region
      $region21: #{tpu_custom_call.1} parent=11 // pred_check
        %p256 = pneg %p104
      $region22: #{tpu_custom_call.1} parent=11 // pred_check_branch
        %258 = sbr.rel (%p256) target = $region24
      $region23: #{tpu_custom_call.1} parent=11 // pred_region
        _
      $region24: #{tpu_custom_call.1} parent=11 // pred_fallthru
        _
      // Predicated region
      $region25: #{tpu_custom_call.1} parent=11 // pred_check
        %p259 = pneg %p125
      $region26: #{tpu_custom_call.1} parent=11 // pred_check_branch
        %261 = sbr.rel (%p259) target = $region28
      $region27: #{tpu_custom_call.1} parent=11 // pred_region
        _
      $region28: #{tpu_custom_call.1} parent=11 // pred_fallthru
        _
      // Predicated region
      $region29: #{tpu_custom_call.1} parent=11 // pred_check
        %p262 = pneg %p146
      $region30: #{tpu_custom_call.1} parent=11 // pred_check_branch
        %264 = sbr.rel (%p262) target = $region32
      $region31: #{tpu_custom_call.1} parent=11 // pred_region
        _
      $region32: #{tpu_custom_call.1} parent=11 // pred_fallthru
        _
      // Predicated region
      $region33: #{tpu_custom_call.1} parent=11 // pred_check
        %p265 = pneg %p167
      $region34: #{tpu_custom_call.1} parent=11 // pred_check_branch
        %267 = sbr.rel (%p265) target = $region36
      $region35: #{tpu_custom_call.1} parent=11 // pred_region
        _
      $region36: #{tpu_custom_call.1} parent=11 // pred_fallthru
        _
      // Predicated region
      $region37: #{tpu_custom_call.1} parent=11 // pred_check
        %p268 = pneg %p188
      $region38: #{tpu_custom_call.1} parent=11 // pred_check_branch
        %270 = sbr.rel (%p268) target = $region40
      $region39: #{tpu_custom_call.1} parent=11 // pred_region
        _
      $region40: #{tpu_custom_call.1} parent=11 // pred_fallthru
        _
      // Predicated region
      $region41: #{tpu_custom_call.1} parent=11 // pred_check
        %p271 = pneg %p209
      $region42: #{tpu_custom_call.1} parent=11 // pred_check_branch
        %273 = sbr.rel (%p271) target = $region44
      $region43: #{tpu_custom_call.1} parent=11 // pred_region
        _
      $region44: #{tpu_custom_call.1} parent=11 // pred_fallthru
        _
    $region12: #{tpu_custom_call.1} parent=5 // pred_fallthru
      _
    %p274 = scmp.lt.s32.totalorder %s15, 2
    // Predicated region
    $region45: #{tpu_custom_call.1} parent=5 // pred_check
      %p275 = pneg %p274
    $region46: #{tpu_custom_call.1} parent=5 // pred_check_branch
      %277 = sbr.rel (%p275) target = $region48
    $region47: #{tpu_custom_call.1} parent=5 // pred_region
      // Predicated region
      $region49: #{tpu_custom_call.1} parent=47 // pred_check
        %p278 = pneg %p35
      $region50: #{tpu_custom_call.1} parent=47 // pred_check_branch
        %280 = sbr.rel (%p278) target = $region52
      $region51: #{tpu_custom_call.1} parent=47 // pred_region
        %p281 = scmp.lt.s32.totalorder %s15, 1
        %s282 = scalar_select %p281, %s15, 1
        %s283 = smul.addr %s282, 32
        %s284 = smul.addr %s283, 4
        %s285 = scalar_lea.vmem %s0, %s284
      $region52: #{tpu_custom_call.1} parent=47 // pred_fallthru
        _
    $region48: #{tpu_custom_call.1} parent=5 // pred_fallthru
      _
    %p286 = scmp.le.s32.totalorder 1, %s15
    %p287 = scmp.lt.s32.totalorder %s15, 3
    %p288 = pnand %p286, %p287
    %p289 = pneg %p288
    // Predicated region
    $region53: #{tpu_custom_call.1} parent=5 // pred_check
      _
    $region54: #{tpu_custom_call.1} parent=5 // pred_check_branch
      %291 = sbr.rel (%p288) target = $region56
    $region55: #{tpu_custom_call.1} parent=5 // pred_region
      %s292 = ssub.s32 %s15, 1
      %p293 = scmp.lt.s32.totalorder %s20, 1
      %s294 = scalar_select %p293, %s20, 1
      %s295 = smul.addr %s294, 32
      %s296 = smul.addr %s295, 4
      %s297 = scalar_lea.vmem %s0, %s296
      %p298 = pneg %p41
      %p299 = pneg %p38
      %p300 = pneg %p62
      %p301 = pneg %p59
      %p302 = pneg %p83
      %p303 = pneg %p80
      %p304 = pneg %p104
      %p305 = pneg %p101
      %p306 = pneg %p125
      %p307 = pneg %p122
      %p308 = pneg %p146
      %p309 = pneg %p143
      %p310 = pneg %p167
      %p311 = pneg %p164
      %p312 = pneg %p188
      %p313 = pneg %p185
      %p314 = pneg %p209
      %p315 = pneg %p206
      %p316 = pneg %p235
      %p317 = pneg %p232
      %p318 = scmp.lt.s32.totalorder %s20, 1
      %s319 = scalar_select %p318, %s20, 1
      %s320 = smul.addr %s319, 32
      %s321 = smul.addr %s320, 8
      %s322 = scalar_lea.vmem %s9, %s321
      %p323 = scmp.lt.s32.totalorder %s20, 1
      %s324 = scalar_select %p323, %s20, 1
      %s325 = smul.addr %s324, 32
      %s326 = smul.addr %s325, 4
      %s327 = scalar_lea.vmem %s0, %s326
      %p328 = scmp.lt.s32.totalorder %s20, 1
      %s329 = scalar_select %p328, %s20, 1
      %s330 = smul.addr %s329, 32
      %s331 = smul.addr %s330, 8
      %s332 = scalar_lea.vmem %s9, %s331
      %vm334 = vcmask 27648
      %335 = vst.msk [vmem:[#allocation2] sm:$0xf] %vm334, 0
      %336 = vst.msk [vmem:[#allocation2 + $0x4] sm:$0xf] %vm334, 0
      %vm337 = vcmask 24576
      %338 = vst.msk [vmem:[#allocation2 + $0x8] sm:$0x1] %vm337, 0
      %s339 = scalar_lea.vmem [#allocation2], 204
      %340 = vst.msk [vmem:[%s339] sm:$0xf] %vm334, 0
      %341 = vst.msk [vmem:[%s339 + $0x4] sm:$0xf] %vm334, 0
      %342 = vst.msk [vmem:[%s339 + $0x8] sm:$0x1] %vm337, 0
      %s343 = scalar_lea.vmem [#allocation2], 12
      %vm344 = vcmask 24576
      %vm345 = vsmask.f32 256
      %vm346 = vmand %vm344, %vm345
      %v347 = vld [vmem:[%s343] sm:$0x1]
      %v348 = vsel %vm346, 0, %v347
      %349 = vst [vmem:[%s343] sm:$0x1] %v348
      %v350 = vld [vmem:[%s343 + $0xc] sm:$0x1]
      %v351 = vsel %vm346, 0, %v350
      %352 = vst [vmem:[%s343 + $0xc] sm:$0x1] %v351
      %v353 = vld [vmem:[%s343 + $0x18] sm:$0x1]
      %v354 = vsel %vm346, 0, %v353
      %355 = vst [vmem:[%s343 + $0x18] sm:$0x1] %v354
      %v356 = vld [vmem:[%s343 + $0x24] sm:$0x1]
      %v357 = vsel %vm346, 0, %v356
      %358 = vst [vmem:[%s343 + $0x24] sm:$0x1] %v357
      %v359 = vld [vmem:[%s343 + $0x30] sm:$0x1]
      %v360 = vsel %vm346, 0, %v359
      %361 = vst [vmem:[%s343 + $0x30] sm:$0x1] %v360
      %v362 = vld [vmem:[%s343 + $0x3c] sm:$0x1]
      %v363 = vsel %vm346, 0, %v362
      %364 = vst [vmem:[%s343 + $0x3c] sm:$0x1] %v363
      %v365 = vld [vmem:[%s343 + $0x48] sm:$0x1]
      %v366 = vsel %vm346, 0, %v365
      %367 = vst [vmem:[%s343 + $0x48] sm:$0x1] %v366
      %v368 = vld [vmem:[%s343 + $0x54] sm:$0x1]
      %v369 = vsel %vm346, 0, %v368
      %370 = vst [vmem:[%s343 + $0x54] sm:$0x1] %v369
      %v371 = vld [vmem:[%s343 + $0x60] sm:$0x1]
      %v372 = vsel %vm346, 0, %v371
      %373 = vst [vmem:[%s343 + $0x60] sm:$0x1] %v372
      %v374 = vld [vmem:[%s343 + $0x6c] sm:$0x1]
      %v375 = vsel %vm346, 0, %v374
      %376 = vst [vmem:[%s343 + $0x6c] sm:$0x1] %v375
      %v377 = vld [vmem:[%s343 + $0x78] sm:$0x1]
      %v378 = vsel %vm346, 0, %v377
      %379 = vst [vmem:[%s343 + $0x78] sm:$0x1] %v378
      %v380 = vld [vmem:[%s343 + $0x84] sm:$0x1]
      %v381 = vsel %vm346, 0, %v380
      %382 = vst [vmem:[%s343 + $0x84] sm:$0x1] %v381
      %v383 = vld [vmem:[%s343 + $0x90] sm:$0x1]
      %v384 = vsel %vm346, 0, %v383
      %385 = vst [vmem:[%s343 + $0x90] sm:$0x1] %v384
      %v386 = vld [vmem:[%s343 + $0x9c] sm:$0x1]
      %v387 = vsel %vm346, 0, %v386
      %388 = vst [vmem:[%s343 + $0x9c] sm:$0x1] %v387
      %v389 = vld [vmem:[%s343 + $0xa8] sm:$0x1]
      %v390 = vsel %vm346, 0, %v389
      %391 = vst [vmem:[%s343 + $0xa8] sm:$0x1] %v390
      %v392 = vld [vmem:[%s343 + $0xb4] sm:$0x1]
      %v393 = vsel %vm346, 0, %v392
      %394 = vst [vmem:[%s343 + $0xb4] sm:$0x1] %v393
      %vm395 = vsmask.f32 7938
      %vm396 = vmand %vm344, %vm395
      %v397 = vld [vmem:[%s343 + $0x8] sm:$0x1]
      %v398 = vsel %vm396, 0, %v397
      %399 = vst [vmem:[%s343 + $0x8] sm:$0x1] %v398
      %v400 = vld [vmem:[%s343 + $0x14] sm:$0x1]
      %v401 = vsel %vm396, 0, %v400
      %402 = vst [vmem:[%s343 + $0x14] sm:$0x1] %v401
      %v403 = vld [vmem:[%s343 + $0x20] sm:$0x1]
      %v404 = vsel %vm396, 0, %v403
      %405 = vst [vmem:[%s343 + $0x20] sm:$0x1] %v404
      %v406 = vld [vmem:[%s343 + $0x2c] sm:$0x1]
      %v407 = vsel %vm396, 0, %v406
      %408 = vst [vmem:[%s343 + $0x2c] sm:$0x1] %v407
      %v409 = vld [vmem:[%s343 + $0x38] sm:$0x1]
      %v410 = vsel %vm396, 0, %v409
      %411 = vst [vmem:[%s343 + $0x38] sm:$0x1] %v410
      %v412 = vld [vmem:[%s343 + $0x44] sm:$0x1]
      %v413 = vsel %vm396, 0, %v412
      %414 = vst [vmem:[%s343 + $0x44] sm:$0x1] %v413
      %v415 = vld [vmem:[%s343 + $0x50] sm:$0x1]
      %v416 = vsel %vm396, 0, %v415
      %417 = vst [vmem:[%s343 + $0x50] sm:$0x1] %v416
      %v418 = vld [vmem:[%s343 + $0x5c] sm:$0x1]
      %v419 = vsel %vm396, 0, %v418
      %420 = vst [vmem:[%s343 + $0x5c] sm:$0x1] %v419
      %v421 = vld [vmem:[%s343 + $0x68] sm:$0x1]
      %v422 = vsel %vm396, 0, %v421
      %423 = vst [vmem:[%s343 + $0x68] sm:$0x1] %v422
      %v424 = vld [vmem:[%s343 + $0x74] sm:$0x1]
      %v425 = vsel %vm396, 0, %v424
      %426 = vst [vmem:[%s343 + $0x74] sm:$0x1] %v425
      %v427 = vld [vmem:[%s343 + $0x80] sm:$0x1]
      %v428 = vsel %vm396, 0, %v427
      %429 = vst [vmem:[%s343 + $0x80] sm:$0x1] %v428
      %v430 = vld [vmem:[%s343 + $0x8c] sm:$0x1]
      %v431 = vsel %vm396, 0, %v430
      %432 = vst [vmem:[%s343 + $0x8c] sm:$0x1] %v431
      %v433 = vld [vmem:[%s343 + $0x98] sm:$0x1]
      %v434 = vsel %vm396, 0, %v433
      %435 = vst [vmem:[%s343 + $0x98] sm:$0x1] %v434
      %v436 = vld [vmem:[%s343 + $0xa4] sm:$0x1]
      %v437 = vsel %vm396, 0, %v436
      %438 = vst [vmem:[%s343 + $0xa4] sm:$0x1] %v437
      %v439 = vld [vmem:[%s343 + $0xb0] sm:$0x1]
      %v440 = vsel %vm396, 0, %v439
      %441 = vst [vmem:[%s343 + $0xb0] sm:$0x1] %v440
      %v442 = vld [vmem:[%s343 + $0xbc] sm:$0x1]
      %v443 = vsel %vm396, 0, %v442
      %444 = vst [vmem:[%s343 + $0xbc] sm:$0x1] %v443
      %v445 = vld [vmem:[%s327] sm:$0xf]
      %v446 = vld [vmem:[%s327 + $0x4] sm:$0xf]
      %v447 = vld [vmem:[%s327 + $0x8] sm:$0xf]
      %v448 = vld [vmem:[%s327 + $0xc] sm:$0xf]
      %v449 = vld [vmem:[%s327 + $0x10] sm:$0xf]
      %v450 = vld [vmem:[%s327 + $0x14] sm:$0xf]
      %v451 = vld [vmem:[%s327 + $0x18] sm:$0xf]
      %v452 = vld [vmem:[%s327 + $0x1c] sm:$0xf]
      %v453 = vld [vmem:[%s327 + $0x20] sm:$0xf]
      %v454 = vld [vmem:[%s327 + $0x24] sm:$0xf]
      %v455 = vld [vmem:[%s327 + $0x28] sm:$0xf]
      %v456 = vld [vmem:[%s327 + $0x2c] sm:$0xf]
      %v457 = vld [vmem:[%s327 + $0x30] sm:$0xf]
      %v458 = vld [vmem:[%s327 + $0x34] sm:$0xf]
      %v459 = vld [vmem:[%s327 + $0x38] sm:$0xf]
      %v460 = vld [vmem:[%s327 + $0x3c] sm:$0xf]
      %v461 = vld [vmem:[%s327 + $0x40] sm:$0xf]
      %v462 = vld [vmem:[%s327 + $0x44] sm:$0xf]
      %v463 = vld [vmem:[%s327 + $0x48] sm:$0xf]
      %v464 = vld [vmem:[%s327 + $0x4c] sm:$0xf]
      %v465 = vld [vmem:[%s327 + $0x50] sm:$0xf]
      %v466 = vld [vmem:[%s327 + $0x54] sm:$0xf]
      %v467 = vld [vmem:[%s327 + $0x58] sm:$0xf]
      %v468 = vld [vmem:[%s327 + $0x5c] sm:$0xf]
      %v469 = vld [vmem:[%s327 + $0x60] sm:$0xf]
      %v470 = vld [vmem:[%s327 + $0x64] sm:$0xf]
      %v471 = vld [vmem:[%s327 + $0x68] sm:$0xf]
      %v472 = vld [vmem:[%s327 + $0x6c] sm:$0xf]
      %v473 = vld [vmem:[%s327 + $0x70] sm:$0xf]
      %v474 = vld [vmem:[%s327 + $0x74] sm:$0xf]
      %v475 = vld [vmem:[%s327 + $0x78] sm:$0xf]
      %v476 = vld [vmem:[%s327 + $0x7c] sm:$0xf]
      %vm477 = vsmask.f32 4368
      %vm478 = vmor %vm345, %vm477
      %v480 = vshrl.u32 %v445, 16
      %v482 = vrot.slane %v480, 7
      %v483 = vshll.u32 %v445, 16
      %v485 = vor.u32 %v482, %v483
      %v486 = vrot.slane %v482, 4
      %v488 = vshrl.u32 %v446, 16
      %v490 = vrot.slane %v488, 7
      %v491 = vshll.u32 %v446, 16
      %v493 = vor.u32 %v490, %v491
      %v494 = vsel %vm478, %v486, %v493
      %v495 = vrot.slane %v490, 4
      %v497 = vshrl.u32 %v447, 16
      %v499 = vrot.slane %v497, 7
      %v500 = vshll.u32 %v447, 16
      %v502 = vor.u32 %v499, %v500
      %v503 = vrot.slane %v499, 4
      %v505 = vshrl.u32 %v448, 16
      %v507 = vrot.slane %v505, 7
      %v508 = vshll.u32 %v448, 16
      %v510 = vor.u32 %v507, %v508
      %v511 = vsel %vm478, %v503, %v510
      %v512 = vrot.slane %v507, 4
      %v514 = vshrl.u32 %v449, 16
      %v516 = vrot.slane %v514, 7
      %v517 = vshll.u32 %v449, 16
      %v519 = vor.u32 %v516, %v517
      %v520 = vrot.slane %v516, 4
      %v522 = vshrl.u32 %v450, 16
      %v524 = vrot.slane %v522, 7
      %v525 = vshll.u32 %v450, 16
      %v527 = vor.u32 %v524, %v525
      %v528 = vsel %vm478, %v520, %v527
      %v529 = vrot.slane %v524, 4
      %v531 = vshrl.u32 %v451, 16
      %v533 = vrot.slane %v531, 7
      %v534 = vshll.u32 %v451, 16
      %v536 = vor.u32 %v533, %v534
      %v537 = vrot.slane %v533, 4
      %v539 = vshrl.u32 %v452, 16
      %v541 = vrot.slane %v539, 7
      %v542 = vshll.u32 %v452, 16
      %v544 = vor.u32 %v541, %v542
      %v545 = vsel %vm478, %v537, %v544
      %v546 = vrot.slane %v541, 4
      %v548 = vshrl.u32 %v453, 16
      %v550 = vrot.slane %v548, 7
      %v551 = vshll.u32 %v453, 16
      %v553 = vor.u32 %v550, %v551
      %v554 = vrot.slane %v550, 4
      %v556 = vshrl.u32 %v454, 16
      %v558 = vrot.slane %v556, 7
      %v559 = vshll.u32 %v454, 16
      %v561 = vor.u32 %v558, %v559
      %v562 = vsel %vm478, %v554, %v561
      %v563 = vrot.slane %v558, 4
      %v565 = vshrl.u32 %v455, 16
      %v567 = vrot.slane %v565, 7
      %v568 = vshll.u32 %v455, 16
      %v570 = vor.u32 %v567, %v568
      %v571 = vrot.slane %v567, 4
      %v573 = vshrl.u32 %v456, 16
      %v575 = vrot.slane %v573, 7
      %v576 = vshll.u32 %v456, 16
      %v578 = vor.u32 %v575, %v576
      %v579 = vsel %vm478, %v571, %v578
      %v580 = vrot.slane %v575, 4
      %v582 = vshrl.u32 %v457, 16
      %v584 = vrot.slane %v582, 7
      %v585 = vshll.u32 %v457, 16
      %v587 = vor.u32 %v584, %v585
      %v588 = vrot.slane %v584, 4
      %v590 = vshrl.u32 %v458, 16
      %v592 = vrot.slane %v590, 7
      %v593 = vshll.u32 %v458, 16
      %v595 = vor.u32 %v592, %v593
      %v596 = vsel %vm478, %v588, %v595
      %v597 = vrot.slane %v592, 4
      %v599 = vshrl.u32 %v459, 16
      %v601 = vrot.slane %v599, 7
      %v602 = vshll.u32 %v459, 16
      %v604 = vor.u32 %v601, %v602
      %v605 = vrot.slane %v601, 4
      %v607 = vshrl.u32 %v460, 16
      %v609 = vrot.slane %v607, 7
      %v610 = vshll.u32 %v460, 16
      %v612 = vor.u32 %v609, %v610
      %v613 = vsel %vm478, %v605, %v612
      %v614 = vrot.slane %v609, 4
      %v616 = vshrl.u32 %v461, 16
      %v618 = vrot.slane %v616, 7
      %v619 = vshll.u32 %v461, 16
      %v621 = vor.u32 %v618, %v619
      %v622 = vrot.slane %v618, 4
      %v624 = vshrl.u32 %v462, 16
      %v626 = vrot.slane %v624, 7
      %v627 = vshll.u32 %v462, 16
      %v629 = vor.u32 %v626, %v627
      %v630 = vsel %vm478, %v622, %v629
      %v631 = vrot.slane %v626, 4
      %v633 = vshrl.u32 %v463, 16
      %v635 = vrot.slane %v633, 7
      %v636 = vshll.u32 %v463, 16
      %v638 = vor.u32 %v635, %v636
      %v639 = vrot.slane %v635, 4
      %v641 = vshrl.u32 %v464, 16
      %v643 = vrot.slane %v641, 7
      %v644 = vshll.u32 %v464, 16
      %v646 = vor.u32 %v643, %v644
      %v647 = vsel %vm478, %v639, %v646
      %v648 = vrot.slane %v643, 4
      %v650 = vshrl.u32 %v465, 16
      %v652 = vrot.slane %v650, 7
      %v653 = vshll.u32 %v465, 16
      %v655 = vor.u32 %v652, %v653
      %v656 = vrot.slane %v652, 4
      %v658 = vshrl.u32 %v466, 16
      %v660 = vrot.slane %v658, 7
      %v661 = vshll.u32 %v466, 16
      %v663 = vor.u32 %v660, %v661
      %v664 = vsel %vm478, %v656, %v663
      %v665 = vrot.slane %v660, 4
      %v667 = vshrl.u32 %v467, 16
      %v669 = vrot.slane %v667, 7
      %v670 = vshll.u32 %v467, 16
      %v672 = vor.u32 %v669, %v670
      %v673 = vrot.slane %v669, 4
      %v675 = vshrl.u32 %v468, 16
      %v677 = vrot.slane %v675, 7
      %v678 = vshll.u32 %v468, 16
      %v680 = vor.u32 %v677, %v678
      %v681 = vsel %vm478, %v673, %v680
      %v682 = vrot.slane %v677, 4
      %v684 = vshrl.u32 %v469, 16
      %v686 = vrot.slane %v684, 7
      %v687 = vshll.u32 %v469, 16
      %v689 = vor.u32 %v686, %v687
      %v690 = vrot.slane %v686, 4
      %v692 = vshrl.u32 %v470, 16
      %v694 = vrot.slane %v692, 7
      %v695 = vshll.u32 %v470, 16
      %v697 = vor.u32 %v694, %v695
      %v698 = vsel %vm478, %v690, %v697
      %v699 = vrot.slane %v694, 4
      %v701 = vshrl.u32 %v471, 16
      %v703 = vrot.slane %v701, 7
      %v704 = vshll.u32 %v471, 16
      %v706 = vor.u32 %v703, %v704
      %v707 = vrot.slane %v703, 4
      %v709 = vshrl.u32 %v472, 16
      %v711 = vrot.slane %v709, 7
      %v712 = vshll.u32 %v472, 16
      %v714 = vor.u32 %v711, %v712
      %v715 = vsel %vm478, %v707, %v714
      %v716 = vrot.slane %v711, 4
      %v718 = vshrl.u32 %v473, 16
      %v720 = vrot.slane %v718, 7
      %v721 = vshll.u32 %v473, 16
      %v723 = vor.u32 %v720, %v721
      %v724 = vrot.slane %v720, 4
      %v726 = vshrl.u32 %v474, 16
      %v728 = vrot.slane %v726, 7
      %v729 = vshll.u32 %v474, 16
      %v731 = vor.u32 %v728, %v729
      %v732 = vsel %vm478, %v724, %v731
      %v733 = vrot.slane %v728, 4
      %v735 = vshrl.u32 %v475, 16
      %v737 = vrot.slane %v735, 7
      %v738 = vshll.u32 %v475, 16
      %v740 = vor.u32 %v737, %v738
      %v741 = vrot.slane %v737, 4
      %v743 = vshrl.u32 %v476, 16
      %v745 = vrot.slane %v743, 7
      %v746 = vshll.u32 %v476, 16
      %v748 = vor.u32 %v745, %v746
      %v749 = vsel %vm478, %v741, %v748
      %v750 = vrot.slane %v745, 4
      %vm799 = vcmask 27648
      %vm800 = vmand %vm799, %vm395
      %v801 = vld [vmem:[%s343] sm:$0xf]
      %v802 = vsel %vm800, %v485, %v801
      %803 = vst [vmem:[%s343] sm:$0xf] %v802
      %804 = vst.msk [vmem:[%s343 + $0x4] sm:$0xf] %vm334, %v494
      %v805 = vld [vmem:[%s343 + $0x8] sm:$0x1]
      %v806 = vsel %vm346, %v495, %v805
      %807 = vst [vmem:[%s343 + $0x8] sm:$0x1] %v806
      %v808 = vld [vmem:[%s343 + $0xc] sm:$0xf]
      %v809 = vsel %vm800, %v502, %v808
      %810 = vst [vmem:[%s343 + $0xc] sm:$0xf] %v809
      %811 = vst.msk [vmem:[%s343 + $0x10] sm:$0xf] %vm334, %v511
      %v812 = vld [vmem:[%s343 + $0x14] sm:$0x1]
      %v813 = vsel %vm346, %v512, %v812
      %814 = vst [vmem:[%s343 + $0x14] sm:$0x1] %v813
      %v815 = vld [vmem:[%s343 + $0x18] sm:$0xf]
      %v816 = vsel %vm800, %v519, %v815
      %817 = vst [vmem:[%s343 + $0x18] sm:$0xf] %v816
      %818 = vst.msk [vmem:[%s343 + $0x1c] sm:$0xf] %vm334, %v528
      %v819 = vld [vmem:[%s343 + $0x20] sm:$0x1]
      %v820 = vsel %vm346, %v529, %v819
      %821 = vst [vmem:[%s343 + $0x20] sm:$0x1] %v820
      %v822 = vld [vmem:[%s343 + $0x24] sm:$0xf]
      %v823 = vsel %vm800, %v536, %v822
      %824 = vst [vmem:[%s343 + $0x24] sm:$0xf] %v823
      %825 = vst.msk [vmem:[%s343 + $0x28] sm:$0xf] %vm334, %v545
      %v826 = vld [vmem:[%s343 + $0x2c] sm:$0x1]
      %v827 = vsel %vm346, %v546, %v826
      %828 = vst [vmem:[%s343 + $0x2c] sm:$0x1] %v827
      %v829 = vld [vmem:[%s343 + $0x30] sm:$0xf]
      %v830 = vsel %vm800, %v553, %v829
      %831 = vst [vmem:[%s343 + $0x30] sm:$0xf] %v830
      %832 = vst.msk [vmem:[%s343 + $0x34] sm:$0xf] %vm334, %v562
      %v833 = vld [vmem:[%s343 + $0x38] sm:$0x1]
      %v834 = vsel %vm346, %v563, %v833
      %835 = vst [vmem:[%s343 + $0x38] sm:$0x1] %v834
      %v836 = vld [vmem:[%s343 + $0x3c] sm:$0xf]
      %v837 = vsel %vm800, %v570, %v836
      %838 = vst [vmem:[%s343 + $0x3c] sm:$0xf] %v837
      %839 = vst.msk [vmem:[%s343 + $0x40] sm:$0xf] %vm334, %v579
      %v840 = vld [vmem:[%s343 + $0x44] sm:$0x1]
      %v841 = vsel %vm346, %v580, %v840
      %842 = vst [vmem:[%s343 + $0x44] sm:$0x1] %v841
      %v843 = vld [vmem:[%s343 + $0x48] sm:$0xf]
      %v844 = vsel %vm800, %v587, %v843
      %845 = vst [vmem:[%s343 + $0x48] sm:$0xf] %v844
      %846 = vst.msk [vmem:[%s343 + $0x4c] sm:$0xf] %vm334, %v596
      %v847 = vld [vmem:[%s343 + $0x50] sm:$0x1]
      %v848 = vsel %vm346, %v597, %v847
      %849 = vst [vmem:[%s343 + $0x50] sm:$0x1] %v848
      %v850 = vld [vmem:[%s343 + $0x54] sm:$0xf]
      %v851 = vsel %vm800, %v604, %v850
      %852 = vst [vmem:[%s343 + $0x54] sm:$0xf] %v851
      %853 = vst.msk [vmem:[%s343 + $0x58] sm:$0xf] %vm334, %v613
      %v854 = vld [vmem:[%s343 + $0x5c] sm:$0x1]
      %v855 = vsel %vm346, %v614, %v854
      %856 = vst [vmem:[%s343 + $0x5c] sm:$0x1] %v855
      %v857 = vld [vmem:[%s343 + $0x60] sm:$0xf]
      %v858 = vsel %vm800, %v621, %v857
      %859 = vst [vmem:[%s343 + $0x60] sm:$0xf] %v858
      %860 = vst.msk [vmem:[%s343 + $0x64] sm:$0xf] %vm334, %v630
      %v861 = vld [vmem:[%s343 + $0x68] sm:$0x1]
      %v862 = vsel %vm346, %v631, %v861
      %863 = vst [vmem:[%s343 + $0x68] sm:$0x1] %v862
      %v864 = vld [vmem:[%s343 + $0x6c] sm:$0xf]
      %v865 = vsel %vm800, %v638, %v864
      %866 = vst [vmem:[%s343 + $0x6c] sm:$0xf] %v865
      %867 = vst.msk [vmem:[%s343 + $0x70] sm:$0xf] %vm334, %v647
      %v868 = vld [vmem:[%s343 + $0x74] sm:$0x1]
      %v869 = vsel %vm346, %v648, %v868
      %870 = vst [vmem:[%s343 + $0x74] sm:$0x1] %v869
      %v871 = vld [vmem:[%s343 + $0x78] sm:$0xf]
      %v872 = vsel %vm800, %v655, %v871
      %873 = vst [vmem:[%s343 + $0x78] sm:$0xf] %v872
      %874 = vst.msk [vmem:[%s343 + $0x7c] sm:$0xf] %vm334, %v664
      %v875 = vld [vmem:[%s343 + $0x80] sm:$0x1]
      %v876 = vsel %vm346, %v665, %v875
      %877 = vst [vmem:[%s343 + $0x80] sm:$0x1] %v876
      %v878 = vld [vmem:[%s343 + $0x84] sm:$0xf]
      %v879 = vsel %vm800, %v672, %v878
      %880 = vst [vmem:[%s343 + $0x84] sm:$0xf] %v879
      %881 = vst.msk [vmem:[%s343 + $0x88] sm:$0xf] %vm334, %v681
      %v882 = vld [vmem:[%s343 + $0x8c] sm:$0x1]
      %v883 = vsel %vm346, %v682, %v882
      %884 = vst [vmem:[%s343 + $0x8c] sm:$0x1] %v883
      %v885 = vld [vmem:[%s343 + $0x90] sm:$0xf]
      %v886 = vsel %vm800, %v689, %v885
      %887 = vst [vmem:[%s343 + $0x90] sm:$0xf] %v886
      %888 = vst.msk [vmem:[%s343 + $0x94] sm:$0xf] %vm334, %v698
      %v889 = vld [vmem:[%s343 + $0x98] sm:$0x1]
      %v890 = vsel %vm346, %v699, %v889
      %891 = vst [vmem:[%s343 + $0x98] sm:$0x1] %v890
      %v892 = vld [vmem:[%s343 + $0x9c] sm:$0xf]
      %v893 = vsel %vm800, %v706, %v892
      %894 = vst [vmem:[%s343 + $0x9c] sm:$0xf] %v893
      %895 = vst.msk [vmem:[%s343 + $0xa0] sm:$0xf] %vm334, %v715
      %v896 = vld [vmem:[%s343 + $0xa4] sm:$0x1]
      %v897 = vsel %vm346, %v716, %v896
      %898 = vst [vmem:[%s343 + $0xa4] sm:$0x1] %v897
      %v899 = vld [vmem:[%s343 + $0xa8] sm:$0xf]
      %v900 = vsel %vm800, %v723, %v899
      %901 = vst [vmem:[%s343 + $0xa8] sm:$0xf] %v900
      %902 = vst.msk [vmem:[%s343 + $0xac] sm:$0xf] %vm334, %v732
      %v903 = vld [vmem:[%s343 + $0xb0] sm:$0x1]
      %v904 = vsel %vm346, %v733, %v903
      %905 = vst [vmem:[%s343 + $0xb0] sm:$0x1] %v904
      %v906 = vld [vmem:[%s343 + $0xb4] sm:$0xf]
      %v907 = vsel %vm800, %v740, %v906
      %908 = vst [vmem:[%s343 + $0xb4] sm:$0xf] %v907
      %909 = vst.msk [vmem:[%s343 + $0xb8] sm:$0xf] %vm334, %v749
      %v910 = vld [vmem:[%s343 + $0xbc] sm:$0x1]
      %v911 = vsel %vm346, %v750, %v910
      %912 = vst [vmem:[%s343 + $0xbc] sm:$0x1] %v911
      %v913 = vld [vmem:[#allocation2] sm:$0xf]
      %v914 = vld [vmem:[#allocation2 + $0x4] sm:$0xf]
      %v915 = vld [vmem:[#allocation2 + $0xc] sm:$0xf]
      %v916 = vld [vmem:[#allocation2 + $0x10] sm:$0xf]
      %v917 = vld [vmem:[#allocation2 + $0x18] sm:$0xf]
      %v918 = vld [vmem:[#allocation2 + $0x1c] sm:$0xf]
      %v919 = vld [vmem:[#allocation2 + $0x24] sm:$0xf]
      %v920 = vld [vmem:[#allocation2 + $0x28] sm:$0xf]
      %v921 = vld [vmem:[#allocation2 + $0x30] sm:$0xf]
      %v922 = vld [vmem:[#allocation2 + $0x34] sm:$0xf]
      %v923 = vld [vmem:[#allocation2 + $0x3c] sm:$0xf]
      %v924 = vld [vmem:[#allocation2 + $0x40] sm:$0xf]
      %v925 = vld [vmem:[#allocation2 + $0x48] sm:$0xf]
      %v926 = vld [vmem:[#allocation2 + $0x4c] sm:$0xf]
      %v927 = vld [vmem:[#allocation2 + $0x54] sm:$0xf]
      %v928 = vld [vmem:[#allocation2 + $0x58] sm:$0xf]
      %v929 = vld [vmem:[#allocation2 + $0x60] sm:$0xf]
      %v930 = vld [vmem:[#allocation2 + $0x64] sm:$0xf]
      %v931 = vld [vmem:[#allocation2 + $0x6c] sm:$0xf]
      %v932 = vld [vmem:[#allocation2 + $0x70] sm:$0xf]
      %v933 = vld [vmem:[#allocation2 + $0x78] sm:$0xf]
      %v934 = vld [vmem:[#allocation2 + $0x7c] sm:$0xf]
      %v935 = vld [vmem:[#allocation2 + $0x84] sm:$0xf]
      %v936 = vld [vmem:[#allocation2 + $0x88] sm:$0xf]
      %v937 = vld [vmem:[#allocation2 + $0x90] sm:$0xf]
      %v938 = vld [vmem:[#allocation2 + $0x94] sm:$0xf]
      %v939 = vld [vmem:[#allocation2 + $0x9c] sm:$0xf]
      %v940 = vld [vmem:[#allocation2 + $0xa0] sm:$0xf]
      %v941 = vld [vmem:[#allocation2 + $0xa8] sm:$0xf]
      %v942 = vld [vmem:[#allocation2 + $0xac] sm:$0xf]
      %v943 = vld [vmem:[#allocation2 + $0xb4] sm:$0xf]
      %v944 = vld [vmem:[#allocation2 + $0xb8] sm:$0xf]
      %v945 = vld [vmem:[%s1] sm:$0x3]
      %v946 = vld [vmem:[#allocation2 + $0x8] sm:$0x1]
      %v947 = vld [vmem:[#allocation2 + $0x14] sm:$0x1]
      %v948 = vld [vmem:[#allocation2 + $0x20] sm:$0x1]
      %v949 = vld [vmem:[#allocation2 + $0x2c] sm:$0x1]
      %v950 = vld [vmem:[#allocation2 + $0x38] sm:$0x1]
      %v951 = vld [vmem:[#allocation2 + $0x44] sm:$0x1]
      %v952 = vld [vmem:[#allocation2 + $0x50] sm:$0x1]
      %v953 = vld [vmem:[#allocation2 + $0x5c] sm:$0x1]
      %v954 = vld [vmem:[#allocation2 + $0x68] sm:$0x1]
      %v955 = vld [vmem:[#allocation2 + $0x74] sm:$0x1]
      %v956 = vld [vmem:[#allocation2 + $0x80] sm:$0x1]
      %v957 = vld [vmem:[#allocation2 + $0x8c] sm:$0x1]
      %v958 = vld [vmem:[#allocation2 + $0x98] sm:$0x1]
      %v959 = vld [vmem:[#allocation2 + $0xa4] sm:$0x1]
      %v960 = vld [vmem:[#allocation2 + $0xb0] sm:$0x1]
      %v961 = vld [vmem:[#allocation2 + $0xbc] sm:$0x1]
      %vm962 = vsmask.f32 3328
      %vm963 = vsmask.f32 7440
      %vm964 = vmor %vm962, %vm963
      %v966 = vshrl.u32 %v913, 16
      %v968 = vrot.slane %v966, 4
      %v969 = vshll.u32 %v913, 16
      %v971 = vrot.slane %v969, 5
      %v972 = vor.u32 %v968, %v971
      %v973 = vrot.slane %v972, 4
      %v975 = vshll.u32 %v914, 16
      %v977 = vrot.slane %v975, 5
      %v978 = vsel %vm964, %v973, %v977
      %v979 = vshrl.u32 %v914, 16
      %v981 = vrot.slane %v979, 4
      %v982 = vor.u32 %v981, %v977
      %v983 = vrot.slane %v982, 4
      %v985 = vshll.u32 %v946, 16
      %v987 = vrot.slane %v985, 5
      %v988 = vsel %vm964, %v983, %v987
      %v990 = vshrl.u32 %v915, 16
      %v992 = vrot.slane %v990, 4
      %v993 = vshll.u32 %v915, 16
      %v995 = vrot.slane %v993, 5
      %v996 = vor.u32 %v992, %v995
      %v997 = vrot.slane %v996, 4
      %v999 = vshll.u32 %v916, 16
      %v1001 = vrot.slane %v999, 5
      %v1002 = vsel %vm964, %v997, %v1001
      %v1003 = vshrl.u32 %v916, 16
      %v1005 = vrot.slane %v1003, 4
      %v1006 = vor.u32 %v1005, %v1001
      %v1007 = vrot.slane %v1006, 4
      %v1009 = vshll.u32 %v947, 16
      %v1011 = vrot.slane %v1009, 5
      %v1012 = vsel %vm964, %v1007, %v1011
      %v1014 = vshrl.u32 %v917, 16
      %v1016 = vrot.slane %v1014, 4
      %v1017 = vshll.u32 %v917, 16
      %v1019 = vrot.slane %v1017, 5
      %v1020 = vor.u32 %v1016, %v1019
      %v1021 = vrot.slane %v1020, 4
      %v1023 = vshll.u32 %v918, 16
      %v1025 = vrot.slane %v1023, 5
      %v1026 = vsel %vm964, %v1021, %v1025
      %v1027 = vshrl.u32 %v918, 16
      %v1029 = vrot.slane %v1027, 4
      %v1030 = vor.u32 %v1029, %v1025
      %v1031 = vrot.slane %v1030, 4
      %v1033 = vshll.u32 %v948, 16
      %v1035 = vrot.slane %v1033, 5
      %v1036 = vsel %vm964, %v1031, %v1035
      %v1038 = vshrl.u32 %v919, 16
      %v1040 = vrot.slane %v1038, 4
      %v1041 = vshll.u32 %v919, 16
      %v1043 = vrot.slane %v1041, 5
      %v1044 = vor.u32 %v1040, %v1043
      %v1045 = vrot.slane %v1044, 4
      %v1047 = vshll.u32 %v920, 16
      %v1049 = vrot.slane %v1047, 5
      %v1050 = vsel %vm964, %v1045, %v1049
      %v1051 = vshrl.u32 %v920, 16
      %v1053 = vrot.slane %v1051, 4
      %v1054 = vor.u32 %v1053, %v1049
      %v1055 = vrot.slane %v1054, 4
      %v1057 = vshll.u32 %v949, 16
      %v1059 = vrot.slane %v1057, 5
      %v1060 = vsel %vm964, %v1055, %v1059
      %v1062 = vshrl.u32 %v921, 16
      %v1064 = vrot.slane %v1062, 4
      %v1065 = vshll.u32 %v921, 16
      %v1067 = vrot.slane %v1065, 5
      %v1068 = vor.u32 %v1064, %v1067
      %v1069 = vrot.slane %v1068, 4
      %v1071 = vshll.u32 %v922, 16
      %v1073 = vrot.slane %v1071, 5
      %v1074 = vsel %vm964, %v1069, %v1073
      %v1075 = vshrl.u32 %v922, 16
      %v1077 = vrot.slane %v1075, 4
      %v1078 = vor.u32 %v1077, %v1073
      %v1079 = vrot.slane %v1078, 4
      %v1081 = vshll.u32 %v950, 16
      %v1083 = vrot.slane %v1081, 5
      %v1084 = vsel %vm964, %v1079, %v1083
      %v1086 = vshrl.u32 %v923, 16
      %v1088 = vrot.slane %v1086, 4
      %v1089 = vshll.u32 %v923, 16
      %v1091 = vrot.slane %v1089, 5
      %v1092 = vor.u32 %v1088, %v1091
      %v1093 = vrot.slane %v1092, 4
      %v1095 = vshll.u32 %v924, 16
      %v1097 = vrot.slane %v1095, 5
      %v1098 = vsel %vm964, %v1093, %v1097
      %v1099 = vshrl.u32 %v924, 16
      %v1101 = vrot.slane %v1099, 4
      %v1102 = vor.u32 %v1101, %v1097
      %v1103 = vrot.slane %v1102, 4
      %v1105 = vshll.u32 %v951, 16
      %v1107 = vrot.slane %v1105, 5
      %v1108 = vsel %vm964, %v1103, %v1107
      %v1110 = vshrl.u32 %v925, 16
      %v1112 = vrot.slane %v1110, 4
      %v1113 = vshll.u32 %v925, 16
      %v1115 = vrot.slane %v1113, 5
      %v1116 = vor.u32 %v1112, %v1115
      %v1117 = vrot.slane %v1116, 4
      %v1119 = vshll.u32 %v926, 16
      %v1121 = vrot.slane %v1119, 5
      %v1122 = vsel %vm964, %v1117, %v1121
      %v1123 = vshrl.u32 %v926, 16
      %v1125 = vrot.slane %v1123, 4
      %v1126 = vor.u32 %v1125, %v1121
      %v1127 = vrot.slane %v1126, 4
      %v1129 = vshll.u32 %v952, 16
      %v1131 = vrot.slane %v1129, 5
      %v1132 = vsel %vm964, %v1127, %v1131
      %v1134 = vshrl.u32 %v927, 16
      %v1136 = vrot.slane %v1134, 4
      %v1137 = vshll.u32 %v927, 16
      %v1139 = vrot.slane %v1137, 5
      %v1140 = vor.u32 %v1136, %v1139
      %v1141 = vrot.slane %v1140, 4
      %v1143 = vshll.u32 %v928, 16
      %v1145 = vrot.slane %v1143, 5
      %v1146 = vsel %vm964, %v1141, %v1145
      %v1147 = vshrl.u32 %v928, 16
      %v1149 = vrot.slane %v1147, 4
      %v1150 = vor.u32 %v1149, %v1145
      %v1151 = vrot.slane %v1150, 4
      %v1153 = vshll.u32 %v953, 16
      %v1155 = vrot.slane %v1153, 5
      %v1156 = vsel %vm964, %v1151, %v1155
      %v1158 = vshrl.u32 %v929, 16
      %v1160 = vrot.slane %v1158, 4
      %v1161 = vshll.u32 %v929, 16
      %v1163 = vrot.slane %v1161, 5
      %v1164 = vor.u32 %v1160, %v1163
      %v1165 = vrot.slane %v1164, 4
      %v1167 = vshll.u32 %v930, 16
      %v1169 = vrot.slane %v1167, 5
      %v1170 = vsel %vm964, %v1165, %v1169
      %v1171 = vshrl.u32 %v930, 16
      %v1173 = vrot.slane %v1171, 4
      %v1174 = vor.u32 %v1173, %v1169
      %v1175 = vrot.slane %v1174, 4
      %v1177 = vshll.u32 %v954, 16
      %v1179 = vrot.slane %v1177, 5
      %v1180 = vsel %vm964, %v1175, %v1179
      %v1182 = vshrl.u32 %v931, 16
      %v1184 = vrot.slane %v1182, 4
      %v1185 = vshll.u32 %v931, 16
      %v1187 = vrot.slane %v1185, 5
      %v1188 = vor.u32 %v1184, %v1187
      %v1189 = vrot.slane %v1188, 4
      %v1191 = vshll.u32 %v932, 16
      %v1193 = vrot.slane %v1191, 5
      %v1194 = vsel %vm964, %v1189, %v1193
      %v1195 = vshrl.u32 %v932, 16
      %v1197 = vrot.slane %v1195, 4
      %v1198 = vor.u32 %v1197, %v1193
      %v1199 = vrot.slane %v1198, 4
      %v1201 = vshll.u32 %v955, 16
      %v1203 = vrot.slane %v1201, 5
      %v1204 = vsel %vm964, %v1199, %v1203
      %v1206 = vshrl.u32 %v933, 16
      %v1208 = vrot.slane %v1206, 4
      %v1209 = vshll.u32 %v933, 16
      %v1211 = vrot.slane %v1209, 5
      %v1212 = vor.u32 %v1208, %v1211
      %v1213 = vrot.slane %v1212, 4
      %v1215 = vshll.u32 %v934, 16
      %v1217 = vrot.slane %v1215, 5
      %v1218 = vsel %vm964, %v1213, %v1217
      %v1219 = vshrl.u32 %v934, 16
      %v1221 = vrot.slane %v1219, 4
      %v1222 = vor.u32 %v1221, %v1217
      %v1223 = vrot.slane %v1222, 4
      %v1225 = vshll.u32 %v956, 16
      %v1227 = vrot.slane %v1225, 5
      %v1228 = vsel %vm964, %v1223, %v1227
      %v1230 = vshrl.u32 %v935, 16
      %v1232 = vrot.slane %v1230, 4
      %v1233 = vshll.u32 %v935, 16
      %v1235 = vrot.slane %v1233, 5
      %v1236 = vor.u32 %v1232, %v1235
      %v1237 = vrot.slane %v1236, 4
      %v1239 = vshll.u32 %v936, 16
      %v1241 = vrot.slane %v1239, 5
      %v1242 = vsel %vm964, %v1237, %v1241
      %v1243 = vshrl.u32 %v936, 16
      %v1245 = vrot.slane %v1243, 4
      %v1246 = vor.u32 %v1245, %v1241
      %v1247 = vrot.slane %v1246, 4
      %v1249 = vshll.u32 %v957, 16
      %v1251 = vrot.slane %v1249, 5
      %v1252 = vsel %vm964, %v1247, %v1251
      %v1254 = vshrl.u32 %v937, 16
      %v1256 = vrot.slane %v1254, 4
      %v1257 = vshll.u32 %v937, 16
      %v1259 = vrot.slane %v1257, 5
      %v1260 = vor.u32 %v1256, %v1259
      %v1261 = vrot.slane %v1260, 4
      %v1263 = vshll.u32 %v938, 16
      %v1265 = vrot.slane %v1263, 5
      %v1266 = vsel %vm964, %v1261, %v1265
      %v1267 = vshrl.u32 %v938, 16
      %v1269 = vrot.slane %v1267, 4
      %v1270 = vor.u32 %v1269, %v1265
      %v1271 = vrot.slane %v1270, 4
      %v1273 = vshll.u32 %v958, 16
      %v1275 = vrot.slane %v1273, 5
      %v1276 = vsel %vm964, %v1271, %v1275
      %v1278 = vshrl.u32 %v939, 16
      %v1280 = vrot.slane %v1278, 4
      %v1281 = vshll.u32 %v939, 16
      %v1283 = vrot.slane %v1281, 5
      %v1284 = vor.u32 %v1280, %v1283
      %v1285 = vrot.slane %v1284, 4
      %v1287 = vshll.u32 %v940, 16
      %v1289 = vrot.slane %v1287, 5
      %v1290 = vsel %vm964, %v1285, %v1289
      %v1291 = vshrl.u32 %v940, 16
      %v1293 = vrot.slane %v1291, 4
      %v1294 = vor.u32 %v1293, %v1289
      %v1295 = vrot.slane %v1294, 4
      %v1297 = vshll.u32 %v959, 16
      %v1299 = vrot.slane %v1297, 5
      %v1300 = vsel %vm964, %v1295, %v1299
      %v1302 = vshrl.u32 %v941, 16
      %v1304 = vrot.slane %v1302, 4
      %v1305 = vshll.u32 %v941, 16
      %v1307 = vrot.slane %v1305, 5
      %v1308 = vor.u32 %v1304, %v1307
      %v1309 = vrot.slane %v1308, 4
      %v1311 = vshll.u32 %v942, 16
      %v1313 = vrot.slane %v1311, 5
      %v1314 = vsel %vm964, %v1309, %v1313
      %v1315 = vshrl.u32 %v942, 16
      %v1317 = vrot.slane %v1315, 4
      %v1318 = vor.u32 %v1317, %v1313
      %v1319 = vrot.slane %v1318, 4
      %v1321 = vshll.u32 %v960, 16
      %v1323 = vrot.slane %v1321, 5
      %v1324 = vsel %vm964, %v1319, %v1323
      %v1326 = vshrl.u32 %v943, 16
      %v1328 = vrot.slane %v1326, 4
      %v1329 = vshll.u32 %v943, 16
      %v1331 = vrot.slane %v1329, 5
      %v1332 = vor.u32 %v1328, %v1331
      %v1333 = vrot.slane %v1332, 4
      %v1335 = vshll.u32 %v944, 16
      %v1337 = vrot.slane %v1335, 5
      %v1338 = vsel %vm964, %v1333, %v1337
      %v1339 = vshrl.u32 %v944, 16
      %v1341 = vrot.slane %v1339, 4
      %v1342 = vor.u32 %v1341, %v1337
      %v1343 = vrot.slane %v1342, 4
      %v1345 = vshll.u32 %v961, 16
      %v1347 = vrot.slane %v1345, 5
      %v1348 = vsel %vm964, %v1343, %v1347
      %s1349 = scalar_lea.vmem %s1, 2
      %v1350 = vld [vmem:[%s1349] sm:$0x3]
      %v1351 = vunpack.c.l.b16 %v978
      %v1352 = vunpack.c.l.b16 %v988
      %v1353 = vunpack.c.l.b16 %v1002
      %v1354 = vunpack.c.l.b16 %v1012
      %v1355 = vunpack.c.l.b16 %v1026
      %v1356 = vunpack.c.l.b16 %v1036
      %v1357 = vunpack.c.l.b16 %v1050
      %v1358 = vunpack.c.l.b16 %v1060
      %v1359 = vunpack.c.l.b16 %v1074
      %v1360 = vunpack.c.l.b16 %v1084
      %v1361 = vunpack.c.l.b16 %v1098
      %v1362 = vunpack.c.l.b16 %v1108
      %v1363 = vunpack.c.l.b16 %v1122
      %v1364 = vunpack.c.l.b16 %v1132
      %v1365 = vunpack.c.l.b16 %v1146
      %v1366 = vunpack.c.l.b16 %v1156
      %v1367 = vunpack.c.l.b16 %v1170
      %v1368 = vunpack.c.l.b16 %v1180
      %v1369 = vunpack.c.l.b16 %v1194
      %v1370 = vunpack.c.l.b16 %v1204
      %v1371 = vunpack.c.l.b16 %v1218
      %v1372 = vunpack.c.l.b16 %v1228
      %v1373 = vunpack.c.l.b16 %v1242
      %v1374 = vunpack.c.l.b16 %v1252
      %v1375 = vunpack.c.l.b16 %v1266
      %v1376 = vunpack.c.l.b16 %v1276
      %v1377 = vunpack.c.l.b16 %v1290
      %v1378 = vunpack.c.l.b16 %v1300
      %v1379 = vunpack.c.l.b16 %v1314
      %v1380 = vunpack.c.l.b16 %v1324
      %v1381 = vunpack.c.l.b16 %v1338
      %v1382 = vunpack.c.l.b16 %v1348
      %v1383 = vpack.c.b16 %v1352, %v1351
      %v1384 = vpack.c.b16 %v1354, %v1353
      %v1385 = vpack.c.b16 %v1356, %v1355
      %v1386 = vpack.c.b16 %v1358, %v1357
      %v1387 = vpack.c.b16 %v1360, %v1359
      %v1388 = vpack.c.b16 %v1362, %v1361
      %v1389 = vpack.c.b16 %v1364, %v1363
      %v1390 = vpack.c.b16 %v1366, %v1365
      %v1391 = vpack.c.b16 %v1368, %v1367
      %v1392 = vpack.c.b16 %v1370, %v1369
      %v1393 = vpack.c.b16 %v1372, %v1371
      %v1394 = vpack.c.b16 %v1374, %v1373
      %v1395 = vpack.c.b16 %v1376, %v1375
      %v1396 = vpack.c.b16 %v1378, %v1377
      %v1397 = vpack.c.b16 %v1380, %v1379
      %v1398 = vpack.c.b16 %v1382, %v1381
      %vm1399 = vcmask 31744
      %v1401 = vsel %vm1399, %v1383, 0
      %v1404 = vsel %vm1399, %v1384, 0
      %v1407 = vsel %vm1399, %v1385, 0
      %v1410 = vsel %vm1399, %v1386, 0
      %v1413 = vsel %vm1399, %v1387, 0
      %v1416 = vsel %vm1399, %v1388, 0
      %v1419 = vsel %vm1399, %v1389, 0
      %v1422 = vsel %vm1399, %v1390, 0
      %v1425 = vsel %vm1399, %v1391, 0
      %v1428 = vsel %vm1399, %v1392, 0
      %v1431 = vsel %vm1399, %v1393, 0
      %v1434 = vsel %vm1399, %v1394, 0
      %v1437 = vsel %vm1399, %v1395, 0
      %v1440 = vsel %vm1399, %v1396, 0
      %v1443 = vsel %vm1399, %v1397, 0
      %v1446 = vsel %vm1399, %v1398, 0
      %vm1448 = vcmask 1041408
      %v1450 = vsel %vm1448, %v1350, 0
      %1452 = vmatprep.subr.bf16.mxu0 0
      %1453 = vmatpush1.bf16.msra.mxu0 0
      %1454 = vmatprep.subr.bf16.mxu0 0
      %1455 = vmatpush1.bf16.msra.mxu0 0
      %1456 = vmatprep.subr.bf16.mxu0 0
      %1457 = vmatpush1.bf16.msra.mxu0 0
      %1458 = vmatprep.subr.bf16.mxu0 0
      %1459 = vmatpush1.bf16.msra.mxu0 0
      %1460 = vmatprep.subr.bf16.mxu0 0
      %1461 = vmatpush1.bf16.msra.mxu0 0
      %1462 = vmatprep.subr.bf16.mxu0 0
      %1463 = vmatpush1.bf16.msra.mxu0 0
      %1464 = vmatprep.subr.bf16.mxu0 0
      %1465 = vmatpush1.bf16.msra.mxu0 0
      %1466 = vmatprep.subr.bf16.mxu0 0
      %1467 = vmatpush1.bf16.msra.mxu0 %v1450
      %1468 = vmatprep.subr.bf16.mxu0 0
      %1469 = vmatpush2.bf16.msra.mxu0 0
      %1470 = vmatprep.subr.bf16.mxu0 0
      %1471 = vmatpush2.bf16.msra.mxu0 0
      %1472 = vmatprep.subr.bf16.mxu0 0
      %1473 = vmatpush2.bf16.msra.mxu0 0
      %1474 = vmatprep.subr.bf16.mxu0 0
      %1475 = vmatpush2.bf16.msra.mxu0 0
      %1476 = vmatprep.subr.bf16.mxu0 0
      %1477 = vmatpush2.bf16.msra.mxu0 0
      %1478 = vmatprep.subr.bf16.mxu0 0
      %1479 = vmatpush2.bf16.msra.mxu0 0
      %1480 = vmatprep.subr.bf16.mxu0 0
      %1481 = vmatpush2.bf16.msra.mxu0 0
      %1482 = vmatprep.subr.bf16.mxu0 0
      %1483 = vmatpush2.bf16.msra.mxu0 0
      %1484 = vmatprep.mubr.bf16.mxu0 0
      %1485 = vmatmul.mubr.bf16.gmra.mxu0 %v1401
      %v1486 = vpop.f32.mrf.mxu0
      %v1487 = vadd.f32 0.0, %v1486
      %v1488 = vpop.f32.mrf.mxu0
      %v1489 = vpop.f32.mrf.mxu0
      %v1490 = vadd.f32 0.0, %v1489
      %v1491 = vpop.f32.mrf.mxu0
      %1492 = vmatprep.mubr.bf16.mxu0 0
      %1493 = vmatmul.mubr.bf16.gmra.mxu0 %v1404
      %v1494 = vpop.f32.mrf.mxu0
      %v1495 = vadd.f32 0.0, %v1494
      %v1496 = vpop.f32.mrf.mxu0
      %v1497 = vpop.f32.mrf.mxu0
      %v1498 = vadd.f32 0.0, %v1497
      %v1499 = vpop.f32.mrf.mxu0
      %1500 = vmatprep.mubr.bf16.mxu0 0
      %1501 = vmatmul.mubr.bf16.gmra.mxu0 %v1407
      %v1502 = vpop.f32.mrf.mxu0
      %v1503 = vadd.f32 0.0, %v1502
      %v1504 = vpop.f32.mrf.mxu0
      %v1505 = vpop.f32.mrf.mxu0
      %v1506 = vadd.f32 0.0, %v1505
      %v1507 = vpop.f32.mrf.mxu0
      %1508 = vmatprep.mubr.bf16.mxu0 0
      %1509 = vmatmul.mubr.bf16.gmra.mxu0 %v1410
      %v1510 = vpop.f32.mrf.mxu0
      %v1511 = vadd.f32 0.0, %v1510
      %v1512 = vpop.f32.mrf.mxu0
      %v1513 = vpop.f32.mrf.mxu0
      %v1514 = vadd.f32 0.0, %v1513
      %v1515 = vpop.f32.mrf.mxu0
      %1516 = vmatprep.mubr.bf16.mxu0 0
      %1517 = vmatmul.mubr.bf16.gmra.mxu0 %v1413
      %v1518 = vpop.f32.mrf.mxu0
      %v1519 = vadd.f32 0.0, %v1518
      %v1520 = vpop.f32.mrf.mxu0
      %v1521 = vpop.f32.mrf.mxu0
      %v1522 = vadd.f32 0.0, %v1521
      %v1523 = vpop.f32.mrf.mxu0
      %1524 = vmatprep.mubr.bf16.mxu0 0
      %1525 = vmatmul.mubr.bf16.gmra.mxu0 %v1416
      %v1526 = vpop.f32.mrf.mxu0
      %v1527 = vadd.f32 0.0, %v1526
      %v1528 = vpop.f32.mrf.mxu0
      %v1529 = vpop.f32.mrf.mxu0
      %v1530 = vadd.f32 0.0, %v1529
      %v1531 = vpop.f32.mrf.mxu0
      %1532 = vmatprep.mubr.bf16.mxu0 0
      %1533 = vmatmul.mubr.bf16.gmra.mxu0 %v1419
      %v1534 = vpop.f32.mrf.mxu0
      %v1535 = vadd.f32 0.0, %v1534
      %v1536 = vpop.f32.mrf.mxu0
      %v1537 = vpop.f32.mrf.mxu0
      %v1538 = vadd.f32 0.0, %v1537
      %v1539 = vpop.f32.mrf.mxu0
      %1540 = vmatprep.mubr.bf16.mxu0 0
      %1541 = vmatmul.mubr.bf16.gmra.mxu0 %v1422
      %v1542 = vpop.f32.mrf.mxu0
      %v1543 = vadd.f32 0.0, %v1542
      %v1544 = vpop.f32.mrf.mxu0
      %v1545 = vpop.f32.mrf.mxu0
      %v1546 = vadd.f32 0.0, %v1545
      %v1547 = vpop.f32.mrf.mxu0
      %1548 = vmatprep.mubr.bf16.mxu0 0
      %1549 = vmatmul.mubr.bf16.gmra.mxu0 %v1425
      %v1550 = vpop.f32.mrf.mxu0
      %v1551 = vadd.f32 0.0, %v1550
      %v1552 = vpop.f32.mrf.mxu0
      %v1553 = vpop.f32.mrf.mxu0
      %v1554 = vadd.f32 0.0, %v1553
      %v1555 = vpop.f32.mrf.mxu0
      %1556 = vmatprep.mubr.bf16.mxu0 0
      %1557 = vmatmul.mubr.bf16.gmra.mxu0 %v1428
      %v1558 = vpop.f32.mrf.mxu0
      %v1559 = vadd.f32 0.0, %v1558
      %v1560 = vpop.f32.mrf.mxu0
      %v1561 = vpop.f32.mrf.mxu0
      %v1562 = vadd.f32 0.0, %v1561
      %v1563 = vpop.f32.mrf.mxu0
      %1564 = vmatprep.mubr.bf16.mxu0 0
      %1565 = vmatmul.mubr.bf16.gmra.mxu0 %v1431
      %v1566 = vpop.f32.mrf.mxu0
      %v1567 = vadd.f32 0.0, %v1566
      %v1568 = vpop.f32.mrf.mxu0
      %v1569 = vpop.f32.mrf.mxu0
      %v1570 = vadd.f32 0.0, %v1569
      %v1571 = vpop.f32.mrf.mxu0
      %1572 = vmatprep.mubr.bf16.mxu0 0
      %1573 = vmatmul.mubr.bf16.gmra.mxu0 %v1434
      %v1574 = vpop.f32.mrf.mxu0
      %v1575 = vadd.f32 0.0, %v1574
      %v1576 = vpop.f32.mrf.mxu0
      %v1577 = vpop.f32.mrf.mxu0
      %v1578 = vadd.f32 0.0, %v1577
      %v1579 = vpop.f32.mrf.mxu0
      %1580 = vmatprep.mubr.bf16.mxu0 0
      %1581 = vmatmul.mubr.bf16.gmra.mxu0 %v1437
      %v1582 = vpop.f32.mrf.mxu0
      %v1583 = vadd.f32 0.0, %v1582
      %v1584 = vpop.f32.mrf.mxu0
      %v1585 = vpop.f32.mrf.mxu0
      %v1586 = vadd.f32 0.0, %v1585
      %v1587 = vpop.f32.mrf.mxu0
      %1588 = vmatprep.mubr.bf16.mxu0 0
      %1589 = vmatmul.mubr.bf16.gmra.mxu0 %v1440
      %v1590 = vpop.f32.mrf.mxu0
      %v1591 = vadd.f32 0.0, %v1590
      %v1592 = vpop.f32.mrf.mxu0
      %v1593 = vpop.f32.mrf.mxu0
      %v1594 = vadd.f32 0.0, %v1593
      %v1595 = vpop.f32.mrf.mxu0
      %1596 = vmatprep.mubr.bf16.mxu0 0
      %1597 = vmatmul.mubr.bf16.gmra.mxu0 %v1443
      %v1598 = vpop.f32.mrf.mxu0
      %v1599 = vadd.f32 0.0, %v1598
      %v1600 = vpop.f32.mrf.mxu0
      %v1601 = vpop.f32.mrf.mxu0
      %v1602 = vadd.f32 0.0, %v1601
      %v1603 = vpop.f32.mrf.mxu0
      %1604 = vmatprep.mubr.bf16.mxu0 0
      %1605 = vmatmul.mubr.bf16.gmra.mxu0 %v1446
      %v1606 = vpop.f32.mrf.mxu0
      %v1607 = vadd.f32 0.0, %v1606
      %v1608 = vpop.f32.mrf.mxu0
      %v1609 = vpop.f32.mrf.mxu0
      %v1610 = vadd.f32 0.0, %v1609
      %v1611 = vpop.f32.mrf.mxu0
      %1612 = vdwg.mxu0
      %v1645 = vunpack.c.l.b16 %v913
      %v1646 = vunpack.c.l.b16 %v914
      %v1647 = vunpack.c.l.b16 %v915
      %v1648 = vunpack.c.l.b16 %v916
      %v1649 = vunpack.c.l.b16 %v917
      %v1650 = vunpack.c.l.b16 %v918
      %v1651 = vunpack.c.l.b16 %v919
      %v1652 = vunpack.c.l.b16 %v920
      %v1653 = vunpack.c.l.b16 %v921
      %v1654 = vunpack.c.l.b16 %v922
      %v1655 = vunpack.c.l.b16 %v923
      %v1656 = vunpack.c.l.b16 %v924
      %v1657 = vunpack.c.l.b16 %v925
      %v1658 = vunpack.c.l.b16 %v926
      %v1659 = vunpack.c.l.b16 %v927
      %v1660 = vunpack.c.l.b16 %v928
      %v1661 = vunpack.c.l.b16 %v929
      %v1662 = vunpack.c.l.b16 %v930
      %v1663 = vunpack.c.l.b16 %v931
      %v1664 = vunpack.c.l.b16 %v932
      %v1665 = vunpack.c.l.b16 %v933
      %v1666 = vunpack.c.l.b16 %v934
      %v1667 = vunpack.c.l.b16 %v935
      %v1668 = vunpack.c.l.b16 %v936
      %v1669 = vunpack.c.l.b16 %v937
      %v1670 = vunpack.c.l.b16 %v938
      %v1671 = vunpack.c.l.b16 %v939
      %v1672 = vunpack.c.l.b16 %v940
      %v1673 = vunpack.c.l.b16 %v941
      %v1674 = vunpack.c.l.b16 %v942
      %v1675 = vunpack.c.l.b16 %v943
      %v1676 = vunpack.c.l.b16 %v944
      %v1677 = vpack.c.b16 %v1646, %v1645
      %v1678 = vpack.c.b16 %v1648, %v1647
      %v1679 = vpack.c.b16 %v1650, %v1649
      %v1680 = vpack.c.b16 %v1652, %v1651
      %v1681 = vpack.c.b16 %v1654, %v1653
      %v1682 = vpack.c.b16 %v1656, %v1655
      %v1683 = vpack.c.b16 %v1658, %v1657
      %v1684 = vpack.c.b16 %v1660, %v1659
      %v1685 = vpack.c.b16 %v1662, %v1661
      %v1686 = vpack.c.b16 %v1664, %v1663
      %v1687 = vpack.c.b16 %v1666, %v1665
      %v1688 = vpack.c.b16 %v1668, %v1667
      %v1689 = vpack.c.b16 %v1670, %v1669
      %v1690 = vpack.c.b16 %v1672, %v1671
      %v1691 = vpack.c.b16 %v1674, %v1673
      %v1692 = vpack.c.b16 %v1676, %v1675
      %v1694 = vsel %vm1399, %v1677, 0
      %v1697 = vsel %vm1399, %v1678, 0
      %v1700 = vsel %vm1399, %v1679, 0
      %v1703 = vsel %vm1399, %v1680, 0
      %v1706 = vsel %vm1399, %v1681, 0
      %v1709 = vsel %vm1399, %v1682, 0
      %v1712 = vsel %vm1399, %v1683, 0
      %v1715 = vsel %vm1399, %v1684, 0
      %v1718 = vsel %vm1399, %v1685, 0
      %v1721 = vsel %vm1399, %v1686, 0
      %v1724 = vsel %vm1399, %v1687, 0
      %v1727 = vsel %vm1399, %v1688, 0
      %v1730 = vsel %vm1399, %v1689, 0
      %v1733 = vsel %vm1399, %v1690, 0
      %v1736 = vsel %vm1399, %v1691, 0
      %v1739 = vsel %vm1399, %v1692, 0
      %v1742 = vsel %vm1448, %v945, 0
      %1744 = vmatprep.subr.bf16.mxu0 0
      %1745 = vmatpush1.bf16.msra.mxu0 0
      %1746 = vmatprep.subr.bf16.mxu0 0
      %1747 = vmatpush1.bf16.msra.mxu0 0
      %1748 = vmatprep.subr.bf16.mxu0 0
      %1749 = vmatpush1.bf16.msra.mxu0 0
      %1750 = vmatprep.subr.bf16.mxu0 0
      %1751 = vmatpush1.bf16.msra.mxu0 0
      %1752 = vmatprep.subr.bf16.mxu0 0
      %1753 = vmatpush1.bf16.msra.mxu0 0
      %1754 = vmatprep.subr.bf16.mxu0 0
      %1755 = vmatpush1.bf16.msra.mxu0 0
      %1756 = vmatprep.subr.bf16.mxu0 0
      %1757 = vmatpush1.bf16.msra.mxu0 0
      %1758 = vmatprep.subr.bf16.mxu0 0
      %1759 = vmatpush1.bf16.msra.mxu0 %v1742
      %1760 = vmatprep.subr.bf16.mxu0 0
      %1761 = vmatpush2.bf16.msra.mxu0 0
      %1762 = vmatprep.subr.bf16.mxu0 0
      %1763 = vmatpush2.bf16.msra.mxu0 0
      %1764 = vmatprep.subr.bf16.mxu0 0
      %1765 = vmatpush2.bf16.msra.mxu0 0
      %1766 = vmatprep.subr.bf16.mxu0 0
      %1767 = vmatpush2.bf16.msra.mxu0 0
      %1768 = vmatprep.subr.bf16.mxu0 0
      %1769 = vmatpush2.bf16.msra.mxu0 0
      %1770 = vmatprep.subr.bf16.mxu0 0
      %1771 = vmatpush2.bf16.msra.mxu0 0
      %1772 = vmatprep.subr.bf16.mxu0 0
      %1773 = vmatpush2.bf16.msra.mxu0 0
      %1774 = vmatprep.subr.bf16.mxu0 0
      %1775 = vmatpush2.bf16.msra.mxu0 0
      %1776 = vmatprep.mubr.bf16.mxu0 0
      %1777 = vmatmul.mubr.bf16.gmra.mxu0 %v1694
      %v1778 = vpop.f32.mrf.mxu0
      %v1779 = vadd.f32 %v1487, %v1778
      %v1780 = vpop.f32.mrf.mxu0
      %v1781 = vpop.f32.mrf.mxu0
      %v1782 = vadd.f32 %v1490, %v1781
      %v1783 = vpop.f32.mrf.mxu0
      %1784 = vmatprep.mubr.bf16.mxu0 0
      %1785 = vmatmul.mubr.bf16.gmra.mxu0 %v1697
      %v1786 = vpop.f32.mrf.mxu0
      %v1787 = vadd.f32 %v1495, %v1786
      %v1788 = vpop.f32.mrf.mxu0
      %v1789 = vpop.f32.mrf.mxu0
      %v1790 = vadd.f32 %v1498, %v1789
      %v1791 = vpop.f32.mrf.mxu0
      %1792 = vmatprep.mubr.bf16.mxu0 0
      %1793 = vmatmul.mubr.bf16.gmra.mxu0 %v1700
      %v1794 = vpop.f32.mrf.mxu0
      %v1795 = vadd.f32 %v1503, %v1794
      %v1796 = vpop.f32.mrf.mxu0
      %v1797 = vpop.f32.mrf.mxu0
      %v1798 = vadd.f32 %v1506, %v1797
      %v1799 = vpop.f32.mrf.mxu0
      %1800 = vmatprep.mubr.bf16.mxu0 0
      %1801 = vmatmul.mubr.bf16.gmra.mxu0 %v1703
      %v1802 = vpop.f32.mrf.mxu0
      %v1803 = vadd.f32 %v1511, %v1802
      %v1804 = vpop.f32.mrf.mxu0
      %v1805 = vpop.f32.mrf.mxu0
      %v1806 = vadd.f32 %v1514, %v1805
      %v1807 = vpop.f32.mrf.mxu0
      %1808 = vmatprep.mubr.bf16.mxu0 0
      %1809 = vmatmul.mubr.bf16.gmra.mxu0 %v1706
      %v1810 = vpop.f32.mrf.mxu0
      %v1811 = vadd.f32 %v1519, %v1810
      %v1812 = vpop.f32.mrf.mxu0
      %v1813 = vpop.f32.mrf.mxu0
      %v1814 = vadd.f32 %v1522, %v1813
      %v1815 = vpop.f32.mrf.mxu0
      %1816 = vmatprep.mubr.bf16.mxu0 0
      %1817 = vmatmul.mubr.bf16.gmra.mxu0 %v1709
      %v1818 = vpop.f32.mrf.mxu0
      %v1819 = vadd.f32 %v1527, %v1818
      %v1820 = vpop.f32.mrf.mxu0
      %v1821 = vpop.f32.mrf.mxu0
      %v1822 = vadd.f32 %v1530, %v1821
      %v1823 = vpop.f32.mrf.mxu0
      %1824 = vmatprep.mubr.bf16.mxu0 0
      %1825 = vmatmul.mubr.bf16.gmra.mxu0 %v1712
      %v1826 = vpop.f32.mrf.mxu0
      %v1827 = vadd.f32 %v1535, %v1826
      %v1828 = vpop.f32.mrf.mxu0
      %v1829 = vpop.f32.mrf.mxu0
      %v1830 = vadd.f32 %v1538, %v1829
      %v1831 = vpop.f32.mrf.mxu0
      %1832 = vmatprep.mubr.bf16.mxu0 0
      %1833 = vmatmul.mubr.bf16.gmra.mxu0 %v1715
      %v1834 = vpop.f32.mrf.mxu0
      %v1835 = vadd.f32 %v1543, %v1834
      %v1836 = vpop.f32.mrf.mxu0
      %v1837 = vpop.f32.mrf.mxu0
      %v1838 = vadd.f32 %v1546, %v1837
      %v1839 = vpop.f32.mrf.mxu0
      %1840 = vmatprep.mubr.bf16.mxu0 0
      %1841 = vmatmul.mubr.bf16.gmra.mxu0 %v1718
      %v1842 = vpop.f32.mrf.mxu0
      %v1843 = vadd.f32 %v1551, %v1842
      %v1844 = vpop.f32.mrf.mxu0
      %v1845 = vpop.f32.mrf.mxu0
      %v1846 = vadd.f32 %v1554, %v1845
      %v1847 = vpop.f32.mrf.mxu0
      %1848 = vmatprep.mubr.bf16.mxu0 0
      %1849 = vmatmul.mubr.bf16.gmra.mxu0 %v1721
      %v1850 = vpop.f32.mrf.mxu0
      %v1851 = vadd.f32 %v1559, %v1850
      %v1852 = vpop.f32.mrf.mxu0
      %v1853 = vpop.f32.mrf.mxu0
      %v1854 = vadd.f32 %v1562, %v1853
      %v1855 = vpop.f32.mrf.mxu0
      %1856 = vmatprep.mubr.bf16.mxu0 0
      %1857 = vmatmul.mubr.bf16.gmra.mxu0 %v1724
      %v1858 = vpop.f32.mrf.mxu0
      %v1859 = vadd.f32 %v1567, %v1858
      %v1860 = vpop.f32.mrf.mxu0
      %v1861 = vpop.f32.mrf.mxu0
      %v1862 = vadd.f32 %v1570, %v1861
      %v1863 = vpop.f32.mrf.mxu0
      %1864 = vmatprep.mubr.bf16.mxu0 0
      %1865 = vmatmul.mubr.bf16.gmra.mxu0 %v1727
      %v1866 = vpop.f32.mrf.mxu0
      %v1867 = vadd.f32 %v1575, %v1866
      %v1868 = vpop.f32.mrf.mxu0
      %v1869 = vpop.f32.mrf.mxu0
      %v1870 = vadd.f32 %v1578, %v1869
      %v1871 = vpop.f32.mrf.mxu0
      %1872 = vmatprep.mubr.bf16.mxu0 0
      %1873 = vmatmul.mubr.bf16.gmra.mxu0 %v1730
      %v1874 = vpop.f32.mrf.mxu0
      %v1875 = vadd.f32 %v1583, %v1874
      %v1876 = vpop.f32.mrf.mxu0
      %v1877 = vpop.f32.mrf.mxu0
      %v1878 = vadd.f32 %v1586, %v1877
      %v1879 = vpop.f32.mrf.mxu0
      %1880 = vmatprep.mubr.bf16.mxu0 0
      %1881 = vmatmul.mubr.bf16.gmra.mxu0 %v1733
      %v1882 = vpop.f32.mrf.mxu0
      %v1883 = vadd.f32 %v1591, %v1882
      %v1884 = vpop.f32.mrf.mxu0
      %v1885 = vpop.f32.mrf.mxu0
      %v1886 = vadd.f32 %v1594, %v1885
      %v1887 = vpop.f32.mrf.mxu0
      %1888 = vmatprep.mubr.bf16.mxu0 0
      %1889 = vmatmul.mubr.bf16.gmra.mxu0 %v1736
      %v1890 = vpop.f32.mrf.mxu0
      %v1891 = vadd.f32 %v1599, %v1890
      %v1892 = vpop.f32.mrf.mxu0
      %v1893 = vpop.f32.mrf.mxu0
      %v1894 = vadd.f32 %v1602, %v1893
      %v1895 = vpop.f32.mrf.mxu0
      %1896 = vmatprep.mubr.bf16.mxu0 0
      %1897 = vmatmul.mubr.bf16.gmra.mxu0 %v1739
      %v1898 = vpop.f32.mrf.mxu0
      %v1899 = vadd.f32 %v1607, %v1898
      %v1900 = vpop.f32.mrf.mxu0
      %v1901 = vpop.f32.mrf.mxu0
      %v1902 = vadd.f32 %v1610, %v1901
      %v1903 = vpop.f32.mrf.mxu0
      %1904 = vdwg.mxu0
      %v1905 = vld [vmem:[#allocation2] sm:$0xe]
      %v1906 = vld [vmem:[#allocation2 + $0xc] sm:$0xe]
      %v1907 = vld [vmem:[#allocation2 + $0x18] sm:$0xe]
      %v1908 = vld [vmem:[#allocation2 + $0x24] sm:$0xe]
      %v1909 = vld [vmem:[#allocation2 + $0x30] sm:$0xe]
      %v1910 = vld [vmem:[#allocation2 + $0x3c] sm:$0xe]
      %v1911 = vld [vmem:[#allocation2 + $0x48] sm:$0xe]
      %v1912 = vld [vmem:[#allocation2 + $0x54] sm:$0xe]
      %v1913 = vld [vmem:[#allocation2 + $0x60] sm:$0xe]
      %v1914 = vld [vmem:[#allocation2 + $0x6c] sm:$0xe]
      %v1915 = vld [vmem:[#allocation2 + $0x78] sm:$0xe]
      %v1916 = vld [vmem:[#allocation2 + $0x84] sm:$0xe]
      %v1917 = vld [vmem:[#allocation2 + $0x90] sm:$0xe]
      %v1918 = vld [vmem:[#allocation2 + $0x9c] sm:$0xe]
      %v1919 = vld [vmem:[#allocation2 + $0xa8] sm:$0xe]
      %v1920 = vld [vmem:[#allocation2 + $0xb4] sm:$0xe]
      %vm1953 = vcmask 1042432
      %vm1954 = vcmask 1046532
      %vm1955 = vmor %vm1953, %vm1954
      %v1956 = vrot.slane %v1905, 5
      %v1957 = vrot.slane %v1956, 4
      %v1958 = vrot.slane %v914, 5
      %v1959 = vsel %vm1955, %v1957, %v1958
      %v1960 = vrot.slane %v1958, 4
      %v1961 = vrot.slane %v946, 5
      %v1962 = vsel %vm1955, %v1960, %v1961
      %v1963 = vrot.slane %v1906, 5
      %v1964 = vrot.slane %v1963, 4
      %v1965 = vrot.slane %v916, 5
      %v1966 = vsel %vm1955, %v1964, %v1965
      %v1967 = vrot.slane %v1965, 4
      %v1968 = vrot.slane %v947, 5
      %v1969 = vsel %vm1955, %v1967, %v1968
      %v1970 = vrot.slane %v1907, 5
      %v1971 = vrot.slane %v1970, 4
      %v1972 = vrot.slane %v918, 5
      %v1973 = vsel %vm1955, %v1971, %v1972
      %v1974 = vrot.slane %v1972, 4
      %v1975 = vrot.slane %v948, 5
      %v1976 = vsel %vm1955, %v1974, %v1975
      %v1977 = vrot.slane %v1908, 5
      %v1978 = vrot.slane %v1977, 4
      %v1979 = vrot.slane %v920, 5
      %v1980 = vsel %vm1955, %v1978, %v1979
      %v1981 = vrot.slane %v1979, 4
      %v1982 = vrot.slane %v949, 5
      %v1983 = vsel %vm1955, %v1981, %v1982
      %v1984 = vrot.slane %v1909, 5
      %v1985 = vrot.slane %v1984, 4
      %v1986 = vrot.slane %v922, 5
      %v1987 = vsel %vm1955, %v1985, %v1986
      %v1988 = vrot.slane %v1986, 4
      %v1989 = vrot.slane %v950, 5
      %v1990 = vsel %vm1955, %v1988, %v1989
      %v1991 = vrot.slane %v1910, 5
      %v1992 = vrot.slane %v1991, 4
      %v1993 = vrot.slane %v924, 5
      %v1994 = vsel %vm1955, %v1992, %v1993
      %v1995 = vrot.slane %v1993, 4
      %v1996 = vrot.slane %v951, 5
      %v1997 = vsel %vm1955, %v1995, %v1996
      %v1998 = vrot.slane %v1911, 5
      %v1999 = vrot.slane %v1998, 4
      %v2000 = vrot.slane %v926, 5
      %v2001 = vsel %vm1955, %v1999, %v2000
      %v2002 = vrot.slane %v2000, 4
      %v2003 = vrot.slane %v952, 5
      %v2004 = vsel %vm1955, %v2002, %v2003
      %v2005 = vrot.slane %v1912, 5
      %v2006 = vrot.slane %v2005, 4
      %v2007 = vrot.slane %v928, 5
      %v2008 = vsel %vm1955, %v2006, %v2007
      %v2009 = vrot.slane %v2007, 4
      %v2010 = vrot.slane %v953, 5
      %v2011 = vsel %vm1955, %v2009, %v2010
      %v2012 = vrot.slane %v1913, 5
      %v2013 = vrot.slane %v2012, 4
      %v2014 = vrot.slane %v930, 5
      %v2015 = vsel %vm1955, %v2013, %v2014
      %v2016 = vrot.slane %v2014, 4
      %v2017 = vrot.slane %v954, 5
      %v2018 = vsel %vm1955, %v2016, %v2017
      %v2019 = vrot.slane %v1914, 5
      %v2020 = vrot.slane %v2019, 4
      %v2021 = vrot.slane %v932, 5
      %v2022 = vsel %vm1955, %v2020, %v2021
      %v2023 = vrot.slane %v2021, 4
      %v2024 = vrot.slane %v955, 5
      %v2025 = vsel %vm1955, %v2023, %v2024
      %v2026 = vrot.slane %v1915, 5
      %v2027 = vrot.slane %v2026, 4
      %v2028 = vrot.slane %v934, 5
      %v2029 = vsel %vm1955, %v2027, %v2028
      %v2030 = vrot.slane %v2028, 4
      %v2031 = vrot.slane %v956, 5
      %v2032 = vsel %vm1955, %v2030, %v2031
      %v2033 = vrot.slane %v1916, 5
      %v2034 = vrot.slane %v2033, 4
      %v2035 = vrot.slane %v936, 5
      %v2036 = vsel %vm1955, %v2034, %v2035
      %v2037 = vrot.slane %v2035, 4
      %v2038 = vrot.slane %v957, 5
      %v2039 = vsel %vm1955, %v2037, %v2038
      %v2040 = vrot.slane %v1917, 5
      %v2041 = vrot.slane %v2040, 4
      %v2042 = vrot.slane %v938, 5
      %v2043 = vsel %vm1955, %v2041, %v2042
      %v2044 = vrot.slane %v2042, 4
      %v2045 = vrot.slane %v958, 5
      %v2046 = vsel %vm1955, %v2044, %v2045
      %v2047 = vrot.slane %v1918, 5
      %v2048 = vrot.slane %v2047, 4
      %v2049 = vrot.slane %v940, 5
      %v2050 = vsel %vm1955, %v2048, %v2049
      %v2051 = vrot.slane %v2049, 4
      %v2052 = vrot.slane %v959, 5
      %v2053 = vsel %vm1955, %v2051, %v2052
      %v2054 = vrot.slane %v1919, 5
      %v2055 = vrot.slane %v2054, 4
      %v2056 = vrot.slane %v942, 5
      %v2057 = vsel %vm1955, %v2055, %v2056
      %v2058 = vrot.slane %v2056, 4
      %v2059 = vrot.slane %v960, 5
      %v2060 = vsel %vm1955, %v2058, %v2059
      %v2061 = vrot.slane %v1920, 5
      %v2062 = vrot.slane %v2061, 4
      %v2063 = vrot.slane %v944, 5
      %v2064 = vsel %vm1955, %v2062, %v2063
      %v2065 = vrot.slane %v2063, 4
      %v2066 = vrot.slane %v961, 5
      %v2067 = vsel %vm1955, %v2065, %v2066
      %s2068 = scalar_lea.vmem %s1, 4
      %v2069 = vld [vmem:[%s2068] sm:$0x3]
      %v2070 = vunpack.c.l.b16 %v1959
      %v2071 = vunpack.c.l.b16 %v1962
      %v2072 = vunpack.c.l.b16 %v1966
      %v2073 = vunpack.c.l.b16 %v1969
      %v2074 = vunpack.c.l.b16 %v1973
      %v2075 = vunpack.c.l.b16 %v1976
      %v2076 = vunpack.c.l.b16 %v1980
      %v2077 = vunpack.c.l.b16 %v1983
      %v2078 = vunpack.c.l.b16 %v1987
      %v2079 = vunpack.c.l.b16 %v1990
      %v2080 = vunpack.c.l.b16 %v1994
      %v2081 = vunpack.c.l.b16 %v1997
      %v2082 = vunpack.c.l.b16 %v2001
      %v2083 = vunpack.c.l.b16 %v2004
      %v2084 = vunpack.c.l.b16 %v2008
      %v2085 = vunpack.c.l.b16 %v2011
      %v2086 = vunpack.c.l.b16 %v2015
      %v2087 = vunpack.c.l.b16 %v2018
      %v2088 = vunpack.c.l.b16 %v2022
      %v2089 = vunpack.c.l.b16 %v2025
      %v2090 = vunpack.c.l.b16 %v2029
      %v2091 = vunpack.c.l.b16 %v2032
      %v2092 = vunpack.c.l.b16 %v2036
      %v2093 = vunpack.c.l.b16 %v2039
      %v2094 = vunpack.c.l.b16 %v2043
      %v2095 = vunpack.c.l.b16 %v2046
      %v2096 = vunpack.c.l.b16 %v2050
      %v2097 = vunpack.c.l.b16 %v2053
      %v2098 = vunpack.c.l.b16 %v2057
      %v2099 = vunpack.c.l.b16 %v2060
      %v2100 = vunpack.c.l.b16 %v2064
      %v2101 = vunpack.c.l.b16 %v2067
      %v2102 = vpack.c.b16 %v2071, %v2070
      %v2103 = vpack.c.b16 %v2073, %v2072
      %v2104 = vpack.c.b16 %v2075, %v2074
      %v2105 = vpack.c.b16 %v2077, %v2076
      %v2106 = vpack.c.b16 %v2079, %v2078
      %v2107 = vpack.c.b16 %v2081, %v2080
      %v2108 = vpack.c.b16 %v2083, %v2082
      %v2109 = vpack.c.b16 %v2085, %v2084
      %v2110 = vpack.c.b16 %v2087, %v2086
      %v2111 = vpack.c.b16 %v2089, %v2088
      %v2112 = vpack.c.b16 %v2091, %v2090
      %v2113 = vpack.c.b16 %v2093, %v2092
      %v2114 = vpack.c.b16 %v2095, %v2094
      %v2115 = vpack.c.b16 %v2097, %v2096
      %v2116 = vpack.c.b16 %v2099, %v2098
      %v2117 = vpack.c.b16 %v2101, %v2100
      %v2119 = vsel %vm1399, %v2102, 0
      %v2122 = vsel %vm1399, %v2103, 0
      %v2125 = vsel %vm1399, %v2104, 0
      %v2128 = vsel %vm1399, %v2105, 0
      %v2131 = vsel %vm1399, %v2106, 0
      %v2134 = vsel %vm1399, %v2107, 0
      %v2137 = vsel %vm1399, %v2108, 0
      %v2140 = vsel %vm1399, %v2109, 0
      %v2143 = vsel %vm1399, %v2110, 0
      %v2146 = vsel %vm1399, %v2111, 0
      %v2149 = vsel %vm1399, %v2112, 0
      %v2152 = vsel %vm1399, %v2113, 0
      %v2155 = vsel %vm1399, %v2114, 0
      %v2158 = vsel %vm1399, %v2115, 0
      %v2161 = vsel %vm1399, %v2116, 0
      %v2164 = vsel %vm1399, %v2117, 0
      %v2167 = vsel %vm1448, %v2069, 0
      %2169 = vmatprep.subr.bf16.mxu0 0
      %2170 = vmatpush1.bf16.msra.mxu0 0
      %2171 = vmatprep.subr.bf16.mxu0 0
      %2172 = vmatpush1.bf16.msra.mxu0 0
      %2173 = vmatprep.subr.bf16.mxu0 0
      %2174 = vmatpush1.bf16.msra.mxu0 0
      %2175 = vmatprep.subr.bf16.mxu0 0
      %2176 = vmatpush1.bf16.msra.mxu0 0
      %2177 = vmatprep.subr.bf16.mxu0 0
      %2178 = vmatpush1.bf16.msra.mxu0 0
      %2179 = vmatprep.subr.bf16.mxu0 0
      %2180 = vmatpush1.bf16.msra.mxu0 0
      %2181 = vmatprep.subr.bf16.mxu0 0
      %2182 = vmatpush1.bf16.msra.mxu0 0
      %2183 = vmatprep.subr.bf16.mxu0 0
      %2184 = vmatpush1.bf16.msra.mxu0 %v2167
      %2185 = vmatprep.subr.bf16.mxu0 0
      %2186 = vmatpush2.bf16.msra.mxu0 0
      %2187 = vmatprep.subr.bf16.mxu0 0
      %2188 = vmatpush2.bf16.msra.mxu0 0
      %2189 = vmatprep.subr.bf16.mxu0 0
      %2190 = vmatpush2.bf16.msra.mxu0 0
      %2191 = vmatprep.subr.bf16.mxu0 0
      %2192 = vmatpush2.bf16.msra.mxu0 0
      %2193 = vmatprep.subr.bf16.mxu0 0
      %2194 = vmatpush2.bf16.msra.mxu0 0
      %2195 = vmatprep.subr.bf16.mxu0 0
      %2196 = vmatpush2.bf16.msra.mxu0 0
      %2197 = vmatprep.subr.bf16.mxu0 0
      %2198 = vmatpush2.bf16.msra.mxu0 0
      %2199 = vmatprep.subr.bf16.mxu0 0
      %2200 = vmatpush2.bf16.msra.mxu0 0
      %2201 = vmatprep.mubr.bf16.mxu0 0
      %2202 = vmatmul.mubr.bf16.gmra.mxu0 %v2119
      %v2203 = vpop.f32.mrf.mxu0
      %v2204 = vadd.f32 0.0, %v2203
      %v2205 = vpop.f32.mrf.mxu0
      %v2206 = vpop.f32.mrf.mxu0
      %v2207 = vadd.f32 0.0, %v2206
      %v2208 = vpop.f32.mrf.mxu0
      %2209 = vmatprep.mubr.bf16.mxu0 0
      %2210 = vmatmul.mubr.bf16.gmra.mxu0 %v2122
      %v2211 = vpop.f32.mrf.mxu0
      %v2212 = vadd.f32 0.0, %v2211
      %v2213 = vpop.f32.mrf.mxu0
      %v2214 = vpop.f32.mrf.mxu0
      %v2215 = vadd.f32 0.0, %v2214
      %v2216 = vpop.f32.mrf.mxu0
      %2217 = vmatprep.mubr.bf16.mxu0 0
      %2218 = vmatmul.mubr.bf16.gmra.mxu0 %v2125
      %v2219 = vpop.f32.mrf.mxu0
      %v2220 = vadd.f32 0.0, %v2219
      %v2221 = vpop.f32.mrf.mxu0
      %v2222 = vpop.f32.mrf.mxu0
      %v2223 = vadd.f32 0.0, %v2222
      %v2224 = vpop.f32.mrf.mxu0
      %2225 = vmatprep.mubr.bf16.mxu0 0
      %2226 = vmatmul.mubr.bf16.gmra.mxu0 %v2128
      %v2227 = vpop.f32.mrf.mxu0
      %v2228 = vadd.f32 0.0, %v2227
      %v2229 = vpop.f32.mrf.mxu0
      %v2230 = vpop.f32.mrf.mxu0
      %v2231 = vadd.f32 0.0, %v2230
      %v2232 = vpop.f32.mrf.mxu0
      %2233 = vmatprep.mubr.bf16.mxu0 0
      %2234 = vmatmul.mubr.bf16.gmra.mxu0 %v2131
      %v2235 = vpop.f32.mrf.mxu0
      %v2236 = vadd.f32 0.0, %v2235
      %v2237 = vpop.f32.mrf.mxu0
      %v2238 = vpop.f32.mrf.mxu0
      %v2239 = vadd.f32 0.0, %v2238
      %v2240 = vpop.f32.mrf.mxu0
      %2241 = vmatprep.mubr.bf16.mxu0 0
      %2242 = vmatmul.mubr.bf16.gmra.mxu0 %v2134
      %v2243 = vpop.f32.mrf.mxu0
      %v2244 = vadd.f32 0.0, %v2243
      %v2245 = vpop.f32.mrf.mxu0
      %v2246 = vpop.f32.mrf.mxu0
      %v2247 = vadd.f32 0.0, %v2246
      %v2248 = vpop.f32.mrf.mxu0
      %2249 = vmatprep.mubr.bf16.mxu0 0
      %2250 = vmatmul.mubr.bf16.gmra.mxu0 %v2137
      %v2251 = vpop.f32.mrf.mxu0
      %v2252 = vadd.f32 0.0, %v2251
      %v2253 = vpop.f32.mrf.mxu0
      %v2254 = vpop.f32.mrf.mxu0
      %v2255 = vadd.f32 0.0, %v2254
      %v2256 = vpop.f32.mrf.mxu0
      %2257 = vmatprep.mubr.bf16.mxu0 0
      %2258 = vmatmul.mubr.bf16.gmra.mxu0 %v2140
      %v2259 = vpop.f32.mrf.mxu0
      %v2260 = vadd.f32 0.0, %v2259
      %v2261 = vpop.f32.mrf.mxu0
      %v2262 = vpop.f32.mrf.mxu0
      %v2263 = vadd.f32 0.0, %v2262
      %v2264 = vpop.f32.mrf.mxu0
      %2265 = vmatprep.mubr.bf16.mxu0 0
      %2266 = vmatmul.mubr.bf16.gmra.mxu0 %v2143
      %v2267 = vpop.f32.mrf.mxu0
      %v2268 = vadd.f32 0.0, %v2267
      %v2269 = vpop.f32.mrf.mxu0
      %v2270 = vpop.f32.mrf.mxu0
      %v2271 = vadd.f32 0.0, %v2270
      %v2272 = vpop.f32.mrf.mxu0
      %2273 = vmatprep.mubr.bf16.mxu0 0
      %2274 = vmatmul.mubr.bf16.gmra.mxu0 %v2146
      %v2275 = vpop.f32.mrf.mxu0
      %v2276 = vadd.f32 0.0, %v2275
      %v2277 = vpop.f32.mrf.mxu0
      %v2278 = vpop.f32.mrf.mxu0
      %v2279 = vadd.f32 0.0, %v2278
      %v2280 = vpop.f32.mrf.mxu0
      %2281 = vmatprep.mubr.bf16.mxu0 0
      %2282 = vmatmul.mubr.bf16.gmra.mxu0 %v2149
      %v2283 = vpop.f32.mrf.mxu0
      %v2284 = vadd.f32 0.0, %v2283
      %v2285 = vpop.f32.mrf.mxu0
      %v2286 = vpop.f32.mrf.mxu0
      %v2287 = vadd.f32 0.0, %v2286
      %v2288 = vpop.f32.mrf.mxu0
      %2289 = vmatprep.mubr.bf16.mxu0 0
      %2290 = vmatmul.mubr.bf16.gmra.mxu0 %v2152
      %v2291 = vpop.f32.mrf.mxu0
      %v2292 = vadd.f32 0.0, %v2291
      %v2293 = vpop.f32.mrf.mxu0
      %v2294 = vpop.f32.mrf.mxu0
      %v2295 = vadd.f32 0.0, %v2294
      %v2296 = vpop.f32.mrf.mxu0
      %2297 = vmatprep.mubr.bf16.mxu0 0
      %2298 = vmatmul.mubr.bf16.gmra.mxu0 %v2155
      %v2299 = vpop.f32.mrf.mxu0
      %v2300 = vadd.f32 0.0, %v2299
      %v2301 = vpop.f32.mrf.mxu0
      %v2302 = vpop.f32.mrf.mxu0
      %v2303 = vadd.f32 0.0, %v2302
      %v2304 = vpop.f32.mrf.mxu0
      %2305 = vmatprep.mubr.bf16.mxu0 0
      %2306 = vmatmul.mubr.bf16.gmra.mxu0 %v2158
      %v2307 = vpop.f32.mrf.mxu0
      %v2308 = vadd.f32 0.0, %v2307
      %v2309 = vpop.f32.mrf.mxu0
      %v2310 = vpop.f32.mrf.mxu0
      %v2311 = vadd.f32 0.0, %v2310
      %v2312 = vpop.f32.mrf.mxu0
      %2313 = vmatprep.mubr.bf16.mxu0 0
      %2314 = vmatmul.mubr.bf16.gmra.mxu0 %v2161
      %v2315 = vpop.f32.mrf.mxu0
      %v2316 = vadd.f32 0.0, %v2315
      %v2317 = vpop.f32.mrf.mxu0
      %v2318 = vpop.f32.mrf.mxu0
      %v2319 = vadd.f32 0.0, %v2318
      %v2320 = vpop.f32.mrf.mxu0
      %2321 = vmatprep.mubr.bf16.mxu0 0
      %2322 = vmatmul.mubr.bf16.gmra.mxu0 %v2164
      %v2323 = vpop.f32.mrf.mxu0
      %v2324 = vadd.f32 0.0, %v2323
      %v2325 = vpop.f32.mrf.mxu0
      %v2326 = vpop.f32.mrf.mxu0
      %v2327 = vadd.f32 0.0, %v2326
      %v2328 = vpop.f32.mrf.mxu0
      %2329 = vdwg.mxu0
      %v2330 = vadd.f32 %v1779, %v2204
      %v2331 = vadd.f32 %v1782, %v2207
      %v2332 = vadd.f32 %v1787, %v2212
      %v2333 = vadd.f32 %v1790, %v2215
      %v2334 = vadd.f32 %v1795, %v2220
      %v2335 = vadd.f32 %v1798, %v2223
      %v2336 = vadd.f32 %v1803, %v2228
      %v2337 = vadd.f32 %v1806, %v2231
      %v2338 = vadd.f32 %v1811, %v2236
      %v2339 = vadd.f32 %v1814, %v2239
      %v2340 = vadd.f32 %v1819, %v2244
      %v2341 = vadd.f32 %v1822, %v2247
      %v2342 = vadd.f32 %v1827, %v2252
      %v2343 = vadd.f32 %v1830, %v2255
      %v2344 = vadd.f32 %v1835, %v2260
      %v2345 = vadd.f32 %v1838, %v2263
      %v2346 = vadd.f32 %v1843, %v2268
      %v2347 = vadd.f32 %v1846, %v2271
      %v2348 = vadd.f32 %v1851, %v2276
      %v2349 = vadd.f32 %v1854, %v2279
      %v2350 = vadd.f32 %v1859, %v2284
      %v2351 = vadd.f32 %v1862, %v2287
      %v2352 = vadd.f32 %v1867, %v2292
      %v2353 = vadd.f32 %v1870, %v2295
      %v2354 = vadd.f32 %v1875, %v2300
      %v2355 = vadd.f32 %v1878, %v2303
      %v2356 = vadd.f32 %v1883, %v2308
      %v2357 = vadd.f32 %v1886, %v2311
      %v2358 = vadd.f32 %v1891, %v2316
      %v2359 = vadd.f32 %v1894, %v2319
      %v2360 = vadd.f32 %v1899, %v2324
      %v2361 = vadd.f32 %v1902, %v2327
      %v2362 = vld [vmem:[%s343] sm:$0xf]
      %v2363 = vld [vmem:[%s343 + $0x4] sm:$0xf]
      %v2364 = vld [vmem:[%s343 + $0xc] sm:$0xf]
      %v2365 = vld [vmem:[%s343 + $0x10] sm:$0xf]
      %v2366 = vld [vmem:[%s343 + $0x18] sm:$0xf]
      %v2367 = vld [vmem:[%s343 + $0x1c] sm:$0xf]
      %v2368 = vld [vmem:[%s343 + $0x24] sm:$0xf]
      %v2369 = vld [vmem:[%s343 + $0x28] sm:$0xf]
      %v2370 = vld [vmem:[%s343 + $0x30] sm:$0xf]
      %v2371 = vld [vmem:[%s343 + $0x34] sm:$0xf]
      %v2372 = vld [vmem:[%s343 + $0x3c] sm:$0xf]
      %v2373 = vld [vmem:[%s343 + $0x40] sm:$0xf]
      %v2374 = vld [vmem:[%s343 + $0x48] sm:$0xf]
      %v2375 = vld [vmem:[%s343 + $0x4c] sm:$0xf]
      %v2376 = vld [vmem:[%s343 + $0x54] sm:$0xf]
      %v2377 = vld [vmem:[%s343 + $0x58] sm:$0xf]
      %v2378 = vld [vmem:[%s343 + $0x60] sm:$0xf]
      %v2379 = vld [vmem:[%s343 + $0x64] sm:$0xf]
      %v2380 = vld [vmem:[%s343 + $0x6c] sm:$0xf]
      %v2381 = vld [vmem:[%s343 + $0x70] sm:$0xf]
      %v2382 = vld [vmem:[%s343 + $0x78] sm:$0xf]
      %v2383 = vld [vmem:[%s343 + $0x7c] sm:$0xf]
      %v2384 = vld [vmem:[%s343 + $0x84] sm:$0xf]
      %v2385 = vld [vmem:[%s343 + $0x88] sm:$0xf]
      %v2386 = vld [vmem:[%s343 + $0x90] sm:$0xf]
      %v2387 = vld [vmem:[%s343 + $0x94] sm:$0xf]
      %v2388 = vld [vmem:[%s343 + $0x9c] sm:$0xf]
      %v2389 = vld [vmem:[%s343 + $0xa0] sm:$0xf]
      %v2390 = vld [vmem:[%s343 + $0xa8] sm:$0xf]
      %v2391 = vld [vmem:[%s343 + $0xac] sm:$0xf]
      %v2392 = vld [vmem:[%s343 + $0xb4] sm:$0xf]
      %v2393 = vld [vmem:[%s343 + $0xb8] sm:$0xf]
      %s2394 = scalar_lea.vmem %s1, 6
      %v2395 = vld [vmem:[%s2394] sm:$0x3]
      %v2428 = vunpack.c.l.b16 %v2362
      %v2429 = vunpack.c.l.b16 %v2363
      %v2430 = vunpack.c.l.b16 %v2364
      %v2431 = vunpack.c.l.b16 %v2365
      %v2432 = vunpack.c.l.b16 %v2366
      %v2433 = vunpack.c.l.b16 %v2367
      %v2434 = vunpack.c.l.b16 %v2368
      %v2435 = vunpack.c.l.b16 %v2369
      %v2436 = vunpack.c.l.b16 %v2370
      %v2437 = vunpack.c.l.b16 %v2371
      %v2438 = vunpack.c.l.b16 %v2372
      %v2439 = vunpack.c.l.b16 %v2373
      %v2440 = vunpack.c.l.b16 %v2374
      %v2441 = vunpack.c.l.b16 %v2375
      %v2442 = vunpack.c.l.b16 %v2376
      %v2443 = vunpack.c.l.b16 %v2377
      %v2444 = vunpack.c.l.b16 %v2378
      %v2445 = vunpack.c.l.b16 %v2379
      %v2446 = vunpack.c.l.b16 %v2380
      %v2447 = vunpack.c.l.b16 %v2381
      %v2448 = vunpack.c.l.b16 %v2382
      %v2449 = vunpack.c.l.b16 %v2383
      %v2450 = vunpack.c.l.b16 %v2384
      %v2451 = vunpack.c.l.b16 %v2385
      %v2452 = vunpack.c.l.b16 %v2386
      %v2453 = vunpack.c.l.b16 %v2387
      %v2454 = vunpack.c.l.b16 %v2388
      %v2455 = vunpack.c.l.b16 %v2389
      %v2456 = vunpack.c.l.b16 %v2390
      %v2457 = vunpack.c.l.b16 %v2391
      %v2458 = vunpack.c.l.b16 %v2392
      %v2459 = vunpack.c.l.b16 %v2393
      %v2460 = vpack.c.b16 %v2429, %v2428
      %v2461 = vpack.c.b16 %v2431, %v2430
      %v2462 = vpack.c.b16 %v2433, %v2432
      %v2463 = vpack.c.b16 %v2435, %v2434
      %v2464 = vpack.c.b16 %v2437, %v2436
      %v2465 = vpack.c.b16 %v2439, %v2438
      %v2466 = vpack.c.b16 %v2441, %v2440
      %v2467 = vpack.c.b16 %v2443, %v2442
      %v2468 = vpack.c.b16 %v2445, %v2444
      %v2469 = vpack.c.b16 %v2447, %v2446
      %v2470 = vpack.c.b16 %v2449, %v2448
      %v2471 = vpack.c.b16 %v2451, %v2450
      %v2472 = vpack.c.b16 %v2453, %v2452
      %v2473 = vpack.c.b16 %v2455, %v2454
      %v2474 = vpack.c.b16 %v2457, %v2456
      %v2475 = vpack.c.b16 %v2459, %v2458
      %v2477 = vsel %vm1399, %v2460, 0
      %v2480 = vsel %vm1399, %v2461, 0
      %v2483 = vsel %vm1399, %v2462, 0
      %v2486 = vsel %vm1399, %v2463, 0
      %v2489 = vsel %vm1399, %v2464, 0
      %v2492 = vsel %vm1399, %v2465, 0
      %v2495 = vsel %vm1399, %v2466, 0
      %v2498 = vsel %vm1399, %v2467, 0
      %v2501 = vsel %vm1399, %v2468, 0
      %v2504 = vsel %vm1399, %v2469, 0
      %v2507 = vsel %vm1399, %v2470, 0
      %v2510 = vsel %vm1399, %v2471, 0
      %v2513 = vsel %vm1399, %v2472, 0
      %v2516 = vsel %vm1399, %v2473, 0
      %v2519 = vsel %vm1399, %v2474, 0
      %v2522 = vsel %vm1399, %v2475, 0
      %v2525 = vsel %vm1448, %v2395, 0
      %2527 = vmatprep.subr.bf16.mxu0 0
      %2528 = vmatpush1.bf16.msra.mxu0 0
      %2529 = vmatprep.subr.bf16.mxu0 0
      %2530 = vmatpush1.bf16.msra.mxu0 0
      %2531 = vmatprep.subr.bf16.mxu0 0
      %2532 = vmatpush1.bf16.msra.mxu0 0
      %2533 = vmatprep.subr.bf16.mxu0 0
      %2534 = vmatpush1.bf16.msra.mxu0 0
      %2535 = vmatprep.subr.bf16.mxu0 0
      %2536 = vmatpush1.bf16.msra.mxu0 0
      %2537 = vmatprep.subr.bf16.mxu0 0
      %2538 = vmatpush1.bf16.msra.mxu0 0
      %2539 = vmatprep.subr.bf16.mxu0 0
      %2540 = vmatpush1.bf16.msra.mxu0 0
      %2541 = vmatprep.subr.bf16.mxu0 0
      %2542 = vmatpush1.bf16.msra.mxu0 %v2525
      %2543 = vmatprep.subr.bf16.mxu0 0
      %2544 = vmatpush2.bf16.msra.mxu0 0
      %2545 = vmatprep.subr.bf16.mxu0 0
      %2546 = vmatpush2.bf16.msra.mxu0 0
      %2547 = vmatprep.subr.bf16.mxu0 0
      %2548 = vmatpush2.bf16.msra.mxu0 0
      %2549 = vmatprep.subr.bf16.mxu0 0
      %2550 = vmatpush2.bf16.msra.mxu0 0
      %2551 = vmatprep.subr.bf16.mxu0 0
      %2552 = vmatpush2.bf16.msra.mxu0 0
      %2553 = vmatprep.subr.bf16.mxu0 0
      %2554 = vmatpush2.bf16.msra.mxu0 0
      %2555 = vmatprep.subr.bf16.mxu0 0
      %2556 = vmatpush2.bf16.msra.mxu0 0
      %2557 = vmatprep.subr.bf16.mxu0 0
      %2558 = vmatpush2.bf16.msra.mxu0 0
      %2559 = vmatprep.mubr.bf16.mxu0 0
      %2560 = vmatmul.mubr.bf16.gmra.mxu0 %v2477
      %v2561 = vpop.f32.mrf.mxu0
      %v2562 = vadd.f32 0.0, %v2561
      %v2563 = vpop.f32.mrf.mxu0
      %v2564 = vpop.f32.mrf.mxu0
      %v2565 = vadd.f32 0.0, %v2564
      %v2566 = vpop.f32.mrf.mxu0
      %2567 = vmatprep.mubr.bf16.mxu0 0
      %2568 = vmatmul.mubr.bf16.gmra.mxu0 %v2480
      %v2569 = vpop.f32.mrf.mxu0
      %v2570 = vadd.f32 0.0, %v2569
      %v2571 = vpop.f32.mrf.mxu0
      %v2572 = vpop.f32.mrf.mxu0
      %v2573 = vadd.f32 0.0, %v2572
      %v2574 = vpop.f32.mrf.mxu0
      %2575 = vmatprep.mubr.bf16.mxu0 0
      %2576 = vmatmul.mubr.bf16.gmra.mxu0 %v2483
      %v2577 = vpop.f32.mrf.mxu0
      %v2578 = vadd.f32 0.0, %v2577
      %v2579 = vpop.f32.mrf.mxu0
      %v2580 = vpop.f32.mrf.mxu0
      %v2581 = vadd.f32 0.0, %v2580
      %v2582 = vpop.f32.mrf.mxu0
      %2583 = vmatprep.mubr.bf16.mxu0 0
      %2584 = vmatmul.mubr.bf16.gmra.mxu0 %v2486
      %v2585 = vpop.f32.mrf.mxu0
      %v2586 = vadd.f32 0.0, %v2585
      %v2587 = vpop.f32.mrf.mxu0
      %v2588 = vpop.f32.mrf.mxu0
      %v2589 = vadd.f32 0.0, %v2588
      %v2590 = vpop.f32.mrf.mxu0
      %2591 = vmatprep.mubr.bf16.mxu0 0
      %2592 = vmatmul.mubr.bf16.gmra.mxu0 %v2489
      %v2593 = vpop.f32.mrf.mxu0
      %v2594 = vadd.f32 0.0, %v2593
      %v2595 = vpop.f32.mrf.mxu0
      %v2596 = vpop.f32.mrf.mxu0
      %v2597 = vadd.f32 0.0, %v2596
      %v2598 = vpop.f32.mrf.mxu0
      %2599 = vmatprep.mubr.bf16.mxu0 0
      %2600 = vmatmul.mubr.bf16.gmra.mxu0 %v2492
      %v2601 = vpop.f32.mrf.mxu0
      %v2602 = vadd.f32 0.0, %v2601
      %v2603 = vpop.f32.mrf.mxu0
      %v2604 = vpop.f32.mrf.mxu0
      %v2605 = vadd.f32 0.0, %v2604
      %v2606 = vpop.f32.mrf.mxu0
      %2607 = vmatprep.mubr.bf16.mxu0 0
      %2608 = vmatmul.mubr.bf16.gmra.mxu0 %v2495
      %v2609 = vpop.f32.mrf.mxu0
      %v2610 = vadd.f32 0.0, %v2609
      %v2611 = vpop.f32.mrf.mxu0
      %v2612 = vpop.f32.mrf.mxu0
      %v2613 = vadd.f32 0.0, %v2612
      %v2614 = vpop.f32.mrf.mxu0
      %2615 = vmatprep.mubr.bf16.mxu0 0
      %2616 = vmatmul.mubr.bf16.gmra.mxu0 %v2498
      %v2617 = vpop.f32.mrf.mxu0
      %v2618 = vadd.f32 0.0, %v2617
      %v2619 = vpop.f32.mrf.mxu0
      %v2620 = vpop.f32.mrf.mxu0
      %v2621 = vadd.f32 0.0, %v2620
      %v2622 = vpop.f32.mrf.mxu0
      %2623 = vmatprep.mubr.bf16.mxu0 0
      %2624 = vmatmul.mubr.bf16.gmra.mxu0 %v2501
      %v2625 = vpop.f32.mrf.mxu0
      %v2626 = vadd.f32 0.0, %v2625
      %v2627 = vpop.f32.mrf.mxu0
      %v2628 = vpop.f32.mrf.mxu0
      %v2629 = vadd.f32 0.0, %v2628
      %v2630 = vpop.f32.mrf.mxu0
      %2631 = vmatprep.mubr.bf16.mxu0 0
      %2632 = vmatmul.mubr.bf16.gmra.mxu0 %v2504
      %v2633 = vpop.f32.mrf.mxu0
      %v2634 = vadd.f32 0.0, %v2633
      %v2635 = vpop.f32.mrf.mxu0
      %v2636 = vpop.f32.mrf.mxu0
      %v2637 = vadd.f32 0.0, %v2636
      %v2638 = vpop.f32.mrf.mxu0
      %2639 = vmatprep.mubr.bf16.mxu0 0
      %2640 = vmatmul.mubr.bf16.gmra.mxu0 %v2507
      %v2641 = vpop.f32.mrf.mxu0
      %v2642 = vadd.f32 0.0, %v2641
      %v2643 = vpop.f32.mrf.mxu0
      %v2644 = vpop.f32.mrf.mxu0
      %v2645 = vadd.f32 0.0, %v2644
      %v2646 = vpop.f32.mrf.mxu0
      %2647 = vmatprep.mubr.bf16.mxu0 0
      %2648 = vmatmul.mubr.bf16.gmra.mxu0 %v2510
      %v2649 = vpop.f32.mrf.mxu0
      %v2650 = vadd.f32 0.0, %v2649
      %v2651 = vpop.f32.mrf.mxu0
      %v2652 = vpop.f32.mrf.mxu0
      %v2653 = vadd.f32 0.0, %v2652
      %v2654 = vpop.f32.mrf.mxu0
      %2655 = vmatprep.mubr.bf16.mxu0 0
      %2656 = vmatmul.mubr.bf16.gmra.mxu0 %v2513
      %v2657 = vpop.f32.mrf.mxu0
      %v2658 = vadd.f32 0.0, %v2657
      %v2659 = vpop.f32.mrf.mxu0
      %v2660 = vpop.f32.mrf.mxu0
      %v2661 = vadd.f32 0.0, %v2660
      %v2662 = vpop.f32.mrf.mxu0
      %2663 = vmatprep.mubr.bf16.mxu0 0
      %2664 = vmatmul.mubr.bf16.gmra.mxu0 %v2516
      %v2665 = vpop.f32.mrf.mxu0
      %v2666 = vadd.f32 0.0, %v2665
      %v2667 = vpop.f32.mrf.mxu0
      %v2668 = vpop.f32.mrf.mxu0
      %v2669 = vadd.f32 0.0, %v2668
      %v2670 = vpop.f32.mrf.mxu0
      %2671 = vmatprep.mubr.bf16.mxu0 0
      %2672 = vmatmul.mubr.bf16.gmra.mxu0 %v2519
      %v2673 = vpop.f32.mrf.mxu0
      %v2674 = vadd.f32 0.0, %v2673
      %v2675 = vpop.f32.mrf.mxu0
      %v2676 = vpop.f32.mrf.mxu0
      %v2677 = vadd.f32 0.0, %v2676
      %v2678 = vpop.f32.mrf.mxu0
      %2679 = vmatprep.mubr.bf16.mxu0 0
      %2680 = vmatmul.mubr.bf16.gmra.mxu0 %v2522
      %v2681 = vpop.f32.mrf.mxu0
      %v2682 = vadd.f32 0.0, %v2681
      %v2683 = vpop.f32.mrf.mxu0
      %v2684 = vpop.f32.mrf.mxu0
      %v2685 = vadd.f32 0.0, %v2684
      %v2686 = vpop.f32.mrf.mxu0
      %2687 = vdwg.mxu0
      %v2688 = vadd.f32 %v2330, %v2562
      %v2689 = vadd.f32 %v2331, %v2565
      %v2690 = vadd.f32 %v2332, %v2570
      %v2691 = vadd.f32 %v2333, %v2573
      %v2692 = vadd.f32 %v2334, %v2578
      %v2693 = vadd.f32 %v2335, %v2581
      %v2694 = vadd.f32 %v2336, %v2586
      %v2695 = vadd.f32 %v2337, %v2589
      %v2696 = vadd.f32 %v2338, %v2594
      %v2697 = vadd.f32 %v2339, %v2597
      %v2698 = vadd.f32 %v2340, %v2602
      %v2699 = vadd.f32 %v2341, %v2605
      %v2700 = vadd.f32 %v2342, %v2610
      %v2701 = vadd.f32 %v2343, %v2613
      %v2702 = vadd.f32 %v2344, %v2618
      %v2703 = vadd.f32 %v2345, %v2621
      %v2704 = vadd.f32 %v2346, %v2626
      %v2705 = vadd.f32 %v2347, %v2629
      %v2706 = vadd.f32 %v2348, %v2634
      %v2707 = vadd.f32 %v2349, %v2637
      %v2708 = vadd.f32 %v2350, %v2642
      %v2709 = vadd.f32 %v2351, %v2645
      %v2710 = vadd.f32 %v2352, %v2650
      %v2711 = vadd.f32 %v2353, %v2653
      %v2712 = vadd.f32 %v2354, %v2658
      %v2713 = vadd.f32 %v2355, %v2661
      %v2714 = vadd.f32 %v2356, %v2666
      %v2715 = vadd.f32 %v2357, %v2669
      %v2716 = vadd.f32 %v2358, %v2674
      %v2717 = vadd.f32 %v2359, %v2677
      %v2718 = vadd.f32 %v2360, %v2682
      %v2719 = vadd.f32 %v2361, %v2685
      %v2720 = vld [vmem:[%s343] sm:$0xf]
      %v2721 = vld [vmem:[%s343 + $0x4] sm:$0xf]
      %v2722 = vld [vmem:[%s343 + $0x8] sm:$0x1]
      %v2723 = vld [vmem:[%s343 + $0xc] sm:$0xf]
      %v2724 = vld [vmem:[%s343 + $0x10] sm:$0xf]
      %v2725 = vld [vmem:[%s343 + $0x14] sm:$0x1]
      %v2726 = vld [vmem:[%s343 + $0x18] sm:$0xf]
      %v2727 = vld [vmem:[%s343 + $0x1c] sm:$0xf]
      %v2728 = vld [vmem:[%s343 + $0x20] sm:$0x1]
      %v2729 = vld [vmem:[%s343 + $0x24] sm:$0xf]
      %v2730 = vld [vmem:[%s343 + $0x28] sm:$0xf]
      %v2731 = vld [vmem:[%s343 + $0x2c] sm:$0x1]
      %v2732 = vld [vmem:[%s343 + $0x30] sm:$0xf]
      %v2733 = vld [vmem:[%s343 + $0x34] sm:$0xf]
      %v2734 = vld [vmem:[%s343 + $0x38] sm:$0x1]
      %v2735 = vld [vmem:[%s343 + $0x3c] sm:$0xf]
      %v2736 = vld [vmem:[%s343 + $0x40] sm:$0xf]
      %v2737 = vld [vmem:[%s343 + $0x44] sm:$0x1]
      %v2738 = vld [vmem:[%s343 + $0x48] sm:$0xf]
      %v2739 = vld [vmem:[%s343 + $0x4c] sm:$0xf]
      %v2740 = vld [vmem:[%s343 + $0x50] sm:$0x1]
      %v2741 = vld [vmem:[%s343 + $0x54] sm:$0xf]
      %v2742 = vld [vmem:[%s343 + $0x58] sm:$0xf]
      %v2743 = vld [vmem:[%s343 + $0x5c] sm:$0x1]
      %v2744 = vld [vmem:[%s343 + $0x60] sm:$0xf]
      %v2745 = vld [vmem:[%s343 + $0x64] sm:$0xf]
      %v2746 = vld [vmem:[%s343 + $0x68] sm:$0x1]
      %v2747 = vld [vmem:[%s343 + $0x6c] sm:$0xf]
      %v2748 = vld [vmem:[%s343 + $0x70] sm:$0xf]
      %v2749 = vld [vmem:[%s343 + $0x74] sm:$0x1]
      %v2750 = vld [vmem:[%s343 + $0x78] sm:$0xf]
      %v2751 = vld [vmem:[%s343 + $0x7c] sm:$0xf]
      %v2752 = vld [vmem:[%s343 + $0x80] sm:$0x1]
      %v2753 = vld [vmem:[%s343 + $0x84] sm:$0xf]
      %v2754 = vld [vmem:[%s343 + $0x88] sm:$0xf]
      %v2755 = vld [vmem:[%s343 + $0x8c] sm:$0x1]
      %v2756 = vld [vmem:[%s343 + $0x90] sm:$0xf]
      %v2757 = vld [vmem:[%s343 + $0x94] sm:$0xf]
      %v2758 = vld [vmem:[%s343 + $0x98] sm:$0x1]
      %v2759 = vld [vmem:[%s343 + $0x9c] sm:$0xf]
      %v2760 = vld [vmem:[%s343 + $0xa0] sm:$0xf]
      %v2761 = vld [vmem:[%s343 + $0xa4] sm:$0x1]
      %v2762 = vld [vmem:[%s343 + $0xa8] sm:$0xf]
      %v2763 = vld [vmem:[%s343 + $0xac] sm:$0xf]
      %v2764 = vld [vmem:[%s343 + $0xb0] sm:$0x1]
      %v2765 = vld [vmem:[%s343 + $0xb4] sm:$0xf]
      %v2766 = vld [vmem:[%s343 + $0xb8] sm:$0xf]
      %v2767 = vld [vmem:[%s343 + $0xbc] sm:$0x1]
      %v2769 = vshrl.u32 %v2720, 16
      %v2771 = vrot.slane %v2769, 4
      %v2772 = vshll.u32 %v2720, 16
      %v2774 = vrot.slane %v2772, 5
      %v2775 = vor.u32 %v2771, %v2774
      %v2776 = vrot.slane %v2775, 4
      %v2778 = vshll.u32 %v2721, 16
      %v2780 = vrot.slane %v2778, 5
      %v2781 = vsel %vm964, %v2776, %v2780
      %v2782 = vshrl.u32 %v2721, 16
      %v2784 = vrot.slane %v2782, 4
      %v2785 = vor.u32 %v2784, %v2780
      %v2786 = vrot.slane %v2785, 4
      %v2788 = vshll.u32 %v2722, 16
      %v2790 = vrot.slane %v2788, 5
      %v2791 = vsel %vm964, %v2786, %v2790
      %v2793 = vshrl.u32 %v2723, 16
      %v2795 = vrot.slane %v2793, 4
      %v2796 = vshll.u32 %v2723, 16
      %v2798 = vrot.slane %v2796, 5
      %v2799 = vor.u32 %v2795, %v2798
      %v2800 = vrot.slane %v2799, 4
      %v2802 = vshll.u32 %v2724, 16
      %v2804 = vrot.slane %v2802, 5
      %v2805 = vsel %vm964, %v2800, %v2804
      %v2806 = vshrl.u32 %v2724, 16
      %v2808 = vrot.slane %v2806, 4
      %v2809 = vor.u32 %v2808, %v2804
      %v2810 = vrot.slane %v2809, 4
      %v2812 = vshll.u32 %v2725, 16
      %v2814 = vrot.slane %v2812, 5
      %v2815 = vsel %vm964, %v2810, %v2814
      %v2817 = vshrl.u32 %v2726, 16
      %v2819 = vrot.slane %v2817, 4
      %v2820 = vshll.u32 %v2726, 16
      %v2822 = vrot.slane %v2820, 5
      %v2823 = vor.u32 %v2819, %v2822
      %v2824 = vrot.slane %v2823, 4
      %v2826 = vshll.u32 %v2727, 16
      %v2828 = vrot.slane %v2826, 5
      %v2829 = vsel %vm964, %v2824, %v2828
      %v2830 = vshrl.u32 %v2727, 16
      %v2832 = vrot.slane %v2830, 4
      %v2833 = vor.u32 %v2832, %v2828
      %v2834 = vrot.slane %v2833, 4
      %v2836 = vshll.u32 %v2728, 16
      %v2838 = vrot.slane %v2836, 5
      %v2839 = vsel %vm964, %v2834, %v2838
      %v2841 = vshrl.u32 %v2729, 16
      %v2843 = vrot.slane %v2841, 4
      %v2844 = vshll.u32 %v2729, 16
      %v2846 = vrot.slane %v2844, 5
      %v2847 = vor.u32 %v2843, %v2846
      %v2848 = vrot.slane %v2847, 4
      %v2850 = vshll.u32 %v2730, 16
      %v2852 = vrot.slane %v2850, 5
      %v2853 = vsel %vm964, %v2848, %v2852
      %v2854 = vshrl.u32 %v2730, 16
      %v2856 = vrot.slane %v2854, 4
      %v2857 = vor.u32 %v2856, %v2852
      %v2858 = vrot.slane %v2857, 4
      %v2860 = vshll.u32 %v2731, 16
      %v2862 = vrot.slane %v2860, 5
      %v2863 = vsel %vm964, %v2858, %v2862
      %v2865 = vshrl.u32 %v2732, 16
      %v2867 = vrot.slane %v2865, 4
      %v2868 = vshll.u32 %v2732, 16
      %v2870 = vrot.slane %v2868, 5
      %v2871 = vor.u32 %v2867, %v2870
      %v2872 = vrot.slane %v2871, 4
      %v2874 = vshll.u32 %v2733, 16
      %v2876 = vrot.slane %v2874, 5
      %v2877 = vsel %vm964, %v2872, %v2876
      %v2878 = vshrl.u32 %v2733, 16
      %v2880 = vrot.slane %v2878, 4
      %v2881 = vor.u32 %v2880, %v2876
      %v2882 = vrot.slane %v2881, 4
      %v2884 = vshll.u32 %v2734, 16
      %v2886 = vrot.slane %v2884, 5
      %v2887 = vsel %vm964, %v2882, %v2886
      %v2889 = vshrl.u32 %v2735, 16
      %v2891 = vrot.slane %v2889, 4
      %v2892 = vshll.u32 %v2735, 16
      %v2894 = vrot.slane %v2892, 5
      %v2895 = vor.u32 %v2891, %v2894
      %v2896 = vrot.slane %v2895, 4
      %v2898 = vshll.u32 %v2736, 16
      %v2900 = vrot.slane %v2898, 5
      %v2901 = vsel %vm964, %v2896, %v2900
      %v2902 = vshrl.u32 %v2736, 16
      %v2904 = vrot.slane %v2902, 4
      %v2905 = vor.u32 %v2904, %v2900
      %v2906 = vrot.slane %v2905, 4
      %v2908 = vshll.u32 %v2737, 16
      %v2910 = vrot.slane %v2908, 5
      %v2911 = vsel %vm964, %v2906, %v2910
      %v2913 = vshrl.u32 %v2738, 16
      %v2915 = vrot.slane %v2913, 4
      %v2916 = vshll.u32 %v2738, 16
      %v2918 = vrot.slane %v2916, 5
      %v2919 = vor.u32 %v2915, %v2918
      %v2920 = vrot.slane %v2919, 4
      %v2922 = vshll.u32 %v2739, 16
      %v2924 = vrot.slane %v2922, 5
      %v2925 = vsel %vm964, %v2920, %v2924
      %v2926 = vshrl.u32 %v2739, 16
      %v2928 = vrot.slane %v2926, 4
      %v2929 = vor.u32 %v2928, %v2924
      %v2930 = vrot.slane %v2929, 4
      %v2932 = vshll.u32 %v2740, 16
      %v2934 = vrot.slane %v2932, 5
      %v2935 = vsel %vm964, %v2930, %v2934
      %v2937 = vshrl.u32 %v2741, 16
      %v2939 = vrot.slane %v2937, 4
      %v2940 = vshll.u32 %v2741, 16
      %v2942 = vrot.slane %v2940, 5
      %v2943 = vor.u32 %v2939, %v2942
      %v2944 = vrot.slane %v2943, 4
      %v2946 = vshll.u32 %v2742, 16
      %v2948 = vrot.slane %v2946, 5
      %v2949 = vsel %vm964, %v2944, %v2948
      %v2950 = vshrl.u32 %v2742, 16
      %v2952 = vrot.slane %v2950, 4
      %v2953 = vor.u32 %v2952, %v2948
      %v2954 = vrot.slane %v2953, 4
      %v2956 = vshll.u32 %v2743, 16
      %v2958 = vrot.slane %v2956, 5
      %v2959 = vsel %vm964, %v2954, %v2958
      %v2961 = vshrl.u32 %v2744, 16
      %v2963 = vrot.slane %v2961, 4
      %v2964 = vshll.u32 %v2744, 16
      %v2966 = vrot.slane %v2964, 5
      %v2967 = vor.u32 %v2963, %v2966
      %v2968 = vrot.slane %v2967, 4
      %v2970 = vshll.u32 %v2745, 16
      %v2972 = vrot.slane %v2970, 5
      %v2973 = vsel %vm964, %v2968, %v2972
      %v2974 = vshrl.u32 %v2745, 16
      %v2976 = vrot.slane %v2974, 4
      %v2977 = vor.u32 %v2976, %v2972
      %v2978 = vrot.slane %v2977, 4
      %v2980 = vshll.u32 %v2746, 16
      %v2982 = vrot.slane %v2980, 5
      %v2983 = vsel %vm964, %v2978, %v2982
      %v2985 = vshrl.u32 %v2747, 16
      %v2987 = vrot.slane %v2985, 4
      %v2988 = vshll.u32 %v2747, 16
      %v2990 = vrot.slane %v2988, 5
      %v2991 = vor.u32 %v2987, %v2990
      %v2992 = vrot.slane %v2991, 4
      %v2994 = vshll.u32 %v2748, 16
      %v2996 = vrot.slane %v2994, 5
      %v2997 = vsel %vm964, %v2992, %v2996
      %v2998 = vshrl.u32 %v2748, 16
      %v3000 = vrot.slane %v2998, 4
      %v3001 = vor.u32 %v3000, %v2996
      %v3002 = vrot.slane %v3001, 4
      %v3004 = vshll.u32 %v2749, 16
      %v3006 = vrot.slane %v3004, 5
      %v3007 = vsel %vm964, %v3002, %v3006
      %v3009 = vshrl.u32 %v2750, 16
      %v3011 = vrot.slane %v3009, 4
      %v3012 = vshll.u32 %v2750, 16
      %v3014 = vrot.slane %v3012, 5
      %v3015 = vor.u32 %v3011, %v3014
      %v3016 = vrot.slane %v3015, 4
      %v3018 = vshll.u32 %v2751, 16
      %v3020 = vrot.slane %v3018, 5
      %v3021 = vsel %vm964, %v3016, %v3020
      %v3022 = vshrl.u32 %v2751, 16
      %v3024 = vrot.slane %v3022, 4
      %v3025 = vor.u32 %v3024, %v3020
      %v3026 = vrot.slane %v3025, 4
      %v3028 = vshll.u32 %v2752, 16
      %v3030 = vrot.slane %v3028, 5
      %v3031 = vsel %vm964, %v3026, %v3030
      %v3033 = vshrl.u32 %v2753, 16
      %v3035 = vrot.slane %v3033, 4
      %v3036 = vshll.u32 %v2753, 16
      %v3038 = vrot.slane %v3036, 5
      %v3039 = vor.u32 %v3035, %v3038
      %v3040 = vrot.slane %v3039, 4
      %v3042 = vshll.u32 %v2754, 16
      %v3044 = vrot.slane %v3042, 5
      %v3045 = vsel %vm964, %v3040, %v3044
      %v3046 = vshrl.u32 %v2754, 16
      %v3048 = vrot.slane %v3046, 4
      %v3049 = vor.u32 %v3048, %v3044
      %v3050 = vrot.slane %v3049, 4
      %v3052 = vshll.u32 %v2755, 16
      %v3054 = vrot.slane %v3052, 5
      %v3055 = vsel %vm964, %v3050, %v3054
      %v3057 = vshrl.u32 %v2756, 16
      %v3059 = vrot.slane %v3057, 4
      %v3060 = vshll.u32 %v2756, 16
      %v3062 = vrot.slane %v3060, 5
      %v3063 = vor.u32 %v3059, %v3062
      %v3064 = vrot.slane %v3063, 4
      %v3066 = vshll.u32 %v2757, 16
      %v3068 = vrot.slane %v3066, 5
      %v3069 = vsel %vm964, %v3064, %v3068
      %v3070 = vshrl.u32 %v2757, 16
      %v3072 = vrot.slane %v3070, 4
      %v3073 = vor.u32 %v3072, %v3068
      %v3074 = vrot.slane %v3073, 4
      %v3076 = vshll.u32 %v2758, 16
      %v3078 = vrot.slane %v3076, 5
      %v3079 = vsel %vm964, %v3074, %v3078
      %v3081 = vshrl.u32 %v2759, 16
      %v3083 = vrot.slane %v3081, 4
      %v3084 = vshll.u32 %v2759, 16
      %v3086 = vrot.slane %v3084, 5
      %v3087 = vor.u32 %v3083, %v3086
      %v3088 = vrot.slane %v3087, 4
      %v3090 = vshll.u32 %v2760, 16
      %v3092 = vrot.slane %v3090, 5
      %v3093 = vsel %vm964, %v3088, %v3092
      %v3094 = vshrl.u32 %v2760, 16
      %v3096 = vrot.slane %v3094, 4
      %v3097 = vor.u32 %v3096, %v3092
      %v3098 = vrot.slane %v3097, 4
      %v3100 = vshll.u32 %v2761, 16
      %v3102 = vrot.slane %v3100, 5
      %v3103 = vsel %vm964, %v3098, %v3102
      %v3105 = vshrl.u32 %v2762, 16
      %v3107 = vrot.slane %v3105, 4
      %v3108 = vshll.u32 %v2762, 16
      %v3110 = vrot.slane %v3108, 5
      %v3111 = vor.u32 %v3107, %v3110
      %v3112 = vrot.slane %v3111, 4
      %v3114 = vshll.u32 %v2763, 16
      %v3116 = vrot.slane %v3114, 5
      %v3117 = vsel %vm964, %v3112, %v3116
      %v3118 = vshrl.u32 %v2763, 16
      %v3120 = vrot.slane %v3118, 4
      %v3121 = vor.u32 %v3120, %v3116
      %v3122 = vrot.slane %v3121, 4
      %v3124 = vshll.u32 %v2764, 16
      %v3126 = vrot.slane %v3124, 5
      %v3127 = vsel %vm964, %v3122, %v3126
      %v3129 = vshrl.u32 %v2765, 16
      %v3131 = vrot.slane %v3129, 4
      %v3132 = vshll.u32 %v2765, 16
      %v3134 = vrot.slane %v3132, 5
      %v3135 = vor.u32 %v3131, %v3134
      %v3136 = vrot.slane %v3135, 4
      %v3138 = vshll.u32 %v2766, 16
      %v3140 = vrot.slane %v3138, 5
      %v3141 = vsel %vm964, %v3136, %v3140
      %v3142 = vshrl.u32 %v2766, 16
      %v3144 = vrot.slane %v3142, 4
      %v3145 = vor.u32 %v3144, %v3140
      %v3146 = vrot.slane %v3145, 4
      %v3148 = vshll.u32 %v2767, 16
      %v3150 = vrot.slane %v3148, 5
      %v3151 = vsel %vm964, %v3146, %v3150
      %s3152 = scalar_lea.vmem %s1, 8
      %v3153 = vld [vmem:[%s3152] sm:$0x3]
      %v3154 = vunpack.c.l.b16 %v2781
      %v3155 = vunpack.c.l.b16 %v2791
      %v3156 = vunpack.c.l.b16 %v2805
      %v3157 = vunpack.c.l.b16 %v2815
      %v3158 = vunpack.c.l.b16 %v2829
      %v3159 = vunpack.c.l.b16 %v2839
      %v3160 = vunpack.c.l.b16 %v2853
      %v3161 = vunpack.c.l.b16 %v2863
      %v3162 = vunpack.c.l.b16 %v2877
      %v3163 = vunpack.c.l.b16 %v2887
      %v3164 = vunpack.c.l.b16 %v2901
      %v3165 = vunpack.c.l.b16 %v2911
      %v3166 = vunpack.c.l.b16 %v2925
      %v3167 = vunpack.c.l.b16 %v2935
      %v3168 = vunpack.c.l.b16 %v2949
      %v3169 = vunpack.c.l.b16 %v2959
      %v3170 = vunpack.c.l.b16 %v2973
      %v3171 = vunpack.c.l.b16 %v2983
      %v3172 = vunpack.c.l.b16 %v2997
      %v3173 = vunpack.c.l.b16 %v3007
      %v3174 = vunpack.c.l.b16 %v3021
      %v3175 = vunpack.c.l.b16 %v3031
      %v3176 = vunpack.c.l.b16 %v3045
      %v3177 = vunpack.c.l.b16 %v3055
      %v3178 = vunpack.c.l.b16 %v3069
      %v3179 = vunpack.c.l.b16 %v3079
      %v3180 = vunpack.c.l.b16 %v3093
      %v3181 = vunpack.c.l.b16 %v3103
      %v3182 = vunpack.c.l.b16 %v3117
      %v3183 = vunpack.c.l.b16 %v3127
      %v3184 = vunpack.c.l.b16 %v3141
      %v3185 = vunpack.c.l.b16 %v3151
      %v3186 = vpack.c.b16 %v3155, %v3154
      %v3187 = vpack.c.b16 %v3157, %v3156
      %v3188 = vpack.c.b16 %v3159, %v3158
      %v3189 = vpack.c.b16 %v3161, %v3160
      %v3190 = vpack.c.b16 %v3163, %v3162
      %v3191 = vpack.c.b16 %v3165, %v3164
      %v3192 = vpack.c.b16 %v3167, %v3166
      %v3193 = vpack.c.b16 %v3169, %v3168
      %v3194 = vpack.c.b16 %v3171, %v3170
      %v3195 = vpack.c.b16 %v3173, %v3172
      %v3196 = vpack.c.b16 %v3175, %v3174
      %v3197 = vpack.c.b16 %v3177, %v3176
      %v3198 = vpack.c.b16 %v3179, %v3178
      %v3199 = vpack.c.b16 %v3181, %v3180
      %v3200 = vpack.c.b16 %v3183, %v3182
      %v3201 = vpack.c.b16 %v3185, %v3184
      %v3203 = vsel %vm1399, %v3186, 0
      %v3206 = vsel %vm1399, %v3187, 0
      %v3209 = vsel %vm1399, %v3188, 0
      %v3212 = vsel %vm1399, %v3189, 0
      %v3215 = vsel %vm1399, %v3190, 0
      %v3218 = vsel %vm1399, %v3191, 0
      %v3221 = vsel %vm1399, %v3192, 0
      %v3224 = vsel %vm1399, %v3193, 0
      %v3227 = vsel %vm1399, %v3194, 0
      %v3230 = vsel %vm1399, %v3195, 0
      %v3233 = vsel %vm1399, %v3196, 0
      %v3236 = vsel %vm1399, %v3197, 0
      %v3239 = vsel %vm1399, %v3198, 0
      %v3242 = vsel %vm1399, %v3199, 0
      %v3245 = vsel %vm1399, %v3200, 0
      %v3248 = vsel %vm1399, %v3201, 0
      %v3251 = vsel %vm1448, %v3153, 0
      %3253 = vmatprep.subr.bf16.mxu0 0
      %3254 = vmatpush1.bf16.msra.mxu0 0
      %3255 = vmatprep.subr.bf16.mxu0 0
      %3256 = vmatpush1.bf16.msra.mxu0 0
      %3257 = vmatprep.subr.bf16.mxu0 0
      %3258 = vmatpush1.bf16.msra.mxu0 0
      %3259 = vmatprep.subr.bf16.mxu0 0
      %3260 = vmatpush1.bf16.msra.mxu0 0
      %3261 = vmatprep.subr.bf16.mxu0 0
      %3262 = vmatpush1.bf16.msra.mxu0 0
      %3263 = vmatprep.subr.bf16.mxu0 0
      %3264 = vmatpush1.bf16.msra.mxu0 0
      %3265 = vmatprep.subr.bf16.mxu0 0
      %3266 = vmatpush1.bf16.msra.mxu0 0
      %3267 = vmatprep.subr.bf16.mxu0 0
      %3268 = vmatpush1.bf16.msra.mxu0 %v3251
      %3269 = vmatprep.subr.bf16.mxu0 0
      %3270 = vmatpush2.bf16.msra.mxu0 0
      %3271 = vmatprep.subr.bf16.mxu0 0
      %3272 = vmatpush2.bf16.msra.mxu0 0
      %3273 = vmatprep.subr.bf16.mxu0 0
      %3274 = vmatpush2.bf16.msra.mxu0 0
      %3275 = vmatprep.subr.bf16.mxu0 0
      %3276 = vmatpush2.bf16.msra.mxu0 0
      %3277 = vmatprep.subr.bf16.mxu0 0
      %3278 = vmatpush2.bf16.msra.mxu0 0
      %3279 = vmatprep.subr.bf16.mxu0 0
      %3280 = vmatpush2.bf16.msra.mxu0 0
      %3281 = vmatprep.subr.bf16.mxu0 0
      %3282 = vmatpush2.bf16.msra.mxu0 0
      %3283 = vmatprep.subr.bf16.mxu0 0
      %3284 = vmatpush2.bf16.msra.mxu0 0
      %3285 = vmatprep.mubr.bf16.mxu0 0
      %3286 = vmatmul.mubr.bf16.gmra.mxu0 %v3203
      %v3287 = vpop.f32.mrf.mxu0
      %v3288 = vadd.f32 0.0, %v3287
      %v3289 = vpop.f32.mrf.mxu0
      %v3290 = vpop.f32.mrf.mxu0
      %v3291 = vadd.f32 0.0, %v3290
      %v3292 = vpop.f32.mrf.mxu0
      %3293 = vmatprep.mubr.bf16.mxu0 0
      %3294 = vmatmul.mubr.bf16.gmra.mxu0 %v3206
      %v3295 = vpop.f32.mrf.mxu0
      %v3296 = vadd.f32 0.0, %v3295
      %v3297 = vpop.f32.mrf.mxu0
      %v3298 = vpop.f32.mrf.mxu0
      %v3299 = vadd.f32 0.0, %v3298
      %v3300 = vpop.f32.mrf.mxu0
      %3301 = vmatprep.mubr.bf16.mxu0 0
      %3302 = vmatmul.mubr.bf16.gmra.mxu0 %v3209
      %v3303 = vpop.f32.mrf.mxu0
      %v3304 = vadd.f32 0.0, %v3303
      %v3305 = vpop.f32.mrf.mxu0
      %v3306 = vpop.f32.mrf.mxu0
      %v3307 = vadd.f32 0.0, %v3306
      %v3308 = vpop.f32.mrf.mxu0
      %3309 = vmatprep.mubr.bf16.mxu0 0
      %3310 = vmatmul.mubr.bf16.gmra.mxu0 %v3212
      %v3311 = vpop.f32.mrf.mxu0
      %v3312 = vadd.f32 0.0, %v3311
      %v3313 = vpop.f32.mrf.mxu0
      %v3314 = vpop.f32.mrf.mxu0
      %v3315 = vadd.f32 0.0, %v3314
      %v3316 = vpop.f32.mrf.mxu0
      %3317 = vmatprep.mubr.bf16.mxu0 0
      %3318 = vmatmul.mubr.bf16.gmra.mxu0 %v3215
      %v3319 = vpop.f32.mrf.mxu0
      %v3320 = vadd.f32 0.0, %v3319
      %v3321 = vpop.f32.mrf.mxu0
      %v3322 = vpop.f32.mrf.mxu0
      %v3323 = vadd.f32 0.0, %v3322
      %v3324 = vpop.f32.mrf.mxu0
      %3325 = vmatprep.mubr.bf16.mxu0 0
      %3326 = vmatmul.mubr.bf16.gmra.mxu0 %v3218
      %v3327 = vpop.f32.mrf.mxu0
      %v3328 = vadd.f32 0.0, %v3327
      %v3329 = vpop.f32.mrf.mxu0
      %v3330 = vpop.f32.mrf.mxu0
      %v3331 = vadd.f32 0.0, %v3330
      %v3332 = vpop.f32.mrf.mxu0
      %3333 = vmatprep.mubr.bf16.mxu0 0
      %3334 = vmatmul.mubr.bf16.gmra.mxu0 %v3221
      %v3335 = vpop.f32.mrf.mxu0
      %v3336 = vadd.f32 0.0, %v3335
      %v3337 = vpop.f32.mrf.mxu0
      %v3338 = vpop.f32.mrf.mxu0
      %v3339 = vadd.f32 0.0, %v3338
      %v3340 = vpop.f32.mrf.mxu0
      %3341 = vmatprep.mubr.bf16.mxu0 0
      %3342 = vmatmul.mubr.bf16.gmra.mxu0 %v3224
      %v3343 = vpop.f32.mrf.mxu0
      %v3344 = vadd.f32 0.0, %v3343
      %v3345 = vpop.f32.mrf.mxu0
      %v3346 = vpop.f32.mrf.mxu0
      %v3347 = vadd.f32 0.0, %v3346
      %v3348 = vpop.f32.mrf.mxu0
      %3349 = vmatprep.mubr.bf16.mxu0 0
      %3350 = vmatmul.mubr.bf16.gmra.mxu0 %v3227
      %v3351 = vpop.f32.mrf.mxu0
      %v3352 = vadd.f32 0.0, %v3351
      %v3353 = vpop.f32.mrf.mxu0
      %v3354 = vpop.f32.mrf.mxu0
      %v3355 = vadd.f32 0.0, %v3354
      %v3356 = vpop.f32.mrf.mxu0
      %3357 = vmatprep.mubr.bf16.mxu0 0
      %3358 = vmatmul.mubr.bf16.gmra.mxu0 %v3230
      %v3359 = vpop.f32.mrf.mxu0
      %v3360 = vadd.f32 0.0, %v3359
      %v3361 = vpop.f32.mrf.mxu0
      %v3362 = vpop.f32.mrf.mxu0
      %v3363 = vadd.f32 0.0, %v3362
      %v3364 = vpop.f32.mrf.mxu0
      %3365 = vmatprep.mubr.bf16.mxu0 0
      %3366 = vmatmul.mubr.bf16.gmra.mxu0 %v3233
      %v3367 = vpop.f32.mrf.mxu0
      %v3368 = vadd.f32 0.0, %v3367
      %v3369 = vpop.f32.mrf.mxu0
      %v3370 = vpop.f32.mrf.mxu0
      %v3371 = vadd.f32 0.0, %v3370
      %v3372 = vpop.f32.mrf.mxu0
      %3373 = vmatprep.mubr.bf16.mxu0 0
      %3374 = vmatmul.mubr.bf16.gmra.mxu0 %v3236
      %v3375 = vpop.f32.mrf.mxu0
      %v3376 = vadd.f32 0.0, %v3375
      %v3377 = vpop.f32.mrf.mxu0
      %v3378 = vpop.f32.mrf.mxu0
      %v3379 = vadd.f32 0.0, %v3378
      %v3380 = vpop.f32.mrf.mxu0
      %3381 = vmatprep.mubr.bf16.mxu0 0
      %3382 = vmatmul.mubr.bf16.gmra.mxu0 %v3239
      %v3383 = vpop.f32.mrf.mxu0
      %v3384 = vadd.f32 0.0, %v3383
      %v3385 = vpop.f32.mrf.mxu0
      %v3386 = vpop.f32.mrf.mxu0
      %v3387 = vadd.f32 0.0, %v3386
      %v3388 = vpop.f32.mrf.mxu0
      %3389 = vmatprep.mubr.bf16.mxu0 0
      %3390 = vmatmul.mubr.bf16.gmra.mxu0 %v3242
      %v3391 = vpop.f32.mrf.mxu0
      %v3392 = vadd.f32 0.0, %v3391
      %v3393 = vpop.f32.mrf.mxu0
      %v3394 = vpop.f32.mrf.mxu0
      %v3395 = vadd.f32 0.0, %v3394
      %v3396 = vpop.f32.mrf.mxu0
      %3397 = vmatprep.mubr.bf16.mxu0 0
      %3398 = vmatmul.mubr.bf16.gmra.mxu0 %v3245
      %v3399 = vpop.f32.mrf.mxu0
      %v3400 = vadd.f32 0.0, %v3399
      %v3401 = vpop.f32.mrf.mxu0
      %v3402 = vpop.f32.mrf.mxu0
      %v3403 = vadd.f32 0.0, %v3402
      %v3404 = vpop.f32.mrf.mxu0
      %3405 = vmatprep.mubr.bf16.mxu0 0
      %3406 = vmatmul.mubr.bf16.gmra.mxu0 %v3248
      %v3407 = vpop.f32.mrf.mxu0
      %v3408 = vadd.f32 0.0, %v3407
      %v3409 = vpop.f32.mrf.mxu0
      %v3410 = vpop.f32.mrf.mxu0
      %v3411 = vadd.f32 0.0, %v3410
      %v3412 = vpop.f32.mrf.mxu0
      %3413 = vdwg.mxu0
      %v3414 = vadd.f32 %v2688, %v3288
      %v3415 = vadd.f32 %v2689, %v3291
      %v3416 = vadd.f32 %v2690, %v3296
      %v3417 = vadd.f32 %v2691, %v3299
      %v3418 = vadd.f32 %v2692, %v3304
      %v3419 = vadd.f32 %v2693, %v3307
      %v3420 = vadd.f32 %v2694, %v3312
      %v3421 = vadd.f32 %v2695, %v3315
      %v3422 = vadd.f32 %v2696, %v3320
      %v3423 = vadd.f32 %v2697, %v3323
      %v3424 = vadd.f32 %v2698, %v3328
      %v3425 = vadd.f32 %v2699, %v3331
      %v3426 = vadd.f32 %v2700, %v3336
      %v3427 = vadd.f32 %v2701, %v3339
      %v3428 = vadd.f32 %v2702, %v3344
      %v3429 = vadd.f32 %v2703, %v3347
      %v3430 = vadd.f32 %v2704, %v3352
      %v3431 = vadd.f32 %v2705, %v3355
      %v3432 = vadd.f32 %v2706, %v3360
      %v3433 = vadd.f32 %v2707, %v3363
      %v3434 = vadd.f32 %v2708, %v3368
      %v3435 = vadd.f32 %v2709, %v3371
      %v3436 = vadd.f32 %v2710, %v3376
      %v3437 = vadd.f32 %v2711, %v3379
      %v3438 = vadd.f32 %v2712, %v3384
      %v3439 = vadd.f32 %v2713, %v3387
      %v3440 = vadd.f32 %v2714, %v3392
      %v3441 = vadd.f32 %v2715, %v3395
      %v3442 = vadd.f32 %v2716, %v3400
      %v3443 = vadd.f32 %v2717, %v3403
      %v3444 = vadd.f32 %v2718, %v3408
      %v3445 = vadd.f32 %v2719, %v3411
      %v3446 = vld [vmem:[%s343] sm:$0xe]
      %v3447 = vld [vmem:[%s343 + $0xc] sm:$0xe]
      %v3448 = vld [vmem:[%s343 + $0x18] sm:$0xe]
      %v3449 = vld [vmem:[%s343 + $0x24] sm:$0xe]
      %v3450 = vld [vmem:[%s343 + $0x30] sm:$0xe]
      %v3451 = vld [vmem:[%s343 + $0x3c] sm:$0xe]
      %v3452 = vld [vmem:[%s343 + $0x48] sm:$0xe]
      %v3453 = vld [vmem:[%s343 + $0x54] sm:$0xe]
      %v3454 = vld [vmem:[%s343 + $0x60] sm:$0xe]
      %v3455 = vld [vmem:[%s343 + $0x6c] sm:$0xe]
      %v3456 = vld [vmem:[%s343 + $0x78] sm:$0xe]
      %v3457 = vld [vmem:[%s343 + $0x84] sm:$0xe]
      %v3458 = vld [vmem:[%s343 + $0x90] sm:$0xe]
      %v3459 = vld [vmem:[%s343 + $0x9c] sm:$0xe]
      %v3460 = vld [vmem:[%s343 + $0xa8] sm:$0xe]
      %v3461 = vld [vmem:[%s343 + $0xb4] sm:$0xe]
      %v3510 = vrot.slane %v3446, 5
      %v3511 = vrot.slane %v3510, 4
      %v3512 = vrot.slane %v2721, 5
      %v3513 = vsel %vm1955, %v3511, %v3512
      %v3514 = vrot.slane %v3512, 4
      %v3515 = vrot.slane %v2722, 5
      %v3516 = vsel %vm1955, %v3514, %v3515
      %v3517 = vrot.slane %v3447, 5
      %v3518 = vrot.slane %v3517, 4
      %v3519 = vrot.slane %v2724, 5
      %v3520 = vsel %vm1955, %v3518, %v3519
      %v3521 = vrot.slane %v3519, 4
      %v3522 = vrot.slane %v2725, 5
      %v3523 = vsel %vm1955, %v3521, %v3522
      %v3524 = vrot.slane %v3448, 5
      %v3525 = vrot.slane %v3524, 4
      %v3526 = vrot.slane %v2727, 5
      %v3527 = vsel %vm1955, %v3525, %v3526
      %v3528 = vrot.slane %v3526, 4
      %v3529 = vrot.slane %v2728, 5
      %v3530 = vsel %vm1955, %v3528, %v3529
      %v3531 = vrot.slane %v3449, 5
      %v3532 = vrot.slane %v3531, 4
      %v3533 = vrot.slane %v2730, 5
      %v3534 = vsel %vm1955, %v3532, %v3533
      %v3535 = vrot.slane %v3533, 4
      %v3536 = vrot.slane %v2731, 5
      %v3537 = vsel %vm1955, %v3535, %v3536
      %v3538 = vrot.slane %v3450, 5
      %v3539 = vrot.slane %v3538, 4
      %v3540 = vrot.slane %v2733, 5
      %v3541 = vsel %vm1955, %v3539, %v3540
      %v3542 = vrot.slane %v3540, 4
      %v3543 = vrot.slane %v2734, 5
      %v3544 = vsel %vm1955, %v3542, %v3543
      %v3545 = vrot.slane %v3451, 5
      %v3546 = vrot.slane %v3545, 4
      %v3547 = vrot.slane %v2736, 5
      %v3548 = vsel %vm1955, %v3546, %v3547
      %v3549 = vrot.slane %v3547, 4
      %v3550 = vrot.slane %v2737, 5
      %v3551 = vsel %vm1955, %v3549, %v3550
      %v3552 = vrot.slane %v3452, 5
      %v3553 = vrot.slane %v3552, 4
      %v3554 = vrot.slane %v2739, 5
      %v3555 = vsel %vm1955, %v3553, %v3554
      %v3556 = vrot.slane %v3554, 4
      %v3557 = vrot.slane %v2740, 5
      %v3558 = vsel %vm1955, %v3556, %v3557
      %v3559 = vrot.slane %v3453, 5
      %v3560 = vrot.slane %v3559, 4
      %v3561 = vrot.slane %v2742, 5
      %v3562 = vsel %vm1955, %v3560, %v3561
      %v3563 = vrot.slane %v3561, 4
      %v3564 = vrot.slane %v2743, 5
      %v3565 = vsel %vm1955, %v3563, %v3564
      %v3566 = vrot.slane %v3454, 5
      %v3567 = vrot.slane %v3566, 4
      %v3568 = vrot.slane %v2745, 5
      %v3569 = vsel %vm1955, %v3567, %v3568
      %v3570 = vrot.slane %v3568, 4
      %v3571 = vrot.slane %v2746, 5
      %v3572 = vsel %vm1955, %v3570, %v3571
      %v3573 = vrot.slane %v3455, 5
      %v3574 = vrot.slane %v3573, 4
      %v3575 = vrot.slane %v2748, 5
      %v3576 = vsel %vm1955, %v3574, %v3575
      %v3577 = vrot.slane %v3575, 4
      %v3578 = vrot.slane %v2749, 5
      %v3579 = vsel %vm1955, %v3577, %v3578
      %v3580 = vrot.slane %v3456, 5
      %v3581 = vrot.slane %v3580, 4
      %v3582 = vrot.slane %v2751, 5
      %v3583 = vsel %vm1955, %v3581, %v3582
      %v3584 = vrot.slane %v3582, 4
      %v3585 = vrot.slane %v2752, 5
      %v3586 = vsel %vm1955, %v3584, %v3585
      %v3587 = vrot.slane %v3457, 5
      %v3588 = vrot.slane %v3587, 4
      %v3589 = vrot.slane %v2754, 5
      %v3590 = vsel %vm1955, %v3588, %v3589
      %v3591 = vrot.slane %v3589, 4
      %v3592 = vrot.slane %v2755, 5
      %v3593 = vsel %vm1955, %v3591, %v3592
      %v3594 = vrot.slane %v3458, 5
      %v3595 = vrot.slane %v3594, 4
      %v3596 = vrot.slane %v2757, 5
      %v3597 = vsel %vm1955, %v3595, %v3596
      %v3598 = vrot.slane %v3596, 4
      %v3599 = vrot.slane %v2758, 5
      %v3600 = vsel %vm1955, %v3598, %v3599
      %v3601 = vrot.slane %v3459, 5
      %v3602 = vrot.slane %v3601, 4
      %v3603 = vrot.slane %v2760, 5
      %v3604 = vsel %vm1955, %v3602, %v3603
      %v3605 = vrot.slane %v3603, 4
      %v3606 = vrot.slane %v2761, 5
      %v3607 = vsel %vm1955, %v3605, %v3606
      %v3608 = vrot.slane %v3460, 5
      %v3609 = vrot.slane %v3608, 4
      %v3610 = vrot.slane %v2763, 5
      %v3611 = vsel %vm1955, %v3609, %v3610
      %v3612 = vrot.slane %v3610, 4
      %v3613 = vrot.slane %v2764, 5
      %v3614 = vsel %vm1955, %v3612, %v3613
      %v3615 = vrot.slane %v3461, 5
      %v3616 = vrot.slane %v3615, 4
      %v3617 = vrot.slane %v2766, 5
      %v3618 = vsel %vm1955, %v3616, %v3617
      %v3619 = vrot.slane %v3617, 4
      %v3620 = vrot.slane %v2767, 5
      %v3621 = vsel %vm1955, %v3619, %v3620
      %s3622 = scalar_lea.vmem %s1, 10
      %v3623 = vld [vmem:[%s3622] sm:$0x3]
      %v3624 = vunpack.c.l.b16 %v3513
      %v3625 = vunpack.c.l.b16 %v3516
      %v3626 = vunpack.c.l.b16 %v3520
      %v3627 = vunpack.c.l.b16 %v3523
      %v3628 = vunpack.c.l.b16 %v3527
      %v3629 = vunpack.c.l.b16 %v3530
      %v3630 = vunpack.c.l.b16 %v3534
      %v3631 = vunpack.c.l.b16 %v3537
      %v3632 = vunpack.c.l.b16 %v3541
      %v3633 = vunpack.c.l.b16 %v3544
      %v3634 = vunpack.c.l.b16 %v3548
      %v3635 = vunpack.c.l.b16 %v3551
      %v3636 = vunpack.c.l.b16 %v3555
      %v3637 = vunpack.c.l.b16 %v3558
      %v3638 = vunpack.c.l.b16 %v3562
      %v3639 = vunpack.c.l.b16 %v3565
      %v3640 = vunpack.c.l.b16 %v3569
      %v3641 = vunpack.c.l.b16 %v3572
      %v3642 = vunpack.c.l.b16 %v3576
      %v3643 = vunpack.c.l.b16 %v3579
      %v3644 = vunpack.c.l.b16 %v3583
      %v3645 = vunpack.c.l.b16 %v3586
      %v3646 = vunpack.c.l.b16 %v3590
      %v3647 = vunpack.c.l.b16 %v3593
      %v3648 = vunpack.c.l.b16 %v3597
      %v3649 = vunpack.c.l.b16 %v3600
      %v3650 = vunpack.c.l.b16 %v3604
      %v3651 = vunpack.c.l.b16 %v3607
      %v3652 = vunpack.c.l.b16 %v3611
      %v3653 = vunpack.c.l.b16 %v3614
      %v3654 = vunpack.c.l.b16 %v3618
      %v3655 = vunpack.c.l.b16 %v3621
      %v3656 = vpack.c.b16 %v3625, %v3624
      %v3657 = vpack.c.b16 %v3627, %v3626
      %v3658 = vpack.c.b16 %v3629, %v3628
      %v3659 = vpack.c.b16 %v3631, %v3630
      %v3660 = vpack.c.b16 %v3633, %v3632
      %v3661 = vpack.c.b16 %v3635, %v3634
      %v3662 = vpack.c.b16 %v3637, %v3636
      %v3663 = vpack.c.b16 %v3639, %v3638
      %v3664 = vpack.c.b16 %v3641, %v3640
      %v3665 = vpack.c.b16 %v3643, %v3642
      %v3666 = vpack.c.b16 %v3645, %v3644
      %v3667 = vpack.c.b16 %v3647, %v3646
      %v3668 = vpack.c.b16 %v3649, %v3648
      %v3669 = vpack.c.b16 %v3651, %v3650
      %v3670 = vpack.c.b16 %v3653, %v3652
      %v3671 = vpack.c.b16 %v3655, %v3654
      %v3673 = vsel %vm1399, %v3656, 0
      %v3676 = vsel %vm1399, %v3657, 0
      %v3679 = vsel %vm1399, %v3658, 0
      %v3682 = vsel %vm1399, %v3659, 0
      %v3685 = vsel %vm1399, %v3660, 0
      %v3688 = vsel %vm1399, %v3661, 0
      %v3691 = vsel %vm1399, %v3662, 0
      %v3694 = vsel %vm1399, %v3663, 0
      %v3697 = vsel %vm1399, %v3664, 0
      %v3700 = vsel %vm1399, %v3665, 0
      %v3703 = vsel %vm1399, %v3666, 0
      %v3706 = vsel %vm1399, %v3667, 0
      %v3709 = vsel %vm1399, %v3668, 0
      %v3712 = vsel %vm1399, %v3669, 0
      %v3715 = vsel %vm1399, %v3670, 0
      %v3718 = vsel %vm1399, %v3671, 0
      %v3721 = vsel %vm1448, %v3623, 0
      %3723 = vmatprep.subr.bf16.mxu0 0
      %3724 = vmatpush1.bf16.msra.mxu0 0
      %3725 = vmatprep.subr.bf16.mxu0 0
      %3726 = vmatpush1.bf16.msra.mxu0 0
      %3727 = vmatprep.subr.bf16.mxu0 0
      %3728 = vmatpush1.bf16.msra.mxu0 0
      %3729 = vmatprep.subr.bf16.mxu0 0
      %3730 = vmatpush1.bf16.msra.mxu0 0
      %3731 = vmatprep.subr.bf16.mxu0 0
      %3732 = vmatpush1.bf16.msra.mxu0 0
      %3733 = vmatprep.subr.bf16.mxu0 0
      %3734 = vmatpush1.bf16.msra.mxu0 0
      %3735 = vmatprep.subr.bf16.mxu0 0
      %3736 = vmatpush1.bf16.msra.mxu0 0
      %3737 = vmatprep.subr.bf16.mxu0 0
      %3738 = vmatpush1.bf16.msra.mxu0 %v3721
      %3739 = vmatprep.subr.bf16.mxu0 0
      %3740 = vmatpush2.bf16.msra.mxu0 0
      %3741 = vmatprep.subr.bf16.mxu0 0
      %3742 = vmatpush2.bf16.msra.mxu0 0
      %3743 = vmatprep.subr.bf16.mxu0 0
      %3744 = vmatpush2.bf16.msra.mxu0 0
      %3745 = vmatprep.subr.bf16.mxu0 0
      %3746 = vmatpush2.bf16.msra.mxu0 0
      %3747 = vmatprep.subr.bf16.mxu0 0
      %3748 = vmatpush2.bf16.msra.mxu0 0
      %3749 = vmatprep.subr.bf16.mxu0 0
      %3750 = vmatpush2.bf16.msra.mxu0 0
      %3751 = vmatprep.subr.bf16.mxu0 0
      %3752 = vmatpush2.bf16.msra.mxu0 0
      %3753 = vmatprep.subr.bf16.mxu0 0
      %3754 = vmatpush2.bf16.msra.mxu0 0
      %3755 = vmatprep.mubr.bf16.mxu0 0
      %3756 = vmatmul.mubr.bf16.gmra.mxu0 %v3673
      %v3757 = vpop.f32.mrf.mxu0
      %v3758 = vadd.f32 0.0, %v3757
      %v3759 = vpop.f32.mrf.mxu0
      %v3760 = vpop.f32.mrf.mxu0
      %v3761 = vadd.f32 0.0, %v3760
      %v3762 = vpop.f32.mrf.mxu0
      %3763 = vmatprep.mubr.bf16.mxu0 0
      %3764 = vmatmul.mubr.bf16.gmra.mxu0 %v3676
      %v3765 = vpop.f32.mrf.mxu0
      %v3766 = vadd.f32 0.0, %v3765
      %v3767 = vpop.f32.mrf.mxu0
      %v3768 = vpop.f32.mrf.mxu0
      %v3769 = vadd.f32 0.0, %v3768
      %v3770 = vpop.f32.mrf.mxu0
      %3771 = vmatprep.mubr.bf16.mxu0 0
      %3772 = vmatmul.mubr.bf16.gmra.mxu0 %v3679
      %v3773 = vpop.f32.mrf.mxu0
      %v3774 = vadd.f32 0.0, %v3773
      %v3775 = vpop.f32.mrf.mxu0
      %v3776 = vpop.f32.mrf.mxu0
      %v3777 = vadd.f32 0.0, %v3776
      %v3778 = vpop.f32.mrf.mxu0
      %3779 = vmatprep.mubr.bf16.mxu0 0
      %3780 = vmatmul.mubr.bf16.gmra.mxu0 %v3682
      %v3781 = vpop.f32.mrf.mxu0
      %v3782 = vadd.f32 0.0, %v3781
      %v3783 = vpop.f32.mrf.mxu0
      %v3784 = vpop.f32.mrf.mxu0
      %v3785 = vadd.f32 0.0, %v3784
      %v3786 = vpop.f32.mrf.mxu0
      %3787 = vmatprep.mubr.bf16.mxu0 0
      %3788 = vmatmul.mubr.bf16.gmra.mxu0 %v3685
      %v3789 = vpop.f32.mrf.mxu0
      %v3790 = vadd.f32 0.0, %v3789
      %v3791 = vpop.f32.mrf.mxu0
      %v3792 = vpop.f32.mrf.mxu0
      %v3793 = vadd.f32 0.0, %v3792
      %v3794 = vpop.f32.mrf.mxu0
      %3795 = vmatprep.mubr.bf16.mxu0 0
      %3796 = vmatmul.mubr.bf16.gmra.mxu0 %v3688
      %v3797 = vpop.f32.mrf.mxu0
      %v3798 = vadd.f32 0.0, %v3797
      %v3799 = vpop.f32.mrf.mxu0
      %v3800 = vpop.f32.mrf.mxu0
      %v3801 = vadd.f32 0.0, %v3800
      %v3802 = vpop.f32.mrf.mxu0
      %3803 = vmatprep.mubr.bf16.mxu0 0
      %3804 = vmatmul.mubr.bf16.gmra.mxu0 %v3691
      %v3805 = vpop.f32.mrf.mxu0
      %v3806 = vadd.f32 0.0, %v3805
      %v3807 = vpop.f32.mrf.mxu0
      %v3808 = vpop.f32.mrf.mxu0
      %v3809 = vadd.f32 0.0, %v3808
      %v3810 = vpop.f32.mrf.mxu0
      %3811 = vmatprep.mubr.bf16.mxu0 0
      %3812 = vmatmul.mubr.bf16.gmra.mxu0 %v3694
      %v3813 = vpop.f32.mrf.mxu0
      %v3814 = vadd.f32 0.0, %v3813
      %v3815 = vpop.f32.mrf.mxu0
      %v3816 = vpop.f32.mrf.mxu0
      %v3817 = vadd.f32 0.0, %v3816
      %v3818 = vpop.f32.mrf.mxu0
      %3819 = vmatprep.mubr.bf16.mxu0 0
      %3820 = vmatmul.mubr.bf16.gmra.mxu0 %v3697
      %v3821 = vpop.f32.mrf.mxu0
      %v3822 = vadd.f32 0.0, %v3821
      %v3823 = vpop.f32.mrf.mxu0
      %v3824 = vpop.f32.mrf.mxu0
      %v3825 = vadd.f32 0.0, %v3824
      %v3826 = vpop.f32.mrf.mxu0
      %3827 = vmatprep.mubr.bf16.mxu0 0
      %3828 = vmatmul.mubr.bf16.gmra.mxu0 %v3700
      %v3829 = vpop.f32.mrf.mxu0
      %v3830 = vadd.f32 0.0, %v3829
      %v3831 = vpop.f32.mrf.mxu0
      %v3832 = vpop.f32.mrf.mxu0
      %v3833 = vadd.f32 0.0, %v3832
      %v3834 = vpop.f32.mrf.mxu0
      %3835 = vmatprep.mubr.bf16.mxu0 0
      %3836 = vmatmul.mubr.bf16.gmra.mxu0 %v3703
      %v3837 = vpop.f32.mrf.mxu0
      %v3838 = vadd.f32 0.0, %v3837
      %v3839 = vpop.f32.mrf.mxu0
      %v3840 = vpop.f32.mrf.mxu0
      %v3841 = vadd.f32 0.0, %v3840
      %v3842 = vpop.f32.mrf.mxu0
      %3843 = vmatprep.mubr.bf16.mxu0 0
      %3844 = vmatmul.mubr.bf16.gmra.mxu0 %v3706
      %v3845 = vpop.f32.mrf.mxu0
      %v3846 = vadd.f32 0.0, %v3845
      %v3847 = vpop.f32.mrf.mxu0
      %v3848 = vpop.f32.mrf.mxu0
      %v3849 = vadd.f32 0.0, %v3848
      %v3850 = vpop.f32.mrf.mxu0
      %3851 = vmatprep.mubr.bf16.mxu0 0
      %3852 = vmatmul.mubr.bf16.gmra.mxu0 %v3709
      %v3853 = vpop.f32.mrf.mxu0
      %v3854 = vadd.f32 0.0, %v3853
      %v3855 = vpop.f32.mrf.mxu0
      %v3856 = vpop.f32.mrf.mxu0
      %v3857 = vadd.f32 0.0, %v3856
      %v3858 = vpop.f32.mrf.mxu0
      %3859 = vmatprep.mubr.bf16.mxu0 0
      %3860 = vmatmul.mubr.bf16.gmra.mxu0 %v3712
      %v3861 = vpop.f32.mrf.mxu0
      %v3862 = vadd.f32 0.0, %v3861
      %v3863 = vpop.f32.mrf.mxu0
      %v3864 = vpop.f32.mrf.mxu0
      %v3865 = vadd.f32 0.0, %v3864
      %v3866 = vpop.f32.mrf.mxu0
      %3867 = vmatprep.mubr.bf16.mxu0 0
      %3868 = vmatmul.mubr.bf16.gmra.mxu0 %v3715
      %v3869 = vpop.f32.mrf.mxu0
      %v3870 = vadd.f32 0.0, %v3869
      %v3871 = vpop.f32.mrf.mxu0
      %v3872 = vpop.f32.mrf.mxu0
      %v3873 = vadd.f32 0.0, %v3872
      %v3874 = vpop.f32.mrf.mxu0
      %3875 = vmatprep.mubr.bf16.mxu0 0
      %3876 = vmatmul.mubr.bf16.gmra.mxu0 %v3718
      %v3877 = vpop.f32.mrf.mxu0
      %v3878 = vadd.f32 0.0, %v3877
      %v3879 = vpop.f32.mrf.mxu0
      %v3880 = vpop.f32.mrf.mxu0
      %v3881 = vadd.f32 0.0, %v3880
      %v3882 = vpop.f32.mrf.mxu0
      %3883 = vdwg.mxu0
      %v3884 = vadd.f32 %v3414, %v3758
      %v3885 = vadd.f32 %v3415, %v3761
      %v3886 = vadd.f32 %v3416, %v3766
      %v3887 = vadd.f32 %v3417, %v3769
      %v3888 = vadd.f32 %v3418, %v3774
      %v3889 = vadd.f32 %v3419, %v3777
      %v3890 = vadd.f32 %v3420, %v3782
      %v3891 = vadd.f32 %v3421, %v3785
      %v3892 = vadd.f32 %v3422, %v3790
      %v3893 = vadd.f32 %v3423, %v3793
      %v3894 = vadd.f32 %v3424, %v3798
      %v3895 = vadd.f32 %v3425, %v3801
      %v3896 = vadd.f32 %v3426, %v3806
      %v3897 = vadd.f32 %v3427, %v3809
      %v3898 = vadd.f32 %v3428, %v3814
      %v3899 = vadd.f32 %v3429, %v3817
      %v3900 = vadd.f32 %v3430, %v3822
      %v3901 = vadd.f32 %v3431, %v3825
      %v3902 = vadd.f32 %v3432, %v3830
      %v3903 = vadd.f32 %v3433, %v3833
      %v3904 = vadd.f32 %v3434, %v3838
      %v3905 = vadd.f32 %v3435, %v3841
      %v3906 = vadd.f32 %v3436, %v3846
      %v3907 = vadd.f32 %v3437, %v3849
      %v3908 = vadd.f32 %v3438, %v3854
      %v3909 = vadd.f32 %v3439, %v3857
      %v3910 = vadd.f32 %v3440, %v3862
      %v3911 = vadd.f32 %v3441, %v3865
      %v3912 = vadd.f32 %v3442, %v3870
      %v3913 = vadd.f32 %v3443, %v3873
      %v3914 = vadd.f32 %v3444, %v3878
      %v3915 = vadd.f32 %v3445, %v3881
      %s3916 = scalar_lea.vmem [#allocation2], 24
      %v3917 = vld [vmem:[%s3916] sm:$0xf]
      %v3918 = vld [vmem:[%s3916 + $0x4] sm:$0xf]
      %v3919 = vld [vmem:[%s3916 + $0xc] sm:$0xf]
      %v3920 = vld [vmem:[%s3916 + $0x10] sm:$0xf]
      %v3921 = vld [vmem:[%s3916 + $0x18] sm:$0xf]
      %v3922 = vld [vmem:[%s3916 + $0x1c] sm:$0xf]
      %v3923 = vld [vmem:[%s3916 + $0x24] sm:$0xf]
      %v3924 = vld [vmem:[%s3916 + $0x28] sm:$0xf]
      %v3925 = vld [vmem:[%s3916 + $0x30] sm:$0xf]
      %v3926 = vld [vmem:[%s3916 + $0x34] sm:$0xf]
      %v3927 = vld [vmem:[%s3916 + $0x3c] sm:$0xf]
      %v3928 = vld [vmem:[%s3916 + $0x40] sm:$0xf]
      %v3929 = vld [vmem:[%s3916 + $0x48] sm:$0xf]
      %v3930 = vld [vmem:[%s3916 + $0x4c] sm:$0xf]
      %v3931 = vld [vmem:[%s3916 + $0x54] sm:$0xf]
      %v3932 = vld [vmem:[%s3916 + $0x58] sm:$0xf]
      %v3933 = vld [vmem:[%s3916 + $0x60] sm:$0xf]
      %v3934 = vld [vmem:[%s3916 + $0x64] sm:$0xf]
      %v3935 = vld [vmem:[%s3916 + $0x6c] sm:$0xf]
      %v3936 = vld [vmem:[%s3916 + $0x70] sm:$0xf]
      %v3937 = vld [vmem:[%s3916 + $0x78] sm:$0xf]
      %v3938 = vld [vmem:[%s3916 + $0x7c] sm:$0xf]
      %v3939 = vld [vmem:[%s3916 + $0x84] sm:$0xf]
      %v3940 = vld [vmem:[%s3916 + $0x88] sm:$0xf]
      %v3941 = vld [vmem:[%s3916 + $0x90] sm:$0xf]
      %v3942 = vld [vmem:[%s3916 + $0x94] sm:$0xf]
      %v3943 = vld [vmem:[%s3916 + $0x9c] sm:$0xf]
      %v3944 = vld [vmem:[%s3916 + $0xa0] sm:$0xf]
      %v3945 = vld [vmem:[%s3916 + $0xa8] sm:$0xf]
      %v3946 = vld [vmem:[%s3916 + $0xac] sm:$0xf]
      %v3947 = vld [vmem:[%s3916 + $0xb4] sm:$0xf]
      %v3948 = vld [vmem:[%s3916 + $0xb8] sm:$0xf]
      %s3949 = scalar_lea.vmem %s1, 12
      %v3950 = vld [vmem:[%s3949] sm:$0x3]
      %v3983 = vunpack.c.l.b16 %v3917
      %v3984 = vunpack.c.l.b16 %v3918
      %v3985 = vunpack.c.l.b16 %v3919
      %v3986 = vunpack.c.l.b16 %v3920
      %v3987 = vunpack.c.l.b16 %v3921
      %v3988 = vunpack.c.l.b16 %v3922
      %v3989 = vunpack.c.l.b16 %v3923
      %v3990 = vunpack.c.l.b16 %v3924
      %v3991 = vunpack.c.l.b16 %v3925
      %v3992 = vunpack.c.l.b16 %v3926
      %v3993 = vunpack.c.l.b16 %v3927
      %v3994 = vunpack.c.l.b16 %v3928
      %v3995 = vunpack.c.l.b16 %v3929
      %v3996 = vunpack.c.l.b16 %v3930
      %v3997 = vunpack.c.l.b16 %v3931
      %v3998 = vunpack.c.l.b16 %v3932
      %v3999 = vunpack.c.l.b16 %v3933
      %v4000 = vunpack.c.l.b16 %v3934
      %v4001 = vunpack.c.l.b16 %v3935
      %v4002 = vunpack.c.l.b16 %v3936
      %v4003 = vunpack.c.l.b16 %v3937
      %v4004 = vunpack.c.l.b16 %v3938
      %v4005 = vunpack.c.l.b16 %v3939
      %v4006 = vunpack.c.l.b16 %v3940
      %v4007 = vunpack.c.l.b16 %v3941
      %v4008 = vunpack.c.l.b16 %v3942
      %v4009 = vunpack.c.l.b16 %v3943
      %v4010 = vunpack.c.l.b16 %v3944
      %v4011 = vunpack.c.l.b16 %v3945
      %v4012 = vunpack.c.l.b16 %v3946
      %v4013 = vunpack.c.l.b16 %v3947
      %v4014 = vunpack.c.l.b16 %v3948
      %v4015 = vpack.c.b16 %v3984, %v3983
      %v4016 = vpack.c.b16 %v3986, %v3985
      %v4017 = vpack.c.b16 %v3988, %v3987
      %v4018 = vpack.c.b16 %v3990, %v3989
      %v4019 = vpack.c.b16 %v3992, %v3991
      %v4020 = vpack.c.b16 %v3994, %v3993
      %v4021 = vpack.c.b16 %v3996, %v3995
      %v4022 = vpack.c.b16 %v3998, %v3997
      %v4023 = vpack.c.b16 %v4000, %v3999
      %v4024 = vpack.c.b16 %v4002, %v4001
      %v4025 = vpack.c.b16 %v4004, %v4003
      %v4026 = vpack.c.b16 %v4006, %v4005
      %v4027 = vpack.c.b16 %v4008, %v4007
      %v4028 = vpack.c.b16 %v4010, %v4009
      %v4029 = vpack.c.b16 %v4012, %v4011
      %v4030 = vpack.c.b16 %v4014, %v4013
      %v4032 = vsel %vm1399, %v4015, 0
      %v4035 = vsel %vm1399, %v4016, 0
      %v4038 = vsel %vm1399, %v4017, 0
      %v4041 = vsel %vm1399, %v4018, 0
      %v4044 = vsel %vm1399, %v4019, 0
      %v4047 = vsel %vm1399, %v4020, 0
      %v4050 = vsel %vm1399, %v4021, 0
      %v4053 = vsel %vm1399, %v4022, 0
      %v4056 = vsel %vm1399, %v4023, 0
      %v4059 = vsel %vm1399, %v4024, 0
      %v4062 = vsel %vm1399, %v4025, 0
      %v4065 = vsel %vm1399, %v4026, 0
      %v4068 = vsel %vm1399, %v4027, 0
      %v4071 = vsel %vm1399, %v4028, 0
      %v4074 = vsel %vm1399, %v4029, 0
      %v4077 = vsel %vm1399, %v4030, 0
      %v4080 = vsel %vm1448, %v3950, 0
      %4082 = vmatprep.subr.bf16.mxu0 0
      %4083 = vmatpush1.bf16.msra.mxu0 0
      %4084 = vmatprep.subr.bf16.mxu0 0
      %4085 = vmatpush1.bf16.msra.mxu0 0
      %4086 = vmatprep.subr.bf16.mxu0 0
      %4087 = vmatpush1.bf16.msra.mxu0 0
      %4088 = vmatprep.subr.bf16.mxu0 0
      %4089 = vmatpush1.bf16.msra.mxu0 0
      %4090 = vmatprep.subr.bf16.mxu0 0
      %4091 = vmatpush1.bf16.msra.mxu0 0
      %4092 = vmatprep.subr.bf16.mxu0 0
      %4093 = vmatpush1.bf16.msra.mxu0 0
      %4094 = vmatprep.subr.bf16.mxu0 0
      %4095 = vmatpush1.bf16.msra.mxu0 0
      %4096 = vmatprep.subr.bf16.mxu0 0
      %4097 = vmatpush1.bf16.msra.mxu0 %v4080
      %4098 = vmatprep.subr.bf16.mxu0 0
      %4099 = vmatpush2.bf16.msra.mxu0 0
      %4100 = vmatprep.subr.bf16.mxu0 0
      %4101 = vmatpush2.bf16.msra.mxu0 0
      %4102 = vmatprep.subr.bf16.mxu0 0
      %4103 = vmatpush2.bf16.msra.mxu0 0
      %4104 = vmatprep.subr.bf16.mxu0 0
      %4105 = vmatpush2.bf16.msra.mxu0 0
      %4106 = vmatprep.subr.bf16.mxu0 0
      %4107 = vmatpush2.bf16.msra.mxu0 0
      %4108 = vmatprep.subr.bf16.mxu0 0
      %4109 = vmatpush2.bf16.msra.mxu0 0
      %4110 = vmatprep.subr.bf16.mxu0 0
      %4111 = vmatpush2.bf16.msra.mxu0 0
      %4112 = vmatprep.subr.bf16.mxu0 0
      %4113 = vmatpush2.bf16.msra.mxu0 0
      %4114 = vmatprep.mubr.bf16.mxu0 0
      %4115 = vmatmul.mubr.bf16.gmra.mxu0 %v4032
      %v4116 = vpop.f32.mrf.mxu0
      %v4117 = vadd.f32 0.0, %v4116
      %v4118 = vpop.f32.mrf.mxu0
      %v4119 = vpop.f32.mrf.mxu0
      %v4120 = vadd.f32 0.0, %v4119
      %v4121 = vpop.f32.mrf.mxu0
      %4122 = vmatprep.mubr.bf16.mxu0 0
      %4123 = vmatmul.mubr.bf16.gmra.mxu0 %v4035
      %v4124 = vpop.f32.mrf.mxu0
      %v4125 = vadd.f32 0.0, %v4124
      %v4126 = vpop.f32.mrf.mxu0
      %v4127 = vpop.f32.mrf.mxu0
      %v4128 = vadd.f32 0.0, %v4127
      %v4129 = vpop.f32.mrf.mxu0
      %4130 = vmatprep.mubr.bf16.mxu0 0
      %4131 = vmatmul.mubr.bf16.gmra.mxu0 %v4038
      %v4132 = vpop.f32.mrf.mxu0
      %v4133 = vadd.f32 0.0, %v4132
      %v4134 = vpop.f32.mrf.mxu0
      %v4135 = vpop.f32.mrf.mxu0
      %v4136 = vadd.f32 0.0, %v4135
      %v4137 = vpop.f32.mrf.mxu0
      %4138 = vmatprep.mubr.bf16.mxu0 0
      %4139 = vmatmul.mubr.bf16.gmra.mxu0 %v4041
      %v4140 = vpop.f32.mrf.mxu0
      %v4141 = vadd.f32 0.0, %v4140
      %v4142 = vpop.f32.mrf.mxu0
      %v4143 = vpop.f32.mrf.mxu0
      %v4144 = vadd.f32 0.0, %v4143
      %v4145 = vpop.f32.mrf.mxu0
      %4146 = vmatprep.mubr.bf16.mxu0 0
      %4147 = vmatmul.mubr.bf16.gmra.mxu0 %v4044
      %v4148 = vpop.f32.mrf.mxu0
      %v4149 = vadd.f32 0.0, %v4148
      %v4150 = vpop.f32.mrf.mxu0
      %v4151 = vpop.f32.mrf.mxu0
      %v4152 = vadd.f32 0.0, %v4151
      %v4153 = vpop.f32.mrf.mxu0
      %4154 = vmatprep.mubr.bf16.mxu0 0
      %4155 = vmatmul.mubr.bf16.gmra.mxu0 %v4047
      %v4156 = vpop.f32.mrf.mxu0
      %v4157 = vadd.f32 0.0, %v4156
      %v4158 = vpop.f32.mrf.mxu0
      %v4159 = vpop.f32.mrf.mxu0
      %v4160 = vadd.f32 0.0, %v4159
      %v4161 = vpop.f32.mrf.mxu0
      %4162 = vmatprep.mubr.bf16.mxu0 0
      %4163 = vmatmul.mubr.bf16.gmra.mxu0 %v4050
      %v4164 = vpop.f32.mrf.mxu0
      %v4165 = vadd.f32 0.0, %v4164
      %v4166 = vpop.f32.mrf.mxu0
      %v4167 = vpop.f32.mrf.mxu0
      %v4168 = vadd.f32 0.0, %v4167
      %v4169 = vpop.f32.mrf.mxu0
      %4170 = vmatprep.mubr.bf16.mxu0 0
      %4171 = vmatmul.mubr.bf16.gmra.mxu0 %v4053
      %v4172 = vpop.f32.mrf.mxu0
      %v4173 = vadd.f32 0.0, %v4172
      %v4174 = vpop.f32.mrf.mxu0
      %v4175 = vpop.f32.mrf.mxu0
      %v4176 = vadd.f32 0.0, %v4175
      %v4177 = vpop.f32.mrf.mxu0
      %4178 = vmatprep.mubr.bf16.mxu0 0
      %4179 = vmatmul.mubr.bf16.gmra.mxu0 %v4056
      %v4180 = vpop.f32.mrf.mxu0
      %v4181 = vadd.f32 0.0, %v4180
      %v4182 = vpop.f32.mrf.mxu0
      %v4183 = vpop.f32.mrf.mxu0
      %v4184 = vadd.f32 0.0, %v4183
      %v4185 = vpop.f32.mrf.mxu0
      %4186 = vmatprep.mubr.bf16.mxu0 0
      %4187 = vmatmul.mubr.bf16.gmra.mxu0 %v4059
      %v4188 = vpop.f32.mrf.mxu0
      %v4189 = vadd.f32 0.0, %v4188
      %v4190 = vpop.f32.mrf.mxu0
      %v4191 = vpop.f32.mrf.mxu0
      %v4192 = vadd.f32 0.0, %v4191
      %v4193 = vpop.f32.mrf.mxu0
      %4194 = vmatprep.mubr.bf16.mxu0 0
      %4195 = vmatmul.mubr.bf16.gmra.mxu0 %v4062
      %v4196 = vpop.f32.mrf.mxu0
      %v4197 = vadd.f32 0.0, %v4196
      %v4198 = vpop.f32.mrf.mxu0
      %v4199 = vpop.f32.mrf.mxu0
      %v4200 = vadd.f32 0.0, %v4199
      %v4201 = vpop.f32.mrf.mxu0
      %4202 = vmatprep.mubr.bf16.mxu0 0
      %4203 = vmatmul.mubr.bf16.gmra.mxu0 %v4065
      %v4204 = vpop.f32.mrf.mxu0
      %v4205 = vadd.f32 0.0, %v4204
      %v4206 = vpop.f32.mrf.mxu0
      %v4207 = vpop.f32.mrf.mxu0
      %v4208 = vadd.f32 0.0, %v4207
      %v4209 = vpop.f32.mrf.mxu0
      %4210 = vmatprep.mubr.bf16.mxu0 0
      %4211 = vmatmul.mubr.bf16.gmra.mxu0 %v4068
      %v4212 = vpop.f32.mrf.mxu0
      %v4213 = vadd.f32 0.0, %v4212
      %v4214 = vpop.f32.mrf.mxu0
      %v4215 = vpop.f32.mrf.mxu0
      %v4216 = vadd.f32 0.0, %v4215
      %v4217 = vpop.f32.mrf.mxu0
      %4218 = vmatprep.mubr.bf16.mxu0 0
      %4219 = vmatmul.mubr.bf16.gmra.mxu0 %v4071
      %v4220 = vpop.f32.mrf.mxu0
      %v4221 = vadd.f32 0.0, %v4220
      %v4222 = vpop.f32.mrf.mxu0
      %v4223 = vpop.f32.mrf.mxu0
      %v4224 = vadd.f32 0.0, %v4223
      %v4225 = vpop.f32.mrf.mxu0
      %4226 = vmatprep.mubr.bf16.mxu0 0
      %4227 = vmatmul.mubr.bf16.gmra.mxu0 %v4074
      %v4228 = vpop.f32.mrf.mxu0
      %v4229 = vadd.f32 0.0, %v4228
      %v4230 = vpop.f32.mrf.mxu0
      %v4231 = vpop.f32.mrf.mxu0
      %v4232 = vadd.f32 0.0, %v4231
      %v4233 = vpop.f32.mrf.mxu0
      %4234 = vmatprep.mubr.bf16.mxu0 0
      %4235 = vmatmul.mubr.bf16.gmra.mxu0 %v4077
      %v4236 = vpop.f32.mrf.mxu0
      %v4237 = vadd.f32 0.0, %v4236
      %v4238 = vpop.f32.mrf.mxu0
      %v4239 = vpop.f32.mrf.mxu0
      %v4240 = vadd.f32 0.0, %v4239
      %v4241 = vpop.f32.mrf.mxu0
      %4242 = vdwg.mxu0
      %v4243 = vadd.f32 %v3884, %v4117
      %v4244 = vadd.f32 %v3885, %v4120
      %v4245 = vadd.f32 %v3886, %v4125
      %v4246 = vadd.f32 %v3887, %v4128
      %v4247 = vadd.f32 %v3888, %v4133
      %v4248 = vadd.f32 %v3889, %v4136
      %v4249 = vadd.f32 %v3890, %v4141
      %v4250 = vadd.f32 %v3891, %v4144
      %v4251 = vadd.f32 %v3892, %v4149
      %v4252 = vadd.f32 %v3893, %v4152
      %v4253 = vadd.f32 %v3894, %v4157
      %v4254 = vadd.f32 %v3895, %v4160
      %v4255 = vadd.f32 %v3896, %v4165
      %v4256 = vadd.f32 %v3897, %v4168
      %v4257 = vadd.f32 %v3898, %v4173
      %v4258 = vadd.f32 %v3899, %v4176
      %v4259 = vadd.f32 %v3900, %v4181
      %v4260 = vadd.f32 %v3901, %v4184
      %v4261 = vadd.f32 %v3902, %v4189
      %v4262 = vadd.f32 %v3903, %v4192
      %v4263 = vadd.f32 %v3904, %v4197
      %v4264 = vadd.f32 %v3905, %v4200
      %v4265 = vadd.f32 %v3906, %v4205
      %v4266 = vadd.f32 %v3907, %v4208
      %v4267 = vadd.f32 %v3908, %v4213
      %v4268 = vadd.f32 %v3909, %v4216
      %v4269 = vadd.f32 %v3910, %v4221
      %v4270 = vadd.f32 %v3911, %v4224
      %v4271 = vadd.f32 %v3912, %v4229
      %v4272 = vadd.f32 %v3913, %v4232
      %v4273 = vadd.f32 %v3914, %v4237
      %v4274 = vadd.f32 %v3915, %v4240
      %v4275 = vld [vmem:[%s3916] sm:$0xf]
      %v4276 = vld [vmem:[%s3916 + $0x4] sm:$0xf]
      %v4277 = vld [vmem:[%s3916 + $0x8] sm:$0x1]
      %v4278 = vld [vmem:[%s3916 + $0xc] sm:$0xf]
      %v4279 = vld [vmem:[%s3916 + $0x10] sm:$0xf]
      %v4280 = vld [vmem:[%s3916 + $0x14] sm:$0x1]
      %v4281 = vld [vmem:[%s3916 + $0x18] sm:$0xf]
      %v4282 = vld [vmem:[%s3916 + $0x1c] sm:$0xf]
      %v4283 = vld [vmem:[%s3916 + $0x20] sm:$0x1]
      %v4284 = vld [vmem:[%s3916 + $0x24] sm:$0xf]
      %v4285 = vld [vmem:[%s3916 + $0x28] sm:$0xf]
      %v4286 = vld [vmem:[%s3916 + $0x2c] sm:$0x1]
      %v4287 = vld [vmem:[%s3916 + $0x30] sm:$0xf]
      %v4288 = vld [vmem:[%s3916 + $0x34] sm:$0xf]
      %v4289 = vld [vmem:[%s3916 + $0x38] sm:$0x1]
      %v4290 = vld [vmem:[%s3916 + $0x3c] sm:$0xf]
      %v4291 = vld [vmem:[%s3916 + $0x40] sm:$0xf]
      %v4292 = vld [vmem:[%s3916 + $0x44] sm:$0x1]
      %v4293 = vld [vmem:[%s3916 + $0x48] sm:$0xf]
      %v4294 = vld [vmem:[%s3916 + $0x4c] sm:$0xf]
      %v4295 = vld [vmem:[%s3916 + $0x50] sm:$0x1]
      %v4296 = vld [vmem:[%s3916 + $0x54] sm:$0xf]
      %v4297 = vld [vmem:[%s3916 + $0x58] sm:$0xf]
      %v4298 = vld [vmem:[%s3916 + $0x5c] sm:$0x1]
      %v4299 = vld [vmem:[%s3916 + $0x60] sm:$0xf]
      %v4300 = vld [vmem:[%s3916 + $0x64] sm:$0xf]
      %v4301 = vld [vmem:[%s3916 + $0x68] sm:$0x1]
      %v4302 = vld [vmem:[%s3916 + $0x6c] sm:$0xf]
      %v4303 = vld [vmem:[%s3916 + $0x70] sm:$0xf]
      %v4304 = vld [vmem:[%s3916 + $0x74] sm:$0x1]
      %v4305 = vld [vmem:[%s3916 + $0x78] sm:$0xf]
      %v4306 = vld [vmem:[%s3916 + $0x7c] sm:$0xf]
      %v4307 = vld [vmem:[%s3916 + $0x80] sm:$0x1]
      %v4308 = vld [vmem:[%s3916 + $0x84] sm:$0xf]
      %v4309 = vld [vmem:[%s3916 + $0x88] sm:$0xf]
      %v4310 = vld [vmem:[%s3916 + $0x8c] sm:$0x1]
      %v4311 = vld [vmem:[%s3916 + $0x90] sm:$0xf]
      %v4312 = vld [vmem:[%s3916 + $0x94] sm:$0xf]
      %v4313 = vld [vmem:[%s3916 + $0x98] sm:$0x1]
      %v4314 = vld [vmem:[%s3916 + $0x9c] sm:$0xf]
      %v4315 = vld [vmem:[%s3916 + $0xa0] sm:$0xf]
      %v4316 = vld [vmem:[%s3916 + $0xa4] sm:$0x1]
      %v4317 = vld [vmem:[%s3916 + $0xa8] sm:$0xf]
      %v4318 = vld [vmem:[%s3916 + $0xac] sm:$0xf]
      %v4319 = vld [vmem:[%s3916 + $0xb0] sm:$0x1]
      %v4320 = vld [vmem:[%s3916 + $0xb4] sm:$0xf]
      %v4321 = vld [vmem:[%s3916 + $0xb8] sm:$0xf]
      %v4322 = vld [vmem:[%s3916 + $0xbc] sm:$0x1]
      %v4324 = vshrl.u32 %v4275, 16
      %v4326 = vrot.slane %v4324, 4
      %v4327 = vshll.u32 %v4275, 16
      %v4329 = vrot.slane %v4327, 5
      %v4330 = vor.u32 %v4326, %v4329
      %v4331 = vrot.slane %v4330, 4
      %v4333 = vshll.u32 %v4276, 16
      %v4335 = vrot.slane %v4333, 5
      %v4336 = vsel %vm964, %v4331, %v4335
      %v4337 = vshrl.u32 %v4276, 16
      %v4339 = vrot.slane %v4337, 4
      %v4340 = vor.u32 %v4339, %v4335
      %v4341 = vrot.slane %v4340, 4
      %v4343 = vshll.u32 %v4277, 16
      %v4345 = vrot.slane %v4343, 5
      %v4346 = vsel %vm964, %v4341, %v4345
      %v4348 = vshrl.u32 %v4278, 16
      %v4350 = vrot.slane %v4348, 4
      %v4351 = vshll.u32 %v4278, 16
      %v4353 = vrot.slane %v4351, 5
      %v4354 = vor.u32 %v4350, %v4353
      %v4355 = vrot.slane %v4354, 4
      %v4357 = vshll.u32 %v4279, 16
      %v4359 = vrot.slane %v4357, 5
      %v4360 = vsel %vm964, %v4355, %v4359
      %v4361 = vshrl.u32 %v4279, 16
      %v4363 = vrot.slane %v4361, 4
      %v4364 = vor.u32 %v4363, %v4359
      %v4365 = vrot.slane %v4364, 4
      %v4367 = vshll.u32 %v4280, 16
      %v4369 = vrot.slane %v4367, 5
      %v4370 = vsel %vm964, %v4365, %v4369
      %v4372 = vshrl.u32 %v4281, 16
      %v4374 = vrot.slane %v4372, 4
      %v4375 = vshll.u32 %v4281, 16
      %v4377 = vrot.slane %v4375, 5
      %v4378 = vor.u32 %v4374, %v4377
      %v4379 = vrot.slane %v4378, 4
      %v4381 = vshll.u32 %v4282, 16
      %v4383 = vrot.slane %v4381, 5
      %v4384 = vsel %vm964, %v4379, %v4383
      %v4385 = vshrl.u32 %v4282, 16
      %v4387 = vrot.slane %v4385, 4
      %v4388 = vor.u32 %v4387, %v4383
      %v4389 = vrot.slane %v4388, 4
      %v4391 = vshll.u32 %v4283, 16
      %v4393 = vrot.slane %v4391, 5
      %v4394 = vsel %vm964, %v4389, %v4393
      %v4396 = vshrl.u32 %v4284, 16
      %v4398 = vrot.slane %v4396, 4
      %v4399 = vshll.u32 %v4284, 16
      %v4401 = vrot.slane %v4399, 5
      %v4402 = vor.u32 %v4398, %v4401
      %v4403 = vrot.slane %v4402, 4
      %v4405 = vshll.u32 %v4285, 16
      %v4407 = vrot.slane %v4405, 5
      %v4408 = vsel %vm964, %v4403, %v4407
      %v4409 = vshrl.u32 %v4285, 16
      %v4411 = vrot.slane %v4409, 4
      %v4412 = vor.u32 %v4411, %v4407
      %v4413 = vrot.slane %v4412, 4
      %v4415 = vshll.u32 %v4286, 16
      %v4417 = vrot.slane %v4415, 5
      %v4418 = vsel %vm964, %v4413, %v4417
      %v4420 = vshrl.u32 %v4287, 16
      %v4422 = vrot.slane %v4420, 4
      %v4423 = vshll.u32 %v4287, 16
      %v4425 = vrot.slane %v4423, 5
      %v4426 = vor.u32 %v4422, %v4425
      %v4427 = vrot.slane %v4426, 4
      %v4429 = vshll.u32 %v4288, 16
      %v4431 = vrot.slane %v4429, 5
      %v4432 = vsel %vm964, %v4427, %v4431
      %v4433 = vshrl.u32 %v4288, 16
      %v4435 = vrot.slane %v4433, 4
      %v4436 = vor.u32 %v4435, %v4431
      %v4437 = vrot.slane %v4436, 4
      %v4439 = vshll.u32 %v4289, 16
      %v4441 = vrot.slane %v4439, 5
      %v4442 = vsel %vm964, %v4437, %v4441
      %v4444 = vshrl.u32 %v4290, 16
      %v4446 = vrot.slane %v4444, 4
      %v4447 = vshll.u32 %v4290, 16
      %v4449 = vrot.slane %v4447, 5
      %v4450 = vor.u32 %v4446, %v4449
      %v4451 = vrot.slane %v4450, 4
      %v4453 = vshll.u32 %v4291, 16
      %v4455 = vrot.slane %v4453, 5
      %v4456 = vsel %vm964, %v4451, %v4455
      %v4457 = vshrl.u32 %v4291, 16
      %v4459 = vrot.slane %v4457, 4
      %v4460 = vor.u32 %v4459, %v4455
      %v4461 = vrot.slane %v4460, 4
      %v4463 = vshll.u32 %v4292, 16
      %v4465 = vrot.slane %v4463, 5
      %v4466 = vsel %vm964, %v4461, %v4465
      %v4468 = vshrl.u32 %v4293, 16
      %v4470 = vrot.slane %v4468, 4
      %v4471 = vshll.u32 %v4293, 16
      %v4473 = vrot.slane %v4471, 5
      %v4474 = vor.u32 %v4470, %v4473
      %v4475 = vrot.slane %v4474, 4
      %v4477 = vshll.u32 %v4294, 16
      %v4479 = vrot.slane %v4477, 5
      %v4480 = vsel %vm964, %v4475, %v4479
      %v4481 = vshrl.u32 %v4294, 16
      %v4483 = vrot.slane %v4481, 4
      %v4484 = vor.u32 %v4483, %v4479
      %v4485 = vrot.slane %v4484, 4
      %v4487 = vshll.u32 %v4295, 16
      %v4489 = vrot.slane %v4487, 5
      %v4490 = vsel %vm964, %v4485, %v4489
      %v4492 = vshrl.u32 %v4296, 16
      %v4494 = vrot.slane %v4492, 4
      %v4495 = vshll.u32 %v4296, 16
      %v4497 = vrot.slane %v4495, 5
      %v4498 = vor.u32 %v4494, %v4497
      %v4499 = vrot.slane %v4498, 4
      %v4501 = vshll.u32 %v4297, 16
      %v4503 = vrot.slane %v4501, 5
      %v4504 = vsel %vm964, %v4499, %v4503
      %v4505 = vshrl.u32 %v4297, 16
      %v4507 = vrot.slane %v4505, 4
      %v4508 = vor.u32 %v4507, %v4503
      %v4509 = vrot.slane %v4508, 4
      %v4511 = vshll.u32 %v4298, 16
      %v4513 = vrot.slane %v4511, 5
      %v4514 = vsel %vm964, %v4509, %v4513
      %v4516 = vshrl.u32 %v4299, 16
      %v4518 = vrot.slane %v4516, 4
      %v4519 = vshll.u32 %v4299, 16
      %v4521 = vrot.slane %v4519, 5
      %v4522 = vor.u32 %v4518, %v4521
      %v4523 = vrot.slane %v4522, 4
      %v4525 = vshll.u32 %v4300, 16
      %v4527 = vrot.slane %v4525, 5
      %v4528 = vsel %vm964, %v4523, %v4527
      %v4529 = vshrl.u32 %v4300, 16
      %v4531 = vrot.slane %v4529, 4
      %v4532 = vor.u32 %v4531, %v4527
      %v4533 = vrot.slane %v4532, 4
      %v4535 = vshll.u32 %v4301, 16
      %v4537 = vrot.slane %v4535, 5
      %v4538 = vsel %vm964, %v4533, %v4537
      %v4540 = vshrl.u32 %v4302, 16
      %v4542 = vrot.slane %v4540, 4
      %v4543 = vshll.u32 %v4302, 16
      %v4545 = vrot.slane %v4543, 5
      %v4546 = vor.u32 %v4542, %v4545
      %v4547 = vrot.slane %v4546, 4
      %v4549 = vshll.u32 %v4303, 16
      %v4551 = vrot.slane %v4549, 5
      %v4552 = vsel %vm964, %v4547, %v4551
      %v4553 = vshrl.u32 %v4303, 16
      %v4555 = vrot.slane %v4553, 4
      %v4556 = vor.u32 %v4555, %v4551
      %v4557 = vrot.slane %v4556, 4
      %v4559 = vshll.u32 %v4304, 16
      %v4561 = vrot.slane %v4559, 5
      %v4562 = vsel %vm964, %v4557, %v4561
      %v4564 = vshrl.u32 %v4305, 16
      %v4566 = vrot.slane %v4564, 4
      %v4567 = vshll.u32 %v4305, 16
      %v4569 = vrot.slane %v4567, 5
      %v4570 = vor.u32 %v4566, %v4569
      %v4571 = vrot.slane %v4570, 4
      %v4573 = vshll.u32 %v4306, 16
      %v4575 = vrot.slane %v4573, 5
      %v4576 = vsel %vm964, %v4571, %v4575
      %v4577 = vshrl.u32 %v4306, 16
      %v4579 = vrot.slane %v4577, 4
      %v4580 = vor.u32 %v4579, %v4575
      %v4581 = vrot.slane %v4580, 4
      %v4583 = vshll.u32 %v4307, 16
      %v4585 = vrot.slane %v4583, 5
      %v4586 = vsel %vm964, %v4581, %v4585
      %v4588 = vshrl.u32 %v4308, 16
      %v4590 = vrot.slane %v4588, 4
      %v4591 = vshll.u32 %v4308, 16
      %v4593 = vrot.slane %v4591, 5
      %v4594 = vor.u32 %v4590, %v4593
      %v4595 = vrot.slane %v4594, 4
      %v4597 = vshll.u32 %v4309, 16
      %v4599 = vrot.slane %v4597, 5
      %v4600 = vsel %vm964, %v4595, %v4599
      %v4601 = vshrl.u32 %v4309, 16
      %v4603 = vrot.slane %v4601, 4
      %v4604 = vor.u32 %v4603, %v4599
      %v4605 = vrot.slane %v4604, 4
      %v4607 = vshll.u32 %v4310, 16
      %v4609 = vrot.slane %v4607, 5
      %v4610 = vsel %vm964, %v4605, %v4609
      %v4612 = vshrl.u32 %v4311, 16
      %v4614 = vrot.slane %v4612, 4
      %v4615 = vshll.u32 %v4311, 16
      %v4617 = vrot.slane %v4615, 5
      %v4618 = vor.u32 %v4614, %v4617
      %v4619 = vrot.slane %v4618, 4
      %v4621 = vshll.u32 %v4312, 16
      %v4623 = vrot.slane %v4621, 5
      %v4624 = vsel %vm964, %v4619, %v4623
      %v4625 = vshrl.u32 %v4312, 16
      %v4627 = vrot.slane %v4625, 4
      %v4628 = vor.u32 %v4627, %v4623
      %v4629 = vrot.slane %v4628, 4
      %v4631 = vshll.u32 %v4313, 16
      %v4633 = vrot.slane %v4631, 5
      %v4634 = vsel %vm964, %v4629, %v4633
      %v4636 = vshrl.u32 %v4314, 16
      %v4638 = vrot.slane %v4636, 4
      %v4639 = vshll.u32 %v4314, 16
      %v4641 = vrot.slane %v4639, 5
      %v4642 = vor.u32 %v4638, %v4641
      %v4643 = vrot.slane %v4642, 4
      %v4645 = vshll.u32 %v4315, 16
      %v4647 = vrot.slane %v4645, 5
      %v4648 = vsel %vm964, %v4643, %v4647
      %v4649 = vshrl.u32 %v4315, 16
      %v4651 = vrot.slane %v4649, 4
      %v4652 = vor.u32 %v4651, %v4647
      %v4653 = vrot.slane %v4652, 4
      %v4655 = vshll.u32 %v4316, 16
      %v4657 = vrot.slane %v4655, 5
      %v4658 = vsel %vm964, %v4653, %v4657
      %v4660 = vshrl.u32 %v4317, 16
      %v4662 = vrot.slane %v4660, 4
      %v4663 = vshll.u32 %v4317, 16
      %v4665 = vrot.slane %v4663, 5
      %v4666 = vor.u32 %v4662, %v4665
      %v4667 = vrot.slane %v4666, 4
      %v4669 = vshll.u32 %v4318, 16
      %v4671 = vrot.slane %v4669, 5
      %v4672 = vsel %vm964, %v4667, %v4671
      %v4673 = vshrl.u32 %v4318, 16
      %v4675 = vrot.slane %v4673, 4
      %v4676 = vor.u32 %v4675, %v4671
      %v4677 = vrot.slane %v4676, 4
      %v4679 = vshll.u32 %v4319, 16
      %v4681 = vrot.slane %v4679, 5
      %v4682 = vsel %vm964, %v4677, %v4681
      %v4684 = vshrl.u32 %v4320, 16
      %v4686 = vrot.slane %v4684, 4
      %v4687 = vshll.u32 %v4320, 16
      %v4689 = vrot.slane %v4687, 5
      %v4690 = vor.u32 %v4686, %v4689
      %v4691 = vrot.slane %v4690, 4
      %v4693 = vshll.u32 %v4321, 16
      %v4695 = vrot.slane %v4693, 5
      %v4696 = vsel %vm964, %v4691, %v4695
      %v4697 = vshrl.u32 %v4321, 16
      %v4699 = vrot.slane %v4697, 4
      %v4700 = vor.u32 %v4699, %v4695
      %v4701 = vrot.slane %v4700, 4
      %v4703 = vshll.u32 %v4322, 16
      %v4705 = vrot.slane %v4703, 5
      %v4706 = vsel %vm964, %v4701, %v4705
      %s4707 = scalar_lea.vmem %s1, 14
      %v4708 = vld [vmem:[%s4707] sm:$0x3]
      %v4709 = vunpack.c.l.b16 %v4336
      %v4710 = vunpack.c.l.b16 %v4346
      %v4711 = vunpack.c.l.b16 %v4360
      %v4712 = vunpack.c.l.b16 %v4370
      %v4713 = vunpack.c.l.b16 %v4384
      %v4714 = vunpack.c.l.b16 %v4394
      %v4715 = vunpack.c.l.b16 %v4408
      %v4716 = vunpack.c.l.b16 %v4418
      %v4717 = vunpack.c.l.b16 %v4432
      %v4718 = vunpack.c.l.b16 %v4442
      %v4719 = vunpack.c.l.b16 %v4456
      %v4720 = vunpack.c.l.b16 %v4466
      %v4721 = vunpack.c.l.b16 %v4480
      %v4722 = vunpack.c.l.b16 %v4490
      %v4723 = vunpack.c.l.b16 %v4504
      %v4724 = vunpack.c.l.b16 %v4514
      %v4725 = vunpack.c.l.b16 %v4528
      %v4726 = vunpack.c.l.b16 %v4538
      %v4727 = vunpack.c.l.b16 %v4552
      %v4728 = vunpack.c.l.b16 %v4562
      %v4729 = vunpack.c.l.b16 %v4576
      %v4730 = vunpack.c.l.b16 %v4586
      %v4731 = vunpack.c.l.b16 %v4600
      %v4732 = vunpack.c.l.b16 %v4610
      %v4733 = vunpack.c.l.b16 %v4624
      %v4734 = vunpack.c.l.b16 %v4634
      %v4735 = vunpack.c.l.b16 %v4648
      %v4736 = vunpack.c.l.b16 %v4658
      %v4737 = vunpack.c.l.b16 %v4672
      %v4738 = vunpack.c.l.b16 %v4682
      %v4739 = vunpack.c.l.b16 %v4696
      %v4740 = vunpack.c.l.b16 %v4706
      %v4741 = vpack.c.b16 %v4710, %v4709
      %v4742 = vpack.c.b16 %v4712, %v4711
      %v4743 = vpack.c.b16 %v4714, %v4713
      %v4744 = vpack.c.b16 %v4716, %v4715
      %v4745 = vpack.c.b16 %v4718, %v4717
      %v4746 = vpack.c.b16 %v4720, %v4719
      %v4747 = vpack.c.b16 %v4722, %v4721
      %v4748 = vpack.c.b16 %v4724, %v4723
      %v4749 = vpack.c.b16 %v4726, %v4725
      %v4750 = vpack.c.b16 %v4728, %v4727
      %v4751 = vpack.c.b16 %v4730, %v4729
      %v4752 = vpack.c.b16 %v4732, %v4731
      %v4753 = vpack.c.b16 %v4734, %v4733
      %v4754 = vpack.c.b16 %v4736, %v4735
      %v4755 = vpack.c.b16 %v4738, %v4737
      %v4756 = vpack.c.b16 %v4740, %v4739
      %v4758 = vsel %vm1399, %v4741, 0
      %v4761 = vsel %vm1399, %v4742, 0
      %v4764 = vsel %vm1399, %v4743, 0
      %v4767 = vsel %vm1399, %v4744, 0
      %v4770 = vsel %vm1399, %v4745, 0
      %v4773 = vsel %vm1399, %v4746, 0
      %v4776 = vsel %vm1399, %v4747, 0
      %v4779 = vsel %vm1399, %v4748, 0
      %v4782 = vsel %vm1399, %v4749, 0
      %v4785 = vsel %vm1399, %v4750, 0
      %v4788 = vsel %vm1399, %v4751, 0
      %v4791 = vsel %vm1399, %v4752, 0
      %v4794 = vsel %vm1399, %v4753, 0
      %v4797 = vsel %vm1399, %v4754, 0
      %v4800 = vsel %vm1399, %v4755, 0
      %v4803 = vsel %vm1399, %v4756, 0
      %v4806 = vsel %vm1448, %v4708, 0
      %4808 = vmatprep.subr.bf16.mxu0 0
      %4809 = vmatpush1.bf16.msra.mxu0 0
      %4810 = vmatprep.subr.bf16.mxu0 0
      %4811 = vmatpush1.bf16.msra.mxu0 0
      %4812 = vmatprep.subr.bf16.mxu0 0
      %4813 = vmatpush1.bf16.msra.mxu0 0
      %4814 = vmatprep.subr.bf16.mxu0 0
      %4815 = vmatpush1.bf16.msra.mxu0 0
      %4816 = vmatprep.subr.bf16.mxu0 0
      %4817 = vmatpush1.bf16.msra.mxu0 0
      %4818 = vmatprep.subr.bf16.mxu0 0
      %4819 = vmatpush1.bf16.msra.mxu0 0
      %4820 = vmatprep.subr.bf16.mxu0 0
      %4821 = vmatpush1.bf16.msra.mxu0 0
      %4822 = vmatprep.subr.bf16.mxu0 0
      %4823 = vmatpush1.bf16.msra.mxu0 %v4806
      %4824 = vmatprep.subr.bf16.mxu0 0
      %4825 = vmatpush2.bf16.msra.mxu0 0
      %4826 = vmatprep.subr.bf16.mxu0 0
      %4827 = vmatpush2.bf16.msra.mxu0 0
      %4828 = vmatprep.subr.bf16.mxu0 0
      %4829 = vmatpush2.bf16.msra.mxu0 0
      %4830 = vmatprep.subr.bf16.mxu0 0
      %4831 = vmatpush2.bf16.msra.mxu0 0
      %4832 = vmatprep.subr.bf16.mxu0 0
      %4833 = vmatpush2.bf16.msra.mxu0 0
      %4834 = vmatprep.subr.bf16.mxu0 0
      %4835 = vmatpush2.bf16.msra.mxu0 0
      %4836 = vmatprep.subr.bf16.mxu0 0
      %4837 = vmatpush2.bf16.msra.mxu0 0
      %4838 = vmatprep.subr.bf16.mxu0 0
      %4839 = vmatpush2.bf16.msra.mxu0 0
      %4840 = vmatprep.mubr.bf16.mxu0 0
      %4841 = vmatmul.mubr.bf16.gmra.mxu0 %v4758
      %v4842 = vpop.f32.mrf.mxu0
      %v4843 = vadd.f32 0.0, %v4842
      %v4844 = vpop.f32.mrf.mxu0
      %v4845 = vpop.f32.mrf.mxu0
      %v4846 = vadd.f32 0.0, %v4845
      %v4847 = vpop.f32.mrf.mxu0
      %4848 = vmatprep.mubr.bf16.mxu0 0
      %4849 = vmatmul.mubr.bf16.gmra.mxu0 %v4761
      %v4850 = vpop.f32.mrf.mxu0
      %v4851 = vadd.f32 0.0, %v4850
      %v4852 = vpop.f32.mrf.mxu0
      %v4853 = vpop.f32.mrf.mxu0
      %v4854 = vadd.f32 0.0, %v4853
      %v4855 = vpop.f32.mrf.mxu0
      %4856 = vmatprep.mubr.bf16.mxu0 0
      %4857 = vmatmul.mubr.bf16.gmra.mxu0 %v4764
      %v4858 = vpop.f32.mrf.mxu0
      %v4859 = vadd.f32 0.0, %v4858
      %v4860 = vpop.f32.mrf.mxu0
      %v4861 = vpop.f32.mrf.mxu0
      %v4862 = vadd.f32 0.0, %v4861
      %v4863 = vpop.f32.mrf.mxu0
      %4864 = vmatprep.mubr.bf16.mxu0 0
      %4865 = vmatmul.mubr.bf16.gmra.mxu0 %v4767
      %v4866 = vpop.f32.mrf.mxu0
      %v4867 = vadd.f32 0.0, %v4866
      %v4868 = vpop.f32.mrf.mxu0
      %v4869 = vpop.f32.mrf.mxu0
      %v4870 = vadd.f32 0.0, %v4869
      %v4871 = vpop.f32.mrf.mxu0
      %4872 = vmatprep.mubr.bf16.mxu0 0
      %4873 = vmatmul.mubr.bf16.gmra.mxu0 %v4770
      %v4874 = vpop.f32.mrf.mxu0
      %v4875 = vadd.f32 0.0, %v4874
      %v4876 = vpop.f32.mrf.mxu0
      %v4877 = vpop.f32.mrf.mxu0
      %v4878 = vadd.f32 0.0, %v4877
      %v4879 = vpop.f32.mrf.mxu0
      %4880 = vmatprep.mubr.bf16.mxu0 0
      %4881 = vmatmul.mubr.bf16.gmra.mxu0 %v4773
      %v4882 = vpop.f32.mrf.mxu0
      %v4883 = vadd.f32 0.0, %v4882
      %v4884 = vpop.f32.mrf.mxu0
      %v4885 = vpop.f32.mrf.mxu0
      %v4886 = vadd.f32 0.0, %v4885
      %v4887 = vpop.f32.mrf.mxu0
      %4888 = vmatprep.mubr.bf16.mxu0 0
      %4889 = vmatmul.mubr.bf16.gmra.mxu0 %v4776
      %v4890 = vpop.f32.mrf.mxu0
      %v4891 = vadd.f32 0.0, %v4890
      %v4892 = vpop.f32.mrf.mxu0
      %v4893 = vpop.f32.mrf.mxu0
      %v4894 = vadd.f32 0.0, %v4893
      %v4895 = vpop.f32.mrf.mxu0
      %4896 = vmatprep.mubr.bf16.mxu0 0
      %4897 = vmatmul.mubr.bf16.gmra.mxu0 %v4779
      %v4898 = vpop.f32.mrf.mxu0
      %v4899 = vadd.f32 0.0, %v4898
      %v4900 = vpop.f32.mrf.mxu0
      %v4901 = vpop.f32.mrf.mxu0
      %v4902 = vadd.f32 0.0, %v4901
      %v4903 = vpop.f32.mrf.mxu0
      %4904 = vmatprep.mubr.bf16.mxu0 0
      %4905 = vmatmul.mubr.bf16.gmra.mxu0 %v4782
      %v4906 = vpop.f32.mrf.mxu0
      %v4907 = vadd.f32 0.0, %v4906
      %v4908 = vpop.f32.mrf.mxu0
      %v4909 = vpop.f32.mrf.mxu0
      %v4910 = vadd.f32 0.0, %v4909
      %v4911 = vpop.f32.mrf.mxu0
      %4912 = vmatprep.mubr.bf16.mxu0 0
      %4913 = vmatmul.mubr.bf16.gmra.mxu0 %v4785
      %v4914 = vpop.f32.mrf.mxu0
      %v4915 = vadd.f32 0.0, %v4914
      %v4916 = vpop.f32.mrf.mxu0
      %v4917 = vpop.f32.mrf.mxu0
      %v4918 = vadd.f32 0.0, %v4917
      %v4919 = vpop.f32.mrf.mxu0
      %4920 = vmatprep.mubr.bf16.mxu0 0
      %4921 = vmatmul.mubr.bf16.gmra.mxu0 %v4788
      %v4922 = vpop.f32.mrf.mxu0
      %v4923 = vadd.f32 0.0, %v4922
      %v4924 = vpop.f32.mrf.mxu0
      %v4925 = vpop.f32.mrf.mxu0
      %v4926 = vadd.f32 0.0, %v4925
      %v4927 = vpop.f32.mrf.mxu0
      %4928 = vmatprep.mubr.bf16.mxu0 0
      %4929 = vmatmul.mubr.bf16.gmra.mxu0 %v4791
      %v4930 = vpop.f32.mrf.mxu0
      %v4931 = vadd.f32 0.0, %v4930
      %v4932 = vpop.f32.mrf.mxu0
      %v4933 = vpop.f32.mrf.mxu0
      %v4934 = vadd.f32 0.0, %v4933
      %v4935 = vpop.f32.mrf.mxu0
      %4936 = vmatprep.mubr.bf16.mxu0 0
      %4937 = vmatmul.mubr.bf16.gmra.mxu0 %v4794
      %v4938 = vpop.f32.mrf.mxu0
      %v4939 = vadd.f32 0.0, %v4938
      %v4940 = vpop.f32.mrf.mxu0
      %v4941 = vpop.f32.mrf.mxu0
      %v4942 = vadd.f32 0.0, %v4941
      %v4943 = vpop.f32.mrf.mxu0
      %4944 = vmatprep.mubr.bf16.mxu0 0
      %4945 = vmatmul.mubr.bf16.gmra.mxu0 %v4797
      %v4946 = vpop.f32.mrf.mxu0
      %v4947 = vadd.f32 0.0, %v4946
      %v4948 = vpop.f32.mrf.mxu0
      %v4949 = vpop.f32.mrf.mxu0
      %v4950 = vadd.f32 0.0, %v4949
      %v4951 = vpop.f32.mrf.mxu0
      %4952 = vmatprep.mubr.bf16.mxu0 0
      %4953 = vmatmul.mubr.bf16.gmra.mxu0 %v4800
      %v4954 = vpop.f32.mrf.mxu0
      %v4955 = vadd.f32 0.0, %v4954
      %v4956 = vpop.f32.mrf.mxu0
      %v4957 = vpop.f32.mrf.mxu0
      %v4958 = vadd.f32 0.0, %v4957
      %v4959 = vpop.f32.mrf.mxu0
      %4960 = vmatprep.mubr.bf16.mxu0 0
      %4961 = vmatmul.mubr.bf16.gmra.mxu0 %v4803
      %v4962 = vpop.f32.mrf.mxu0
      %v4963 = vadd.f32 0.0, %v4962
      %v4964 = vpop.f32.mrf.mxu0
      %v4965 = vpop.f32.mrf.mxu0
      %v4966 = vadd.f32 0.0, %v4965
      %v4967 = vpop.f32.mrf.mxu0
      %4968 = vdwg.mxu0
      %v4969 = vadd.f32 %v4243, %v4843
      %v4970 = vadd.f32 %v4244, %v4846
      %v4971 = vadd.f32 %v4245, %v4851
      %v4972 = vadd.f32 %v4246, %v4854
      %v4973 = vadd.f32 %v4247, %v4859
      %v4974 = vadd.f32 %v4248, %v4862
      %v4975 = vadd.f32 %v4249, %v4867
      %v4976 = vadd.f32 %v4250, %v4870
      %v4977 = vadd.f32 %v4251, %v4875
      %v4978 = vadd.f32 %v4252, %v4878
      %v4979 = vadd.f32 %v4253, %v4883
      %v4980 = vadd.f32 %v4254, %v4886
      %v4981 = vadd.f32 %v4255, %v4891
      %v4982 = vadd.f32 %v4256, %v4894
      %v4983 = vadd.f32 %v4257, %v4899
      %v4984 = vadd.f32 %v4258, %v4902
      %v4985 = vadd.f32 %v4259, %v4907
      %v4986 = vadd.f32 %v4260, %v4910
      %v4987 = vadd.f32 %v4261, %v4915
      %v4988 = vadd.f32 %v4262, %v4918
      %v4989 = vadd.f32 %v4263, %v4923
      %v4990 = vadd.f32 %v4264, %v4926
      %v4991 = vadd.f32 %v4265, %v4931
      %v4992 = vadd.f32 %v4266, %v4934
      %v4993 = vadd.f32 %v4267, %v4939
      %v4994 = vadd.f32 %v4268, %v4942
      %v4995 = vadd.f32 %v4269, %v4947
      %v4996 = vadd.f32 %v4270, %v4950
      %v4997 = vadd.f32 %v4271, %v4955
      %v4998 = vadd.f32 %v4272, %v4958
      %v4999 = vadd.f32 %v4273, %v4963
      %v5000 = vadd.f32 %v4274, %v4966
      %v5001 = vld [vmem:[%s3916] sm:$0xe]
      %v5002 = vld [vmem:[%s3916 + $0xc] sm:$0xe]
      %v5003 = vld [vmem:[%s3916 + $0x18] sm:$0xe]
      %v5004 = vld [vmem:[%s3916 + $0x24] sm:$0xe]
      %v5005 = vld [vmem:[%s3916 + $0x30] sm:$0xe]
      %v5006 = vld [vmem:[%s3916 + $0x3c] sm:$0xe]
      %v5007 = vld [vmem:[%s3916 + $0x48] sm:$0xe]
      %v5008 = vld [vmem:[%s3916 + $0x54] sm:$0xe]
      %v5009 = vld [vmem:[%s3916 + $0x60] sm:$0xe]
      %v5010 = vld [vmem:[%s3916 + $0x6c] sm:$0xe]
      %v5011 = vld [vmem:[%s3916 + $0x78] sm:$0xe]
      %v5012 = vld [vmem:[%s3916 + $0x84] sm:$0xe]
      %v5013 = vld [vmem:[%s3916 + $0x90] sm:$0xe]
      %v5014 = vld [vmem:[%s3916 + $0x9c] sm:$0xe]
      %v5015 = vld [vmem:[%s3916 + $0xa8] sm:$0xe]
      %v5016 = vld [vmem:[%s3916 + $0xb4] sm:$0xe]
      %v5065 = vrot.slane %v5001, 5
      %v5066 = vrot.slane %v5065, 4
      %v5067 = vrot.slane %v4276, 5
      %v5068 = vsel %vm1955, %v5066, %v5067
      %v5069 = vrot.slane %v5067, 4
      %v5070 = vrot.slane %v4277, 5
      %v5071 = vsel %vm1955, %v5069, %v5070
      %v5072 = vrot.slane %v5002, 5
      %v5073 = vrot.slane %v5072, 4
      %v5074 = vrot.slane %v4279, 5
      %v5075 = vsel %vm1955, %v5073, %v5074
      %v5076 = vrot.slane %v5074, 4
      %v5077 = vrot.slane %v4280, 5
      %v5078 = vsel %vm1955, %v5076, %v5077
      %v5079 = vrot.slane %v5003, 5
      %v5080 = vrot.slane %v5079, 4
      %v5081 = vrot.slane %v4282, 5
      %v5082 = vsel %vm1955, %v5080, %v5081
      %v5083 = vrot.slane %v5081, 4
      %v5084 = vrot.slane %v4283, 5
      %v5085 = vsel %vm1955, %v5083, %v5084
      %v5086 = vrot.slane %v5004, 5
      %v5087 = vrot.slane %v5086, 4
      %v5088 = vrot.slane %v4285, 5
      %v5089 = vsel %vm1955, %v5087, %v5088
      %v5090 = vrot.slane %v5088, 4
      %v5091 = vrot.slane %v4286, 5
      %v5092 = vsel %vm1955, %v5090, %v5091
      %v5093 = vrot.slane %v5005, 5
      %v5094 = vrot.slane %v5093, 4
      %v5095 = vrot.slane %v4288, 5
      %v5096 = vsel %vm1955, %v5094, %v5095
      %v5097 = vrot.slane %v5095, 4
      %v5098 = vrot.slane %v4289, 5
      %v5099 = vsel %vm1955, %v5097, %v5098
      %v5100 = vrot.slane %v5006, 5
      %v5101 = vrot.slane %v5100, 4
      %v5102 = vrot.slane %v4291, 5
      %v5103 = vsel %vm1955, %v5101, %v5102
      %v5104 = vrot.slane %v5102, 4
      %v5105 = vrot.slane %v4292, 5
      %v5106 = vsel %vm1955, %v5104, %v5105
      %v5107 = vrot.slane %v5007, 5
      %v5108 = vrot.slane %v5107, 4
      %v5109 = vrot.slane %v4294, 5
      %v5110 = vsel %vm1955, %v5108, %v5109
      %v5111 = vrot.slane %v5109, 4
      %v5112 = vrot.slane %v4295, 5
      %v5113 = vsel %vm1955, %v5111, %v5112
      %v5114 = vrot.slane %v5008, 5
      %v5115 = vrot.slane %v5114, 4
      %v5116 = vrot.slane %v4297, 5
      %v5117 = vsel %vm1955, %v5115, %v5116
      %v5118 = vrot.slane %v5116, 4
      %v5119 = vrot.slane %v4298, 5
      %v5120 = vsel %vm1955, %v5118, %v5119
      %v5121 = vrot.slane %v5009, 5
      %v5122 = vrot.slane %v5121, 4
      %v5123 = vrot.slane %v4300, 5
      %v5124 = vsel %vm1955, %v5122, %v5123
      %v5125 = vrot.slane %v5123, 4
      %v5126 = vrot.slane %v4301, 5
      %v5127 = vsel %vm1955, %v5125, %v5126
      %v5128 = vrot.slane %v5010, 5
      %v5129 = vrot.slane %v5128, 4
      %v5130 = vrot.slane %v4303, 5
      %v5131 = vsel %vm1955, %v5129, %v5130
      %v5132 = vrot.slane %v5130, 4
      %v5133 = vrot.slane %v4304, 5
      %v5134 = vsel %vm1955, %v5132, %v5133
      %v5135 = vrot.slane %v5011, 5
      %v5136 = vrot.slane %v5135, 4
      %v5137 = vrot.slane %v4306, 5
      %v5138 = vsel %vm1955, %v5136, %v5137
      %v5139 = vrot.slane %v5137, 4
      %v5140 = vrot.slane %v4307, 5
      %v5141 = vsel %vm1955, %v5139, %v5140
      %v5142 = vrot.slane %v5012, 5
      %v5143 = vrot.slane %v5142, 4
      %v5144 = vrot.slane %v4309, 5
      %v5145 = vsel %vm1955, %v5143, %v5144
      %v5146 = vrot.slane %v5144, 4
      %v5147 = vrot.slane %v4310, 5
      %v5148 = vsel %vm1955, %v5146, %v5147
      %v5149 = vrot.slane %v5013, 5
      %v5150 = vrot.slane %v5149, 4
      %v5151 = vrot.slane %v4312, 5
      %v5152 = vsel %vm1955, %v5150, %v5151
      %v5153 = vrot.slane %v5151, 4
      %v5154 = vrot.slane %v4313, 5
      %v5155 = vsel %vm1955, %v5153, %v5154
      %v5156 = vrot.slane %v5014, 5
      %v5157 = vrot.slane %v5156, 4
      %v5158 = vrot.slane %v4315, 5
      %v5159 = vsel %vm1955, %v5157, %v5158
      %v5160 = vrot.slane %v5158, 4
      %v5161 = vrot.slane %v4316, 5
      %v5162 = vsel %vm1955, %v5160, %v5161
      %v5163 = vrot.slane %v5015, 5
      %v5164 = vrot.slane %v5163, 4
      %v5165 = vrot.slane %v4318, 5
      %v5166 = vsel %vm1955, %v5164, %v5165
      %v5167 = vrot.slane %v5165, 4
      %v5168 = vrot.slane %v4319, 5
      %v5169 = vsel %vm1955, %v5167, %v5168
      %v5170 = vrot.slane %v5016, 5
      %v5171 = vrot.slane %v5170, 4
      %v5172 = vrot.slane %v4321, 5
      %v5173 = vsel %vm1955, %v5171, %v5172
      %v5174 = vrot.slane %v5172, 4
      %v5175 = vrot.slane %v4322, 5
      %v5176 = vsel %vm1955, %v5174, %v5175
      %s5177 = scalar_lea.vmem %s1, 16
      %v5178 = vld [vmem:[%s5177] sm:$0x3]
      %v5179 = vunpack.c.l.b16 %v5068
      %v5180 = vunpack.c.l.b16 %v5071
      %v5181 = vunpack.c.l.b16 %v5075
      %v5182 = vunpack.c.l.b16 %v5078
      %v5183 = vunpack.c.l.b16 %v5082
      %v5184 = vunpack.c.l.b16 %v5085
      %v5185 = vunpack.c.l.b16 %v5089
      %v5186 = vunpack.c.l.b16 %v5092
      %v5187 = vunpack.c.l.b16 %v5096
      %v5188 = vunpack.c.l.b16 %v5099
      %v5189 = vunpack.c.l.b16 %v5103
      %v5190 = vunpack.c.l.b16 %v5106
      %v5191 = vunpack.c.l.b16 %v5110
      %v5192 = vunpack.c.l.b16 %v5113
      %v5193 = vunpack.c.l.b16 %v5117
      %v5194 = vunpack.c.l.b16 %v5120
      %v5195 = vunpack.c.l.b16 %v5124
      %v5196 = vunpack.c.l.b16 %v5127
      %v5197 = vunpack.c.l.b16 %v5131
      %v5198 = vunpack.c.l.b16 %v5134
      %v5199 = vunpack.c.l.b16 %v5138
      %v5200 = vunpack.c.l.b16 %v5141
      %v5201 = vunpack.c.l.b16 %v5145
      %v5202 = vunpack.c.l.b16 %v5148
      %v5203 = vunpack.c.l.b16 %v5152
      %v5204 = vunpack.c.l.b16 %v5155
      %v5205 = vunpack.c.l.b16 %v5159
      %v5206 = vunpack.c.l.b16 %v5162
      %v5207 = vunpack.c.l.b16 %v5166
      %v5208 = vunpack.c.l.b16 %v5169
      %v5209 = vunpack.c.l.b16 %v5173
      %v5210 = vunpack.c.l.b16 %v5176
      %v5211 = vpack.c.b16 %v5180, %v5179
      %v5212 = vpack.c.b16 %v5182, %v5181
      %v5213 = vpack.c.b16 %v5184, %v5183
      %v5214 = vpack.c.b16 %v5186, %v5185
      %v5215 = vpack.c.b16 %v5188, %v5187
      %v5216 = vpack.c.b16 %v5190, %v5189
      %v5217 = vpack.c.b16 %v5192, %v5191
      %v5218 = vpack.c.b16 %v5194, %v5193
      %v5219 = vpack.c.b16 %v5196, %v5195
      %v5220 = vpack.c.b16 %v5198, %v5197
      %v5221 = vpack.c.b16 %v5200, %v5199
      %v5222 = vpack.c.b16 %v5202, %v5201
      %v5223 = vpack.c.b16 %v5204, %v5203
      %v5224 = vpack.c.b16 %v5206, %v5205
      %v5225 = vpack.c.b16 %v5208, %v5207
      %v5226 = vpack.c.b16 %v5210, %v5209
      %v5228 = vsel %vm1399, %v5211, 0
      %v5231 = vsel %vm1399, %v5212, 0
      %v5234 = vsel %vm1399, %v5213, 0
      %v5237 = vsel %vm1399, %v5214, 0
      %v5240 = vsel %vm1399, %v5215, 0
      %v5243 = vsel %vm1399, %v5216, 0
      %v5246 = vsel %vm1399, %v5217, 0
      %v5249 = vsel %vm1399, %v5218, 0
      %v5252 = vsel %vm1399, %v5219, 0
      %v5255 = vsel %vm1399, %v5220, 0
      %v5258 = vsel %vm1399, %v5221, 0
      %v5261 = vsel %vm1399, %v5222, 0
      %v5264 = vsel %vm1399, %v5223, 0
      %v5267 = vsel %vm1399, %v5224, 0
      %v5270 = vsel %vm1399, %v5225, 0
      %v5273 = vsel %vm1399, %v5226, 0
      %v5276 = vsel %vm1448, %v5178, 0
      %5278 = vmatprep.subr.bf16.mxu0 0
      %5279 = vmatpush1.bf16.msra.mxu0 0
      %5280 = vmatprep.subr.bf16.mxu0 0
      %5281 = vmatpush1.bf16.msra.mxu0 0
      %5282 = vmatprep.subr.bf16.mxu0 0
      %5283 = vmatpush1.bf16.msra.mxu0 0
      %5284 = vmatprep.subr.bf16.mxu0 0
      %5285 = vmatpush1.bf16.msra.mxu0 0
      %5286 = vmatprep.subr.bf16.mxu0 0
      %5287 = vmatpush1.bf16.msra.mxu0 0
      %5288 = vmatprep.subr.bf16.mxu0 0
      %5289 = vmatpush1.bf16.msra.mxu0 0
      %5290 = vmatprep.subr.bf16.mxu0 0
      %5291 = vmatpush1.bf16.msra.mxu0 0
      %5292 = vmatprep.subr.bf16.mxu0 0
      %5293 = vmatpush1.bf16.msra.mxu0 %v5276
      %5294 = vmatprep.subr.bf16.mxu0 0
      %5295 = vmatpush2.bf16.msra.mxu0 0
      %5296 = vmatprep.subr.bf16.mxu0 0
      %5297 = vmatpush2.bf16.msra.mxu0 0
      %5298 = vmatprep.subr.bf16.mxu0 0
      %5299 = vmatpush2.bf16.msra.mxu0 0
      %5300 = vmatprep.subr.bf16.mxu0 0
      %5301 = vmatpush2.bf16.msra.mxu0 0
      %5302 = vmatprep.subr.bf16.mxu0 0
      %5303 = vmatpush2.bf16.msra.mxu0 0
      %5304 = vmatprep.subr.bf16.mxu0 0
      %5305 = vmatpush2.bf16.msra.mxu0 0
      %5306 = vmatprep.subr.bf16.mxu0 0
      %5307 = vmatpush2.bf16.msra.mxu0 0
      %5308 = vmatprep.subr.bf16.mxu0 0
      %5309 = vmatpush2.bf16.msra.mxu0 0
      %5310 = vmatprep.mubr.bf16.mxu0 0
      %5311 = vmatmul.mubr.bf16.gmra.mxu0 %v5228
      %v5312 = vpop.f32.mrf.mxu0
      %v5313 = vadd.f32 0.0, %v5312
      %v5314 = vpop.f32.mrf.mxu0
      %v5315 = vpop.f32.mrf.mxu0
      %v5316 = vadd.f32 0.0, %v5315
      %v5317 = vpop.f32.mrf.mxu0
      %5318 = vmatprep.mubr.bf16.mxu0 0
      %5319 = vmatmul.mubr.bf16.gmra.mxu0 %v5231
      %v5320 = vpop.f32.mrf.mxu0
      %v5321 = vadd.f32 0.0, %v5320
      %v5322 = vpop.f32.mrf.mxu0
      %v5323 = vpop.f32.mrf.mxu0
      %v5324 = vadd.f32 0.0, %v5323
      %v5325 = vpop.f32.mrf.mxu0
      %5326 = vmatprep.mubr.bf16.mxu0 0
      %5327 = vmatmul.mubr.bf16.gmra.mxu0 %v5234
      %v5328 = vpop.f32.mrf.mxu0
      %v5329 = vadd.f32 0.0, %v5328
      %v5330 = vpop.f32.mrf.mxu0
      %v5331 = vpop.f32.mrf.mxu0
      %v5332 = vadd.f32 0.0, %v5331
      %v5333 = vpop.f32.mrf.mxu0
      %5334 = vmatprep.mubr.bf16.mxu0 0
      %5335 = vmatmul.mubr.bf16.gmra.mxu0 %v5237
      %v5336 = vpop.f32.mrf.mxu0
      %v5337 = vadd.f32 0.0, %v5336
      %v5338 = vpop.f32.mrf.mxu0
      %v5339 = vpop.f32.mrf.mxu0
      %v5340 = vadd.f32 0.0, %v5339
      %v5341 = vpop.f32.mrf.mxu0
      %5342 = vmatprep.mubr.bf16.mxu0 0
      %5343 = vmatmul.mubr.bf16.gmra.mxu0 %v5240
      %v5344 = vpop.f32.mrf.mxu0
      %v5345 = vadd.f32 0.0, %v5344
      %v5346 = vpop.f32.mrf.mxu0
      %v5347 = vpop.f32.mrf.mxu0
      %v5348 = vadd.f32 0.0, %v5347
      %v5349 = vpop.f32.mrf.mxu0
      %5350 = vmatprep.mubr.bf16.mxu0 0
      %5351 = vmatmul.mubr.bf16.gmra.mxu0 %v5243
      %v5352 = vpop.f32.mrf.mxu0
      %v5353 = vadd.f32 0.0, %v5352
      %v5354 = vpop.f32.mrf.mxu0
      %v5355 = vpop.f32.mrf.mxu0
      %v5356 = vadd.f32 0.0, %v5355
      %v5357 = vpop.f32.mrf.mxu0
      %5358 = vmatprep.mubr.bf16.mxu0 0
      %5359 = vmatmul.mubr.bf16.gmra.mxu0 %v5246
      %v5360 = vpop.f32.mrf.mxu0
      %v5361 = vadd.f32 0.0, %v5360
      %v5362 = vpop.f32.mrf.mxu0
      %v5363 = vpop.f32.mrf.mxu0
      %v5364 = vadd.f32 0.0, %v5363
      %v5365 = vpop.f32.mrf.mxu0
      %5366 = vmatprep.mubr.bf16.mxu0 0
      %5367 = vmatmul.mubr.bf16.gmra.mxu0 %v5249
      %v5368 = vpop.f32.mrf.mxu0
      %v5369 = vadd.f32 0.0, %v5368
      %v5370 = vpop.f32.mrf.mxu0
      %v5371 = vpop.f32.mrf.mxu0
      %v5372 = vadd.f32 0.0, %v5371
      %v5373 = vpop.f32.mrf.mxu0
      %5374 = vmatprep.mubr.bf16.mxu0 0
      %5375 = vmatmul.mubr.bf16.gmra.mxu0 %v5252
      %v5376 = vpop.f32.mrf.mxu0
      %v5377 = vadd.f32 0.0, %v5376
      %v5378 = vpop.f32.mrf.mxu0
      %v5379 = vpop.f32.mrf.mxu0
      %v5380 = vadd.f32 0.0, %v5379
      %v5381 = vpop.f32.mrf.mxu0
      %5382 = vmatprep.mubr.bf16.mxu0 0
      %5383 = vmatmul.mubr.bf16.gmra.mxu0 %v5255
      %v5384 = vpop.f32.mrf.mxu0
      %v5385 = vadd.f32 0.0, %v5384
      %v5386 = vpop.f32.mrf.mxu0
      %v5387 = vpop.f32.mrf.mxu0
      %v5388 = vadd.f32 0.0, %v5387
      %v5389 = vpop.f32.mrf.mxu0
      %5390 = vmatprep.mubr.bf16.mxu0 0
      %5391 = vmatmul.mubr.bf16.gmra.mxu0 %v5258
      %v5392 = vpop.f32.mrf.mxu0
      %v5393 = vadd.f32 0.0, %v5392
      %v5394 = vpop.f32.mrf.mxu0
      %v5395 = vpop.f32.mrf.mxu0
      %v5396 = vadd.f32 0.0, %v5395
      %v5397 = vpop.f32.mrf.mxu0
      %5398 = vmatprep.mubr.bf16.mxu0 0
      %5399 = vmatmul.mubr.bf16.gmra.mxu0 %v5261
      %v5400 = vpop.f32.mrf.mxu0
      %v5401 = vadd.f32 0.0, %v5400
      %v5402 = vpop.f32.mrf.mxu0
      %v5403 = vpop.f32.mrf.mxu0
      %v5404 = vadd.f32 0.0, %v5403
      %v5405 = vpop.f32.mrf.mxu0
      %5406 = vmatprep.mubr.bf16.mxu0 0
      %5407 = vmatmul.mubr.bf16.gmra.mxu0 %v5264
      %v5408 = vpop.f32.mrf.mxu0
      %v5409 = vadd.f32 0.0, %v5408
      %v5410 = vpop.f32.mrf.mxu0
      %v5411 = vpop.f32.mrf.mxu0
      %v5412 = vadd.f32 0.0, %v5411
      %v5413 = vpop.f32.mrf.mxu0
      %5414 = vmatprep.mubr.bf16.mxu0 0
      %5415 = vmatmul.mubr.bf16.gmra.mxu0 %v5267
      %v5416 = vpop.f32.mrf.mxu0
      %v5417 = vadd.f32 0.0, %v5416
      %v5418 = vpop.f32.mrf.mxu0
      %v5419 = vpop.f32.mrf.mxu0
      %v5420 = vadd.f32 0.0, %v5419
      %v5421 = vpop.f32.mrf.mxu0
      %5422 = vmatprep.mubr.bf16.mxu0 0
      %5423 = vmatmul.mubr.bf16.gmra.mxu0 %v5270
      %v5424 = vpop.f32.mrf.mxu0
      %v5425 = vadd.f32 0.0, %v5424
      %v5426 = vpop.f32.mrf.mxu0
      %v5427 = vpop.f32.mrf.mxu0
      %v5428 = vadd.f32 0.0, %v5427
      %v5429 = vpop.f32.mrf.mxu0
      %5430 = vmatprep.mubr.bf16.mxu0 0
      %5431 = vmatmul.mubr.bf16.gmra.mxu0 %v5273
      %v5432 = vpop.f32.mrf.mxu0
      %v5433 = vadd.f32 0.0, %v5432
      %v5434 = vpop.f32.mrf.mxu0
      %v5435 = vpop.f32.mrf.mxu0
      %v5436 = vadd.f32 0.0, %v5435
      %v5437 = vpop.f32.mrf.mxu0
      %5438 = vdwg.mxu0
      %v5439 = vadd.f32 %v4969, %v5313
      %v5440 = vadd.f32 %v4970, %v5316
      %v5441 = vadd.f32 %v4971, %v5321
      %v5442 = vadd.f32 %v4972, %v5324
      %v5443 = vadd.f32 %v4973, %v5329
      %v5444 = vadd.f32 %v4974, %v5332
      %v5445 = vadd.f32 %v4975, %v5337
      %v5446 = vadd.f32 %v4976, %v5340
      %v5447 = vadd.f32 %v4977, %v5345
      %v5448 = vadd.f32 %v4978, %v5348
      %v5449 = vadd.f32 %v4979, %v5353
      %v5450 = vadd.f32 %v4980, %v5356
      %v5451 = vadd.f32 %v4981, %v5361
      %v5452 = vadd.f32 %v4982, %v5364
      %v5453 = vadd.f32 %v4983, %v5369
      %v5454 = vadd.f32 %v4984, %v5372
      %v5455 = vadd.f32 %v4985, %v5377
      %v5456 = vadd.f32 %v4986, %v5380
      %v5457 = vadd.f32 %v4987, %v5385
      %v5458 = vadd.f32 %v4988, %v5388
      %v5459 = vadd.f32 %v4989, %v5393
      %v5460 = vadd.f32 %v4990, %v5396
      %v5461 = vadd.f32 %v4991, %v5401
      %v5462 = vadd.f32 %v4992, %v5404
      %v5463 = vadd.f32 %v4993, %v5409
      %v5464 = vadd.f32 %v4994, %v5412
      %v5465 = vadd.f32 %v4995, %v5417
      %v5466 = vadd.f32 %v4996, %v5420
      %v5467 = vadd.f32 %v4997, %v5425
      %v5468 = vadd.f32 %v4998, %v5428
      %v5469 = vadd.f32 %v4999, %v5433
      %v5470 = vadd.f32 %v5000, %v5436
      %v5471 = vld [vmem:[%s2] sm:$0x1]
      %v5472 = vld [vmem:[%s3] sm:$0x1]
      %v5473 = vld [vmem:[%s4] sm:$0xff]
      %vm5474 = vcmask 64512
      %v5475 = vsel %vm5474, %v5439, 0.0
      %v5476 = vsel %vm5474, %v5440, 0.0
      %v5477 = vadd.f32 %v5475, %v5476
      %v5478 = vsel %vm5474, %v5441, 0.0
      %v5479 = vadd.f32 %v5477, %v5478
      %v5480 = vsel %vm5474, %v5442, 0.0
      %v5481 = vadd.f32 %v5479, %v5480
      %v5482 = vsel %vm5474, %v5443, 0.0
      %v5483 = vadd.f32 %v5481, %v5482
      %v5484 = vsel %vm5474, %v5444, 0.0
      %v5485 = vadd.f32 %v5483, %v5484
      %v5486 = vsel %vm5474, %v5445, 0.0
      %v5487 = vadd.f32 %v5485, %v5486
      %v5488 = vsel %vm5474, %v5446, 0.0
      %v5489 = vadd.f32 %v5487, %v5488
      %v5490 = vsel %vm5474, %v5447, 0.0
      %v5491 = vadd.f32 %v5489, %v5490
      %v5492 = vsel %vm5474, %v5448, 0.0
      %v5493 = vadd.f32 %v5491, %v5492
      %v5494 = vsel %vm5474, %v5449, 0.0
      %v5495 = vadd.f32 %v5493, %v5494
      %v5496 = vsel %vm5474, %v5450, 0.0
      %v5497 = vadd.f32 %v5495, %v5496
      %v5498 = vsel %vm5474, %v5451, 0.0
      %v5499 = vadd.f32 %v5497, %v5498
      %v5500 = vsel %vm5474, %v5452, 0.0
      %v5501 = vadd.f32 %v5499, %v5500
      %v5502 = vsel %vm5474, %v5453, 0.0
      %v5503 = vadd.f32 %v5501, %v5502
      %v5504 = vsel %vm5474, %v5454, 0.0
      %v5505 = vadd.f32 %v5503, %v5504
      %v5506 = vsel %vm5474, %v5455, 0.0
      %v5507 = vadd.f32 %v5505, %v5506
      %v5508 = vsel %vm5474, %v5456, 0.0
      %v5509 = vadd.f32 %v5507, %v5508
      %v5510 = vsel %vm5474, %v5457, 0.0
      %v5511 = vadd.f32 %v5509, %v5510
      %v5512 = vsel %vm5474, %v5458, 0.0
      %v5513 = vadd.f32 %v5511, %v5512
      %v5514 = vsel %vm5474, %v5459, 0.0
      %v5515 = vadd.f32 %v5513, %v5514
      %v5516 = vsel %vm5474, %v5460, 0.0
      %v5517 = vadd.f32 %v5515, %v5516
      %v5518 = vsel %vm5474, %v5461, 0.0
      %v5519 = vadd.f32 %v5517, %v5518
      %v5520 = vsel %vm5474, %v5462, 0.0
      %v5521 = vadd.f32 %v5519, %v5520
      %v5522 = vsel %vm5474, %v5463, 0.0
      %v5523 = vadd.f32 %v5521, %v5522
      %v5524 = vsel %vm5474, %v5464, 0.0
      %v5525 = vadd.f32 %v5523, %v5524
      %v5526 = vsel %vm5474, %v5465, 0.0
      %v5527 = vadd.f32 %v5525, %v5526
      %v5528 = vsel %vm5474, %v5466, 0.0
      %v5529 = vadd.f32 %v5527, %v5528
      %v5530 = vsel %vm5474, %v5467, 0.0
      %v5531 = vadd.f32 %v5529, %v5530
      %v5532 = vsel %vm5474, %v5468, 0.0
      %v5533 = vadd.f32 %v5531, %v5532
      %v5534 = vsel %vm5474, %v5469, 0.0
      %v5535 = vadd.f32 %v5533, %v5534
      %v5536 = vsel %vm5474, %v5470, 0.0
      %v5537 = vadd.f32 %v5535, %v5536
      %v5538 = vrot.slane %v5537, 4
      %v5539 = vadd.f32 %v5537, %v5538
      %v5540 = vrot.slane %v5539, 2
      %v5541 = vadd.f32 %v5539, %v5540
      %v5542 = vrot.slane %v5541, 1
      %v5543 = vadd.f32 %v5541, %v5542
      %v5544 = vmul.f32 %v5439, %v5439
      %v5545 = vmul.f32 %v5440, %v5440
      %v5546 = vmul.f32 %v5441, %v5441
      %v5547 = vmul.f32 %v5442, %v5442
      %v5548 = vmul.f32 %v5443, %v5443
      %v5549 = vmul.f32 %v5444, %v5444
      %v5550 = vmul.f32 %v5445, %v5445
      %v5551 = vmul.f32 %v5446, %v5446
      %v5552 = vmul.f32 %v5447, %v5447
      %v5553 = vmul.f32 %v5448, %v5448
      %v5554 = vmul.f32 %v5449, %v5449
      %v5555 = vmul.f32 %v5450, %v5450
      %v5556 = vmul.f32 %v5451, %v5451
      %v5557 = vmul.f32 %v5452, %v5452
      %v5558 = vmul.f32 %v5453, %v5453
      %v5559 = vmul.f32 %v5454, %v5454
      %v5560 = vmul.f32 %v5455, %v5455
      %v5561 = vmul.f32 %v5456, %v5456
      %v5562 = vmul.f32 %v5457, %v5457
      %v5563 = vmul.f32 %v5458, %v5458
      %v5564 = vmul.f32 %v5459, %v5459
      %v5565 = vmul.f32 %v5460, %v5460
      %v5566 = vmul.f32 %v5461, %v5461
      %v5567 = vmul.f32 %v5462, %v5462
      %v5568 = vmul.f32 %v5463, %v5463
      %v5569 = vmul.f32 %v5464, %v5464
      %v5570 = vmul.f32 %v5465, %v5465
      %v5571 = vmul.f32 %v5466, %v5466
      %v5572 = vmul.f32 %v5467, %v5467
      %v5573 = vmul.f32 %v5468, %v5468
      %v5574 = vmul.f32 %v5469, %v5469
      %v5575 = vmul.f32 %v5470, %v5470
      %v5576 = vsel %vm5474, %v5544, 0.0
      %v5577 = vsel %vm5474, %v5545, 0.0
      %v5578 = vadd.f32 %v5576, %v5577
      %v5579 = vsel %vm5474, %v5546, 0.0
      %v5580 = vadd.f32 %v5578, %v5579
      %v5581 = vsel %vm5474, %v5547, 0.0
      %v5582 = vadd.f32 %v5580, %v5581
      %v5583 = vsel %vm5474, %v5548, 0.0
      %v5584 = vadd.f32 %v5582, %v5583
      %v5585 = vsel %vm5474, %v5549, 0.0
      %v5586 = vadd.f32 %v5584, %v5585
      %v5587 = vsel %vm5474, %v5550, 0.0
      %v5588 = vadd.f32 %v5586, %v5587
      %v5589 = vsel %vm5474, %v5551, 0.0
      %v5590 = vadd.f32 %v5588, %v5589
      %v5591 = vsel %vm5474, %v5552, 0.0
      %v5592 = vadd.f32 %v5590, %v5591
      %v5593 = vsel %vm5474, %v5553, 0.0
      %v5594 = vadd.f32 %v5592, %v5593
      %v5595 = vsel %vm5474, %v5554, 0.0
      %v5596 = vadd.f32 %v5594, %v5595
      %v5597 = vsel %vm5474, %v5555, 0.0
      %v5598 = vadd.f32 %v5596, %v5597
      %v5599 = vsel %vm5474, %v5556, 0.0
      %v5600 = vadd.f32 %v5598, %v5599
      %v5601 = vsel %vm5474, %v5557, 0.0
      %v5602 = vadd.f32 %v5600, %v5601
      %v5603 = vsel %vm5474, %v5558, 0.0
      %v5604 = vadd.f32 %v5602, %v5603
      %v5605 = vsel %vm5474, %v5559, 0.0
      %v5606 = vadd.f32 %v5604, %v5605
      %v5607 = vsel %vm5474, %v5560, 0.0
      %v5608 = vadd.f32 %v5606, %v5607
      %v5609 = vsel %vm5474, %v5561, 0.0
      %v5610 = vadd.f32 %v5608, %v5609
      %v5611 = vsel %vm5474, %v5562, 0.0
      %v5612 = vadd.f32 %v5610, %v5611
      %v5613 = vsel %vm5474, %v5563, 0.0
      %v5614 = vadd.f32 %v5612, %v5613
      %v5615 = vsel %vm5474, %v5564, 0.0
      %v5616 = vadd.f32 %v5614, %v5615
      %v5617 = vsel %vm5474, %v5565, 0.0
      %v5618 = vadd.f32 %v5616, %v5617
      %v5619 = vsel %vm5474, %v5566, 0.0
      %v5620 = vadd.f32 %v5618, %v5619
      %v5621 = vsel %vm5474, %v5567, 0.0
      %v5622 = vadd.f32 %v5620, %v5621
      %v5623 = vsel %vm5474, %v5568, 0.0
      %v5624 = vadd.f32 %v5622, %v5623
      %v5625 = vsel %vm5474, %v5569, 0.0
      %v5626 = vadd.f32 %v5624, %v5625
      %v5627 = vsel %vm5474, %v5570, 0.0
      %v5628 = vadd.f32 %v5626, %v5627
      %v5629 = vsel %vm5474, %v5571, 0.0
      %v5630 = vadd.f32 %v5628, %v5629
      %v5631 = vsel %vm5474, %v5572, 0.0
      %v5632 = vadd.f32 %v5630, %v5631
      %v5633 = vsel %vm5474, %v5573, 0.0
      %v5634 = vadd.f32 %v5632, %v5633
      %v5635 = vsel %vm5474, %v5574, 0.0
      %v5636 = vadd.f32 %v5634, %v5635
      %v5637 = vsel %vm5474, %v5575, 0.0
      %v5638 = vadd.f32 %v5636, %v5637
      %v5639 = vrot.slane %v5638, 4
      %v5640 = vadd.f32 %v5638, %v5639
      %v5641 = vrot.slane %v5640, 2
      %v5642 = vadd.f32 %v5640, %v5641
      %v5643 = vrot.slane %v5642, 1
      %v5644 = vadd.f32 %v5642, %v5643
      %v5646 = vsel %vm5474, %v5543, 0
      %5648 = vmatprep.subr.mxu0 0.0
      %5649 = vmatpush1.msra.mxu0 0.0
      %5650 = vmatprep.subr.mxu0 0.0
      %5651 = vmatpush1.msra.mxu0 0.0
      %5652 = vmatprep.subr.mxu0 0.0
      %5653 = vmatpush1.msra.mxu0 0.0
      %5654 = vmatprep.subr.mxu0 0.0
      %5655 = vmatpush1.msra.mxu0 0.0
      %5656 = vmatprep.subr.mxu0 0.0
      %5657 = vmatpush1.msra.mxu0 0.0
      %5658 = vmatprep.subr.mxu0 0.0
      %5659 = vmatpush1.msra.mxu0 0.0
      %5660 = vmatprep.subr.mxu0 0.0
      %5661 = vmatpush1.msra.mxu0 0.0
      %5662 = vmatprep.subr.mxu0 0.0
      %5663 = vmatpush1.msra.mxu0 0.0
      %5664 = vmatprep.subr.mxu0 0.0
      %5665 = vmatpush1.msra.mxu0 0.0
      %5666 = vmatprep.subr.mxu0 0.0
      %5667 = vmatpush1.msra.mxu0 0.0
      %5668 = vmatprep.subr.mxu0 0.0
      %5669 = vmatpush1.msra.mxu0 0.0
      %5670 = vmatprep.subr.mxu0 0.0
      %5671 = vmatpush1.msra.mxu0 0.0
      %5672 = vmatprep.subr.mxu0 0.0
      %5673 = vmatpush1.msra.mxu0 0.0
      %5674 = vmatprep.subr.mxu0 0.0
      %5675 = vmatpush1.msra.mxu0 0.0
      %5676 = vmatprep.subr.mxu0 0.0
      %5677 = vmatpush1.msra.mxu0 0.0
      %5678 = vmatprep.subr.mxu0 0.0
      %5679 = vmatpush1.msra.mxu0 %v5473
      %5680 = vmatprep.subr.mxu0 0.0
      %5681 = vmatpush2.msra.mxu0 0.0
      %5682 = vmatprep.subr.mxu0 0.0
      %5683 = vmatpush2.msra.mxu0 0.0
      %5684 = vmatprep.subr.mxu0 0.0
      %5685 = vmatpush2.msra.mxu0 0.0
      %5686 = vmatprep.subr.mxu0 0.0
      %5687 = vmatpush2.msra.mxu0 0.0
      %5688 = vmatprep.subr.mxu0 0.0
      %5689 = vmatpush2.msra.mxu0 0.0
      %5690 = vmatprep.subr.mxu0 0.0
      %5691 = vmatpush2.msra.mxu0 0.0
      %5692 = vmatprep.subr.mxu0 0.0
      %5693 = vmatpush2.msra.mxu0 0.0
      %5694 = vmatprep.subr.mxu0 0.0
      %5695 = vmatpush2.msra.mxu0 0.0
      %5696 = vmatprep.subr.mxu0 0.0
      %5697 = vmatpush2.msra.mxu0 0.0
      %5698 = vmatprep.subr.mxu0 0.0
      %5699 = vmatpush2.msra.mxu0 0.0
      %5700 = vmatprep.subr.mxu0 0.0
      %5701 = vmatpush2.msra.mxu0 0.0
      %5702 = vmatprep.subr.mxu0 0.0
      %5703 = vmatpush2.msra.mxu0 0.0
      %5704 = vmatprep.subr.mxu0 0.0
      %5705 = vmatpush2.msra.mxu0 0.0
      %5706 = vmatprep.subr.mxu0 0.0
      %5707 = vmatpush2.msra.mxu0 0.0
      %5708 = vmatprep.subr.mxu0 0.0
      %5709 = vmatpush2.msra.mxu0 0.0
      %5710 = vmatprep.subr.mxu0 0.0
      %5711 = vmatpush2.msra.mxu0 0.0
      %5712 = vmatprep.mubr.f32.mxu0 0.0
      %5713 = vmatmul.mubr.f32.gmra.mxu0 %v5646
      %v5714 = vpop.f32.mrf.mxu0
      %v5715 = vadd.f32 0.0, %v5714
      %v5716 = vpop.f32.mrf.mxu0
      %5717 = vdwg.mxu0
      %v5719 = vsel %vm5474, %v5644, 0
      %5721 = vmatprep.subr.mxu0 0.0
      %5722 = vmatpush1.msra.mxu0 0.0
      %5723 = vmatprep.subr.mxu0 0.0
      %5724 = vmatpush1.msra.mxu0 0.0
      %5725 = vmatprep.subr.mxu0 0.0
      %5726 = vmatpush1.msra.mxu0 0.0
      %5727 = vmatprep.subr.mxu0 0.0
      %5728 = vmatpush1.msra.mxu0 0.0
      %5729 = vmatprep.subr.mxu0 0.0
      %5730 = vmatpush1.msra.mxu0 0.0
      %5731 = vmatprep.subr.mxu0 0.0
      %5732 = vmatpush1.msra.mxu0 0.0
      %5733 = vmatprep.subr.mxu0 0.0
      %5734 = vmatpush1.msra.mxu0 0.0
      %5735 = vmatprep.subr.mxu0 0.0
      %5736 = vmatpush1.msra.mxu0 0.0
      %5737 = vmatprep.subr.mxu0 0.0
      %5738 = vmatpush1.msra.mxu0 0.0
      %5739 = vmatprep.subr.mxu0 0.0
      %5740 = vmatpush1.msra.mxu0 0.0
      %5741 = vmatprep.subr.mxu0 0.0
      %5742 = vmatpush1.msra.mxu0 0.0
      %5743 = vmatprep.subr.mxu0 0.0
      %5744 = vmatpush1.msra.mxu0 0.0
      %5745 = vmatprep.subr.mxu0 0.0
      %5746 = vmatpush1.msra.mxu0 0.0
      %5747 = vmatprep.subr.mxu0 0.0
      %5748 = vmatpush1.msra.mxu0 0.0
      %5749 = vmatprep.subr.mxu0 0.0
      %5750 = vmatpush1.msra.mxu0 0.0
      %5751 = vmatprep.subr.mxu0 0.0
      %5752 = vmatpush1.msra.mxu0 %v5473
      %5753 = vmatprep.subr.mxu0 0.0
      %5754 = vmatpush2.msra.mxu0 0.0
      %5755 = vmatprep.subr.mxu0 0.0
      %5756 = vmatpush2.msra.mxu0 0.0
      %5757 = vmatprep.subr.mxu0 0.0
      %5758 = vmatpush2.msra.mxu0 0.0
      %5759 = vmatprep.subr.mxu0 0.0
      %5760 = vmatpush2.msra.mxu0 0.0
      %5761 = vmatprep.subr.mxu0 0.0
      %5762 = vmatpush2.msra.mxu0 0.0
      %5763 = vmatprep.subr.mxu0 0.0
      %5764 = vmatpush2.msra.mxu0 0.0
      %5765 = vmatprep.subr.mxu0 0.0
      %5766 = vmatpush2.msra.mxu0 0.0
      %5767 = vmatprep.subr.mxu0 0.0
      %5768 = vmatpush2.msra.mxu0 0.0
      %5769 = vmatprep.subr.mxu0 0.0
      %5770 = vmatpush2.msra.mxu0 0.0
      %5771 = vmatprep.subr.mxu0 0.0
      %5772 = vmatpush2.msra.mxu0 0.0
      %5773 = vmatprep.subr.mxu0 0.0
      %5774 = vmatpush2.msra.mxu0 0.0
      %5775 = vmatprep.subr.mxu0 0.0
      %5776 = vmatpush2.msra.mxu0 0.0
      %5777 = vmatprep.subr.mxu0 0.0
      %5778 = vmatpush2.msra.mxu0 0.0
      %5779 = vmatprep.subr.mxu0 0.0
      %5780 = vmatpush2.msra.mxu0 0.0
      %5781 = vmatprep.subr.mxu0 0.0
      %5782 = vmatpush2.msra.mxu0 0.0
      %5783 = vmatprep.subr.mxu0 0.0
      %5784 = vmatpush2.msra.mxu0 0.0
      %5785 = vmatprep.mubr.f32.mxu0 0.0
      %5786 = vmatmul.mubr.f32.gmra.mxu0 %v5719
      %v5787 = vpop.f32.mrf.mxu0
      %v5788 = vadd.f32 0.0, %v5787
      %v5789 = vpop.f32.mrf.mxu0
      %5790 = vdwg.mxu0
      %v5791 = vrcp.pop 1024.0
      %v5792 = vmul.f32 %v5715, %v5791
      %v5793 = vmul.f32 %v5788, %v5791
      %v5794 = vmul.f32 %v5792, %v5792
      %v5795 = vsub.f32 %v5793, %v5794
      %v5796 = vadd.f32 %v5795, 1e-05
      %v5797 = vrsqrt.pop %v5796
      %v5798 = vlaneseq
      %v5799 = vshrl.u32 %v5798, 7
      %v5800 = vsub.s32 0, %v5799
      %v5801 = vrot.slane %v5792, %v5800
      %v5802 = vsub.f32 %v5439, %v5801
      %v5803 = vsub.f32 %v5440, %v5801
      %v5804 = vsub.f32 %v5441, %v5801
      %v5805 = vsub.f32 %v5442, %v5801
      %v5806 = vsub.f32 %v5443, %v5801
      %v5807 = vsub.f32 %v5444, %v5801
      %v5808 = vsub.f32 %v5445, %v5801
      %v5809 = vsub.f32 %v5446, %v5801
      %v5810 = vsub.f32 %v5447, %v5801
      %v5811 = vsub.f32 %v5448, %v5801
      %v5812 = vsub.f32 %v5449, %v5801
      %v5813 = vsub.f32 %v5450, %v5801
      %v5814 = vsub.f32 %v5451, %v5801
      %v5815 = vsub.f32 %v5452, %v5801
      %v5816 = vsub.f32 %v5453, %v5801
      %v5817 = vsub.f32 %v5454, %v5801
      %v5818 = vsub.f32 %v5455, %v5801
      %v5819 = vsub.f32 %v5456, %v5801
      %v5820 = vsub.f32 %v5457, %v5801
      %v5821 = vsub.f32 %v5458, %v5801
      %v5822 = vsub.f32 %v5459, %v5801
      %v5823 = vsub.f32 %v5460, %v5801
      %v5824 = vsub.f32 %v5461, %v5801
      %v5825 = vsub.f32 %v5462, %v5801
      %v5826 = vsub.f32 %v5463, %v5801
      %v5827 = vsub.f32 %v5464, %v5801
      %v5828 = vsub.f32 %v5465, %v5801
      %v5829 = vsub.f32 %v5466, %v5801
      %v5830 = vsub.f32 %v5467, %v5801
      %v5831 = vsub.f32 %v5468, %v5801
      %v5832 = vsub.f32 %v5469, %v5801
      %v5833 = vsub.f32 %v5470, %v5801
      %v5834 = vlaneseq
      %v5835 = vshrl.u32 %v5834, 7
      %v5836 = vsub.s32 0, %v5835
      %v5837 = vrot.slane %v5797, %v5836
      %v5838 = vmul.f32 %v5802, %v5837
      %v5839 = vmul.f32 %v5803, %v5837
      %v5840 = vmul.f32 %v5804, %v5837
      %v5841 = vmul.f32 %v5805, %v5837
      %v5842 = vmul.f32 %v5806, %v5837
      %v5843 = vmul.f32 %v5807, %v5837
      %v5844 = vmul.f32 %v5808, %v5837
      %v5845 = vmul.f32 %v5809, %v5837
      %v5846 = vmul.f32 %v5810, %v5837
      %v5847 = vmul.f32 %v5811, %v5837
      %v5848 = vmul.f32 %v5812, %v5837
      %v5849 = vmul.f32 %v5813, %v5837
      %v5850 = vmul.f32 %v5814, %v5837
      %v5851 = vmul.f32 %v5815, %v5837
      %v5852 = vmul.f32 %v5816, %v5837
      %v5853 = vmul.f32 %v5817, %v5837
      %v5854 = vmul.f32 %v5818, %v5837
      %v5855 = vmul.f32 %v5819, %v5837
      %v5856 = vmul.f32 %v5820, %v5837
      %v5857 = vmul.f32 %v5821, %v5837
      %v5858 = vmul.f32 %v5822, %v5837
      %v5859 = vmul.f32 %v5823, %v5837
      %v5860 = vmul.f32 %v5824, %v5837
      %v5861 = vmul.f32 %v5825, %v5837
      %v5862 = vmul.f32 %v5826, %v5837
      %v5863 = vmul.f32 %v5827, %v5837
      %v5864 = vmul.f32 %v5828, %v5837
      %v5865 = vmul.f32 %v5829, %v5837
      %v5866 = vmul.f32 %v5830, %v5837
      %v5867 = vmul.f32 %v5831, %v5837
      %v5868 = vmul.f32 %v5832, %v5837
      %v5869 = vmul.f32 %v5833, %v5837
      %v5871 = vlaneseq
      %v5872 = vshrl.u32 %v5871, 7
      %v5873 = vsub.s32 0, %v5872
      %v5874 = vrot.slane %v5471, %v5873
      %v5876 = vmul.f32 %v5838, %v5874
      %v5877 = vmul.f32 %v5839, %v5874
      %v5878 = vmul.f32 %v5840, %v5874
      %v5879 = vmul.f32 %v5841, %v5874
      %v5880 = vmul.f32 %v5842, %v5874
      %v5881 = vmul.f32 %v5843, %v5874
      %v5882 = vmul.f32 %v5844, %v5874
      %v5883 = vmul.f32 %v5845, %v5874
      %v5884 = vmul.f32 %v5846, %v5874
      %v5885 = vmul.f32 %v5847, %v5874
      %v5886 = vmul.f32 %v5848, %v5874
      %v5887 = vmul.f32 %v5849, %v5874
      %v5888 = vmul.f32 %v5850, %v5874
      %v5889 = vmul.f32 %v5851, %v5874
      %v5890 = vmul.f32 %v5852, %v5874
      %v5891 = vmul.f32 %v5853, %v5874
      %v5892 = vmul.f32 %v5854, %v5874
      %v5893 = vmul.f32 %v5855, %v5874
      %v5894 = vmul.f32 %v5856, %v5874
      %v5895 = vmul.f32 %v5857, %v5874
      %v5896 = vmul.f32 %v5858, %v5874
      %v5897 = vmul.f32 %v5859, %v5874
      %v5898 = vmul.f32 %v5860, %v5874
      %v5899 = vmul.f32 %v5861, %v5874
      %v5900 = vmul.f32 %v5862, %v5874
      %v5901 = vmul.f32 %v5863, %v5874
      %v5902 = vmul.f32 %v5864, %v5874
      %v5903 = vmul.f32 %v5865, %v5874
      %v5904 = vmul.f32 %v5866, %v5874
      %v5905 = vmul.f32 %v5867, %v5874
      %v5906 = vmul.f32 %v5868, %v5874
      %v5907 = vmul.f32 %v5869, %v5874
      %v5909 = vlaneseq
      %v5910 = vshrl.u32 %v5909, 7
      %v5911 = vsub.s32 0, %v5910
      %v5912 = vrot.slane %v5472, %v5911
      %v5914 = vadd.f32 %v5876, %v5912
      %v5915 = vadd.f32 %v5877, %v5912
      %v5916 = vadd.f32 %v5878, %v5912
      %v5917 = vadd.f32 %v5879, %v5912
      %v5918 = vadd.f32 %v5880, %v5912
      %v5919 = vadd.f32 %v5881, %v5912
      %v5920 = vadd.f32 %v5882, %v5912
      %v5921 = vadd.f32 %v5883, %v5912
      %v5922 = vadd.f32 %v5884, %v5912
      %v5923 = vadd.f32 %v5885, %v5912
      %v5924 = vadd.f32 %v5886, %v5912
      %v5925 = vadd.f32 %v5887, %v5912
      %v5926 = vadd.f32 %v5888, %v5912
      %v5927 = vadd.f32 %v5889, %v5912
      %v5928 = vadd.f32 %v5890, %v5912
      %v5929 = vadd.f32 %v5891, %v5912
      %v5930 = vadd.f32 %v5892, %v5912
      %v5931 = vadd.f32 %v5893, %v5912
      %v5932 = vadd.f32 %v5894, %v5912
      %v5933 = vadd.f32 %v5895, %v5912
      %v5934 = vadd.f32 %v5896, %v5912
      %v5935 = vadd.f32 %v5897, %v5912
      %v5936 = vadd.f32 %v5898, %v5912
      %v5937 = vadd.f32 %v5899, %v5912
      %v5938 = vadd.f32 %v5900, %v5912
      %v5939 = vadd.f32 %v5901, %v5912
      %v5940 = vadd.f32 %v5902, %v5912
      %v5941 = vadd.f32 %v5903, %v5912
      %v5942 = vadd.f32 %v5904, %v5912
      %v5943 = vadd.f32 %v5905, %v5912
      %v5944 = vadd.f32 %v5906, %v5912
      %v5945 = vadd.f32 %v5907, %v5912
      %v5946 = vmax.f32 %v5914, 0.0
      %v5947 = vmax.f32 %v5915, 0.0
      %v5948 = vmax.f32 %v5916, 0.0
      %v5949 = vmax.f32 %v5917, 0.0
      %v5950 = vmax.f32 %v5918, 0.0
      %v5951 = vmax.f32 %v5919, 0.0
      %v5952 = vmax.f32 %v5920, 0.0
      %v5953 = vmax.f32 %v5921, 0.0
      %v5954 = vmax.f32 %v5922, 0.0
      %v5955 = vmax.f32 %v5923, 0.0
      %v5956 = vmax.f32 %v5924, 0.0
      %v5957 = vmax.f32 %v5925, 0.0
      %v5958 = vmax.f32 %v5926, 0.0
      %v5959 = vmax.f32 %v5927, 0.0
      %v5960 = vmax.f32 %v5928, 0.0
      %v5961 = vmax.f32 %v5929, 0.0
      %v5962 = vmax.f32 %v5930, 0.0
      %v5963 = vmax.f32 %v5931, 0.0
      %v5964 = vmax.f32 %v5932, 0.0
      %v5965 = vmax.f32 %v5933, 0.0
      %v5966 = vmax.f32 %v5934, 0.0
      %v5967 = vmax.f32 %v5935, 0.0
      %v5968 = vmax.f32 %v5936, 0.0
      %v5969 = vmax.f32 %v5937, 0.0
      %v5970 = vmax.f32 %v5938, 0.0
      %v5971 = vmax.f32 %v5939, 0.0
      %v5972 = vmax.f32 %v5940, 0.0
      %v5973 = vmax.f32 %v5941, 0.0
      %v5974 = vmax.f32 %v5942, 0.0
      %v5975 = vmax.f32 %v5943, 0.0
      %v5976 = vmax.f32 %v5944, 0.0
      %v5977 = vmax.f32 %v5945, 0.0
      %vm5978 = vcmask 60416
      %5979 = vst.msk [vmem:[#allocation3] sm:$0xf] %vm5978, 0
      %5980 = vst.msk [vmem:[#allocation3 + $0x4] sm:$0xf] %vm5978, 0
      %vm5981 = vcmask 57344
      %5982 = vst.msk [vmem:[#allocation3 + $0x8] sm:$0x1] %vm5981, 0
      %s5983 = scalar_lea.vmem [#allocation3], 204
      %5984 = vst.msk [vmem:[%s5983] sm:$0xf] %vm5978, 0
      %5985 = vst.msk [vmem:[%s5983 + $0x4] sm:$0xf] %vm5978, 0
      %5986 = vst.msk [vmem:[%s5983 + $0x8] sm:$0x1] %vm5981, 0
      %s5987 = scalar_lea.vmem [#allocation3], 12
      %vm5988 = vcmask 57344
      %vm5989 = vmand %vm5988, %vm345
      %v5990 = vld [vmem:[%s5987] sm:$0x1]
      %v5991 = vsel %vm5989, 0, %v5990
      %5992 = vst [vmem:[%s5987] sm:$0x1] %v5991
      %v5993 = vld [vmem:[%s5987 + $0xc] sm:$0x1]
      %v5994 = vsel %vm5989, 0, %v5993
      %5995 = vst [vmem:[%s5987 + $0xc] sm:$0x1] %v5994
      %v5996 = vld [vmem:[%s5987 + $0x18] sm:$0x1]
      %v5997 = vsel %vm5989, 0, %v5996
      %5998 = vst [vmem:[%s5987 + $0x18] sm:$0x1] %v5997
      %v5999 = vld [vmem:[%s5987 + $0x24] sm:$0x1]
      %v6000 = vsel %vm5989, 0, %v5999
      %6001 = vst [vmem:[%s5987 + $0x24] sm:$0x1] %v6000
      %v6002 = vld [vmem:[%s5987 + $0x30] sm:$0x1]
      %v6003 = vsel %vm5989, 0, %v6002
      %6004 = vst [vmem:[%s5987 + $0x30] sm:$0x1] %v6003
      %v6005 = vld [vmem:[%s5987 + $0x3c] sm:$0x1]
      %v6006 = vsel %vm5989, 0, %v6005
      %6007 = vst [vmem:[%s5987 + $0x3c] sm:$0x1] %v6006
      %v6008 = vld [vmem:[%s5987 + $0x48] sm:$0x1]
      %v6009 = vsel %vm5989, 0, %v6008
      %6010 = vst [vmem:[%s5987 + $0x48] sm:$0x1] %v6009
      %v6011 = vld [vmem:[%s5987 + $0x54] sm:$0x1]
      %v6012 = vsel %vm5989, 0, %v6011
      %6013 = vst [vmem:[%s5987 + $0x54] sm:$0x1] %v6012
      %v6014 = vld [vmem:[%s5987 + $0x60] sm:$0x1]
      %v6015 = vsel %vm5989, 0, %v6014
      %6016 = vst [vmem:[%s5987 + $0x60] sm:$0x1] %v6015
      %v6017 = vld [vmem:[%s5987 + $0x6c] sm:$0x1]
      %v6018 = vsel %vm5989, 0, %v6017
      %6019 = vst [vmem:[%s5987 + $0x6c] sm:$0x1] %v6018
      %v6020 = vld [vmem:[%s5987 + $0x78] sm:$0x1]
      %v6021 = vsel %vm5989, 0, %v6020
      %6022 = vst [vmem:[%s5987 + $0x78] sm:$0x1] %v6021
      %v6023 = vld [vmem:[%s5987 + $0x84] sm:$0x1]
      %v6024 = vsel %vm5989, 0, %v6023
      %6025 = vst [vmem:[%s5987 + $0x84] sm:$0x1] %v6024
      %v6026 = vld [vmem:[%s5987 + $0x90] sm:$0x1]
      %v6027 = vsel %vm5989, 0, %v6026
      %6028 = vst [vmem:[%s5987 + $0x90] sm:$0x1] %v6027
      %v6029 = vld [vmem:[%s5987 + $0x9c] sm:$0x1]
      %v6030 = vsel %vm5989, 0, %v6029
      %6031 = vst [vmem:[%s5987 + $0x9c] sm:$0x1] %v6030
      %v6032 = vld [vmem:[%s5987 + $0xa8] sm:$0x1]
      %v6033 = vsel %vm5989, 0, %v6032
      %6034 = vst [vmem:[%s5987 + $0xa8] sm:$0x1] %v6033
      %v6035 = vld [vmem:[%s5987 + $0xb4] sm:$0x1]
      %v6036 = vsel %vm5989, 0, %v6035
      %6037 = vst [vmem:[%s5987 + $0xb4] sm:$0x1] %v6036
      %vm6038 = vmand %vm5988, %vm395
      %v6039 = vld [vmem:[%s5987 + $0x8] sm:$0x1]
      %v6040 = vsel %vm6038, 0, %v6039
      %6041 = vst [vmem:[%s5987 + $0x8] sm:$0x1] %v6040
      %v6042 = vld [vmem:[%s5987 + $0x14] sm:$0x1]
      %v6043 = vsel %vm6038, 0, %v6042
      %6044 = vst [vmem:[%s5987 + $0x14] sm:$0x1] %v6043
      %v6045 = vld [vmem:[%s5987 + $0x20] sm:$0x1]
      %v6046 = vsel %vm6038, 0, %v6045
      %6047 = vst [vmem:[%s5987 + $0x20] sm:$0x1] %v6046
      %v6048 = vld [vmem:[%s5987 + $0x2c] sm:$0x1]
      %v6049 = vsel %vm6038, 0, %v6048
      %6050 = vst [vmem:[%s5987 + $0x2c] sm:$0x1] %v6049
      %v6051 = vld [vmem:[%s5987 + $0x38] sm:$0x1]
      %v6052 = vsel %vm6038, 0, %v6051
      %6053 = vst [vmem:[%s5987 + $0x38] sm:$0x1] %v6052
      %v6054 = vld [vmem:[%s5987 + $0x44] sm:$0x1]
      %v6055 = vsel %vm6038, 0, %v6054
      %6056 = vst [vmem:[%s5987 + $0x44] sm:$0x1] %v6055
      %v6057 = vld [vmem:[%s5987 + $0x50] sm:$0x1]
      %v6058 = vsel %vm6038, 0, %v6057
      %6059 = vst [vmem:[%s5987 + $0x50] sm:$0x1] %v6058
      %v6060 = vld [vmem:[%s5987 + $0x5c] sm:$0x1]
      %v6061 = vsel %vm6038, 0, %v6060
      %6062 = vst [vmem:[%s5987 + $0x5c] sm:$0x1] %v6061
      %v6063 = vld [vmem:[%s5987 + $0x68] sm:$0x1]
      %v6064 = vsel %vm6038, 0, %v6063
      %6065 = vst [vmem:[%s5987 + $0x68] sm:$0x1] %v6064
      %v6066 = vld [vmem:[%s5987 + $0x74] sm:$0x1]
      %v6067 = vsel %vm6038, 0, %v6066
      %6068 = vst [vmem:[%s5987 + $0x74] sm:$0x1] %v6067
      %v6069 = vld [vmem:[%s5987 + $0x80] sm:$0x1]
      %v6070 = vsel %vm6038, 0, %v6069
      %6071 = vst [vmem:[%s5987 + $0x80] sm:$0x1] %v6070
      %v6072 = vld [vmem:[%s5987 + $0x8c] sm:$0x1]
      %v6073 = vsel %vm6038, 0, %v6072
      %6074 = vst [vmem:[%s5987 + $0x8c] sm:$0x1] %v6073
      %v6075 = vld [vmem:[%s5987 + $0x98] sm:$0x1]
      %v6076 = vsel %vm6038, 0, %v6075
      %6077 = vst [vmem:[%s5987 + $0x98] sm:$0x1] %v6076
      %v6078 = vld [vmem:[%s5987 + $0xa4] sm:$0x1]
      %v6079 = vsel %vm6038, 0, %v6078
      %6080 = vst [vmem:[%s5987 + $0xa4] sm:$0x1] %v6079
      %v6081 = vld [vmem:[%s5987 + $0xb0] sm:$0x1]
      %v6082 = vsel %vm6038, 0, %v6081
      %6083 = vst [vmem:[%s5987 + $0xb0] sm:$0x1] %v6082
      %v6084 = vld [vmem:[%s5987 + $0xbc] sm:$0x1]
      %v6085 = vsel %vm6038, 0, %v6084
      %6086 = vst [vmem:[%s5987 + $0xbc] sm:$0x1] %v6085
      %v6087 = vpack.c.bf16 %v5947, %v5946
      %v6088 = vpack.c.bf16 %v5949, %v5948
      %v6089 = vpack.c.bf16 %v5951, %v5950
      %v6090 = vpack.c.bf16 %v5953, %v5952
      %v6091 = vpack.c.bf16 %v5955, %v5954
      %v6092 = vpack.c.bf16 %v5957, %v5956
      %v6093 = vpack.c.bf16 %v5959, %v5958
      %v6094 = vpack.c.bf16 %v5961, %v5960
      %v6095 = vpack.c.bf16 %v5963, %v5962
      %v6096 = vpack.c.bf16 %v5965, %v5964
      %v6097 = vpack.c.bf16 %v5967, %v5966
      %v6098 = vpack.c.bf16 %v5969, %v5968
      %v6099 = vpack.c.bf16 %v5971, %v5970
      %v6100 = vpack.c.bf16 %v5973, %v5972
      %v6101 = vpack.c.bf16 %v5975, %v5974
      %v6102 = vpack.c.bf16 %v5977, %v5976
      %v6119 = vunpack.c.l.b16 %v6087
      %v6120 = vunpack.c.h.b16 %v6087
      %v6121 = vunpack.c.l.b16 %v6088
      %v6122 = vunpack.c.h.b16 %v6088
      %v6123 = vunpack.c.l.b16 %v6089
      %v6124 = vunpack.c.h.b16 %v6089
      %v6125 = vunpack.c.l.b16 %v6090
      %v6126 = vunpack.c.h.b16 %v6090
      %v6127 = vunpack.c.l.b16 %v6091
      %v6128 = vunpack.c.h.b16 %v6091
      %v6129 = vunpack.c.l.b16 %v6092
      %v6130 = vunpack.c.h.b16 %v6092
      %v6131 = vunpack.c.l.b16 %v6093
      %v6132 = vunpack.c.h.b16 %v6093
      %v6133 = vunpack.c.l.b16 %v6094
      %v6134 = vunpack.c.h.b16 %v6094
      %v6135 = vunpack.c.l.b16 %v6095
      %v6136 = vunpack.c.h.b16 %v6095
      %v6137 = vunpack.c.l.b16 %v6096
      %v6138 = vunpack.c.h.b16 %v6096
      %v6139 = vunpack.c.l.b16 %v6097
      %v6140 = vunpack.c.h.b16 %v6097
      %v6141 = vunpack.c.l.b16 %v6098
      %v6142 = vunpack.c.h.b16 %v6098
      %v6143 = vunpack.c.l.b16 %v6099
      %v6144 = vunpack.c.h.b16 %v6099
      %v6145 = vunpack.c.l.b16 %v6100
      %v6146 = vunpack.c.h.b16 %v6100
      %v6147 = vunpack.c.l.b16 %v6101
      %v6148 = vunpack.c.h.b16 %v6101
      %v6149 = vunpack.c.l.b16 %v6102
      %v6150 = vunpack.c.h.b16 %v6102
      %v6151 = vpack.c.b16 %v6119, %v6119
      %v6152 = vpack.c.b16 %v6120, %v6120
      %v6153 = vpack.c.b16 %v6121, %v6121
      %v6154 = vpack.c.b16 %v6122, %v6122
      %v6155 = vpack.c.b16 %v6123, %v6123
      %v6156 = vpack.c.b16 %v6124, %v6124
      %v6157 = vpack.c.b16 %v6125, %v6125
      %v6158 = vpack.c.b16 %v6126, %v6126
      %v6159 = vpack.c.b16 %v6127, %v6127
      %v6160 = vpack.c.b16 %v6128, %v6128
      %v6161 = vpack.c.b16 %v6129, %v6129
      %v6162 = vpack.c.b16 %v6130, %v6130
      %v6163 = vpack.c.b16 %v6131, %v6131
      %v6164 = vpack.c.b16 %v6132, %v6132
      %v6165 = vpack.c.b16 %v6133, %v6133
      %v6166 = vpack.c.b16 %v6134, %v6134
      %v6167 = vpack.c.b16 %v6135, %v6135
      %v6168 = vpack.c.b16 %v6136, %v6136
      %v6169 = vpack.c.b16 %v6137, %v6137
      %v6170 = vpack.c.b16 %v6138, %v6138
      %v6171 = vpack.c.b16 %v6139, %v6139
      %v6172 = vpack.c.b16 %v6140, %v6140
      %v6173 = vpack.c.b16 %v6141, %v6141
      %v6174 = vpack.c.b16 %v6142, %v6142
      %v6175 = vpack.c.b16 %v6143, %v6143
      %v6176 = vpack.c.b16 %v6144, %v6144
      %v6177 = vpack.c.b16 %v6145, %v6145
      %v6178 = vpack.c.b16 %v6146, %v6146
      %v6179 = vpack.c.b16 %v6147, %v6147
      %v6180 = vpack.c.b16 %v6148, %v6148
      %v6181 = vpack.c.b16 %v6149, %v6149
      %v6182 = vpack.c.b16 %v6150, %v6150
      %v6184 = vshrl.u32 %v6151, 16
      %v6186 = vrot.slane %v6184, 7
      %v6187 = vshll.u32 %v6151, 16
      %v6189 = vor.u32 %v6186, %v6187
      %v6190 = vrot.slane %v6186, 4
      %v6192 = vshrl.u32 %v6152, 16
      %v6194 = vrot.slane %v6192, 7
      %v6195 = vshll.u32 %v6152, 16
      %v6197 = vor.u32 %v6194, %v6195
      %v6198 = vsel %vm478, %v6190, %v6197
      %v6199 = vrot.slane %v6194, 4
      %v6201 = vshrl.u32 %v6153, 16
      %v6203 = vrot.slane %v6201, 7
      %v6204 = vshll.u32 %v6153, 16
      %v6206 = vor.u32 %v6203, %v6204
      %v6207 = vrot.slane %v6203, 4
      %v6209 = vshrl.u32 %v6154, 16
      %v6211 = vrot.slane %v6209, 7
      %v6212 = vshll.u32 %v6154, 16
      %v6214 = vor.u32 %v6211, %v6212
      %v6215 = vsel %vm478, %v6207, %v6214
      %v6216 = vrot.slane %v6211, 4
      %v6218 = vshrl.u32 %v6155, 16
      %v6220 = vrot.slane %v6218, 7
      %v6221 = vshll.u32 %v6155, 16
      %v6223 = vor.u32 %v6220, %v6221
      %v6224 = vrot.slane %v6220, 4
      %v6226 = vshrl.u32 %v6156, 16
      %v6228 = vrot.slane %v6226, 7
      %v6229 = vshll.u32 %v6156, 16
      %v6231 = vor.u32 %v6228, %v6229
      %v6232 = vsel %vm478, %v6224, %v6231
      %v6233 = vrot.slane %v6228, 4
      %v6235 = vshrl.u32 %v6157, 16
      %v6237 = vrot.slane %v6235, 7
      %v6238 = vshll.u32 %v6157, 16
      %v6240 = vor.u32 %v6237, %v6238
      %v6241 = vrot.slane %v6237, 4
      %v6243 = vshrl.u32 %v6158, 16
      %v6245 = vrot.slane %v6243, 7
      %v6246 = vshll.u32 %v6158, 16
      %v6248 = vor.u32 %v6245, %v6246
      %v6249 = vsel %vm478, %v6241, %v6248
      %v6250 = vrot.slane %v6245, 4
      %v6252 = vshrl.u32 %v6159, 16
      %v6254 = vrot.slane %v6252, 7
      %v6255 = vshll.u32 %v6159, 16
      %v6257 = vor.u32 %v6254, %v6255
      %v6258 = vrot.slane %v6254, 4
      %v6260 = vshrl.u32 %v6160, 16
      %v6262 = vrot.slane %v6260, 7
      %v6263 = vshll.u32 %v6160, 16
      %v6265 = vor.u32 %v6262, %v6263
      %v6266 = vsel %vm478, %v6258, %v6265
      %v6267 = vrot.slane %v6262, 4
      %v6269 = vshrl.u32 %v6161, 16
      %v6271 = vrot.slane %v6269, 7
      %v6272 = vshll.u32 %v6161, 16
      %v6274 = vor.u32 %v6271, %v6272
      %v6275 = vrot.slane %v6271, 4
      %v6277 = vshrl.u32 %v6162, 16
      %v6279 = vrot.slane %v6277, 7
      %v6280 = vshll.u32 %v6162, 16
      %v6282 = vor.u32 %v6279, %v6280
      %v6283 = vsel %vm478, %v6275, %v6282
      %v6284 = vrot.slane %v6279, 4
      %v6286 = vshrl.u32 %v6163, 16
      %v6288 = vrot.slane %v6286, 7
      %v6289 = vshll.u32 %v6163, 16
      %v6291 = vor.u32 %v6288, %v6289
      %v6292 = vrot.slane %v6288, 4
      %v6294 = vshrl.u32 %v6164, 16
      %v6296 = vrot.slane %v6294, 7
      %v6297 = vshll.u32 %v6164, 16
      %v6299 = vor.u32 %v6296, %v6297
      %v6300 = vsel %vm478, %v6292, %v6299
      %v6301 = vrot.slane %v6296, 4
      %v6303 = vshrl.u32 %v6165, 16
      %v6305 = vrot.slane %v6303, 7
      %v6306 = vshll.u32 %v6165, 16
      %v6308 = vor.u32 %v6305, %v6306
      %v6309 = vrot.slane %v6305, 4
      %v6311 = vshrl.u32 %v6166, 16
      %v6313 = vrot.slane %v6311, 7
      %v6314 = vshll.u32 %v6166, 16
      %v6316 = vor.u32 %v6313, %v6314
      %v6317 = vsel %vm478, %v6309, %v6316
      %v6318 = vrot.slane %v6313, 4
      %v6320 = vshrl.u32 %v6167, 16
      %v6322 = vrot.slane %v6320, 7
      %v6323 = vshll.u32 %v6167, 16
      %v6325 = vor.u32 %v6322, %v6323
      %v6326 = vrot.slane %v6322, 4
      %v6328 = vshrl.u32 %v6168, 16
      %v6330 = vrot.slane %v6328, 7
      %v6331 = vshll.u32 %v6168, 16
      %v6333 = vor.u32 %v6330, %v6331
      %v6334 = vsel %vm478, %v6326, %v6333
      %v6335 = vrot.slane %v6330, 4
      %v6337 = vshrl.u32 %v6169, 16
      %v6339 = vrot.slane %v6337, 7
      %v6340 = vshll.u32 %v6169, 16
      %v6342 = vor.u32 %v6339, %v6340
      %v6343 = vrot.slane %v6339, 4
      %v6345 = vshrl.u32 %v6170, 16
      %v6347 = vrot.slane %v6345, 7
      %v6348 = vshll.u32 %v6170, 16
      %v6350 = vor.u32 %v6347, %v6348
      %v6351 = vsel %vm478, %v6343, %v6350
      %v6352 = vrot.slane %v6347, 4
      %v6354 = vshrl.u32 %v6171, 16
      %v6356 = vrot.slane %v6354, 7
      %v6357 = vshll.u32 %v6171, 16
      %v6359 = vor.u32 %v6356, %v6357
      %v6360 = vrot.slane %v6356, 4
      %v6362 = vshrl.u32 %v6172, 16
      %v6364 = vrot.slane %v6362, 7
      %v6365 = vshll.u32 %v6172, 16
      %v6367 = vor.u32 %v6364, %v6365
      %v6368 = vsel %vm478, %v6360, %v6367
      %v6369 = vrot.slane %v6364, 4
      %v6371 = vshrl.u32 %v6173, 16
      %v6373 = vrot.slane %v6371, 7
      %v6374 = vshll.u32 %v6173, 16
      %v6376 = vor.u32 %v6373, %v6374
      %v6377 = vrot.slane %v6373, 4
      %v6379 = vshrl.u32 %v6174, 16
      %v6381 = vrot.slane %v6379, 7
      %v6382 = vshll.u32 %v6174, 16
      %v6384 = vor.u32 %v6381, %v6382
      %v6385 = vsel %vm478, %v6377, %v6384
      %v6386 = vrot.slane %v6381, 4
      %v6388 = vshrl.u32 %v6175, 16
      %v6390 = vrot.slane %v6388, 7
      %v6391 = vshll.u32 %v6175, 16
      %v6393 = vor.u32 %v6390, %v6391
      %v6394 = vrot.slane %v6390, 4
      %v6396 = vshrl.u32 %v6176, 16
      %v6398 = vrot.slane %v6396, 7
      %v6399 = vshll.u32 %v6176, 16
      %v6401 = vor.u32 %v6398, %v6399
      %v6402 = vsel %vm478, %v6394, %v6401
      %v6403 = vrot.slane %v6398, 4
      %v6405 = vshrl.u32 %v6177, 16
      %v6407 = vrot.slane %v6405, 7
      %v6408 = vshll.u32 %v6177, 16
      %v6410 = vor.u32 %v6407, %v6408
      %v6411 = vrot.slane %v6407, 4
      %v6413 = vshrl.u32 %v6178, 16
      %v6415 = vrot.slane %v6413, 7
      %v6416 = vshll.u32 %v6178, 16
      %v6418 = vor.u32 %v6415, %v6416
      %v6419 = vsel %vm478, %v6411, %v6418
      %v6420 = vrot.slane %v6415, 4
      %v6422 = vshrl.u32 %v6179, 16
      %v6424 = vrot.slane %v6422, 7
      %v6425 = vshll.u32 %v6179, 16
      %v6427 = vor.u32 %v6424, %v6425
      %v6428 = vrot.slane %v6424, 4
      %v6430 = vshrl.u32 %v6180, 16
      %v6432 = vrot.slane %v6430, 7
      %v6433 = vshll.u32 %v6180, 16
      %v6435 = vor.u32 %v6432, %v6433
      %v6436 = vsel %vm478, %v6428, %v6435
      %v6437 = vrot.slane %v6432, 4
      %v6439 = vshrl.u32 %v6181, 16
      %v6441 = vrot.slane %v6439, 7
      %v6442 = vshll.u32 %v6181, 16
      %v6444 = vor.u32 %v6441, %v6442
      %v6445 = vrot.slane %v6441, 4
      %v6447 = vshrl.u32 %v6182, 16
      %v6449 = vrot.slane %v6447, 7
      %v6450 = vshll.u32 %v6182, 16
      %v6452 = vor.u32 %v6449, %v6450
      %v6453 = vsel %vm478, %v6445, %v6452
      %v6454 = vrot.slane %v6449, 4
      %vm6503 = vcmask 60416
      %vm6504 = vmand %vm6503, %vm395
      %v6505 = vld [vmem:[%s5987] sm:$0xf]
      %v6506 = vsel %vm6504, %v6189, %v6505
      %6507 = vst [vmem:[%s5987] sm:$0xf] %v6506
      %6508 = vst.msk [vmem:[%s5987 + $0x4] sm:$0xf] %vm5978, %v6198
      %v6509 = vld [vmem:[%s5987 + $0x8] sm:$0x1]
      %v6510 = vsel %vm5989, %v6199, %v6509
      %6511 = vst [vmem:[%s5987 + $0x8] sm:$0x1] %v6510
      %v6512 = vld [vmem:[%s5987 + $0xc] sm:$0xf]
      %v6513 = vsel %vm6504, %v6206, %v6512
      %6514 = vst [vmem:[%s5987 + $0xc] sm:$0xf] %v6513
      %6515 = vst.msk [vmem:[%s5987 + $0x10] sm:$0xf] %vm5978, %v6215
      %v6516 = vld [vmem:[%s5987 + $0x14] sm:$0x1]
      %v6517 = vsel %vm5989, %v6216, %v6516
      %6518 = vst [vmem:[%s5987 + $0x14] sm:$0x1] %v6517
      %v6519 = vld [vmem:[%s5987 + $0x18] sm:$0xf]
      %v6520 = vsel %vm6504, %v6223, %v6519
      %6521 = vst [vmem:[%s5987 + $0x18] sm:$0xf] %v6520
      %6522 = vst.msk [vmem:[%s5987 + $0x1c] sm:$0xf] %vm5978, %v6232
      %v6523 = vld [vmem:[%s5987 + $0x20] sm:$0x1]
      %v6524 = vsel %vm5989, %v6233, %v6523
      %6525 = vst [vmem:[%s5987 + $0x20] sm:$0x1] %v6524
      %v6526 = vld [vmem:[%s5987 + $0x24] sm:$0xf]
      %v6527 = vsel %vm6504, %v6240, %v6526
      %6528 = vst [vmem:[%s5987 + $0x24] sm:$0xf] %v6527
      %6529 = vst.msk [vmem:[%s5987 + $0x28] sm:$0xf] %vm5978, %v6249
      %v6530 = vld [vmem:[%s5987 + $0x2c] sm:$0x1]
      %v6531 = vsel %vm5989, %v6250, %v6530
      %6532 = vst [vmem:[%s5987 + $0x2c] sm:$0x1] %v6531
      %v6533 = vld [vmem:[%s5987 + $0x30] sm:$0xf]
      %v6534 = vsel %vm6504, %v6257, %v6533
      %6535 = vst [vmem:[%s5987 + $0x30] sm:$0xf] %v6534
      %6536 = vst.msk [vmem:[%s5987 + $0x34] sm:$0xf] %vm5978, %v6266
      %v6537 = vld [vmem:[%s5987 + $0x38] sm:$0x1]
      %v6538 = vsel %vm5989, %v6267, %v6537
      %6539 = vst [vmem:[%s5987 + $0x38] sm:$0x1] %v6538
      %v6540 = vld [vmem:[%s5987 + $0x3c] sm:$0xf]
      %v6541 = vsel %vm6504, %v6274, %v6540
      %6542 = vst [vmem:[%s5987 + $0x3c] sm:$0xf] %v6541
      %6543 = vst.msk [vmem:[%s5987 + $0x40] sm:$0xf] %vm5978, %v6283
      %v6544 = vld [vmem:[%s5987 + $0x44] sm:$0x1]
      %v6545 = vsel %vm5989, %v6284, %v6544
      %6546 = vst [vmem:[%s5987 + $0x44] sm:$0x1] %v6545
      %v6547 = vld [vmem:[%s5987 + $0x48] sm:$0xf]
      %v6548 = vsel %vm6504, %v6291, %v6547
      %6549 = vst [vmem:[%s5987 + $0x48] sm:$0xf] %v6548
      %6550 = vst.msk [vmem:[%s5987 + $0x4c] sm:$0xf] %vm5978, %v6300
      %v6551 = vld [vmem:[%s5987 + $0x50] sm:$0x1]
      %v6552 = vsel %vm5989, %v6301, %v6551
      %6553 = vst [vmem:[%s5987 + $0x50] sm:$0x1] %v6552
      %v6554 = vld [vmem:[%s5987 + $0x54] sm:$0xf]
      %v6555 = vsel %vm6504, %v6308, %v6554
      %6556 = vst [vmem:[%s5987 + $0x54] sm:$0xf] %v6555
      %6557 = vst.msk [vmem:[%s5987 + $0x58] sm:$0xf] %vm5978, %v6317
      %v6558 = vld [vmem:[%s5987 + $0x5c] sm:$0x1]
      %v6559 = vsel %vm5989, %v6318, %v6558
      %6560 = vst [vmem:[%s5987 + $0x5c] sm:$0x1] %v6559
      %v6561 = vld [vmem:[%s5987 + $0x60] sm:$0xf]
      %v6562 = vsel %vm6504, %v6325, %v6561
      %6563 = vst [vmem:[%s5987 + $0x60] sm:$0xf] %v6562
      %6564 = vst.msk [vmem:[%s5987 + $0x64] sm:$0xf] %vm5978, %v6334
      %v6565 = vld [vmem:[%s5987 + $0x68] sm:$0x1]
      %v6566 = vsel %vm5989, %v6335, %v6565
      %6567 = vst [vmem:[%s5987 + $0x68] sm:$0x1] %v6566
      %v6568 = vld [vmem:[%s5987 + $0x6c] sm:$0xf]
      %v6569 = vsel %vm6504, %v6342, %v6568
      %6570 = vst [vmem:[%s5987 + $0x6c] sm:$0xf] %v6569
      %6571 = vst.msk [vmem:[%s5987 + $0x70] sm:$0xf] %vm5978, %v6351
      %v6572 = vld [vmem:[%s5987 + $0x74] sm:$0x1]
      %v6573 = vsel %vm5989, %v6352, %v6572
      %6574 = vst [vmem:[%s5987 + $0x74] sm:$0x1] %v6573
      %v6575 = vld [vmem:[%s5987 + $0x78] sm:$0xf]
      %v6576 = vsel %vm6504, %v6359, %v6575
      %6577 = vst [vmem:[%s5987 + $0x78] sm:$0xf] %v6576
      %6578 = vst.msk [vmem:[%s5987 + $0x7c] sm:$0xf] %vm5978, %v6368
      %v6579 = vld [vmem:[%s5987 + $0x80] sm:$0x1]
      %v6580 = vsel %vm5989, %v6369, %v6579
      %6581 = vst [vmem:[%s5987 + $0x80] sm:$0x1] %v6580
      %v6582 = vld [vmem:[%s5987 + $0x84] sm:$0xf]
      %v6583 = vsel %vm6504, %v6376, %v6582
      %6584 = vst [vmem:[%s5987 + $0x84] sm:$0xf] %v6583
      %6585 = vst.msk [vmem:[%s5987 + $0x88] sm:$0xf] %vm5978, %v6385
      %v6586 = vld [vmem:[%s5987 + $0x8c] sm:$0x1]
      %v6587 = vsel %vm5989, %v6386, %v6586
      %6588 = vst [vmem:[%s5987 + $0x8c] sm:$0x1] %v6587
      %v6589 = vld [vmem:[%s5987 + $0x90] sm:$0xf]
      %v6590 = vsel %vm6504, %v6393, %v6589
      %6591 = vst [vmem:[%s5987 + $0x90] sm:$0xf] %v6590
      %6592 = vst.msk [vmem:[%s5987 + $0x94] sm:$0xf] %vm5978, %v6402
      %v6593 = vld [vmem:[%s5987 + $0x98] sm:$0x1]
      %v6594 = vsel %vm5989, %v6403, %v6593
      %6595 = vst [vmem:[%s5987 + $0x98] sm:$0x1] %v6594
      %v6596 = vld [vmem:[%s5987 + $0x9c] sm:$0xf]
      %v6597 = vsel %vm6504, %v6410, %v6596
      %6598 = vst [vmem:[%s5987 + $0x9c] sm:$0xf] %v6597
      %6599 = vst.msk [vmem:[%s5987 + $0xa0] sm:$0xf] %vm5978, %v6419
      %v6600 = vld [vmem:[%s5987 + $0xa4] sm:$0x1]
      %v6601 = vsel %vm5989, %v6420, %v6600
      %6602 = vst [vmem:[%s5987 + $0xa4] sm:$0x1] %v6601
      %v6603 = vld [vmem:[%s5987 + $0xa8] sm:$0xf]
      %v6604 = vsel %vm6504, %v6427, %v6603
      %6605 = vst [vmem:[%s5987 + $0xa8] sm:$0xf] %v6604
      %6606 = vst.msk [vmem:[%s5987 + $0xac] sm:$0xf] %vm5978, %v6436
      %v6607 = vld [vmem:[%s5987 + $0xb0] sm:$0x1]
      %v6608 = vsel %vm5989, %v6437, %v6607
      %6609 = vst [vmem:[%s5987 + $0xb0] sm:$0x1] %v6608
      %v6610 = vld [vmem:[%s5987 + $0xb4] sm:$0xf]
      %v6611 = vsel %vm6504, %v6444, %v6610
      %6612 = vst [vmem:[%s5987 + $0xb4] sm:$0xf] %v6611
      %6613 = vst.msk [vmem:[%s5987 + $0xb8] sm:$0xf] %vm5978, %v6453
      %v6614 = vld [vmem:[%s5987 + $0xbc] sm:$0x1]
      %v6615 = vsel %vm5989, %v6454, %v6614
      %6616 = vst [vmem:[%s5987 + $0xbc] sm:$0x1] %v6615
      %v6617 = vld [vmem:[#allocation3] sm:$0xf]
      %v6618 = vld [vmem:[#allocation3 + $0x4] sm:$0xf]
      %v6619 = vld [vmem:[#allocation3 + $0xc] sm:$0xf]
      %v6620 = vld [vmem:[#allocation3 + $0x10] sm:$0xf]
      %v6621 = vld [vmem:[#allocation3 + $0x18] sm:$0xf]
      %v6622 = vld [vmem:[#allocation3 + $0x1c] sm:$0xf]
      %v6623 = vld [vmem:[#allocation3 + $0x24] sm:$0xf]
      %v6624 = vld [vmem:[#allocation3 + $0x28] sm:$0xf]
      %v6625 = vld [vmem:[#allocation3 + $0x30] sm:$0xf]
      %v6626 = vld [vmem:[#allocation3 + $0x34] sm:$0xf]
      %v6627 = vld [vmem:[#allocation3 + $0x3c] sm:$0xf]
      %v6628 = vld [vmem:[#allocation3 + $0x40] sm:$0xf]
      %v6629 = vld [vmem:[#allocation3 + $0x48] sm:$0xf]
      %v6630 = vld [vmem:[#allocation3 + $0x4c] sm:$0xf]
      %v6631 = vld [vmem:[#allocation3 + $0x54] sm:$0xf]
      %v6632 = vld [vmem:[#allocation3 + $0x58] sm:$0xf]
      %v6633 = vld [vmem:[#allocation3 + $0x60] sm:$0xf]
      %v6634 = vld [vmem:[#allocation3 + $0x64] sm:$0xf]
      %v6635 = vld [vmem:[#allocation3 + $0x6c] sm:$0xf]
      %v6636 = vld [vmem:[#allocation3 + $0x70] sm:$0xf]
      %v6637 = vld [vmem:[#allocation3 + $0x78] sm:$0xf]
      %v6638 = vld [vmem:[#allocation3 + $0x7c] sm:$0xf]
      %v6639 = vld [vmem:[#allocation3 + $0x84] sm:$0xf]
      %v6640 = vld [vmem:[#allocation3 + $0x88] sm:$0xf]
      %v6641 = vld [vmem:[#allocation3 + $0x90] sm:$0xf]
      %v6642 = vld [vmem:[#allocation3 + $0x94] sm:$0xf]
      %v6643 = vld [vmem:[#allocation3 + $0x9c] sm:$0xf]
      %v6644 = vld [vmem:[#allocation3 + $0xa0] sm:$0xf]
      %v6645 = vld [vmem:[#allocation3 + $0xa8] sm:$0xf]
      %v6646 = vld [vmem:[#allocation3 + $0xac] sm:$0xf]
      %v6647 = vld [vmem:[#allocation3 + $0xb4] sm:$0xf]
      %v6648 = vld [vmem:[#allocation3 + $0xb8] sm:$0xf]
      %v6649 = vld [vmem:[%s5] sm:$0xf]
      %v6650 = vld [vmem:[#allocation3 + $0x8] sm:$0x1]
      %v6651 = vld [vmem:[#allocation3 + $0x14] sm:$0x1]
      %v6652 = vld [vmem:[#allocation3 + $0x20] sm:$0x1]
      %v6653 = vld [vmem:[#allocation3 + $0x2c] sm:$0x1]
      %v6654 = vld [vmem:[#allocation3 + $0x38] sm:$0x1]
      %v6655 = vld [vmem:[#allocation3 + $0x44] sm:$0x1]
      %v6656 = vld [vmem:[#allocation3 + $0x50] sm:$0x1]
      %v6657 = vld [vmem:[#allocation3 + $0x5c] sm:$0x1]
      %v6658 = vld [vmem:[#allocation3 + $0x68] sm:$0x1]
      %v6659 = vld [vmem:[#allocation3 + $0x74] sm:$0x1]
      %v6660 = vld [vmem:[#allocation3 + $0x80] sm:$0x1]
      %v6661 = vld [vmem:[#allocation3 + $0x8c] sm:$0x1]
      %v6662 = vld [vmem:[#allocation3 + $0x98] sm:$0x1]
      %v6663 = vld [vmem:[#allocation3 + $0xa4] sm:$0x1]
      %v6664 = vld [vmem:[#allocation3 + $0xb0] sm:$0x1]
      %v6665 = vld [vmem:[#allocation3 + $0xbc] sm:$0x1]
      %v6667 = vshrl.u32 %v6617, 16
      %v6669 = vrot.slane %v6667, 4
      %v6670 = vshll.u32 %v6617, 16
      %v6672 = vrot.slane %v6670, 5
      %v6673 = vor.u32 %v6669, %v6672
      %v6674 = vrot.slane %v6673, 4
      %v6676 = vshll.u32 %v6618, 16
      %v6678 = vrot.slane %v6676, 5
      %v6679 = vsel %vm964, %v6674, %v6678
      %v6680 = vshrl.u32 %v6618, 16
      %v6682 = vrot.slane %v6680, 4
      %v6683 = vor.u32 %v6682, %v6678
      %v6684 = vrot.slane %v6683, 4
      %v6686 = vshll.u32 %v6650, 16
      %v6688 = vrot.slane %v6686, 5
      %v6689 = vsel %vm964, %v6684, %v6688
      %v6691 = vshrl.u32 %v6619, 16
      %v6693 = vrot.slane %v6691, 4
      %v6694 = vshll.u32 %v6619, 16
      %v6696 = vrot.slane %v6694, 5
      %v6697 = vor.u32 %v6693, %v6696
      %v6698 = vrot.slane %v6697, 4
      %v6700 = vshll.u32 %v6620, 16
      %v6702 = vrot.slane %v6700, 5
      %v6703 = vsel %vm964, %v6698, %v6702
      %v6704 = vshrl.u32 %v6620, 16
      %v6706 = vrot.slane %v6704, 4
      %v6707 = vor.u32 %v6706, %v6702
      %v6708 = vrot.slane %v6707, 4
      %v6710 = vshll.u32 %v6651, 16
      %v6712 = vrot.slane %v6710, 5
      %v6713 = vsel %vm964, %v6708, %v6712
      %v6715 = vshrl.u32 %v6621, 16
      %v6717 = vrot.slane %v6715, 4
      %v6718 = vshll.u32 %v6621, 16
      %v6720 = vrot.slane %v6718, 5
      %v6721 = vor.u32 %v6717, %v6720
      %v6722 = vrot.slane %v6721, 4
      %v6724 = vshll.u32 %v6622, 16
      %v6726 = vrot.slane %v6724, 5
      %v6727 = vsel %vm964, %v6722, %v6726
      %v6728 = vshrl.u32 %v6622, 16
      %v6730 = vrot.slane %v6728, 4
      %v6731 = vor.u32 %v6730, %v6726
      %v6732 = vrot.slane %v6731, 4
      %v6734 = vshll.u32 %v6652, 16
      %v6736 = vrot.slane %v6734, 5
      %v6737 = vsel %vm964, %v6732, %v6736
      %v6739 = vshrl.u32 %v6623, 16
      %v6741 = vrot.slane %v6739, 4
      %v6742 = vshll.u32 %v6623, 16
      %v6744 = vrot.slane %v6742, 5
      %v6745 = vor.u32 %v6741, %v6744
      %v6746 = vrot.slane %v6745, 4
      %v6748 = vshll.u32 %v6624, 16
      %v6750 = vrot.slane %v6748, 5
      %v6751 = vsel %vm964, %v6746, %v6750
      %v6752 = vshrl.u32 %v6624, 16
      %v6754 = vrot.slane %v6752, 4
      %v6755 = vor.u32 %v6754, %v6750
      %v6756 = vrot.slane %v6755, 4
      %v6758 = vshll.u32 %v6653, 16
      %v6760 = vrot.slane %v6758, 5
      %v6761 = vsel %vm964, %v6756, %v6760
      %v6763 = vshrl.u32 %v6625, 16
      %v6765 = vrot.slane %v6763, 4
      %v6766 = vshll.u32 %v6625, 16
      %v6768 = vrot.slane %v6766, 5
      %v6769 = vor.u32 %v6765, %v6768
      %v6770 = vrot.slane %v6769, 4
      %v6772 = vshll.u32 %v6626, 16
      %v6774 = vrot.slane %v6772, 5
      %v6775 = vsel %vm964, %v6770, %v6774
      %v6776 = vshrl.u32 %v6626, 16
      %v6778 = vrot.slane %v6776, 4
      %v6779 = vor.u32 %v6778, %v6774
      %v6780 = vrot.slane %v6779, 4
      %v6782 = vshll.u32 %v6654, 16
      %v6784 = vrot.slane %v6782, 5
      %v6785 = vsel %vm964, %v6780, %v6784
      %v6787 = vshrl.u32 %v6627, 16
      %v6789 = vrot.slane %v6787, 4
      %v6790 = vshll.u32 %v6627, 16
      %v6792 = vrot.slane %v6790, 5
      %v6793 = vor.u32 %v6789, %v6792
      %v6794 = vrot.slane %v6793, 4
      %v6796 = vshll.u32 %v6628, 16
      %v6798 = vrot.slane %v6796, 5
      %v6799 = vsel %vm964, %v6794, %v6798
      %v6800 = vshrl.u32 %v6628, 16
      %v6802 = vrot.slane %v6800, 4
      %v6803 = vor.u32 %v6802, %v6798
      %v6804 = vrot.slane %v6803, 4
      %v6806 = vshll.u32 %v6655, 16
      %v6808 = vrot.slane %v6806, 5
      %v6809 = vsel %vm964, %v6804, %v6808
      %v6811 = vshrl.u32 %v6629, 16
      %v6813 = vrot.slane %v6811, 4
      %v6814 = vshll.u32 %v6629, 16
      %v6816 = vrot.slane %v6814, 5
      %v6817 = vor.u32 %v6813, %v6816
      %v6818 = vrot.slane %v6817, 4
      %v6820 = vshll.u32 %v6630, 16
      %v6822 = vrot.slane %v6820, 5
      %v6823 = vsel %vm964, %v6818, %v6822
      %v6824 = vshrl.u32 %v6630, 16
      %v6826 = vrot.slane %v6824, 4
      %v6827 = vor.u32 %v6826, %v6822
      %v6828 = vrot.slane %v6827, 4
      %v6830 = vshll.u32 %v6656, 16
      %v6832 = vrot.slane %v6830, 5
      %v6833 = vsel %vm964, %v6828, %v6832
      %v6835 = vshrl.u32 %v6631, 16
      %v6837 = vrot.slane %v6835, 4
      %v6838 = vshll.u32 %v6631, 16
      %v6840 = vrot.slane %v6838, 5
      %v6841 = vor.u32 %v6837, %v6840
      %v6842 = vrot.slane %v6841, 4
      %v6844 = vshll.u32 %v6632, 16
      %v6846 = vrot.slane %v6844, 5
      %v6847 = vsel %vm964, %v6842, %v6846
      %v6848 = vshrl.u32 %v6632, 16
      %v6850 = vrot.slane %v6848, 4
      %v6851 = vor.u32 %v6850, %v6846
      %v6852 = vrot.slane %v6851, 4
      %v6854 = vshll.u32 %v6657, 16
      %v6856 = vrot.slane %v6854, 5
      %v6857 = vsel %vm964, %v6852, %v6856
      %v6859 = vshrl.u32 %v6633, 16
      %v6861 = vrot.slane %v6859, 4
      %v6862 = vshll.u32 %v6633, 16
      %v6864 = vrot.slane %v6862, 5
      %v6865 = vor.u32 %v6861, %v6864
      %v6866 = vrot.slane %v6865, 4
      %v6868 = vshll.u32 %v6634, 16
      %v6870 = vrot.slane %v6868, 5
      %v6871 = vsel %vm964, %v6866, %v6870
      %v6872 = vshrl.u32 %v6634, 16
      %v6874 = vrot.slane %v6872, 4
      %v6875 = vor.u32 %v6874, %v6870
      %v6876 = vrot.slane %v6875, 4
      %v6878 = vshll.u32 %v6658, 16
      %v6880 = vrot.slane %v6878, 5
      %v6881 = vsel %vm964, %v6876, %v6880
      %v6883 = vshrl.u32 %v6635, 16
      %v6885 = vrot.slane %v6883, 4
      %v6886 = vshll.u32 %v6635, 16
      %v6888 = vrot.slane %v6886, 5
      %v6889 = vor.u32 %v6885, %v6888
      %v6890 = vrot.slane %v6889, 4
      %v6892 = vshll.u32 %v6636, 16
      %v6894 = vrot.slane %v6892, 5
      %v6895 = vsel %vm964, %v6890, %v6894
      %v6896 = vshrl.u32 %v6636, 16
      %v6898 = vrot.slane %v6896, 4
      %v6899 = vor.u32 %v6898, %v6894
      %v6900 = vrot.slane %v6899, 4
      %v6902 = vshll.u32 %v6659, 16
      %v6904 = vrot.slane %v6902, 5
      %v6905 = vsel %vm964, %v6900, %v6904
      %v6907 = vshrl.u32 %v6637, 16
      %v6909 = vrot.slane %v6907, 4
      %v6910 = vshll.u32 %v6637, 16
      %v6912 = vrot.slane %v6910, 5
      %v6913 = vor.u32 %v6909, %v6912
      %v6914 = vrot.slane %v6913, 4
      %v6916 = vshll.u32 %v6638, 16
      %v6918 = vrot.slane %v6916, 5
      %v6919 = vsel %vm964, %v6914, %v6918
      %v6920 = vshrl.u32 %v6638, 16
      %v6922 = vrot.slane %v6920, 4
      %v6923 = vor.u32 %v6922, %v6918
      %v6924 = vrot.slane %v6923, 4
      %v6926 = vshll.u32 %v6660, 16
      %v6928 = vrot.slane %v6926, 5
      %v6929 = vsel %vm964, %v6924, %v6928
      %v6931 = vshrl.u32 %v6639, 16
      %v6933 = vrot.slane %v6931, 4
      %v6934 = vshll.u32 %v6639, 16
      %v6936 = vrot.slane %v6934, 5
      %v6937 = vor.u32 %v6933, %v6936
      %v6938 = vrot.slane %v6937, 4
      %v6940 = vshll.u32 %v6640, 16
      %v6942 = vrot.slane %v6940, 5
      %v6943 = vsel %vm964, %v6938, %v6942
      %v6944 = vshrl.u32 %v6640, 16
      %v6946 = vrot.slane %v6944, 4
      %v6947 = vor.u32 %v6946, %v6942
      %v6948 = vrot.slane %v6947, 4
      %v6950 = vshll.u32 %v6661, 16
      %v6952 = vrot.slane %v6950, 5
      %v6953 = vsel %vm964, %v6948, %v6952
      %v6955 = vshrl.u32 %v6641, 16
      %v6957 = vrot.slane %v6955, 4
      %v6958 = vshll.u32 %v6641, 16
      %v6960 = vrot.slane %v6958, 5
      %v6961 = vor.u32 %v6957, %v6960
      %v6962 = vrot.slane %v6961, 4
      %v6964 = vshll.u32 %v6642, 16
      %v6966 = vrot.slane %v6964, 5
      %v6967 = vsel %vm964, %v6962, %v6966
      %v6968 = vshrl.u32 %v6642, 16
      %v6970 = vrot.slane %v6968, 4
      %v6971 = vor.u32 %v6970, %v6966
      %v6972 = vrot.slane %v6971, 4
      %v6974 = vshll.u32 %v6662, 16
      %v6976 = vrot.slane %v6974, 5
      %v6977 = vsel %vm964, %v6972, %v6976
      %v6979 = vshrl.u32 %v6643, 16
      %v6981 = vrot.slane %v6979, 4
      %v6982 = vshll.u32 %v6643, 16
      %v6984 = vrot.slane %v6982, 5
      %v6985 = vor.u32 %v6981, %v6984
      %v6986 = vrot.slane %v6985, 4
      %v6988 = vshll.u32 %v6644, 16
      %v6990 = vrot.slane %v6988, 5
      %v6991 = vsel %vm964, %v6986, %v6990
      %v6992 = vshrl.u32 %v6644, 16
      %v6994 = vrot.slane %v6992, 4
      %v6995 = vor.u32 %v6994, %v6990
      %v6996 = vrot.slane %v6995, 4
      %v6998 = vshll.u32 %v6663, 16
      %v7000 = vrot.slane %v6998, 5
      %v7001 = vsel %vm964, %v6996, %v7000
      %v7003 = vshrl.u32 %v6645, 16
      %v7005 = vrot.slane %v7003, 4
      %v7006 = vshll.u32 %v6645, 16
      %v7008 = vrot.slane %v7006, 5
      %v7009 = vor.u32 %v7005, %v7008
      %v7010 = vrot.slane %v7009, 4
      %v7012 = vshll.u32 %v6646, 16
      %v7014 = vrot.slane %v7012, 5
      %v7015 = vsel %vm964, %v7010, %v7014
      %v7016 = vshrl.u32 %v6646, 16
      %v7018 = vrot.slane %v7016, 4
      %v7019 = vor.u32 %v7018, %v7014
      %v7020 = vrot.slane %v7019, 4
      %v7022 = vshll.u32 %v6664, 16
      %v7024 = vrot.slane %v7022, 5
      %v7025 = vsel %vm964, %v7020, %v7024
      %v7027 = vshrl.u32 %v6647, 16
      %v7029 = vrot.slane %v7027, 4
      %v7030 = vshll.u32 %v6647, 16
      %v7032 = vrot.slane %v7030, 5
      %v7033 = vor.u32 %v7029, %v7032
      %v7034 = vrot.slane %v7033, 4
      %v7036 = vshll.u32 %v6648, 16
      %v7038 = vrot.slane %v7036, 5
      %v7039 = vsel %vm964, %v7034, %v7038
      %v7040 = vshrl.u32 %v6648, 16
      %v7042 = vrot.slane %v7040, 4
      %v7043 = vor.u32 %v7042, %v7038
      %v7044 = vrot.slane %v7043, 4
      %v7046 = vshll.u32 %v6665, 16
      %v7048 = vrot.slane %v7046, 5
      %v7049 = vsel %vm964, %v7044, %v7048
      %s7050 = scalar_lea.vmem %s5, 4
      %v7051 = vld [vmem:[%s7050] sm:$0xf]
      %v7052 = vunpack.c.l.b16 %v6679
      %v7053 = vunpack.c.l.b16 %v6689
      %v7054 = vunpack.c.l.b16 %v6703
      %v7055 = vunpack.c.l.b16 %v6713
      %v7056 = vunpack.c.l.b16 %v6727
      %v7057 = vunpack.c.l.b16 %v6737
      %v7058 = vunpack.c.l.b16 %v6751
      %v7059 = vunpack.c.l.b16 %v6761
      %v7060 = vunpack.c.l.b16 %v6775
      %v7061 = vunpack.c.l.b16 %v6785
      %v7062 = vunpack.c.l.b16 %v6799
      %v7063 = vunpack.c.l.b16 %v6809
      %v7064 = vunpack.c.l.b16 %v6823
      %v7065 = vunpack.c.l.b16 %v6833
      %v7066 = vunpack.c.l.b16 %v6847
      %v7067 = vunpack.c.l.b16 %v6857
      %v7068 = vunpack.c.l.b16 %v6871
      %v7069 = vunpack.c.l.b16 %v6881
      %v7070 = vunpack.c.l.b16 %v6895
      %v7071 = vunpack.c.l.b16 %v6905
      %v7072 = vunpack.c.l.b16 %v6919
      %v7073 = vunpack.c.l.b16 %v6929
      %v7074 = vunpack.c.l.b16 %v6943
      %v7075 = vunpack.c.l.b16 %v6953
      %v7076 = vunpack.c.l.b16 %v6967
      %v7077 = vunpack.c.l.b16 %v6977
      %v7078 = vunpack.c.l.b16 %v6991
      %v7079 = vunpack.c.l.b16 %v7001
      %v7080 = vunpack.c.l.b16 %v7015
      %v7081 = vunpack.c.l.b16 %v7025
      %v7082 = vunpack.c.l.b16 %v7039
      %v7083 = vunpack.c.l.b16 %v7049
      %v7084 = vpack.c.b16 %v7053, %v7052
      %v7085 = vpack.c.b16 %v7055, %v7054
      %v7086 = vpack.c.b16 %v7057, %v7056
      %v7087 = vpack.c.b16 %v7059, %v7058
      %v7088 = vpack.c.b16 %v7061, %v7060
      %v7089 = vpack.c.b16 %v7063, %v7062
      %v7090 = vpack.c.b16 %v7065, %v7064
      %v7091 = vpack.c.b16 %v7067, %v7066
      %v7092 = vpack.c.b16 %v7069, %v7068
      %v7093 = vpack.c.b16 %v7071, %v7070
      %v7094 = vpack.c.b16 %v7073, %v7072
      %v7095 = vpack.c.b16 %v7075, %v7074
      %v7096 = vpack.c.b16 %v7077, %v7076
      %v7097 = vpack.c.b16 %v7079, %v7078
      %v7098 = vpack.c.b16 %v7081, %v7080
      %v7099 = vpack.c.b16 %v7083, %v7082
      %v7101 = vsel %vm5474, %v7084, 0
      %v7104 = vsel %vm5474, %v7085, 0
      %v7107 = vsel %vm5474, %v7086, 0
      %v7110 = vsel %vm5474, %v7087, 0
      %v7113 = vsel %vm5474, %v7088, 0
      %v7116 = vsel %vm5474, %v7089, 0
      %v7119 = vsel %vm5474, %v7090, 0
      %v7122 = vsel %vm5474, %v7091, 0
      %v7125 = vsel %vm5474, %v7092, 0
      %v7128 = vsel %vm5474, %v7093, 0
      %v7131 = vsel %vm5474, %v7094, 0
      %v7134 = vsel %vm5474, %v7095, 0
      %v7137 = vsel %vm5474, %v7096, 0
      %v7140 = vsel %vm5474, %v7097, 0
      %v7143 = vsel %vm5474, %v7098, 0
      %v7146 = vsel %vm5474, %v7099, 0
      %vm7148 = vcmask 1043456
      %v7150 = vsel %vm7148, %v7051, 0
      %7152 = vmatprep.subr.bf16.mxu0 0
      %7153 = vmatpush1.bf16.msra.mxu0 0
      %7154 = vmatprep.subr.bf16.mxu0 0
      %7155 = vmatpush1.bf16.msra.mxu0 0
      %7156 = vmatprep.subr.bf16.mxu0 0
      %7157 = vmatpush1.bf16.msra.mxu0 0
      %7158 = vmatprep.subr.bf16.mxu0 0
      %7159 = vmatpush1.bf16.msra.mxu0 0
      %7160 = vmatprep.subr.bf16.mxu0 0
      %7161 = vmatpush1.bf16.msra.mxu0 0
      %7162 = vmatprep.subr.bf16.mxu0 0
      %7163 = vmatpush1.bf16.msra.mxu0 0
      %7164 = vmatprep.subr.bf16.mxu0 0
      %7165 = vmatpush1.bf16.msra.mxu0 0
      %7166 = vmatprep.subr.bf16.mxu0 0
      %7167 = vmatpush1.bf16.msra.mxu0 %v7150
      %7168 = vmatprep.subr.bf16.mxu0 0
      %7169 = vmatpush2.bf16.msra.mxu0 0
      %7170 = vmatprep.subr.bf16.mxu0 0
      %7171 = vmatpush2.bf16.msra.mxu0 0
      %7172 = vmatprep.subr.bf16.mxu0 0
      %7173 = vmatpush2.bf16.msra.mxu0 0
      %7174 = vmatprep.subr.bf16.mxu0 0
      %7175 = vmatpush2.bf16.msra.mxu0 0
      %7176 = vmatprep.subr.bf16.mxu0 0
      %7177 = vmatpush2.bf16.msra.mxu0 0
      %7178 = vmatprep.subr.bf16.mxu0 0
      %7179 = vmatpush2.bf16.msra.mxu0 0
      %7180 = vmatprep.subr.bf16.mxu0 0
      %7181 = vmatpush2.bf16.msra.mxu0 0
      %7182 = vmatprep.subr.bf16.mxu0 0
      %7183 = vmatpush2.bf16.msra.mxu0 0
      %7184 = vmatprep.mubr.bf16.mxu0 0
      %7185 = vmatmul.mubr.bf16.gmra.mxu0 %v7101
      %v7186 = vpop.f32.mrf.mxu0
      %v7187 = vadd.f32 0.0, %v7186
      %v7188 = vpop.f32.mrf.mxu0
      %v7189 = vpop.f32.mrf.mxu0
      %v7190 = vadd.f32 0.0, %v7189
      %v7191 = vpop.f32.mrf.mxu0
      %7192 = vmatprep.mubr.bf16.mxu0 0
      %7193 = vmatmul.mubr.bf16.gmra.mxu0 %v7104
      %v7194 = vpop.f32.mrf.mxu0
      %v7195 = vadd.f32 0.0, %v7194
      %v7196 = vpop.f32.mrf.mxu0
      %v7197 = vpop.f32.mrf.mxu0
      %v7198 = vadd.f32 0.0, %v7197
      %v7199 = vpop.f32.mrf.mxu0
      %7200 = vmatprep.mubr.bf16.mxu0 0
      %7201 = vmatmul.mubr.bf16.gmra.mxu0 %v7107
      %v7202 = vpop.f32.mrf.mxu0
      %v7203 = vadd.f32 0.0, %v7202
      %v7204 = vpop.f32.mrf.mxu0
      %v7205 = vpop.f32.mrf.mxu0
      %v7206 = vadd.f32 0.0, %v7205
      %v7207 = vpop.f32.mrf.mxu0
      %7208 = vmatprep.mubr.bf16.mxu0 0
      %7209 = vmatmul.mubr.bf16.gmra.mxu0 %v7110
      %v7210 = vpop.f32.mrf.mxu0
      %v7211 = vadd.f32 0.0, %v7210
      %v7212 = vpop.f32.mrf.mxu0
      %v7213 = vpop.f32.mrf.mxu0
      %v7214 = vadd.f32 0.0, %v7213
      %v7215 = vpop.f32.mrf.mxu0
      %7216 = vmatprep.mubr.bf16.mxu0 0
      %7217 = vmatmul.mubr.bf16.gmra.mxu0 %v7113
      %v7218 = vpop.f32.mrf.mxu0
      %v7219 = vadd.f32 0.0, %v7218
      %v7220 = vpop.f32.mrf.mxu0
      %v7221 = vpop.f32.mrf.mxu0
      %v7222 = vadd.f32 0.0, %v7221
      %v7223 = vpop.f32.mrf.mxu0
      %7224 = vmatprep.mubr.bf16.mxu0 0
      %7225 = vmatmul.mubr.bf16.gmra.mxu0 %v7116
      %v7226 = vpop.f32.mrf.mxu0
      %v7227 = vadd.f32 0.0, %v7226
      %v7228 = vpop.f32.mrf.mxu0
      %v7229 = vpop.f32.mrf.mxu0
      %v7230 = vadd.f32 0.0, %v7229
      %v7231 = vpop.f32.mrf.mxu0
      %7232 = vmatprep.mubr.bf16.mxu0 0
      %7233 = vmatmul.mubr.bf16.gmra.mxu0 %v7119
      %v7234 = vpop.f32.mrf.mxu0
      %v7235 = vadd.f32 0.0, %v7234
      %v7236 = vpop.f32.mrf.mxu0
      %v7237 = vpop.f32.mrf.mxu0
      %v7238 = vadd.f32 0.0, %v7237
      %v7239 = vpop.f32.mrf.mxu0
      %7240 = vmatprep.mubr.bf16.mxu0 0
      %7241 = vmatmul.mubr.bf16.gmra.mxu0 %v7122
      %v7242 = vpop.f32.mrf.mxu0
      %v7243 = vadd.f32 0.0, %v7242
      %v7244 = vpop.f32.mrf.mxu0
      %v7245 = vpop.f32.mrf.mxu0
      %v7246 = vadd.f32 0.0, %v7245
      %v7247 = vpop.f32.mrf.mxu0
      %7248 = vmatprep.mubr.bf16.mxu0 0
      %7249 = vmatmul.mubr.bf16.gmra.mxu0 %v7125
      %v7250 = vpop.f32.mrf.mxu0
      %v7251 = vadd.f32 0.0, %v7250
      %v7252 = vpop.f32.mrf.mxu0
      %v7253 = vpop.f32.mrf.mxu0
      %v7254 = vadd.f32 0.0, %v7253
      %v7255 = vpop.f32.mrf.mxu0
      %7256 = vmatprep.mubr.bf16.mxu0 0
      %7257 = vmatmul.mubr.bf16.gmra.mxu0 %v7128
      %v7258 = vpop.f32.mrf.mxu0
      %v7259 = vadd.f32 0.0, %v7258
      %v7260 = vpop.f32.mrf.mxu0
      %v7261 = vpop.f32.mrf.mxu0
      %v7262 = vadd.f32 0.0, %v7261
      %v7263 = vpop.f32.mrf.mxu0
      %7264 = vmatprep.mubr.bf16.mxu0 0
      %7265 = vmatmul.mubr.bf16.gmra.mxu0 %v7131
      %v7266 = vpop.f32.mrf.mxu0
      %v7267 = vadd.f32 0.0, %v7266
      %v7268 = vpop.f32.mrf.mxu0
      %v7269 = vpop.f32.mrf.mxu0
      %v7270 = vadd.f32 0.0, %v7269
      %v7271 = vpop.f32.mrf.mxu0
      %7272 = vmatprep.mubr.bf16.mxu0 0
      %7273 = vmatmul.mubr.bf16.gmra.mxu0 %v7134
      %v7274 = vpop.f32.mrf.mxu0
      %v7275 = vadd.f32 0.0, %v7274
      %v7276 = vpop.f32.mrf.mxu0
      %v7277 = vpop.f32.mrf.mxu0
      %v7278 = vadd.f32 0.0, %v7277
      %v7279 = vpop.f32.mrf.mxu0
      %7280 = vmatprep.mubr.bf16.mxu0 0
      %7281 = vmatmul.mubr.bf16.gmra.mxu0 %v7137
      %v7282 = vpop.f32.mrf.mxu0
      %v7283 = vadd.f32 0.0, %v7282
      %v7284 = vpop.f32.mrf.mxu0
      %v7285 = vpop.f32.mrf.mxu0
      %v7286 = vadd.f32 0.0, %v7285
      %v7287 = vpop.f32.mrf.mxu0
      %7288 = vmatprep.mubr.bf16.mxu0 0
      %7289 = vmatmul.mubr.bf16.gmra.mxu0 %v7140
      %v7290 = vpop.f32.mrf.mxu0
      %v7291 = vadd.f32 0.0, %v7290
      %v7292 = vpop.f32.mrf.mxu0
      %v7293 = vpop.f32.mrf.mxu0
      %v7294 = vadd.f32 0.0, %v7293
      %v7295 = vpop.f32.mrf.mxu0
      %7296 = vmatprep.mubr.bf16.mxu0 0
      %7297 = vmatmul.mubr.bf16.gmra.mxu0 %v7143
      %v7298 = vpop.f32.mrf.mxu0
      %v7299 = vadd.f32 0.0, %v7298
      %v7300 = vpop.f32.mrf.mxu0
      %v7301 = vpop.f32.mrf.mxu0
      %v7302 = vadd.f32 0.0, %v7301
      %v7303 = vpop.f32.mrf.mxu0
      %7304 = vmatprep.mubr.bf16.mxu0 0
      %7305 = vmatmul.mubr.bf16.gmra.mxu0 %v7146
      %v7306 = vpop.f32.mrf.mxu0
      %v7307 = vadd.f32 0.0, %v7306
      %v7308 = vpop.f32.mrf.mxu0
      %v7309 = vpop.f32.mrf.mxu0
      %v7310 = vadd.f32 0.0, %v7309
      %v7311 = vpop.f32.mrf.mxu0
      %7312 = vdwg.mxu0
      %v7345 = vunpack.c.l.b16 %v6617
      %v7346 = vunpack.c.l.b16 %v6618
      %v7347 = vunpack.c.l.b16 %v6619
      %v7348 = vunpack.c.l.b16 %v6620
      %v7349 = vunpack.c.l.b16 %v6621
      %v7350 = vunpack.c.l.b16 %v6622
      %v7351 = vunpack.c.l.b16 %v6623
      %v7352 = vunpack.c.l.b16 %v6624
      %v7353 = vunpack.c.l.b16 %v6625
      %v7354 = vunpack.c.l.b16 %v6626
      %v7355 = vunpack.c.l.b16 %v6627
      %v7356 = vunpack.c.l.b16 %v6628
      %v7357 = vunpack.c.l.b16 %v6629
      %v7358 = vunpack.c.l.b16 %v6630
      %v7359 = vunpack.c.l.b16 %v6631
      %v7360 = vunpack.c.l.b16 %v6632
      %v7361 = vunpack.c.l.b16 %v6633
      %v7362 = vunpack.c.l.b16 %v6634
      %v7363 = vunpack.c.l.b16 %v6635
      %v7364 = vunpack.c.l.b16 %v6636
      %v7365 = vunpack.c.l.b16 %v6637
      %v7366 = vunpack.c.l.b16 %v6638
      %v7367 = vunpack.c.l.b16 %v6639
      %v7368 = vunpack.c.l.b16 %v6640
      %v7369 = vunpack.c.l.b16 %v6641
      %v7370 = vunpack.c.l.b16 %v6642
      %v7371 = vunpack.c.l.b16 %v6643
      %v7372 = vunpack.c.l.b16 %v6644
      %v7373 = vunpack.c.l.b16 %v6645
      %v7374 = vunpack.c.l.b16 %v6646
      %v7375 = vunpack.c.l.b16 %v6647
      %v7376 = vunpack.c.l.b16 %v6648
      %v7377 = vpack.c.b16 %v7346, %v7345
      %v7378 = vpack.c.b16 %v7348, %v7347
      %v7379 = vpack.c.b16 %v7350, %v7349
      %v7380 = vpack.c.b16 %v7352, %v7351
      %v7381 = vpack.c.b16 %v7354, %v7353
      %v7382 = vpack.c.b16 %v7356, %v7355
      %v7383 = vpack.c.b16 %v7358, %v7357
      %v7384 = vpack.c.b16 %v7360, %v7359
      %v7385 = vpack.c.b16 %v7362, %v7361
      %v7386 = vpack.c.b16 %v7364, %v7363
      %v7387 = vpack.c.b16 %v7366, %v7365
      %v7388 = vpack.c.b16 %v7368, %v7367
      %v7389 = vpack.c.b16 %v7370, %v7369
      %v7390 = vpack.c.b16 %v7372, %v7371
      %v7391 = vpack.c.b16 %v7374, %v7373
      %v7392 = vpack.c.b16 %v7376, %v7375
      %v7394 = vsel %vm5474, %v7377, 0
      %v7397 = vsel %vm5474, %v7378, 0
      %v7400 = vsel %vm5474, %v7379, 0
      %v7403 = vsel %vm5474, %v7380, 0
      %v7406 = vsel %vm5474, %v7381, 0
      %v7409 = vsel %vm5474, %v7382, 0
      %v7412 = vsel %vm5474, %v7383, 0
      %v7415 = vsel %vm5474, %v7384, 0
      %v7418 = vsel %vm5474, %v7385, 0
      %v7421 = vsel %vm5474, %v7386, 0
      %v7424 = vsel %vm5474, %v7387, 0
      %v7427 = vsel %vm5474, %v7388, 0
      %v7430 = vsel %vm5474, %v7389, 0
      %v7433 = vsel %vm5474, %v7390, 0
      %v7436 = vsel %vm5474, %v7391, 0
      %v7439 = vsel %vm5474, %v7392, 0
      %v7442 = vsel %vm7148, %v6649, 0
      %7444 = vmatprep.subr.bf16.mxu0 0
      %7445 = vmatpush1.bf16.msra.mxu0 0
      %7446 = vmatprep.subr.bf16.mxu0 0
      %7447 = vmatpush1.bf16.msra.mxu0 0
      %7448 = vmatprep.subr.bf16.mxu0 0
      %7449 = vmatpush1.bf16.msra.mxu0 0
      %7450 = vmatprep.subr.bf16.mxu0 0
      %7451 = vmatpush1.bf16.msra.mxu0 0
      %7452 = vmatprep.subr.bf16.mxu0 0
      %7453 = vmatpush1.bf16.msra.mxu0 0
      %7454 = vmatprep.subr.bf16.mxu0 0
      %7455 = vmatpush1.bf16.msra.mxu0 0
      %7456 = vmatprep.subr.bf16.mxu0 0
      %7457 = vmatpush1.bf16.msra.mxu0 0
      %7458 = vmatprep.subr.bf16.mxu0 0
      %7459 = vmatpush1.bf16.msra.mxu0 %v7442
      %7460 = vmatprep.subr.bf16.mxu0 0
      %7461 = vmatpush2.bf16.msra.mxu0 0
      %7462 = vmatprep.subr.bf16.mxu0 0
      %7463 = vmatpush2.bf16.msra.mxu0 0
      %7464 = vmatprep.subr.bf16.mxu0 0
      %7465 = vmatpush2.bf16.msra.mxu0 0
      %7466 = vmatprep.subr.bf16.mxu0 0
      %7467 = vmatpush2.bf16.msra.mxu0 0
      %7468 = vmatprep.subr.bf16.mxu0 0
      %7469 = vmatpush2.bf16.msra.mxu0 0
      %7470 = vmatprep.subr.bf16.mxu0 0
      %7471 = vmatpush2.bf16.msra.mxu0 0
      %7472 = vmatprep.subr.bf16.mxu0 0
      %7473 = vmatpush2.bf16.msra.mxu0 0
      %7474 = vmatprep.subr.bf16.mxu0 0
      %7475 = vmatpush2.bf16.msra.mxu0 0
      %7476 = vmatprep.mubr.bf16.mxu0 0
      %7477 = vmatmul.mubr.bf16.gmra.mxu0 %v7394
      %v7478 = vpop.f32.mrf.mxu0
      %v7479 = vadd.f32 %v7187, %v7478
      %v7480 = vpop.f32.mrf.mxu0
      %v7481 = vpop.f32.mrf.mxu0
      %v7482 = vadd.f32 %v7190, %v7481
      %v7483 = vpop.f32.mrf.mxu0
      %7484 = vmatprep.mubr.bf16.mxu0 0
      %7485 = vmatmul.mubr.bf16.gmra.mxu0 %v7397
      %v7486 = vpop.f32.mrf.mxu0
      %v7487 = vadd.f32 %v7195, %v7486
      %v7488 = vpop.f32.mrf.mxu0
      %v7489 = vpop.f32.mrf.mxu0
      %v7490 = vadd.f32 %v7198, %v7489
      %v7491 = vpop.f32.mrf.mxu0
      %7492 = vmatprep.mubr.bf16.mxu0 0
      %7493 = vmatmul.mubr.bf16.gmra.mxu0 %v7400
      %v7494 = vpop.f32.mrf.mxu0
      %v7495 = vadd.f32 %v7203, %v7494
      %v7496 = vpop.f32.mrf.mxu0
      %v7497 = vpop.f32.mrf.mxu0
      %v7498 = vadd.f32 %v7206, %v7497
      %v7499 = vpop.f32.mrf.mxu0
      %7500 = vmatprep.mubr.bf16.mxu0 0
      %7501 = vmatmul.mubr.bf16.gmra.mxu0 %v7403
      %v7502 = vpop.f32.mrf.mxu0
      %v7503 = vadd.f32 %v7211, %v7502
      %v7504 = vpop.f32.mrf.mxu0
      %v7505 = vpop.f32.mrf.mxu0
      %v7506 = vadd.f32 %v7214, %v7505
      %v7507 = vpop.f32.mrf.mxu0
      %7508 = vmatprep.mubr.bf16.mxu0 0
      %7509 = vmatmul.mubr.bf16.gmra.mxu0 %v7406
      %v7510 = vpop.f32.mrf.mxu0
      %v7511 = vadd.f32 %v7219, %v7510
      %v7512 = vpop.f32.mrf.mxu0
      %v7513 = vpop.f32.mrf.mxu0
      %v7514 = vadd.f32 %v7222, %v7513
      %v7515 = vpop.f32.mrf.mxu0
      %7516 = vmatprep.mubr.bf16.mxu0 0
      %7517 = vmatmul.mubr.bf16.gmra.mxu0 %v7409
      %v7518 = vpop.f32.mrf.mxu0
      %v7519 = vadd.f32 %v7227, %v7518
      %v7520 = vpop.f32.mrf.mxu0
      %v7521 = vpop.f32.mrf.mxu0
      %v7522 = vadd.f32 %v7230, %v7521
      %v7523 = vpop.f32.mrf.mxu0
      %7524 = vmatprep.mubr.bf16.mxu0 0
      %7525 = vmatmul.mubr.bf16.gmra.mxu0 %v7412
      %v7526 = vpop.f32.mrf.mxu0
      %v7527 = vadd.f32 %v7235, %v7526
      %v7528 = vpop.f32.mrf.mxu0
      %v7529 = vpop.f32.mrf.mxu0
      %v7530 = vadd.f32 %v7238, %v7529
      %v7531 = vpop.f32.mrf.mxu0
      %7532 = vmatprep.mubr.bf16.mxu0 0
      %7533 = vmatmul.mubr.bf16.gmra.mxu0 %v7415
      %v7534 = vpop.f32.mrf.mxu0
      %v7535 = vadd.f32 %v7243, %v7534
      %v7536 = vpop.f32.mrf.mxu0
      %v7537 = vpop.f32.mrf.mxu0
      %v7538 = vadd.f32 %v7246, %v7537
      %v7539 = vpop.f32.mrf.mxu0
      %7540 = vmatprep.mubr.bf16.mxu0 0
      %7541 = vmatmul.mubr.bf16.gmra.mxu0 %v7418
      %v7542 = vpop.f32.mrf.mxu0
      %v7543 = vadd.f32 %v7251, %v7542
      %v7544 = vpop.f32.mrf.mxu0
      %v7545 = vpop.f32.mrf.mxu0
      %v7546 = vadd.f32 %v7254, %v7545
      %v7547 = vpop.f32.mrf.mxu0
      %7548 = vmatprep.mubr.bf16.mxu0 0
      %7549 = vmatmul.mubr.bf16.gmra.mxu0 %v7421
      %v7550 = vpop.f32.mrf.mxu0
      %v7551 = vadd.f32 %v7259, %v7550
      %v7552 = vpop.f32.mrf.mxu0
      %v7553 = vpop.f32.mrf.mxu0
      %v7554 = vadd.f32 %v7262, %v7553
      %v7555 = vpop.f32.mrf.mxu0
      %7556 = vmatprep.mubr.bf16.mxu0 0
      %7557 = vmatmul.mubr.bf16.gmra.mxu0 %v7424
      %v7558 = vpop.f32.mrf.mxu0
      %v7559 = vadd.f32 %v7267, %v7558
      %v7560 = vpop.f32.mrf.mxu0
      %v7561 = vpop.f32.mrf.mxu0
      %v7562 = vadd.f32 %v7270, %v7561
      %v7563 = vpop.f32.mrf.mxu0
      %7564 = vmatprep.mubr.bf16.mxu0 0
      %7565 = vmatmul.mubr.bf16.gmra.mxu0 %v7427
      %v7566 = vpop.f32.mrf.mxu0
      %v7567 = vadd.f32 %v7275, %v7566
      %v7568 = vpop.f32.mrf.mxu0
      %v7569 = vpop.f32.mrf.mxu0
      %v7570 = vadd.f32 %v7278, %v7569
      %v7571 = vpop.f32.mrf.mxu0
      %7572 = vmatprep.mubr.bf16.mxu0 0
      %7573 = vmatmul.mubr.bf16.gmra.mxu0 %v7430
      %v7574 = vpop.f32.mrf.mxu0
      %v7575 = vadd.f32 %v7283, %v7574
      %v7576 = vpop.f32.mrf.mxu0
      %v7577 = vpop.f32.mrf.mxu0
      %v7578 = vadd.f32 %v7286, %v7577
      %v7579 = vpop.f32.mrf.mxu0
      %7580 = vmatprep.mubr.bf16.mxu0 0
      %7581 = vmatmul.mubr.bf16.gmra.mxu0 %v7433
      %v7582 = vpop.f32.mrf.mxu0
      %v7583 = vadd.f32 %v7291, %v7582
      %v7584 = vpop.f32.mrf.mxu0
      %v7585 = vpop.f32.mrf.mxu0
      %v7586 = vadd.f32 %v7294, %v7585
      %v7587 = vpop.f32.mrf.mxu0
      %7588 = vmatprep.mubr.bf16.mxu0 0
      %7589 = vmatmul.mubr.bf16.gmra.mxu0 %v7436
      %v7590 = vpop.f32.mrf.mxu0
      %v7591 = vadd.f32 %v7299, %v7590
      %v7592 = vpop.f32.mrf.mxu0
      %v7593 = vpop.f32.mrf.mxu0
      %v7594 = vadd.f32 %v7302, %v7593
      %v7595 = vpop.f32.mrf.mxu0
      %7596 = vmatprep.mubr.bf16.mxu0 0
      %7597 = vmatmul.mubr.bf16.gmra.mxu0 %v7439
      %v7598 = vpop.f32.mrf.mxu0
      %v7599 = vadd.f32 %v7307, %v7598
      %v7600 = vpop.f32.mrf.mxu0
      %v7601 = vpop.f32.mrf.mxu0
      %v7602 = vadd.f32 %v7310, %v7601
      %v7603 = vpop.f32.mrf.mxu0
      %7604 = vdwg.mxu0
      %v7605 = vld [vmem:[#allocation3] sm:$0xe]
      %v7606 = vld [vmem:[#allocation3 + $0xc] sm:$0xe]
      %v7607 = vld [vmem:[#allocation3 + $0x18] sm:$0xe]
      %v7608 = vld [vmem:[#allocation3 + $0x24] sm:$0xe]
      %v7609 = vld [vmem:[#allocation3 + $0x30] sm:$0xe]
      %v7610 = vld [vmem:[#allocation3 + $0x3c] sm:$0xe]
      %v7611 = vld [vmem:[#allocation3 + $0x48] sm:$0xe]
      %v7612 = vld [vmem:[#allocation3 + $0x54] sm:$0xe]
      %v7613 = vld [vmem:[#allocation3 + $0x60] sm:$0xe]
      %v7614 = vld [vmem:[#allocation3 + $0x6c] sm:$0xe]
      %v7615 = vld [vmem:[#allocation3 + $0x78] sm:$0xe]
      %v7616 = vld [vmem:[#allocation3 + $0x84] sm:$0xe]
      %v7617 = vld [vmem:[#allocation3 + $0x90] sm:$0xe]
      %v7618 = vld [vmem:[#allocation3 + $0x9c] sm:$0xe]
      %v7619 = vld [vmem:[#allocation3 + $0xa8] sm:$0xe]
      %v7620 = vld [vmem:[#allocation3 + $0xb4] sm:$0xe]
      %v7653 = vrot.slane %v7605, 5
      %v7654 = vrot.slane %v7653, 4
      %v7655 = vrot.slane %v6618, 5
      %v7656 = vsel %vm1955, %v7654, %v7655
      %v7657 = vrot.slane %v7655, 4
      %v7658 = vrot.slane %v6650, 5
      %v7659 = vsel %vm1955, %v7657, %v7658
      %v7660 = vrot.slane %v7606, 5
      %v7661 = vrot.slane %v7660, 4
      %v7662 = vrot.slane %v6620, 5
      %v7663 = vsel %vm1955, %v7661, %v7662
      %v7664 = vrot.slane %v7662, 4
      %v7665 = vrot.slane %v6651, 5
      %v7666 = vsel %vm1955, %v7664, %v7665
      %v7667 = vrot.slane %v7607, 5
      %v7668 = vrot.slane %v7667, 4
      %v7669 = vrot.slane %v6622, 5
      %v7670 = vsel %vm1955, %v7668, %v7669
      %v7671 = vrot.slane %v7669, 4
      %v7672 = vrot.slane %v6652, 5
      %v7673 = vsel %vm1955, %v7671, %v7672
      %v7674 = vrot.slane %v7608, 5
      %v7675 = vrot.slane %v7674, 4
      %v7676 = vrot.slane %v6624, 5
      %v7677 = vsel %vm1955, %v7675, %v7676
      %v7678 = vrot.slane %v7676, 4
      %v7679 = vrot.slane %v6653, 5
      %v7680 = vsel %vm1955, %v7678, %v7679
      %v7681 = vrot.slane %v7609, 5
      %v7682 = vrot.slane %v7681, 4
      %v7683 = vrot.slane %v6626, 5
      %v7684 = vsel %vm1955, %v7682, %v7683
      %v7685 = vrot.slane %v7683, 4
      %v7686 = vrot.slane %v6654, 5
      %v7687 = vsel %vm1955, %v7685, %v7686
      %v7688 = vrot.slane %v7610, 5
      %v7689 = vrot.slane %v7688, 4
      %v7690 = vrot.slane %v6628, 5
      %v7691 = vsel %vm1955, %v7689, %v7690
      %v7692 = vrot.slane %v7690, 4
      %v7693 = vrot.slane %v6655, 5
      %v7694 = vsel %vm1955, %v7692, %v7693
      %v7695 = vrot.slane %v7611, 5
      %v7696 = vrot.slane %v7695, 4
      %v7697 = vrot.slane %v6630, 5
      %v7698 = vsel %vm1955, %v7696, %v7697
      %v7699 = vrot.slane %v7697, 4
      %v7700 = vrot.slane %v6656, 5
      %v7701 = vsel %vm1955, %v7699, %v7700
      %v7702 = vrot.slane %v7612, 5
      %v7703 = vrot.slane %v7702, 4
      %v7704 = vrot.slane %v6632, 5
      %v7705 = vsel %vm1955, %v7703, %v7704
      %v7706 = vrot.slane %v7704, 4
      %v7707 = vrot.slane %v6657, 5
      %v7708 = vsel %vm1955, %v7706, %v7707
      %v7709 = vrot.slane %v7613, 5
      %v7710 = vrot.slane %v7709, 4
      %v7711 = vrot.slane %v6634, 5
      %v7712 = vsel %vm1955, %v7710, %v7711
      %v7713 = vrot.slane %v7711, 4
      %v7714 = vrot.slane %v6658, 5
      %v7715 = vsel %vm1955, %v7713, %v7714
      %v7716 = vrot.slane %v7614, 5
      %v7717 = vrot.slane %v7716, 4
      %v7718 = vrot.slane %v6636, 5
      %v7719 = vsel %vm1955, %v7717, %v7718
      %v7720 = vrot.slane %v7718, 4
      %v7721 = vrot.slane %v6659, 5
      %v7722 = vsel %vm1955, %v7720, %v7721
      %v7723 = vrot.slane %v7615, 5
      %v7724 = vrot.slane %v7723, 4
      %v7725 = vrot.slane %v6638, 5
      %v7726 = vsel %vm1955, %v7724, %v7725
      %v7727 = vrot.slane %v7725, 4
      %v7728 = vrot.slane %v6660, 5
      %v7729 = vsel %vm1955, %v7727, %v7728
      %v7730 = vrot.slane %v7616, 5
      %v7731 = vrot.slane %v7730, 4
      %v7732 = vrot.slane %v6640, 5
      %v7733 = vsel %vm1955, %v7731, %v7732
      %v7734 = vrot.slane %v7732, 4
      %v7735 = vrot.slane %v6661, 5
      %v7736 = vsel %vm1955, %v7734, %v7735
      %v7737 = vrot.slane %v7617, 5
      %v7738 = vrot.slane %v7737, 4
      %v7739 = vrot.slane %v6642, 5
      %v7740 = vsel %vm1955, %v7738, %v7739
      %v7741 = vrot.slane %v7739, 4
      %v7742 = vrot.slane %v6662, 5
      %v7743 = vsel %vm1955, %v7741, %v7742
      %v7744 = vrot.slane %v7618, 5
      %v7745 = vrot.slane %v7744, 4
      %v7746 = vrot.slane %v6644, 5
      %v7747 = vsel %vm1955, %v7745, %v7746
      %v7748 = vrot.slane %v7746, 4
      %v7749 = vrot.slane %v6663, 5
      %v7750 = vsel %vm1955, %v7748, %v7749
      %v7751 = vrot.slane %v7619, 5
      %v7752 = vrot.slane %v7751, 4
      %v7753 = vrot.slane %v6646, 5
      %v7754 = vsel %vm1955, %v7752, %v7753
      %v7755 = vrot.slane %v7753, 4
      %v7756 = vrot.slane %v6664, 5
      %v7757 = vsel %vm1955, %v7755, %v7756
      %v7758 = vrot.slane %v7620, 5
      %v7759 = vrot.slane %v7758, 4
      %v7760 = vrot.slane %v6648, 5
      %v7761 = vsel %vm1955, %v7759, %v7760
      %v7762 = vrot.slane %v7760, 4
      %v7763 = vrot.slane %v6665, 5
      %v7764 = vsel %vm1955, %v7762, %v7763
      %s7765 = scalar_lea.vmem %s5, 8
      %v7766 = vld [vmem:[%s7765] sm:$0xf]
      %v7767 = vunpack.c.l.b16 %v7656
      %v7768 = vunpack.c.l.b16 %v7659
      %v7769 = vunpack.c.l.b16 %v7663
      %v7770 = vunpack.c.l.b16 %v7666
      %v7771 = vunpack.c.l.b16 %v7670
      %v7772 = vunpack.c.l.b16 %v7673
      %v7773 = vunpack.c.l.b16 %v7677
      %v7774 = vunpack.c.l.b16 %v7680
      %v7775 = vunpack.c.l.b16 %v7684
      %v7776 = vunpack.c.l.b16 %v7687
      %v7777 = vunpack.c.l.b16 %v7691
      %v7778 = vunpack.c.l.b16 %v7694
      %v7779 = vunpack.c.l.b16 %v7698
      %v7780 = vunpack.c.l.b16 %v7701
      %v7781 = vunpack.c.l.b16 %v7705
      %v7782 = vunpack.c.l.b16 %v7708
      %v7783 = vunpack.c.l.b16 %v7712
      %v7784 = vunpack.c.l.b16 %v7715
      %v7785 = vunpack.c.l.b16 %v7719
      %v7786 = vunpack.c.l.b16 %v7722
      %v7787 = vunpack.c.l.b16 %v7726
      %v7788 = vunpack.c.l.b16 %v7729
      %v7789 = vunpack.c.l.b16 %v7733
      %v7790 = vunpack.c.l.b16 %v7736
      %v7791 = vunpack.c.l.b16 %v7740
      %v7792 = vunpack.c.l.b16 %v7743
      %v7793 = vunpack.c.l.b16 %v7747
      %v7794 = vunpack.c.l.b16 %v7750
      %v7795 = vunpack.c.l.b16 %v7754
      %v7796 = vunpack.c.l.b16 %v7757
      %v7797 = vunpack.c.l.b16 %v7761
      %v7798 = vunpack.c.l.b16 %v7764
      %v7799 = vpack.c.b16 %v7768, %v7767
      %v7800 = vpack.c.b16 %v7770, %v7769
      %v7801 = vpack.c.b16 %v7772, %v7771
      %v7802 = vpack.c.b16 %v7774, %v7773
      %v7803 = vpack.c.b16 %v7776, %v7775
      %v7804 = vpack.c.b16 %v7778, %v7777
      %v7805 = vpack.c.b16 %v7780, %v7779
      %v7806 = vpack.c.b16 %v7782, %v7781
      %v7807 = vpack.c.b16 %v7784, %v7783
      %v7808 = vpack.c.b16 %v7786, %v7785
      %v7809 = vpack.c.b16 %v7788, %v7787
      %v7810 = vpack.c.b16 %v7790, %v7789
      %v7811 = vpack.c.b16 %v7792, %v7791
      %v7812 = vpack.c.b16 %v7794, %v7793
      %v7813 = vpack.c.b16 %v7796, %v7795
      %v7814 = vpack.c.b16 %v7798, %v7797
      %v7816 = vsel %vm5474, %v7799, 0
      %v7819 = vsel %vm5474, %v7800, 0
      %v7822 = vsel %vm5474, %v7801, 0
      %v7825 = vsel %vm5474, %v7802, 0
      %v7828 = vsel %vm5474, %v7803, 0
      %v7831 = vsel %vm5474, %v7804, 0
      %v7834 = vsel %vm5474, %v7805, 0
      %v7837 = vsel %vm5474, %v7806, 0
      %v7840 = vsel %vm5474, %v7807, 0
      %v7843 = vsel %vm5474, %v7808, 0
      %v7846 = vsel %vm5474, %v7809, 0
      %v7849 = vsel %vm5474, %v7810, 0
      %v7852 = vsel %vm5474, %v7811, 0
      %v7855 = vsel %vm5474, %v7812, 0
      %v7858 = vsel %vm5474, %v7813, 0
      %v7861 = vsel %vm5474, %v7814, 0
      %v7864 = vsel %vm7148, %v7766, 0
      %7866 = vmatprep.subr.bf16.mxu0 0
      %7867 = vmatpush1.bf16.msra.mxu0 0
      %7868 = vmatprep.subr.bf16.mxu0 0
      %7869 = vmatpush1.bf16.msra.mxu0 0
      %7870 = vmatprep.subr.bf16.mxu0 0
      %7871 = vmatpush1.bf16.msra.mxu0 0
      %7872 = vmatprep.subr.bf16.mxu0 0
      %7873 = vmatpush1.bf16.msra.mxu0 0
      %7874 = vmatprep.subr.bf16.mxu0 0
      %7875 = vmatpush1.bf16.msra.mxu0 0
      %7876 = vmatprep.subr.bf16.mxu0 0
      %7877 = vmatpush1.bf16.msra.mxu0 0
      %7878 = vmatprep.subr.bf16.mxu0 0
      %7879 = vmatpush1.bf16.msra.mxu0 0
      %7880 = vmatprep.subr.bf16.mxu0 0
      %7881 = vmatpush1.bf16.msra.mxu0 %v7864
      %7882 = vmatprep.subr.bf16.mxu0 0
      %7883 = vmatpush2.bf16.msra.mxu0 0
      %7884 = vmatprep.subr.bf16.mxu0 0
      %7885 = vmatpush2.bf16.msra.mxu0 0
      %7886 = vmatprep.subr.bf16.mxu0 0
      %7887 = vmatpush2.bf16.msra.mxu0 0
      %7888 = vmatprep.subr.bf16.mxu0 0
      %7889 = vmatpush2.bf16.msra.mxu0 0
      %7890 = vmatprep.subr.bf16.mxu0 0
      %7891 = vmatpush2.bf16.msra.mxu0 0
      %7892 = vmatprep.subr.bf16.mxu0 0
      %7893 = vmatpush2.bf16.msra.mxu0 0
      %7894 = vmatprep.subr.bf16.mxu0 0
      %7895 = vmatpush2.bf16.msra.mxu0 0
      %7896 = vmatprep.subr.bf16.mxu0 0
      %7897 = vmatpush2.bf16.msra.mxu0 0
      %7898 = vmatprep.mubr.bf16.mxu0 0
      %7899 = vmatmul.mubr.bf16.gmra.mxu0 %v7816
      %v7900 = vpop.f32.mrf.mxu0
      %v7901 = vadd.f32 0.0, %v7900
      %v7902 = vpop.f32.mrf.mxu0
      %v7903 = vpop.f32.mrf.mxu0
      %v7904 = vadd.f32 0.0, %v7903
      %v7905 = vpop.f32.mrf.mxu0
      %7906 = vmatprep.mubr.bf16.mxu0 0
      %7907 = vmatmul.mubr.bf16.gmra.mxu0 %v7819
      %v7908 = vpop.f32.mrf.mxu0
      %v7909 = vadd.f32 0.0, %v7908
      %v7910 = vpop.f32.mrf.mxu0
      %v7911 = vpop.f32.mrf.mxu0
      %v7912 = vadd.f32 0.0, %v7911
      %v7913 = vpop.f32.mrf.mxu0
      %7914 = vmatprep.mubr.bf16.mxu0 0
      %7915 = vmatmul.mubr.bf16.gmra.mxu0 %v7822
      %v7916 = vpop.f32.mrf.mxu0
      %v7917 = vadd.f32 0.0, %v7916
      %v7918 = vpop.f32.mrf.mxu0
      %v7919 = vpop.f32.mrf.mxu0
      %v7920 = vadd.f32 0.0, %v7919
      %v7921 = vpop.f32.mrf.mxu0
      %7922 = vmatprep.mubr.bf16.mxu0 0
      %7923 = vmatmul.mubr.bf16.gmra.mxu0 %v7825
      %v7924 = vpop.f32.mrf.mxu0
      %v7925 = vadd.f32 0.0, %v7924
      %v7926 = vpop.f32.mrf.mxu0
      %v7927 = vpop.f32.mrf.mxu0
      %v7928 = vadd.f32 0.0, %v7927
      %v7929 = vpop.f32.mrf.mxu0
      %7930 = vmatprep.mubr.bf16.mxu0 0
      %7931 = vmatmul.mubr.bf16.gmra.mxu0 %v7828
      %v7932 = vpop.f32.mrf.mxu0
      %v7933 = vadd.f32 0.0, %v7932
      %v7934 = vpop.f32.mrf.mxu0
      %v7935 = vpop.f32.mrf.mxu0
      %v7936 = vadd.f32 0.0, %v7935
      %v7937 = vpop.f32.mrf.mxu0
      %7938 = vmatprep.mubr.bf16.mxu0 0
      %7939 = vmatmul.mubr.bf16.gmra.mxu0 %v7831
      %v7940 = vpop.f32.mrf.mxu0
      %v7941 = vadd.f32 0.0, %v7940
      %v7942 = vpop.f32.mrf.mxu0
      %v7943 = vpop.f32.mrf.mxu0
      %v7944 = vadd.f32 0.0, %v7943
      %v7945 = vpop.f32.mrf.mxu0
      %7946 = vmatprep.mubr.bf16.mxu0 0
      %7947 = vmatmul.mubr.bf16.gmra.mxu0 %v7834
      %v7948 = vpop.f32.mrf.mxu0
      %v7949 = vadd.f32 0.0, %v7948
      %v7950 = vpop.f32.mrf.mxu0
      %v7951 = vpop.f32.mrf.mxu0
      %v7952 = vadd.f32 0.0, %v7951
      %v7953 = vpop.f32.mrf.mxu0
      %7954 = vmatprep.mubr.bf16.mxu0 0
      %7955 = vmatmul.mubr.bf16.gmra.mxu0 %v7837
      %v7956 = vpop.f32.mrf.mxu0
      %v7957 = vadd.f32 0.0, %v7956
      %v7958 = vpop.f32.mrf.mxu0
      %v7959 = vpop.f32.mrf.mxu0
      %v7960 = vadd.f32 0.0, %v7959
      %v7961 = vpop.f32.mrf.mxu0
      %7962 = vmatprep.mubr.bf16.mxu0 0
      %7963 = vmatmul.mubr.bf16.gmra.mxu0 %v7840
      %v7964 = vpop.f32.mrf.mxu0
      %v7965 = vadd.f32 0.0, %v7964
      %v7966 = vpop.f32.mrf.mxu0
      %v7967 = vpop.f32.mrf.mxu0
      %v7968 = vadd.f32 0.0, %v7967
      %v7969 = vpop.f32.mrf.mxu0
      %7970 = vmatprep.mubr.bf16.mxu0 0
      %7971 = vmatmul.mubr.bf16.gmra.mxu0 %v7843
      %v7972 = vpop.f32.mrf.mxu0
      %v7973 = vadd.f32 0.0, %v7972
      %v7974 = vpop.f32.mrf.mxu0
      %v7975 = vpop.f32.mrf.mxu0
      %v7976 = vadd.f32 0.0, %v7975
      %v7977 = vpop.f32.mrf.mxu0
      %7978 = vmatprep.mubr.bf16.mxu0 0
      %7979 = vmatmul.mubr.bf16.gmra.mxu0 %v7846
      %v7980 = vpop.f32.mrf.mxu0
      %v7981 = vadd.f32 0.0, %v7980
      %v7982 = vpop.f32.mrf.mxu0
      %v7983 = vpop.f32.mrf.mxu0
      %v7984 = vadd.f32 0.0, %v7983
      %v7985 = vpop.f32.mrf.mxu0
      %7986 = vmatprep.mubr.bf16.mxu0 0
      %7987 = vmatmul.mubr.bf16.gmra.mxu0 %v7849
      %v7988 = vpop.f32.mrf.mxu0
      %v7989 = vadd.f32 0.0, %v7988
      %v7990 = vpop.f32.mrf.mxu0
      %v7991 = vpop.f32.mrf.mxu0
      %v7992 = vadd.f32 0.0, %v7991
      %v7993 = vpop.f32.mrf.mxu0
      %7994 = vmatprep.mubr.bf16.mxu0 0
      %7995 = vmatmul.mubr.bf16.gmra.mxu0 %v7852
      %v7996 = vpop.f32.mrf.mxu0
      %v7997 = vadd.f32 0.0, %v7996
      %v7998 = vpop.f32.mrf.mxu0
      %v7999 = vpop.f32.mrf.mxu0
      %v8000 = vadd.f32 0.0, %v7999
      %v8001 = vpop.f32.mrf.mxu0
      %8002 = vmatprep.mubr.bf16.mxu0 0
      %8003 = vmatmul.mubr.bf16.gmra.mxu0 %v7855
      %v8004 = vpop.f32.mrf.mxu0
      %v8005 = vadd.f32 0.0, %v8004
      %v8006 = vpop.f32.mrf.mxu0
      %v8007 = vpop.f32.mrf.mxu0
      %v8008 = vadd.f32 0.0, %v8007
      %v8009 = vpop.f32.mrf.mxu0
      %8010 = vmatprep.mubr.bf16.mxu0 0
      %8011 = vmatmul.mubr.bf16.gmra.mxu0 %v7858
      %v8012 = vpop.f32.mrf.mxu0
      %v8013 = vadd.f32 0.0, %v8012
      %v8014 = vpop.f32.mrf.mxu0
      %v8015 = vpop.f32.mrf.mxu0
      %v8016 = vadd.f32 0.0, %v8015
      %v8017 = vpop.f32.mrf.mxu0
      %8018 = vmatprep.mubr.bf16.mxu0 0
      %8019 = vmatmul.mubr.bf16.gmra.mxu0 %v7861
      %v8020 = vpop.f32.mrf.mxu0
      %v8021 = vadd.f32 0.0, %v8020
      %v8022 = vpop.f32.mrf.mxu0
      %v8023 = vpop.f32.mrf.mxu0
      %v8024 = vadd.f32 0.0, %v8023
      %v8025 = vpop.f32.mrf.mxu0
      %8026 = vdwg.mxu0
      %v8027 = vadd.f32 %v7479, %v7901
      %v8028 = vadd.f32 %v7482, %v7904
      %v8029 = vadd.f32 %v7487, %v7909
      %v8030 = vadd.f32 %v7490, %v7912
      %v8031 = vadd.f32 %v7495, %v7917
      %v8032 = vadd.f32 %v7498, %v7920
      %v8033 = vadd.f32 %v7503, %v7925
      %v8034 = vadd.f32 %v7506, %v7928
      %v8035 = vadd.f32 %v7511, %v7933
      %v8036 = vadd.f32 %v7514, %v7936
      %v8037 = vadd.f32 %v7519, %v7941
      %v8038 = vadd.f32 %v7522, %v7944
      %v8039 = vadd.f32 %v7527, %v7949
      %v8040 = vadd.f32 %v7530, %v7952
      %v8041 = vadd.f32 %v7535, %v7957
      %v8042 = vadd.f32 %v7538, %v7960
      %v8043 = vadd.f32 %v7543, %v7965
      %v8044 = vadd.f32 %v7546, %v7968
      %v8045 = vadd.f32 %v7551, %v7973
      %v8046 = vadd.f32 %v7554, %v7976
      %v8047 = vadd.f32 %v7559, %v7981
      %v8048 = vadd.f32 %v7562, %v7984
      %v8049 = vadd.f32 %v7567, %v7989
      %v8050 = vadd.f32 %v7570, %v7992
      %v8051 = vadd.f32 %v7575, %v7997
      %v8052 = vadd.f32 %v7578, %v8000
      %v8053 = vadd.f32 %v7583, %v8005
      %v8054 = vadd.f32 %v7586, %v8008
      %v8055 = vadd.f32 %v7591, %v8013
      %v8056 = vadd.f32 %v7594, %v8016
      %v8057 = vadd.f32 %v7599, %v8021
      %v8058 = vadd.f32 %v7602, %v8024
      %v8059 = vld [vmem:[%s5987] sm:$0xf]
      %v8060 = vld [vmem:[%s5987 + $0x4] sm:$0xf]
      %v8061 = vld [vmem:[%s5987 + $0xc] sm:$0xf]
      %v8062 = vld [vmem:[%s5987 + $0x10] sm:$0xf]
      %v8063 = vld [vmem:[%s5987 + $0x18] sm:$0xf]
      %v8064 = vld [vmem:[%s5987 + $0x1c] sm:$0xf]
      %v8065 = vld [vmem:[%s5987 + $0x24] sm:$0xf]
      %v8066 = vld [vmem:[%s5987 + $0x28] sm:$0xf]
      %v8067 = vld [vmem:[%s5987 + $0x30] sm:$0xf]
      %v8068 = vld [vmem:[%s5987 + $0x34] sm:$0xf]
      %v8069 = vld [vmem:[%s5987 + $0x3c] sm:$0xf]
      %v8070 = vld [vmem:[%s5987 + $0x40] sm:$0xf]
      %v8071 = vld [vmem:[%s5987 + $0x48] sm:$0xf]
      %v8072 = vld [vmem:[%s5987 + $0x4c] sm:$0xf]
      %v8073 = vld [vmem:[%s5987 + $0x54] sm:$0xf]
      %v8074 = vld [vmem:[%s5987 + $0x58] sm:$0xf]
      %v8075 = vld [vmem:[%s5987 + $0x60] sm:$0xf]
      %v8076 = vld [vmem:[%s5987 + $0x64] sm:$0xf]
      %v8077 = vld [vmem:[%s5987 + $0x6c] sm:$0xf]
      %v8078 = vld [vmem:[%s5987 + $0x70] sm:$0xf]
      %v8079 = vld [vmem:[%s5987 + $0x78] sm:$0xf]
      %v8080 = vld [vmem:[%s5987 + $0x7c] sm:$0xf]
      %v8081 = vld [vmem:[%s5987 + $0x84] sm:$0xf]
      %v8082 = vld [vmem:[%s5987 + $0x88] sm:$0xf]
      %v8083 = vld [vmem:[%s5987 + $0x90] sm:$0xf]
      %v8084 = vld [vmem:[%s5987 + $0x94] sm:$0xf]
      %v8085 = vld [vmem:[%s5987 + $0x9c] sm:$0xf]
      %v8086 = vld [vmem:[%s5987 + $0xa0] sm:$0xf]
      %v8087 = vld [vmem:[%s5987 + $0xa8] sm:$0xf]
      %v8088 = vld [vmem:[%s5987 + $0xac] sm:$0xf]
      %v8089 = vld [vmem:[%s5987 + $0xb4] sm:$0xf]
      %v8090 = vld [vmem:[%s5987 + $0xb8] sm:$0xf]
      %s8091 = scalar_lea.vmem %s5, 12
      %v8092 = vld [vmem:[%s8091] sm:$0xf]
      %v8125 = vunpack.c.l.b16 %v8059
      %v8126 = vunpack.c.l.b16 %v8060
      %v8127 = vunpack.c.l.b16 %v8061
      %v8128 = vunpack.c.l.b16 %v8062
      %v8129 = vunpack.c.l.b16 %v8063
      %v8130 = vunpack.c.l.b16 %v8064
      %v8131 = vunpack.c.l.b16 %v8065
      %v8132 = vunpack.c.l.b16 %v8066
      %v8133 = vunpack.c.l.b16 %v8067
      %v8134 = vunpack.c.l.b16 %v8068
      %v8135 = vunpack.c.l.b16 %v8069
      %v8136 = vunpack.c.l.b16 %v8070
      %v8137 = vunpack.c.l.b16 %v8071
      %v8138 = vunpack.c.l.b16 %v8072
      %v8139 = vunpack.c.l.b16 %v8073
      %v8140 = vunpack.c.l.b16 %v8074
      %v8141 = vunpack.c.l.b16 %v8075
      %v8142 = vunpack.c.l.b16 %v8076
      %v8143 = vunpack.c.l.b16 %v8077
      %v8144 = vunpack.c.l.b16 %v8078
      %v8145 = vunpack.c.l.b16 %v8079
      %v8146 = vunpack.c.l.b16 %v8080
      %v8147 = vunpack.c.l.b16 %v8081
      %v8148 = vunpack.c.l.b16 %v8082
      %v8149 = vunpack.c.l.b16 %v8083
      %v8150 = vunpack.c.l.b16 %v8084
      %v8151 = vunpack.c.l.b16 %v8085
      %v8152 = vunpack.c.l.b16 %v8086
      %v8153 = vunpack.c.l.b16 %v8087
      %v8154 = vunpack.c.l.b16 %v8088
      %v8155 = vunpack.c.l.b16 %v8089
      %v8156 = vunpack.c.l.b16 %v8090
      %v8157 = vpack.c.b16 %v8126, %v8125
      %v8158 = vpack.c.b16 %v8128, %v8127
      %v8159 = vpack.c.b16 %v8130, %v8129
      %v8160 = vpack.c.b16 %v8132, %v8131
      %v8161 = vpack.c.b16 %v8134, %v8133
      %v8162 = vpack.c.b16 %v8136, %v8135
      %v8163 = vpack.c.b16 %v8138, %v8137
      %v8164 = vpack.c.b16 %v8140, %v8139
      %v8165 = vpack.c.b16 %v8142, %v8141
      %v8166 = vpack.c.b16 %v8144, %v8143
      %v8167 = vpack.c.b16 %v8146, %v8145
      %v8168 = vpack.c.b16 %v8148, %v8147
      %v8169 = vpack.c.b16 %v8150, %v8149
      %v8170 = vpack.c.b16 %v8152, %v8151
      %v8171 = vpack.c.b16 %v8154, %v8153
      %v8172 = vpack.c.b16 %v8156, %v8155
      %v8174 = vsel %vm5474, %v8157, 0
      %v8177 = vsel %vm5474, %v8158, 0
      %v8180 = vsel %vm5474, %v8159, 0
      %v8183 = vsel %vm5474, %v8160, 0
      %v8186 = vsel %vm5474, %v8161, 0
      %v8189 = vsel %vm5474, %v8162, 0
      %v8192 = vsel %vm5474, %v8163, 0
      %v8195 = vsel %vm5474, %v8164, 0
      %v8198 = vsel %vm5474, %v8165, 0
      %v8201 = vsel %vm5474, %v8166, 0
      %v8204 = vsel %vm5474, %v8167, 0
      %v8207 = vsel %vm5474, %v8168, 0
      %v8210 = vsel %vm5474, %v8169, 0
      %v8213 = vsel %vm5474, %v8170, 0
      %v8216 = vsel %vm5474, %v8171, 0
      %v8219 = vsel %vm5474, %v8172, 0
      %v8222 = vsel %vm7148, %v8092, 0
      %8224 = vmatprep.subr.bf16.mxu0 0
      %8225 = vmatpush1.bf16.msra.mxu0 0
      %8226 = vmatprep.subr.bf16.mxu0 0
      %8227 = vmatpush1.bf16.msra.mxu0 0
      %8228 = vmatprep.subr.bf16.mxu0 0
      %8229 = vmatpush1.bf16.msra.mxu0 0
      %8230 = vmatprep.subr.bf16.mxu0 0
      %8231 = vmatpush1.bf16.msra.mxu0 0
      %8232 = vmatprep.subr.bf16.mxu0 0
      %8233 = vmatpush1.bf16.msra.mxu0 0
      %8234 = vmatprep.subr.bf16.mxu0 0
      %8235 = vmatpush1.bf16.msra.mxu0 0
      %8236 = vmatprep.subr.bf16.mxu0 0
      %8237 = vmatpush1.bf16.msra.mxu0 0
      %8238 = vmatprep.subr.bf16.mxu0 0
      %8239 = vmatpush1.bf16.msra.mxu0 %v8222
      %8240 = vmatprep.subr.bf16.mxu0 0
      %8241 = vmatpush2.bf16.msra.mxu0 0
      %8242 = vmatprep.subr.bf16.mxu0 0
      %8243 = vmatpush2.bf16.msra.mxu0 0
      %8244 = vmatprep.subr.bf16.mxu0 0
      %8245 = vmatpush2.bf16.msra.mxu0 0
      %8246 = vmatprep.subr.bf16.mxu0 0
      %8247 = vmatpush2.bf16.msra.mxu0 0
      %8248 = vmatprep.subr.bf16.mxu0 0
      %8249 = vmatpush2.bf16.msra.mxu0 0
      %8250 = vmatprep.subr.bf16.mxu0 0
      %8251 = vmatpush2.bf16.msra.mxu0 0
      %8252 = vmatprep.subr.bf16.mxu0 0
      %8253 = vmatpush2.bf16.msra.mxu0 0
      %8254 = vmatprep.subr.bf16.mxu0 0
      %8255 = vmatpush2.bf16.msra.mxu0 0
      %8256 = vmatprep.mubr.bf16.mxu0 0
      %8257 = vmatmul.mubr.bf16.gmra.mxu0 %v8174
      %v8258 = vpop.f32.mrf.mxu0
      %v8259 = vadd.f32 0.0, %v8258
      %v8260 = vpop.f32.mrf.mxu0
      %v8261 = vpop.f32.mrf.mxu0
      %v8262 = vadd.f32 0.0, %v8261
      %v8263 = vpop.f32.mrf.mxu0
      %8264 = vmatprep.mubr.bf16.mxu0 0
      %8265 = vmatmul.mubr.bf16.gmra.mxu0 %v8177
      %v8266 = vpop.f32.mrf.mxu0
      %v8267 = vadd.f32 0.0, %v8266
      %v8268 = vpop.f32.mrf.mxu0
      %v8269 = vpop.f32.mrf.mxu0
      %v8270 = vadd.f32 0.0, %v8269
      %v8271 = vpop.f32.mrf.mxu0
      %8272 = vmatprep.mubr.bf16.mxu0 0
      %8273 = vmatmul.mubr.bf16.gmra.mxu0 %v8180
      %v8274 = vpop.f32.mrf.mxu0
      %v8275 = vadd.f32 0.0, %v8274
      %v8276 = vpop.f32.mrf.mxu0
      %v8277 = vpop.f32.mrf.mxu0
      %v8278 = vadd.f32 0.0, %v8277
      %v8279 = vpop.f32.mrf.mxu0
      %8280 = vmatprep.mubr.bf16.mxu0 0
      %8281 = vmatmul.mubr.bf16.gmra.mxu0 %v8183
      %v8282 = vpop.f32.mrf.mxu0
      %v8283 = vadd.f32 0.0, %v8282
      %v8284 = vpop.f32.mrf.mxu0
      %v8285 = vpop.f32.mrf.mxu0
      %v8286 = vadd.f32 0.0, %v8285
      %v8287 = vpop.f32.mrf.mxu0
      %8288 = vmatprep.mubr.bf16.mxu0 0
      %8289 = vmatmul.mubr.bf16.gmra.mxu0 %v8186
      %v8290 = vpop.f32.mrf.mxu0
      %v8291 = vadd.f32 0.0, %v8290
      %v8292 = vpop.f32.mrf.mxu0
      %v8293 = vpop.f32.mrf.mxu0
      %v8294 = vadd.f32 0.0, %v8293
      %v8295 = vpop.f32.mrf.mxu0
      %8296 = vmatprep.mubr.bf16.mxu0 0
      %8297 = vmatmul.mubr.bf16.gmra.mxu0 %v8189
      %v8298 = vpop.f32.mrf.mxu0
      %v8299 = vadd.f32 0.0, %v8298
      %v8300 = vpop.f32.mrf.mxu0
      %v8301 = vpop.f32.mrf.mxu0
      %v8302 = vadd.f32 0.0, %v8301
      %v8303 = vpop.f32.mrf.mxu0
      %8304 = vmatprep.mubr.bf16.mxu0 0
      %8305 = vmatmul.mubr.bf16.gmra.mxu0 %v8192
      %v8306 = vpop.f32.mrf.mxu0
      %v8307 = vadd.f32 0.0, %v8306
      %v8308 = vpop.f32.mrf.mxu0
      %v8309 = vpop.f32.mrf.mxu0
      %v8310 = vadd.f32 0.0, %v8309
      %v8311 = vpop.f32.mrf.mxu0
      %8312 = vmatprep.mubr.bf16.mxu0 0
      %8313 = vmatmul.mubr.bf16.gmra.mxu0 %v8195
      %v8314 = vpop.f32.mrf.mxu0
      %v8315 = vadd.f32 0.0, %v8314
      %v8316 = vpop.f32.mrf.mxu0
      %v8317 = vpop.f32.mrf.mxu0
      %v8318 = vadd.f32 0.0, %v8317
      %v8319 = vpop.f32.mrf.mxu0
      %8320 = vmatprep.mubr.bf16.mxu0 0
      %8321 = vmatmul.mubr.bf16.gmra.mxu0 %v8198
      %v8322 = vpop.f32.mrf.mxu0
      %v8323 = vadd.f32 0.0, %v8322
      %v8324 = vpop.f32.mrf.mxu0
      %v8325 = vpop.f32.mrf.mxu0
      %v8326 = vadd.f32 0.0, %v8325
      %v8327 = vpop.f32.mrf.mxu0
      %8328 = vmatprep.mubr.bf16.mxu0 0
      %8329 = vmatmul.mubr.bf16.gmra.mxu0 %v8201
      %v8330 = vpop.f32.mrf.mxu0
      %v8331 = vadd.f32 0.0, %v8330
      %v8332 = vpop.f32.mrf.mxu0
      %v8333 = vpop.f32.mrf.mxu0
      %v8334 = vadd.f32 0.0, %v8333
      %v8335 = vpop.f32.mrf.mxu0
      %8336 = vmatprep.mubr.bf16.mxu0 0
      %8337 = vmatmul.mubr.bf16.gmra.mxu0 %v8204
      %v8338 = vpop.f32.mrf.mxu0
      %v8339 = vadd.f32 0.0, %v8338
      %v8340 = vpop.f32.mrf.mxu0
      %v8341 = vpop.f32.mrf.mxu0
      %v8342 = vadd.f32 0.0, %v8341
      %v8343 = vpop.f32.mrf.mxu0
      %8344 = vmatprep.mubr.bf16.mxu0 0
      %8345 = vmatmul.mubr.bf16.gmra.mxu0 %v8207
      %v8346 = vpop.f32.mrf.mxu0
      %v8347 = vadd.f32 0.0, %v8346
      %v8348 = vpop.f32.mrf.mxu0
      %v8349 = vpop.f32.mrf.mxu0
      %v8350 = vadd.f32 0.0, %v8349
      %v8351 = vpop.f32.mrf.mxu0
      %8352 = vmatprep.mubr.bf16.mxu0 0
      %8353 = vmatmul.mubr.bf16.gmra.mxu0 %v8210
      %v8354 = vpop.f32.mrf.mxu0
      %v8355 = vadd.f32 0.0, %v8354
      %v8356 = vpop.f32.mrf.mxu0
      %v8357 = vpop.f32.mrf.mxu0
      %v8358 = vadd.f32 0.0, %v8357
      %v8359 = vpop.f32.mrf.mxu0
      %8360 = vmatprep.mubr.bf16.mxu0 0
      %8361 = vmatmul.mubr.bf16.gmra.mxu0 %v8213
      %v8362 = vpop.f32.mrf.mxu0
      %v8363 = vadd.f32 0.0, %v8362
      %v8364 = vpop.f32.mrf.mxu0
      %v8365 = vpop.f32.mrf.mxu0
      %v8366 = vadd.f32 0.0, %v8365
      %v8367 = vpop.f32.mrf.mxu0
      %8368 = vmatprep.mubr.bf16.mxu0 0
      %8369 = vmatmul.mubr.bf16.gmra.mxu0 %v8216
      %v8370 = vpop.f32.mrf.mxu0
      %v8371 = vadd.f32 0.0, %v8370
      %v8372 = vpop.f32.mrf.mxu0
      %v8373 = vpop.f32.mrf.mxu0
      %v8374 = vadd.f32 0.0, %v8373
      %v8375 = vpop.f32.mrf.mxu0
      %8376 = vmatprep.mubr.bf16.mxu0 0
      %8377 = vmatmul.mubr.bf16.gmra.mxu0 %v8219
      %v8378 = vpop.f32.mrf.mxu0
      %v8379 = vadd.f32 0.0, %v8378
      %v8380 = vpop.f32.mrf.mxu0
      %v8381 = vpop.f32.mrf.mxu0
      %v8382 = vadd.f32 0.0, %v8381
      %v8383 = vpop.f32.mrf.mxu0
      %8384 = vdwg.mxu0
      %v8385 = vadd.f32 %v8027, %v8259
      %v8386 = vadd.f32 %v8028, %v8262
      %v8387 = vadd.f32 %v8029, %v8267
      %v8388 = vadd.f32 %v8030, %v8270
      %v8389 = vadd.f32 %v8031, %v8275
      %v8390 = vadd.f32 %v8032, %v8278
      %v8391 = vadd.f32 %v8033, %v8283
      %v8392 = vadd.f32 %v8034, %v8286
      %v8393 = vadd.f32 %v8035, %v8291
      %v8394 = vadd.f32 %v8036, %v8294
      %v8395 = vadd.f32 %v8037, %v8299
      %v8396 = vadd.f32 %v8038, %v8302
      %v8397 = vadd.f32 %v8039, %v8307
      %v8398 = vadd.f32 %v8040, %v8310
      %v8399 = vadd.f32 %v8041, %v8315
      %v8400 = vadd.f32 %v8042, %v8318
      %v8401 = vadd.f32 %v8043, %v8323
      %v8402 = vadd.f32 %v8044, %v8326
      %v8403 = vadd.f32 %v8045, %v8331
      %v8404 = vadd.f32 %v8046, %v8334
      %v8405 = vadd.f32 %v8047, %v8339
      %v8406 = vadd.f32 %v8048, %v8342
      %v8407 = vadd.f32 %v8049, %v8347
      %v8408 = vadd.f32 %v8050, %v8350
      %v8409 = vadd.f32 %v8051, %v8355
      %v8410 = vadd.f32 %v8052, %v8358
      %v8411 = vadd.f32 %v8053, %v8363
      %v8412 = vadd.f32 %v8054, %v8366
      %v8413 = vadd.f32 %v8055, %v8371
      %v8414 = vadd.f32 %v8056, %v8374
      %v8415 = vadd.f32 %v8057, %v8379
      %v8416 = vadd.f32 %v8058, %v8382
      %v8417 = vld [vmem:[%s5987] sm:$0xf]
      %v8418 = vld [vmem:[%s5987 + $0x4] sm:$0xf]
      %v8419 = vld [vmem:[%s5987 + $0x8] sm:$0x1]
      %v8420 = vld [vmem:[%s5987 + $0xc] sm:$0xf]
      %v8421 = vld [vmem:[%s5987 + $0x10] sm:$0xf]
      %v8422 = vld [vmem:[%s5987 + $0x14] sm:$0x1]
      %v8423 = vld [vmem:[%s5987 + $0x18] sm:$0xf]
      %v8424 = vld [vmem:[%s5987 + $0x1c] sm:$0xf]
      %v8425 = vld [vmem:[%s5987 + $0x20] sm:$0x1]
      %v8426 = vld [vmem:[%s5987 + $0x24] sm:$0xf]
      %v8427 = vld [vmem:[%s5987 + $0x28] sm:$0xf]
      %v8428 = vld [vmem:[%s5987 + $0x2c] sm:$0x1]
      %v8429 = vld [vmem:[%s5987 + $0x30] sm:$0xf]
      %v8430 = vld [vmem:[%s5987 + $0x34] sm:$0xf]
      %v8431 = vld [vmem:[%s5987 + $0x38] sm:$0x1]
      %v8432 = vld [vmem:[%s5987 + $0x3c] sm:$0xf]
      %v8433 = vld [vmem:[%s5987 + $0x40] sm:$0xf]
      %v8434 = vld [vmem:[%s5987 + $0x44] sm:$0x1]
      %v8435 = vld [vmem:[%s5987 + $0x48] sm:$0xf]
      %v8436 = vld [vmem:[%s5987 + $0x4c] sm:$0xf]
      %v8437 = vld [vmem:[%s5987 + $0x50] sm:$0x1]
      %v8438 = vld [vmem:[%s5987 + $0x54] sm:$0xf]
      %v8439 = vld [vmem:[%s5987 + $0x58] sm:$0xf]
      %v8440 = vld [vmem:[%s5987 + $0x5c] sm:$0x1]
      %v8441 = vld [vmem:[%s5987 + $0x60] sm:$0xf]
      %v8442 = vld [vmem:[%s5987 + $0x64] sm:$0xf]
      %v8443 = vld [vmem:[%s5987 + $0x68] sm:$0x1]
      %v8444 = vld [vmem:[%s5987 + $0x6c] sm:$0xf]
      %v8445 = vld [vmem:[%s5987 + $0x70] sm:$0xf]
      %v8446 = vld [vmem:[%s5987 + $0x74] sm:$0x1]
      %v8447 = vld [vmem:[%s5987 + $0x78] sm:$0xf]
      %v8448 = vld [vmem:[%s5987 + $0x7c] sm:$0xf]
      %v8449 = vld [vmem:[%s5987 + $0x80] sm:$0x1]
      %v8450 = vld [vmem:[%s5987 + $0x84] sm:$0xf]
      %v8451 = vld [vmem:[%s5987 + $0x88] sm:$0xf]
      %v8452 = vld [vmem:[%s5987 + $0x8c] sm:$0x1]
      %v8453 = vld [vmem:[%s5987 + $0x90] sm:$0xf]
      %v8454 = vld [vmem:[%s5987 + $0x94] sm:$0xf]
      %v8455 = vld [vmem:[%s5987 + $0x98] sm:$0x1]
      %v8456 = vld [vmem:[%s5987 + $0x9c] sm:$0xf]
      %v8457 = vld [vmem:[%s5987 + $0xa0] sm:$0xf]
      %v8458 = vld [vmem:[%s5987 + $0xa4] sm:$0x1]
      %v8459 = vld [vmem:[%s5987 + $0xa8] sm:$0xf]
      %v8460 = vld [vmem:[%s5987 + $0xac] sm:$0xf]
      %v8461 = vld [vmem:[%s5987 + $0xb0] sm:$0x1]
      %v8462 = vld [vmem:[%s5987 + $0xb4] sm:$0xf]
      %v8463 = vld [vmem:[%s5987 + $0xb8] sm:$0xf]
      %v8464 = vld [vmem:[%s5987 + $0xbc] sm:$0x1]
      %v8466 = vshrl.u32 %v8417, 16
      %v8468 = vrot.slane %v8466, 4
      %v8469 = vshll.u32 %v8417, 16
      %v8471 = vrot.slane %v8469, 5
      %v8472 = vor.u32 %v8468, %v8471
      %v8473 = vrot.slane %v8472, 4
      %v8475 = vshll.u32 %v8418, 16
      %v8477 = vrot.slane %v8475, 5
      %v8478 = vsel %vm964, %v8473, %v8477
      %v8479 = vshrl.u32 %v8418, 16
      %v8481 = vrot.slane %v8479, 4
      %v8482 = vor.u32 %v8481, %v8477
      %v8483 = vrot.slane %v8482, 4
      %v8485 = vshll.u32 %v8419, 16
      %v8487 = vrot.slane %v8485, 5
      %v8488 = vsel %vm964, %v8483, %v8487
      %v8490 = vshrl.u32 %v8420, 16
      %v8492 = vrot.slane %v8490, 4
      %v8493 = vshll.u32 %v8420, 16
      %v8495 = vrot.slane %v8493, 5
      %v8496 = vor.u32 %v8492, %v8495
      %v8497 = vrot.slane %v8496, 4
      %v8499 = vshll.u32 %v8421, 16
      %v8501 = vrot.slane %v8499, 5
      %v8502 = vsel %vm964, %v8497, %v8501
      %v8503 = vshrl.u32 %v8421, 16
      %v8505 = vrot.slane %v8503, 4
      %v8506 = vor.u32 %v8505, %v8501
      %v8507 = vrot.slane %v8506, 4
      %v8509 = vshll.u32 %v8422, 16
      %v8511 = vrot.slane %v8509, 5
      %v8512 = vsel %vm964, %v8507, %v8511
      %v8514 = vshrl.u32 %v8423, 16
      %v8516 = vrot.slane %v8514, 4
      %v8517 = vshll.u32 %v8423, 16
      %v8519 = vrot.slane %v8517, 5
      %v8520 = vor.u32 %v8516, %v8519
      %v8521 = vrot.slane %v8520, 4
      %v8523 = vshll.u32 %v8424, 16
      %v8525 = vrot.slane %v8523, 5
      %v8526 = vsel %vm964, %v8521, %v8525
      %v8527 = vshrl.u32 %v8424, 16
      %v8529 = vrot.slane %v8527, 4
      %v8530 = vor.u32 %v8529, %v8525
      %v8531 = vrot.slane %v8530, 4
      %v8533 = vshll.u32 %v8425, 16
      %v8535 = vrot.slane %v8533, 5
      %v8536 = vsel %vm964, %v8531, %v8535
      %v8538 = vshrl.u32 %v8426, 16
      %v8540 = vrot.slane %v8538, 4
      %v8541 = vshll.u32 %v8426, 16
      %v8543 = vrot.slane %v8541, 5
      %v8544 = vor.u32 %v8540, %v8543
      %v8545 = vrot.slane %v8544, 4
      %v8547 = vshll.u32 %v8427, 16
      %v8549 = vrot.slane %v8547, 5
      %v8550 = vsel %vm964, %v8545, %v8549
      %v8551 = vshrl.u32 %v8427, 16
      %v8553 = vrot.slane %v8551, 4
      %v8554 = vor.u32 %v8553, %v8549
      %v8555 = vrot.slane %v8554, 4
      %v8557 = vshll.u32 %v8428, 16
      %v8559 = vrot.slane %v8557, 5
      %v8560 = vsel %vm964, %v8555, %v8559
      %v8562 = vshrl.u32 %v8429, 16
      %v8564 = vrot.slane %v8562, 4
      %v8565 = vshll.u32 %v8429, 16
      %v8567 = vrot.slane %v8565, 5
      %v8568 = vor.u32 %v8564, %v8567
      %v8569 = vrot.slane %v8568, 4
      %v8571 = vshll.u32 %v8430, 16
      %v8573 = vrot.slane %v8571, 5
      %v8574 = vsel %vm964, %v8569, %v8573
      %v8575 = vshrl.u32 %v8430, 16
      %v8577 = vrot.slane %v8575, 4
      %v8578 = vor.u32 %v8577, %v8573
      %v8579 = vrot.slane %v8578, 4
      %v8581 = vshll.u32 %v8431, 16
      %v8583 = vrot.slane %v8581, 5
      %v8584 = vsel %vm964, %v8579, %v8583
      %v8586 = vshrl.u32 %v8432, 16
      %v8588 = vrot.slane %v8586, 4
      %v8589 = vshll.u32 %v8432, 16
      %v8591 = vrot.slane %v8589, 5
      %v8592 = vor.u32 %v8588, %v8591
      %v8593 = vrot.slane %v8592, 4
      %v8595 = vshll.u32 %v8433, 16
      %v8597 = vrot.slane %v8595, 5
      %v8598 = vsel %vm964, %v8593, %v8597
      %v8599 = vshrl.u32 %v8433, 16
      %v8601 = vrot.slane %v8599, 4
      %v8602 = vor.u32 %v8601, %v8597
      %v8603 = vrot.slane %v8602, 4
      %v8605 = vshll.u32 %v8434, 16
      %v8607 = vrot.slane %v8605, 5
      %v8608 = vsel %vm964, %v8603, %v8607
      %v8610 = vshrl.u32 %v8435, 16
      %v8612 = vrot.slane %v8610, 4
      %v8613 = vshll.u32 %v8435, 16
      %v8615 = vrot.slane %v8613, 5
      %v8616 = vor.u32 %v8612, %v8615
      %v8617 = vrot.slane %v8616, 4
      %v8619 = vshll.u32 %v8436, 16
      %v8621 = vrot.slane %v8619, 5
      %v8622 = vsel %vm964, %v8617, %v8621
      %v8623 = vshrl.u32 %v8436, 16
      %v8625 = vrot.slane %v8623, 4
      %v8626 = vor.u32 %v8625, %v8621
      %v8627 = vrot.slane %v8626, 4
      %v8629 = vshll.u32 %v8437, 16
      %v8631 = vrot.slane %v8629, 5
      %v8632 = vsel %vm964, %v8627, %v8631
      %v8634 = vshrl.u32 %v8438, 16
      %v8636 = vrot.slane %v8634, 4
      %v8637 = vshll.u32 %v8438, 16
      %v8639 = vrot.slane %v8637, 5
      %v8640 = vor.u32 %v8636, %v8639
      %v8641 = vrot.slane %v8640, 4
      %v8643 = vshll.u32 %v8439, 16
      %v8645 = vrot.slane %v8643, 5
      %v8646 = vsel %vm964, %v8641, %v8645
      %v8647 = vshrl.u32 %v8439, 16
      %v8649 = vrot.slane %v8647, 4
      %v8650 = vor.u32 %v8649, %v8645
      %v8651 = vrot.slane %v8650, 4
      %v8653 = vshll.u32 %v8440, 16
      %v8655 = vrot.slane %v8653, 5
      %v8656 = vsel %vm964, %v8651, %v8655
      %v8658 = vshrl.u32 %v8441, 16
      %v8660 = vrot.slane %v8658, 4
      %v8661 = vshll.u32 %v8441, 16
      %v8663 = vrot.slane %v8661, 5
      %v8664 = vor.u32 %v8660, %v8663
      %v8665 = vrot.slane %v8664, 4
      %v8667 = vshll.u32 %v8442, 16
      %v8669 = vrot.slane %v8667, 5
      %v8670 = vsel %vm964, %v8665, %v8669
      %v8671 = vshrl.u32 %v8442, 16
      %v8673 = vrot.slane %v8671, 4
      %v8674 = vor.u32 %v8673, %v8669
      %v8675 = vrot.slane %v8674, 4
      %v8677 = vshll.u32 %v8443, 16
      %v8679 = vrot.slane %v8677, 5
      %v8680 = vsel %vm964, %v8675, %v8679
      %v8682 = vshrl.u32 %v8444, 16
      %v8684 = vrot.slane %v8682, 4
      %v8685 = vshll.u32 %v8444, 16
      %v8687 = vrot.slane %v8685, 5
      %v8688 = vor.u32 %v8684, %v8687
      %v8689 = vrot.slane %v8688, 4
      %v8691 = vshll.u32 %v8445, 16
      %v8693 = vrot.slane %v8691, 5
      %v8694 = vsel %vm964, %v8689, %v8693
      %v8695 = vshrl.u32 %v8445, 16
      %v8697 = vrot.slane %v8695, 4
      %v8698 = vor.u32 %v8697, %v8693
      %v8699 = vrot.slane %v8698, 4
      %v8701 = vshll.u32 %v8446, 16
      %v8703 = vrot.slane %v8701, 5
      %v8704 = vsel %vm964, %v8699, %v8703
      %v8706 = vshrl.u32 %v8447, 16
      %v8708 = vrot.slane %v8706, 4
      %v8709 = vshll.u32 %v8447, 16
      %v8711 = vrot.slane %v8709, 5
      %v8712 = vor.u32 %v8708, %v8711
      %v8713 = vrot.slane %v8712, 4
      %v8715 = vshll.u32 %v8448, 16
      %v8717 = vrot.slane %v8715, 5
      %v8718 = vsel %vm964, %v8713, %v8717
      %v8719 = vshrl.u32 %v8448, 16
      %v8721 = vrot.slane %v8719, 4
      %v8722 = vor.u32 %v8721, %v8717
      %v8723 = vrot.slane %v8722, 4
      %v8725 = vshll.u32 %v8449, 16
      %v8727 = vrot.slane %v8725, 5
      %v8728 = vsel %vm964, %v8723, %v8727
      %v8730 = vshrl.u32 %v8450, 16
      %v8732 = vrot.slane %v8730, 4
      %v8733 = vshll.u32 %v8450, 16
      %v8735 = vrot.slane %v8733, 5
      %v8736 = vor.u32 %v8732, %v8735
      %v8737 = vrot.slane %v8736, 4
      %v8739 = vshll.u32 %v8451, 16
      %v8741 = vrot.slane %v8739, 5
      %v8742 = vsel %vm964, %v8737, %v8741
      %v8743 = vshrl.u32 %v8451, 16
      %v8745 = vrot.slane %v8743, 4
      %v8746 = vor.u32 %v8745, %v8741
      %v8747 = vrot.slane %v8746, 4
      %v8749 = vshll.u32 %v8452, 16
      %v8751 = vrot.slane %v8749, 5
      %v8752 = vsel %vm964, %v8747, %v8751
      %v8754 = vshrl.u32 %v8453, 16
      %v8756 = vrot.slane %v8754, 4
      %v8757 = vshll.u32 %v8453, 16
      %v8759 = vrot.slane %v8757, 5
      %v8760 = vor.u32 %v8756, %v8759
      %v8761 = vrot.slane %v8760, 4
      %v8763 = vshll.u32 %v8454, 16
      %v8765 = vrot.slane %v8763, 5
      %v8766 = vsel %vm964, %v8761, %v8765
      %v8767 = vshrl.u32 %v8454, 16
      %v8769 = vrot.slane %v8767, 4
      %v8770 = vor.u32 %v8769, %v8765
      %v8771 = vrot.slane %v8770, 4
      %v8773 = vshll.u32 %v8455, 16
      %v8775 = vrot.slane %v8773, 5
      %v8776 = vsel %vm964, %v8771, %v8775
      %v8778 = vshrl.u32 %v8456, 16
      %v8780 = vrot.slane %v8778, 4
      %v8781 = vshll.u32 %v8456, 16
      %v8783 = vrot.slane %v8781, 5
      %v8784 = vor.u32 %v8780, %v8783
      %v8785 = vrot.slane %v8784, 4
      %v8787 = vshll.u32 %v8457, 16
      %v8789 = vrot.slane %v8787, 5
      %v8790 = vsel %vm964, %v8785, %v8789
      %v8791 = vshrl.u32 %v8457, 16
      %v8793 = vrot.slane %v8791, 4
      %v8794 = vor.u32 %v8793, %v8789
      %v8795 = vrot.slane %v8794, 4
      %v8797 = vshll.u32 %v8458, 16
      %v8799 = vrot.slane %v8797, 5
      %v8800 = vsel %vm964, %v8795, %v8799
      %v8802 = vshrl.u32 %v8459, 16
      %v8804 = vrot.slane %v8802, 4
      %v8805 = vshll.u32 %v8459, 16
      %v8807 = vrot.slane %v8805, 5
      %v8808 = vor.u32 %v8804, %v8807
      %v8809 = vrot.slane %v8808, 4
      %v8811 = vshll.u32 %v8460, 16
      %v8813 = vrot.slane %v8811, 5
      %v8814 = vsel %vm964, %v8809, %v8813
      %v8815 = vshrl.u32 %v8460, 16
      %v8817 = vrot.slane %v8815, 4
      %v8818 = vor.u32 %v8817, %v8813
      %v8819 = vrot.slane %v8818, 4
      %v8821 = vshll.u32 %v8461, 16
      %v8823 = vrot.slane %v8821, 5
      %v8824 = vsel %vm964, %v8819, %v8823
      %v8826 = vshrl.u32 %v8462, 16
      %v8828 = vrot.slane %v8826, 4
      %v8829 = vshll.u32 %v8462, 16
      %v8831 = vrot.slane %v8829, 5
      %v8832 = vor.u32 %v8828, %v8831
      %v8833 = vrot.slane %v8832, 4
      %v8835 = vshll.u32 %v8463, 16
      %v8837 = vrot.slane %v8835, 5
      %v8838 = vsel %vm964, %v8833, %v8837
      %v8839 = vshrl.u32 %v8463, 16
      %v8841 = vrot.slane %v8839, 4
      %v8842 = vor.u32 %v8841, %v8837
      %v8843 = vrot.slane %v8842, 4
      %v8845 = vshll.u32 %v8464, 16
      %v8847 = vrot.slane %v8845, 5
      %v8848 = vsel %vm964, %v8843, %v8847
      %s8849 = scalar_lea.vmem %s5, 16
      %v8850 = vld [vmem:[%s8849] sm:$0xf]
      %v8851 = vunpack.c.l.b16 %v8478
      %v8852 = vunpack.c.l.b16 %v8488
      %v8853 = vunpack.c.l.b16 %v8502
      %v8854 = vunpack.c.l.b16 %v8512
      %v8855 = vunpack.c.l.b16 %v8526
      %v8856 = vunpack.c.l.b16 %v8536
      %v8857 = vunpack.c.l.b16 %v8550
      %v8858 = vunpack.c.l.b16 %v8560
      %v8859 = vunpack.c.l.b16 %v8574
      %v8860 = vunpack.c.l.b16 %v8584
      %v8861 = vunpack.c.l.b16 %v8598
      %v8862 = vunpack.c.l.b16 %v8608
      %v8863 = vunpack.c.l.b16 %v8622
      %v8864 = vunpack.c.l.b16 %v8632
      %v8865 = vunpack.c.l.b16 %v8646
      %v8866 = vunpack.c.l.b16 %v8656
      %v8867 = vunpack.c.l.b16 %v8670
      %v8868 = vunpack.c.l.b16 %v8680
      %v8869 = vunpack.c.l.b16 %v8694
      %v8870 = vunpack.c.l.b16 %v8704
      %v8871 = vunpack.c.l.b16 %v8718
      %v8872 = vunpack.c.l.b16 %v8728
      %v8873 = vunpack.c.l.b16 %v8742
      %v8874 = vunpack.c.l.b16 %v8752
      %v8875 = vunpack.c.l.b16 %v8766
      %v8876 = vunpack.c.l.b16 %v8776
      %v8877 = vunpack.c.l.b16 %v8790
      %v8878 = vunpack.c.l.b16 %v8800
      %v8879 = vunpack.c.l.b16 %v8814
      %v8880 = vunpack.c.l.b16 %v8824
      %v8881 = vunpack.c.l.b16 %v8838
      %v8882 = vunpack.c.l.b16 %v8848
      %v8883 = vpack.c.b16 %v8852, %v8851
      %v8884 = vpack.c.b16 %v8854, %v8853
      %v8885 = vpack.c.b16 %v8856, %v8855
      %v8886 = vpack.c.b16 %v8858, %v8857
      %v8887 = vpack.c.b16 %v8860, %v8859
      %v8888 = vpack.c.b16 %v8862, %v8861
      %v8889 = vpack.c.b16 %v8864, %v8863
      %v8890 = vpack.c.b16 %v8866, %v8865
      %v8891 = vpack.c.b16 %v8868, %v8867
      %v8892 = vpack.c.b16 %v8870, %v8869
      %v8893 = vpack.c.b16 %v8872, %v8871
      %v8894 = vpack.c.b16 %v8874, %v8873
      %v8895 = vpack.c.b16 %v8876, %v8875
      %v8896 = vpack.c.b16 %v8878, %v8877
      %v8897 = vpack.c.b16 %v8880, %v8879
      %v8898 = vpack.c.b16 %v8882, %v8881
      %v8900 = vsel %vm5474, %v8883, 0
      %v8903 = vsel %vm5474, %v8884, 0
      %v8906 = vsel %vm5474, %v8885, 0
      %v8909 = vsel %vm5474, %v8886, 0
      %v8912 = vsel %vm5474, %v8887, 0
      %v8915 = vsel %vm5474, %v8888, 0
      %v8918 = vsel %vm5474, %v8889, 0
      %v8921 = vsel %vm5474, %v8890, 0
      %v8924 = vsel %vm5474, %v8891, 0
      %v8927 = vsel %vm5474, %v8892, 0
      %v8930 = vsel %vm5474, %v8893, 0
      %v8933 = vsel %vm5474, %v8894, 0
      %v8936 = vsel %vm5474, %v8895, 0
      %v8939 = vsel %vm5474, %v8896, 0
      %v8942 = vsel %vm5474, %v8897, 0
      %v8945 = vsel %vm5474, %v8898, 0
      %v8948 = vsel %vm7148, %v8850, 0
      %8950 = vmatprep.subr.bf16.mxu0 0
      %8951 = vmatpush1.bf16.msra.mxu0 0
      %8952 = vmatprep.subr.bf16.mxu0 0
      %8953 = vmatpush1.bf16.msra.mxu0 0
      %8954 = vmatprep.subr.bf16.mxu0 0
      %8955 = vmatpush1.bf16.msra.mxu0 0
      %8956 = vmatprep.subr.bf16.mxu0 0
      %8957 = vmatpush1.bf16.msra.mxu0 0
      %8958 = vmatprep.subr.bf16.mxu0 0
      %8959 = vmatpush1.bf16.msra.mxu0 0
      %8960 = vmatprep.subr.bf16.mxu0 0
      %8961 = vmatpush1.bf16.msra.mxu0 0
      %8962 = vmatprep.subr.bf16.mxu0 0
      %8963 = vmatpush1.bf16.msra.mxu0 0
      %8964 = vmatprep.subr.bf16.mxu0 0
      %8965 = vmatpush1.bf16.msra.mxu0 %v8948
      %8966 = vmatprep.subr.bf16.mxu0 0
      %8967 = vmatpush2.bf16.msra.mxu0 0
      %8968 = vmatprep.subr.bf16.mxu0 0
      %8969 = vmatpush2.bf16.msra.mxu0 0
      %8970 = vmatprep.subr.bf16.mxu0 0
      %8971 = vmatpush2.bf16.msra.mxu0 0
      %8972 = vmatprep.subr.bf16.mxu0 0
      %8973 = vmatpush2.bf16.msra.mxu0 0
      %8974 = vmatprep.subr.bf16.mxu0 0
      %8975 = vmatpush2.bf16.msra.mxu0 0
      %8976 = vmatprep.subr.bf16.mxu0 0
      %8977 = vmatpush2.bf16.msra.mxu0 0
      %8978 = vmatprep.subr.bf16.mxu0 0
      %8979 = vmatpush2.bf16.msra.mxu0 0
      %8980 = vmatprep.subr.bf16.mxu0 0
      %8981 = vmatpush2.bf16.msra.mxu0 0
      %8982 = vmatprep.mubr.bf16.mxu0 0
      %8983 = vmatmul.mubr.bf16.gmra.mxu0 %v8900
      %v8984 = vpop.f32.mrf.mxu0
      %v8985 = vadd.f32 0.0, %v8984
      %v8986 = vpop.f32.mrf.mxu0
      %v8987 = vpop.f32.mrf.mxu0
      %v8988 = vadd.f32 0.0, %v8987
      %v8989 = vpop.f32.mrf.mxu0
      %8990 = vmatprep.mubr.bf16.mxu0 0
      %8991 = vmatmul.mubr.bf16.gmra.mxu0 %v8903
      %v8992 = vpop.f32.mrf.mxu0
      %v8993 = vadd.f32 0.0, %v8992
      %v8994 = vpop.f32.mrf.mxu0
      %v8995 = vpop.f32.mrf.mxu0
      %v8996 = vadd.f32 0.0, %v8995
      %v8997 = vpop.f32.mrf.mxu0
      %8998 = vmatprep.mubr.bf16.mxu0 0
      %8999 = vmatmul.mubr.bf16.gmra.mxu0 %v8906
      %v9000 = vpop.f32.mrf.mxu0
      %v9001 = vadd.f32 0.0, %v9000
      %v9002 = vpop.f32.mrf.mxu0
      %v9003 = vpop.f32.mrf.mxu0
      %v9004 = vadd.f32 0.0, %v9003
      %v9005 = vpop.f32.mrf.mxu0
      %9006 = vmatprep.mubr.bf16.mxu0 0
      %9007 = vmatmul.mubr.bf16.gmra.mxu0 %v8909
      %v9008 = vpop.f32.mrf.mxu0
      %v9009 = vadd.f32 0.0, %v9008
      %v9010 = vpop.f32.mrf.mxu0
      %v9011 = vpop.f32.mrf.mxu0
      %v9012 = vadd.f32 0.0, %v9011
      %v9013 = vpop.f32.mrf.mxu0
      %9014 = vmatprep.mubr.bf16.mxu0 0
      %9015 = vmatmul.mubr.bf16.gmra.mxu0 %v8912
      %v9016 = vpop.f32.mrf.mxu0
      %v9017 = vadd.f32 0.0, %v9016
      %v9018 = vpop.f32.mrf.mxu0
      %v9019 = vpop.f32.mrf.mxu0
      %v9020 = vadd.f32 0.0, %v9019
      %v9021 = vpop.f32.mrf.mxu0
      %9022 = vmatprep.mubr.bf16.mxu0 0
      %9023 = vmatmul.mubr.bf16.gmra.mxu0 %v8915
      %v9024 = vpop.f32.mrf.mxu0
      %v9025 = vadd.f32 0.0, %v9024
      %v9026 = vpop.f32.mrf.mxu0
      %v9027 = vpop.f32.mrf.mxu0
      %v9028 = vadd.f32 0.0, %v9027
      %v9029 = vpop.f32.mrf.mxu0
      %9030 = vmatprep.mubr.bf16.mxu0 0
      %9031 = vmatmul.mubr.bf16.gmra.mxu0 %v8918
      %v9032 = vpop.f32.mrf.mxu0
      %v9033 = vadd.f32 0.0, %v9032
      %v9034 = vpop.f32.mrf.mxu0
      %v9035 = vpop.f32.mrf.mxu0
      %v9036 = vadd.f32 0.0, %v9035
      %v9037 = vpop.f32.mrf.mxu0
      %9038 = vmatprep.mubr.bf16.mxu0 0
      %9039 = vmatmul.mubr.bf16.gmra.mxu0 %v8921
      %v9040 = vpop.f32.mrf.mxu0
      %v9041 = vadd.f32 0.0, %v9040
      %v9042 = vpop.f32.mrf.mxu0
      %v9043 = vpop.f32.mrf.mxu0
      %v9044 = vadd.f32 0.0, %v9043
      %v9045 = vpop.f32.mrf.mxu0
      %9046 = vmatprep.mubr.bf16.mxu0 0
      %9047 = vmatmul.mubr.bf16.gmra.mxu0 %v8924
      %v9048 = vpop.f32.mrf.mxu0
      %v9049 = vadd.f32 0.0, %v9048
      %v9050 = vpop.f32.mrf.mxu0
      %v9051 = vpop.f32.mrf.mxu0
      %v9052 = vadd.f32 0.0, %v9051
      %v9053 = vpop.f32.mrf.mxu0
      %9054 = vmatprep.mubr.bf16.mxu0 0
      %9055 = vmatmul.mubr.bf16.gmra.mxu0 %v8927
      %v9056 = vpop.f32.mrf.mxu0
      %v9057 = vadd.f32 0.0, %v9056
      %v9058 = vpop.f32.mrf.mxu0
      %v9059 = vpop.f32.mrf.mxu0
      %v9060 = vadd.f32 0.0, %v9059
      %v9061 = vpop.f32.mrf.mxu0
      %9062 = vmatprep.mubr.bf16.mxu0 0
      %9063 = vmatmul.mubr.bf16.gmra.mxu0 %v8930
      %v9064 = vpop.f32.mrf.mxu0
      %v9065 = vadd.f32 0.0, %v9064
      %v9066 = vpop.f32.mrf.mxu0
      %v9067 = vpop.f32.mrf.mxu0
      %v9068 = vadd.f32 0.0, %v9067
      %v9069 = vpop.f32.mrf.mxu0
      %9070 = vmatprep.mubr.bf16.mxu0 0
      %9071 = vmatmul.mubr.bf16.gmra.mxu0 %v8933
      %v9072 = vpop.f32.mrf.mxu0
      %v9073 = vadd.f32 0.0, %v9072
      %v9074 = vpop.f32.mrf.mxu0
      %v9075 = vpop.f32.mrf.mxu0
      %v9076 = vadd.f32 0.0, %v9075
      %v9077 = vpop.f32.mrf.mxu0
      %9078 = vmatprep.mubr.bf16.mxu0 0
      %9079 = vmatmul.mubr.bf16.gmra.mxu0 %v8936
      %v9080 = vpop.f32.mrf.mxu0
      %v9081 = vadd.f32 0.0, %v9080
      %v9082 = vpop.f32.mrf.mxu0
      %v9083 = vpop.f32.mrf.mxu0
      %v9084 = vadd.f32 0.0, %v9083
      %v9085 = vpop.f32.mrf.mxu0
      %9086 = vmatprep.mubr.bf16.mxu0 0
      %9087 = vmatmul.mubr.bf16.gmra.mxu0 %v8939
      %v9088 = vpop.f32.mrf.mxu0
      %v9089 = vadd.f32 0.0, %v9088
      %v9090 = vpop.f32.mrf.mxu0
      %v9091 = vpop.f32.mrf.mxu0
      %v9092 = vadd.f32 0.0, %v9091
      %v9093 = vpop.f32.mrf.mxu0
      %9094 = vmatprep.mubr.bf16.mxu0 0
      %9095 = vmatmul.mubr.bf16.gmra.mxu0 %v8942
      %v9096 = vpop.f32.mrf.mxu0
      %v9097 = vadd.f32 0.0, %v9096
      %v9098 = vpop.f32.mrf.mxu0
      %v9099 = vpop.f32.mrf.mxu0
      %v9100 = vadd.f32 0.0, %v9099
      %v9101 = vpop.f32.mrf.mxu0
      %9102 = vmatprep.mubr.bf16.mxu0 0
      %9103 = vmatmul.mubr.bf16.gmra.mxu0 %v8945
      %v9104 = vpop.f32.mrf.mxu0
      %v9105 = vadd.f32 0.0, %v9104
      %v9106 = vpop.f32.mrf.mxu0
      %v9107 = vpop.f32.mrf.mxu0
      %v9108 = vadd.f32 0.0, %v9107
      %v9109 = vpop.f32.mrf.mxu0
      %9110 = vdwg.mxu0
      %v9111 = vadd.f32 %v8385, %v8985
      %v9112 = vadd.f32 %v8386, %v8988
      %v9113 = vadd.f32 %v8387, %v8993
      %v9114 = vadd.f32 %v8388, %v8996
      %v9115 = vadd.f32 %v8389, %v9001
      %v9116 = vadd.f32 %v8390, %v9004
      %v9117 = vadd.f32 %v8391, %v9009
      %v9118 = vadd.f32 %v8392, %v9012
      %v9119 = vadd.f32 %v8393, %v9017
      %v9120 = vadd.f32 %v8394, %v9020
      %v9121 = vadd.f32 %v8395, %v9025
      %v9122 = vadd.f32 %v8396, %v9028
      %v9123 = vadd.f32 %v8397, %v9033
      %v9124 = vadd.f32 %v8398, %v9036
      %v9125 = vadd.f32 %v8399, %v9041
      %v9126 = vadd.f32 %v8400, %v9044
      %v9127 = vadd.f32 %v8401, %v9049
      %v9128 = vadd.f32 %v8402, %v9052
      %v9129 = vadd.f32 %v8403, %v9057
      %v9130 = vadd.f32 %v8404, %v9060
      %v9131 = vadd.f32 %v8405, %v9065
      %v9132 = vadd.f32 %v8406, %v9068
      %v9133 = vadd.f32 %v8407, %v9073
      %v9134 = vadd.f32 %v8408, %v9076
      %v9135 = vadd.f32 %v8409, %v9081
      %v9136 = vadd.f32 %v8410, %v9084
      %v9137 = vadd.f32 %v8411, %v9089
      %v9138 = vadd.f32 %v8412, %v9092
      %v9139 = vadd.f32 %v8413, %v9097
      %v9140 = vadd.f32 %v8414, %v9100
      %v9141 = vadd.f32 %v8415, %v9105
      %v9142 = vadd.f32 %v8416, %v9108
      %v9143 = vld [vmem:[%s5987] sm:$0xe]
      %v9144 = vld [vmem:[%s5987 + $0xc] sm:$0xe]
      %v9145 = vld [vmem:[%s5987 + $0x18] sm:$0xe]
      %v9146 = vld [vmem:[%s5987 + $0x24] sm:$0xe]
      %v9147 = vld [vmem:[%s5987 + $0x30] sm:$0xe]
      %v9148 = vld [vmem:[%s5987 + $0x3c] sm:$0xe]
      %v9149 = vld [vmem:[%s5987 + $0x48] sm:$0xe]
      %v9150 = vld [vmem:[%s5987 + $0x54] sm:$0xe]
      %v9151 = vld [vmem:[%s5987 + $0x60] sm:$0xe]
      %v9152 = vld [vmem:[%s5987 + $0x6c] sm:$0xe]
      %v9153 = vld [vmem:[%s5987 + $0x78] sm:$0xe]
      %v9154 = vld [vmem:[%s5987 + $0x84] sm:$0xe]
      %v9155 = vld [vmem:[%s5987 + $0x90] sm:$0xe]
      %v9156 = vld [vmem:[%s5987 + $0x9c] sm:$0xe]
      %v9157 = vld [vmem:[%s5987 + $0xa8] sm:$0xe]
      %v9158 = vld [vmem:[%s5987 + $0xb4] sm:$0xe]
      %v9207 = vrot.slane %v9143, 5
      %v9208 = vrot.slane %v9207, 4
      %v9209 = vrot.slane %v8418, 5
      %v9210 = vsel %vm1955, %v9208, %v9209
      %v9211 = vrot.slane %v9209, 4
      %v9212 = vrot.slane %v8419, 5
      %v9213 = vsel %vm1955, %v9211, %v9212
      %v9214 = vrot.slane %v9144, 5
      %v9215 = vrot.slane %v9214, 4
      %v9216 = vrot.slane %v8421, 5
      %v9217 = vsel %vm1955, %v9215, %v9216
      %v9218 = vrot.slane %v9216, 4
      %v9219 = vrot.slane %v8422, 5
      %v9220 = vsel %vm1955, %v9218, %v9219
      %v9221 = vrot.slane %v9145, 5
      %v9222 = vrot.slane %v9221, 4
      %v9223 = vrot.slane %v8424, 5
      %v9224 = vsel %vm1955, %v9222, %v9223
      %v9225 = vrot.slane %v9223, 4
      %v9226 = vrot.slane %v8425, 5
      %v9227 = vsel %vm1955, %v9225, %v9226
      %v9228 = vrot.slane %v9146, 5
      %v9229 = vrot.slane %v9228, 4
      %v9230 = vrot.slane %v8427, 5
      %v9231 = vsel %vm1955, %v9229, %v9230
      %v9232 = vrot.slane %v9230, 4
      %v9233 = vrot.slane %v8428, 5
      %v9234 = vsel %vm1955, %v9232, %v9233
      %v9235 = vrot.slane %v9147, 5
      %v9236 = vrot.slane %v9235, 4
      %v9237 = vrot.slane %v8430, 5
      %v9238 = vsel %vm1955, %v9236, %v9237
      %v9239 = vrot.slane %v9237, 4
      %v9240 = vrot.slane %v8431, 5
      %v9241 = vsel %vm1955, %v9239, %v9240
      %v9242 = vrot.slane %v9148, 5
      %v9243 = vrot.slane %v9242, 4
      %v9244 = vrot.slane %v8433, 5
      %v9245 = vsel %vm1955, %v9243, %v9244
      %v9246 = vrot.slane %v9244, 4
      %v9247 = vrot.slane %v8434, 5
      %v9248 = vsel %vm1955, %v9246, %v9247
      %v9249 = vrot.slane %v9149, 5
      %v9250 = vrot.slane %v9249, 4
      %v9251 = vrot.slane %v8436, 5
      %v9252 = vsel %vm1955, %v9250, %v9251
      %v9253 = vrot.slane %v9251, 4
      %v9254 = vrot.slane %v8437, 5
      %v9255 = vsel %vm1955, %v9253, %v9254
      %v9256 = vrot.slane %v9150, 5
      %v9257 = vrot.slane %v9256, 4
      %v9258 = vrot.slane %v8439, 5
      %v9259 = vsel %vm1955, %v9257, %v9258
      %v9260 = vrot.slane %v9258, 4
      %v9261 = vrot.slane %v8440, 5
      %v9262 = vsel %vm1955, %v9260, %v9261
      %v9263 = vrot.slane %v9151, 5
      %v9264 = vrot.slane %v9263, 4
      %v9265 = vrot.slane %v8442, 5
      %v9266 = vsel %vm1955, %v9264, %v9265
      %v9267 = vrot.slane %v9265, 4
      %v9268 = vrot.slane %v8443, 5
      %v9269 = vsel %vm1955, %v9267, %v9268
      %v9270 = vrot.slane %v9152, 5
      %v9271 = vrot.slane %v9270, 4
      %v9272 = vrot.slane %v8445, 5
      %v9273 = vsel %vm1955, %v9271, %v9272
      %v9274 = vrot.slane %v9272, 4
      %v9275 = vrot.slane %v8446, 5
      %v9276 = vsel %vm1955, %v9274, %v9275
      %v9277 = vrot.slane %v9153, 5
      %v9278 = vrot.slane %v9277, 4
      %v9279 = vrot.slane %v8448, 5
      %v9280 = vsel %vm1955, %v9278, %v9279
      %v9281 = vrot.slane %v9279, 4
      %v9282 = vrot.slane %v8449, 5
      %v9283 = vsel %vm1955, %v9281, %v9282
      %v9284 = vrot.slane %v9154, 5
      %v9285 = vrot.slane %v9284, 4
      %v9286 = vrot.slane %v8451, 5
      %v9287 = vsel %vm1955, %v9285, %v9286
      %v9288 = vrot.slane %v9286, 4
      %v9289 = vrot.slane %v8452, 5
      %v9290 = vsel %vm1955, %v9288, %v9289
      %v9291 = vrot.slane %v9155, 5
      %v9292 = vrot.slane %v9291, 4
      %v9293 = vrot.slane %v8454, 5
      %v9294 = vsel %vm1955, %v9292, %v9293
      %v9295 = vrot.slane %v9293, 4
      %v9296 = vrot.slane %v8455, 5
      %v9297 = vsel %vm1955, %v9295, %v9296
      %v9298 = vrot.slane %v9156, 5
      %v9299 = vrot.slane %v9298, 4
      %v9300 = vrot.slane %v8457, 5
      %v9301 = vsel %vm1955, %v9299, %v9300
      %v9302 = vrot.slane %v9300, 4
      %v9303 = vrot.slane %v8458, 5
      %v9304 = vsel %vm1955, %v9302, %v9303
      %v9305 = vrot.slane %v9157, 5
      %v9306 = vrot.slane %v9305, 4
      %v9307 = vrot.slane %v8460, 5
      %v9308 = vsel %vm1955, %v9306, %v9307
      %v9309 = vrot.slane %v9307, 4
      %v9310 = vrot.slane %v8461, 5
      %v9311 = vsel %vm1955, %v9309, %v9310
      %v9312 = vrot.slane %v9158, 5
      %v9313 = vrot.slane %v9312, 4
      %v9314 = vrot.slane %v8463, 5
      %v9315 = vsel %vm1955, %v9313, %v9314
      %v9316 = vrot.slane %v9314, 4
      %v9317 = vrot.slane %v8464, 5
      %v9318 = vsel %vm1955, %v9316, %v9317
      %s9319 = scalar_lea.vmem %s5, 20
      %v9320 = vld [vmem:[%s9319] sm:$0xf]
      %v9321 = vunpack.c.l.b16 %v9210
      %v9322 = vunpack.c.l.b16 %v9213
      %v9323 = vunpack.c.l.b16 %v9217
      %v9324 = vunpack.c.l.b16 %v9220
      %v9325 = vunpack.c.l.b16 %v9224
      %v9326 = vunpack.c.l.b16 %v9227
      %v9327 = vunpack.c.l.b16 %v9231
      %v9328 = vunpack.c.l.b16 %v9234
      %v9329 = vunpack.c.l.b16 %v9238
      %v9330 = vunpack.c.l.b16 %v9241
      %v9331 = vunpack.c.l.b16 %v9245
      %v9332 = vunpack.c.l.b16 %v9248
      %v9333 = vunpack.c.l.b16 %v9252
      %v9334 = vunpack.c.l.b16 %v9255
      %v9335 = vunpack.c.l.b16 %v9259
      %v9336 = vunpack.c.l.b16 %v9262
      %v9337 = vunpack.c.l.b16 %v9266
      %v9338 = vunpack.c.l.b16 %v9269
      %v9339 = vunpack.c.l.b16 %v9273
      %v9340 = vunpack.c.l.b16 %v9276
      %v9341 = vunpack.c.l.b16 %v9280
      %v9342 = vunpack.c.l.b16 %v9283
      %v9343 = vunpack.c.l.b16 %v9287
      %v9344 = vunpack.c.l.b16 %v9290
      %v9345 = vunpack.c.l.b16 %v9294
      %v9346 = vunpack.c.l.b16 %v9297
      %v9347 = vunpack.c.l.b16 %v9301
      %v9348 = vunpack.c.l.b16 %v9304
      %v9349 = vunpack.c.l.b16 %v9308
      %v9350 = vunpack.c.l.b16 %v9311
      %v9351 = vunpack.c.l.b16 %v9315
      %v9352 = vunpack.c.l.b16 %v9318
      %v9353 = vpack.c.b16 %v9322, %v9321
      %v9354 = vpack.c.b16 %v9324, %v9323
      %v9355 = vpack.c.b16 %v9326, %v9325
      %v9356 = vpack.c.b16 %v9328, %v9327
      %v9357 = vpack.c.b16 %v9330, %v9329
      %v9358 = vpack.c.b16 %v9332, %v9331
      %v9359 = vpack.c.b16 %v9334, %v9333
      %v9360 = vpack.c.b16 %v9336, %v9335
      %v9361 = vpack.c.b16 %v9338, %v9337
      %v9362 = vpack.c.b16 %v9340, %v9339
      %v9363 = vpack.c.b16 %v9342, %v9341
      %v9364 = vpack.c.b16 %v9344, %v9343
      %v9365 = vpack.c.b16 %v9346, %v9345
      %v9366 = vpack.c.b16 %v9348, %v9347
      %v9367 = vpack.c.b16 %v9350, %v9349
      %v9368 = vpack.c.b16 %v9352, %v9351
      %v9370 = vsel %vm5474, %v9353, 0
      %v9373 = vsel %vm5474, %v9354, 0
      %v9376 = vsel %vm5474, %v9355, 0
      %v9379 = vsel %vm5474, %v9356, 0
      %v9382 = vsel %vm5474, %v9357, 0
      %v9385 = vsel %vm5474, %v9358, 0
      %v9388 = vsel %vm5474, %v9359, 0
      %v9391 = vsel %vm5474, %v9360, 0
      %v9394 = vsel %vm5474, %v9361, 0
      %v9397 = vsel %vm5474, %v9362, 0
      %v9400 = vsel %vm5474, %v9363, 0
      %v9403 = vsel %vm5474, %v9364, 0
      %v9406 = vsel %vm5474, %v9365, 0
      %v9409 = vsel %vm5474, %v9366, 0
      %v9412 = vsel %vm5474, %v9367, 0
      %v9415 = vsel %vm5474, %v9368, 0
      %v9418 = vsel %vm7148, %v9320, 0
      %9420 = vmatprep.subr.bf16.mxu0 0
      %9421 = vmatpush1.bf16.msra.mxu0 0
      %9422 = vmatprep.subr.bf16.mxu0 0
      %9423 = vmatpush1.bf16.msra.mxu0 0
      %9424 = vmatprep.subr.bf16.mxu0 0
      %9425 = vmatpush1.bf16.msra.mxu0 0
      %9426 = vmatprep.subr.bf16.mxu0 0
      %9427 = vmatpush1.bf16.msra.mxu0 0
      %9428 = vmatprep.subr.bf16.mxu0 0
      %9429 = vmatpush1.bf16.msra.mxu0 0
      %9430 = vmatprep.subr.bf16.mxu0 0
      %9431 = vmatpush1.bf16.msra.mxu0 0
      %9432 = vmatprep.subr.bf16.mxu0 0
      %9433 = vmatpush1.bf16.msra.mxu0 0
      %9434 = vmatprep.subr.bf16.mxu0 0
      %9435 = vmatpush1.bf16.msra.mxu0 %v9418
      %9436 = vmatprep.subr.bf16.mxu0 0
      %9437 = vmatpush2.bf16.msra.mxu0 0
      %9438 = vmatprep.subr.bf16.mxu0 0
      %9439 = vmatpush2.bf16.msra.mxu0 0
      %9440 = vmatprep.subr.bf16.mxu0 0
      %9441 = vmatpush2.bf16.msra.mxu0 0
      %9442 = vmatprep.subr.bf16.mxu0 0
      %9443 = vmatpush2.bf16.msra.mxu0 0
      %9444 = vmatprep.subr.bf16.mxu0 0
      %9445 = vmatpush2.bf16.msra.mxu0 0
      %9446 = vmatprep.subr.bf16.mxu0 0
      %9447 = vmatpush2.bf16.msra.mxu0 0
      %9448 = vmatprep.subr.bf16.mxu0 0
      %9449 = vmatpush2.bf16.msra.mxu0 0
      %9450 = vmatprep.subr.bf16.mxu0 0
      %9451 = vmatpush2.bf16.msra.mxu0 0
      %9452 = vmatprep.mubr.bf16.mxu0 0
      %9453 = vmatmul.mubr.bf16.gmra.mxu0 %v9370
      %v9454 = vpop.f32.mrf.mxu0
      %v9455 = vadd.f32 0.0, %v9454
      %v9456 = vpop.f32.mrf.mxu0
      %v9457 = vpop.f32.mrf.mxu0
      %v9458 = vadd.f32 0.0, %v9457
      %v9459 = vpop.f32.mrf.mxu0
      %9460 = vmatprep.mubr.bf16.mxu0 0
      %9461 = vmatmul.mubr.bf16.gmra.mxu0 %v9373
      %v9462 = vpop.f32.mrf.mxu0
      %v9463 = vadd.f32 0.0, %v9462
      %v9464 = vpop.f32.mrf.mxu0
      %v9465 = vpop.f32.mrf.mxu0
      %v9466 = vadd.f32 0.0, %v9465
      %v9467 = vpop.f32.mrf.mxu0
      %9468 = vmatprep.mubr.bf16.mxu0 0
      %9469 = vmatmul.mubr.bf16.gmra.mxu0 %v9376
      %v9470 = vpop.f32.mrf.mxu0
      %v9471 = vadd.f32 0.0, %v9470
      %v9472 = vpop.f32.mrf.mxu0
      %v9473 = vpop.f32.mrf.mxu0
      %v9474 = vadd.f32 0.0, %v9473
      %v9475 = vpop.f32.mrf.mxu0
      %9476 = vmatprep.mubr.bf16.mxu0 0
      %9477 = vmatmul.mubr.bf16.gmra.mxu0 %v9379
      %v9478 = vpop.f32.mrf.mxu0
      %v9479 = vadd.f32 0.0, %v9478
      %v9480 = vpop.f32.mrf.mxu0
      %v9481 = vpop.f32.mrf.mxu0
      %v9482 = vadd.f32 0.0, %v9481
      %v9483 = vpop.f32.mrf.mxu0
      %9484 = vmatprep.mubr.bf16.mxu0 0
      %9485 = vmatmul.mubr.bf16.gmra.mxu0 %v9382
      %v9486 = vpop.f32.mrf.mxu0
      %v9487 = vadd.f32 0.0, %v9486
      %v9488 = vpop.f32.mrf.mxu0
      %v9489 = vpop.f32.mrf.mxu0
      %v9490 = vadd.f32 0.0, %v9489
      %v9491 = vpop.f32.mrf.mxu0
      %9492 = vmatprep.mubr.bf16.mxu0 0
      %9493 = vmatmul.mubr.bf16.gmra.mxu0 %v9385
      %v9494 = vpop.f32.mrf.mxu0
      %v9495 = vadd.f32 0.0, %v9494
      %v9496 = vpop.f32.mrf.mxu0
      %v9497 = vpop.f32.mrf.mxu0
      %v9498 = vadd.f32 0.0, %v9497
      %v9499 = vpop.f32.mrf.mxu0
      %9500 = vmatprep.mubr.bf16.mxu0 0
      %9501 = vmatmul.mubr.bf16.gmra.mxu0 %v9388
      %v9502 = vpop.f32.mrf.mxu0
      %v9503 = vadd.f32 0.0, %v9502
      %v9504 = vpop.f32.mrf.mxu0
      %v9505 = vpop.f32.mrf.mxu0
      %v9506 = vadd.f32 0.0, %v9505
      %v9507 = vpop.f32.mrf.mxu0
      %9508 = vmatprep.mubr.bf16.mxu0 0
      %9509 = vmatmul.mubr.bf16.gmra.mxu0 %v9391
      %v9510 = vpop.f32.mrf.mxu0
      %v9511 = vadd.f32 0.0, %v9510
      %v9512 = vpop.f32.mrf.mxu0
      %v9513 = vpop.f32.mrf.mxu0
      %v9514 = vadd.f32 0.0, %v9513
      %v9515 = vpop.f32.mrf.mxu0
      %9516 = vmatprep.mubr.bf16.mxu0 0
      %9517 = vmatmul.mubr.bf16.gmra.mxu0 %v9394
      %v9518 = vpop.f32.mrf.mxu0
      %v9519 = vadd.f32 0.0, %v9518
      %v9520 = vpop.f32.mrf.mxu0
      %v9521 = vpop.f32.mrf.mxu0
      %v9522 = vadd.f32 0.0, %v9521
      %v9523 = vpop.f32.mrf.mxu0
      %9524 = vmatprep.mubr.bf16.mxu0 0
      %9525 = vmatmul.mubr.bf16.gmra.mxu0 %v9397
      %v9526 = vpop.f32.mrf.mxu0
      %v9527 = vadd.f32 0.0, %v9526
      %v9528 = vpop.f32.mrf.mxu0
      %v9529 = vpop.f32.mrf.mxu0
      %v9530 = vadd.f32 0.0, %v9529
      %v9531 = vpop.f32.mrf.mxu0
      %9532 = vmatprep.mubr.bf16.mxu0 0
      %9533 = vmatmul.mubr.bf16.gmra.mxu0 %v9400
      %v9534 = vpop.f32.mrf.mxu0
      %v9535 = vadd.f32 0.0, %v9534
      %v9536 = vpop.f32.mrf.mxu0
      %v9537 = vpop.f32.mrf.mxu0
      %v9538 = vadd.f32 0.0, %v9537
      %v9539 = vpop.f32.mrf.mxu0
      %9540 = vmatprep.mubr.bf16.mxu0 0
      %9541 = vmatmul.mubr.bf16.gmra.mxu0 %v9403
      %v9542 = vpop.f32.mrf.mxu0
      %v9543 = vadd.f32 0.0, %v9542
      %v9544 = vpop.f32.mrf.mxu0
      %v9545 = vpop.f32.mrf.mxu0
      %v9546 = vadd.f32 0.0, %v9545
      %v9547 = vpop.f32.mrf.mxu0
      %9548 = vmatprep.mubr.bf16.mxu0 0
      %9549 = vmatmul.mubr.bf16.gmra.mxu0 %v9406
      %v9550 = vpop.f32.mrf.mxu0
      %v9551 = vadd.f32 0.0, %v9550
      %v9552 = vpop.f32.mrf.mxu0
      %v9553 = vpop.f32.mrf.mxu0
      %v9554 = vadd.f32 0.0, %v9553
      %v9555 = vpop.f32.mrf.mxu0
      %9556 = vmatprep.mubr.bf16.mxu0 0
      %9557 = vmatmul.mubr.bf16.gmra.mxu0 %v9409
      %v9558 = vpop.f32.mrf.mxu0
      %v9559 = vadd.f32 0.0, %v9558
      %v9560 = vpop.f32.mrf.mxu0
      %v9561 = vpop.f32.mrf.mxu0
      %v9562 = vadd.f32 0.0, %v9561
      %v9563 = vpop.f32.mrf.mxu0
      %9564 = vmatprep.mubr.bf16.mxu0 0
      %9565 = vmatmul.mubr.bf16.gmra.mxu0 %v9412
      %v9566 = vpop.f32.mrf.mxu0
      %v9567 = vadd.f32 0.0, %v9566
      %v9568 = vpop.f32.mrf.mxu0
      %v9569 = vpop.f32.mrf.mxu0
      %v9570 = vadd.f32 0.0, %v9569
      %v9571 = vpop.f32.mrf.mxu0
      %9572 = vmatprep.mubr.bf16.mxu0 0
      %9573 = vmatmul.mubr.bf16.gmra.mxu0 %v9415
      %v9574 = vpop.f32.mrf.mxu0
      %v9575 = vadd.f32 0.0, %v9574
      %v9576 = vpop.f32.mrf.mxu0
      %v9577 = vpop.f32.mrf.mxu0
      %v9578 = vadd.f32 0.0, %v9577
      %v9579 = vpop.f32.mrf.mxu0
      %9580 = vdwg.mxu0
      %v9581 = vadd.f32 %v9111, %v9455
      %v9582 = vadd.f32 %v9112, %v9458
      %v9583 = vadd.f32 %v9113, %v9463
      %v9584 = vadd.f32 %v9114, %v9466
      %v9585 = vadd.f32 %v9115, %v9471
      %v9586 = vadd.f32 %v9116, %v9474
      %v9587 = vadd.f32 %v9117, %v9479
      %v9588 = vadd.f32 %v9118, %v9482
      %v9589 = vadd.f32 %v9119, %v9487
      %v9590 = vadd.f32 %v9120, %v9490
      %v9591 = vadd.f32 %v9121, %v9495
      %v9592 = vadd.f32 %v9122, %v9498
      %v9593 = vadd.f32 %v9123, %v9503
      %v9594 = vadd.f32 %v9124, %v9506
      %v9595 = vadd.f32 %v9125, %v9511
      %v9596 = vadd.f32 %v9126, %v9514
      %v9597 = vadd.f32 %v9127, %v9519
      %v9598 = vadd.f32 %v9128, %v9522
      %v9599 = vadd.f32 %v9129, %v9527
      %v9600 = vadd.f32 %v9130, %v9530
      %v9601 = vadd.f32 %v9131, %v9535
      %v9602 = vadd.f32 %v9132, %v9538
      %v9603 = vadd.f32 %v9133, %v9543
      %v9604 = vadd.f32 %v9134, %v9546
      %v9605 = vadd.f32 %v9135, %v9551
      %v9606 = vadd.f32 %v9136, %v9554
      %v9607 = vadd.f32 %v9137, %v9559
      %v9608 = vadd.f32 %v9138, %v9562
      %v9609 = vadd.f32 %v9139, %v9567
      %v9610 = vadd.f32 %v9140, %v9570
      %v9611 = vadd.f32 %v9141, %v9575
      %v9612 = vadd.f32 %v9142, %v9578
      %s9613 = scalar_lea.vmem [#allocation3], 24
      %v9614 = vld [vmem:[%s9613] sm:$0xf]
      %v9615 = vld [vmem:[%s9613 + $0x4] sm:$0xf]
      %v9616 = vld [vmem:[%s9613 + $0xc] sm:$0xf]
      %v9617 = vld [vmem:[%s9613 + $0x10] sm:$0xf]
      %v9618 = vld [vmem:[%s9613 + $0x18] sm:$0xf]
      %v9619 = vld [vmem:[%s9613 + $0x1c] sm:$0xf]
      %v9620 = vld [vmem:[%s9613 + $0x24] sm:$0xf]
      %v9621 = vld [vmem:[%s9613 + $0x28] sm:$0xf]
      %v9622 = vld [vmem:[%s9613 + $0x30] sm:$0xf]
      %v9623 = vld [vmem:[%s9613 + $0x34] sm:$0xf]
      %v9624 = vld [vmem:[%s9613 + $0x3c] sm:$0xf]
      %v9625 = vld [vmem:[%s9613 + $0x40] sm:$0xf]
      %v9626 = vld [vmem:[%s9613 + $0x48] sm:$0xf]
      %v9627 = vld [vmem:[%s9613 + $0x4c] sm:$0xf]
      %v9628 = vld [vmem:[%s9613 + $0x54] sm:$0xf]
      %v9629 = vld [vmem:[%s9613 + $0x58] sm:$0xf]
      %v9630 = vld [vmem:[%s9613 + $0x60] sm:$0xf]
      %v9631 = vld [vmem:[%s9613 + $0x64] sm:$0xf]
      %v9632 = vld [vmem:[%s9613 + $0x6c] sm:$0xf]
      %v9633 = vld [vmem:[%s9613 + $0x70] sm:$0xf]
      %v9634 = vld [vmem:[%s9613 + $0x78] sm:$0xf]
      %v9635 = vld [vmem:[%s9613 + $0x7c] sm:$0xf]
      %v9636 = vld [vmem:[%s9613 + $0x84] sm:$0xf]
      %v9637 = vld [vmem:[%s9613 + $0x88] sm:$0xf]
      %v9638 = vld [vmem:[%s9613 + $0x90] sm:$0xf]
      %v9639 = vld [vmem:[%s9613 + $0x94] sm:$0xf]
      %v9640 = vld [vmem:[%s9613 + $0x9c] sm:$0xf]
      %v9641 = vld [vmem:[%s9613 + $0xa0] sm:$0xf]
      %v9642 = vld [vmem:[%s9613 + $0xa8] sm:$0xf]
      %v9643 = vld [vmem:[%s9613 + $0xac] sm:$0xf]
      %v9644 = vld [vmem:[%s9613 + $0xb4] sm:$0xf]
      %v9645 = vld [vmem:[%s9613 + $0xb8] sm:$0xf]
      %s9646 = scalar_lea.vmem %s5, 24
      %v9647 = vld [vmem:[%s9646] sm:$0xf]
      %v9680 = vunpack.c.l.b16 %v9614
      %v9681 = vunpack.c.l.b16 %v9615
      %v9682 = vunpack.c.l.b16 %v9616
      %v9683 = vunpack.c.l.b16 %v9617
      %v9684 = vunpack.c.l.b16 %v9618
      %v9685 = vunpack.c.l.b16 %v9619
      %v9686 = vunpack.c.l.b16 %v9620
      %v9687 = vunpack.c.l.b16 %v9621
      %v9688 = vunpack.c.l.b16 %v9622
      %v9689 = vunpack.c.l.b16 %v9623
      %v9690 = vunpack.c.l.b16 %v9624
      %v9691 = vunpack.c.l.b16 %v9625
      %v9692 = vunpack.c.l.b16 %v9626
      %v9693 = vunpack.c.l.b16 %v9627
      %v9694 = vunpack.c.l.b16 %v9628
      %v9695 = vunpack.c.l.b16 %v9629
      %v9696 = vunpack.c.l.b16 %v9630
      %v9697 = vunpack.c.l.b16 %v9631
      %v9698 = vunpack.c.l.b16 %v9632
      %v9699 = vunpack.c.l.b16 %v9633
      %v9700 = vunpack.c.l.b16 %v9634
      %v9701 = vunpack.c.l.b16 %v9635
      %v9702 = vunpack.c.l.b16 %v9636
      %v9703 = vunpack.c.l.b16 %v9637
      %v9704 = vunpack.c.l.b16 %v9638
      %v9705 = vunpack.c.l.b16 %v9639
      %v9706 = vunpack.c.l.b16 %v9640
      %v9707 = vunpack.c.l.b16 %v9641
      %v9708 = vunpack.c.l.b16 %v9642
      %v9709 = vunpack.c.l.b16 %v9643
      %v9710 = vunpack.c.l.b16 %v9644
      %v9711 = vunpack.c.l.b16 %v9645
      %v9712 = vpack.c.b16 %v9681, %v9680
      %v9713 = vpack.c.b16 %v9683, %v9682
      %v9714 = vpack.c.b16 %v9685, %v9684
      %v9715 = vpack.c.b16 %v9687, %v9686
      %v9716 = vpack.c.b16 %v9689, %v9688
      %v9717 = vpack.c.b16 %v9691, %v9690
      %v9718 = vpack.c.b16 %v9693, %v9692
      %v9719 = vpack.c.b16 %v9695, %v9694
      %v9720 = vpack.c.b16 %v9697, %v9696
      %v9721 = vpack.c.b16 %v9699, %v9698
      %v9722 = vpack.c.b16 %v9701, %v9700
      %v9723 = vpack.c.b16 %v9703, %v9702
      %v9724 = vpack.c.b16 %v9705, %v9704
      %v9725 = vpack.c.b16 %v9707, %v9706
      %v9726 = vpack.c.b16 %v9709, %v9708
      %v9727 = vpack.c.b16 %v9711, %v9710
      %v9729 = vsel %vm5474, %v9712, 0
      %v9732 = vsel %vm5474, %v9713, 0
      %v9735 = vsel %vm5474, %v9714, 0
      %v9738 = vsel %vm5474, %v9715, 0
      %v9741 = vsel %vm5474, %v9716, 0
      %v9744 = vsel %vm5474, %v9717, 0
      %v9747 = vsel %vm5474, %v9718, 0
      %v9750 = vsel %vm5474, %v9719, 0
      %v9753 = vsel %vm5474, %v9720, 0
      %v9756 = vsel %vm5474, %v9721, 0
      %v9759 = vsel %vm5474, %v9722, 0
      %v9762 = vsel %vm5474, %v9723, 0
      %v9765 = vsel %vm5474, %v9724, 0
      %v9768 = vsel %vm5474, %v9725, 0
      %v9771 = vsel %vm5474, %v9726, 0
      %v9774 = vsel %vm5474, %v9727, 0
      %v9777 = vsel %vm7148, %v9647, 0
      %9779 = vmatprep.subr.bf16.mxu0 0
      %9780 = vmatpush1.bf16.msra.mxu0 0
      %9781 = vmatprep.subr.bf16.mxu0 0
      %9782 = vmatpush1.bf16.msra.mxu0 0
      %9783 = vmatprep.subr.bf16.mxu0 0
      %9784 = vmatpush1.bf16.msra.mxu0 0
      %9785 = vmatprep.subr.bf16.mxu0 0
      %9786 = vmatpush1.bf16.msra.mxu0 0
      %9787 = vmatprep.subr.bf16.mxu0 0
      %9788 = vmatpush1.bf16.msra.mxu0 0
      %9789 = vmatprep.subr.bf16.mxu0 0
      %9790 = vmatpush1.bf16.msra.mxu0 0
      %9791 = vmatprep.subr.bf16.mxu0 0
      %9792 = vmatpush1.bf16.msra.mxu0 0
      %9793 = vmatprep.subr.bf16.mxu0 0
      %9794 = vmatpush1.bf16.msra.mxu0 %v9777
      %9795 = vmatprep.subr.bf16.mxu0 0
      %9796 = vmatpush2.bf16.msra.mxu0 0
      %9797 = vmatprep.subr.bf16.mxu0 0
      %9798 = vmatpush2.bf16.msra.mxu0 0
      %9799 = vmatprep.subr.bf16.mxu0 0
      %9800 = vmatpush2.bf16.msra.mxu0 0
      %9801 = vmatprep.subr.bf16.mxu0 0
      %9802 = vmatpush2.bf16.msra.mxu0 0
      %9803 = vmatprep.subr.bf16.mxu0 0
      %9804 = vmatpush2.bf16.msra.mxu0 0
      %9805 = vmatprep.subr.bf16.mxu0 0
      %9806 = vmatpush2.bf16.msra.mxu0 0
      %9807 = vmatprep.subr.bf16.mxu0 0
      %9808 = vmatpush2.bf16.msra.mxu0 0
      %9809 = vmatprep.subr.bf16.mxu0 0
      %9810 = vmatpush2.bf16.msra.mxu0 0
      %9811 = vmatprep.mubr.bf16.mxu0 0
      %9812 = vmatmul.mubr.bf16.gmra.mxu0 %v9729
      %v9813 = vpop.f32.mrf.mxu0
      %v9814 = vadd.f32 0.0, %v9813
      %v9815 = vpop.f32.mrf.mxu0
      %v9816 = vpop.f32.mrf.mxu0
      %v9817 = vadd.f32 0.0, %v9816
      %v9818 = vpop.f32.mrf.mxu0
      %9819 = vmatprep.mubr.bf16.mxu0 0
      %9820 = vmatmul.mubr.bf16.gmra.mxu0 %v9732
      %v9821 = vpop.f32.mrf.mxu0
      %v9822 = vadd.f32 0.0, %v9821
      %v9823 = vpop.f32.mrf.mxu0
      %v9824 = vpop.f32.mrf.mxu0
      %v9825 = vadd.f32 0.0, %v9824
      %v9826 = vpop.f32.mrf.mxu0
      %9827 = vmatprep.mubr.bf16.mxu0 0
      %9828 = vmatmul.mubr.bf16.gmra.mxu0 %v9735
      %v9829 = vpop.f32.mrf.mxu0
      %v9830 = vadd.f32 0.0, %v9829
      %v9831 = vpop.f32.mrf.mxu0
      %v9832 = vpop.f32.mrf.mxu0
      %v9833 = vadd.f32 0.0, %v9832
      %v9834 = vpop.f32.mrf.mxu0
      %9835 = vmatprep.mubr.bf16.mxu0 0
      %9836 = vmatmul.mubr.bf16.gmra.mxu0 %v9738
      %v9837 = vpop.f32.mrf.mxu0
      %v9838 = vadd.f32 0.0, %v9837
      %v9839 = vpop.f32.mrf.mxu0
      %v9840 = vpop.f32.mrf.mxu0
      %v9841 = vadd.f32 0.0, %v9840
      %v9842 = vpop.f32.mrf.mxu0
      %9843 = vmatprep.mubr.bf16.mxu0 0
      %9844 = vmatmul.mubr.bf16.gmra.mxu0 %v9741
      %v9845 = vpop.f32.mrf.mxu0
      %v9846 = vadd.f32 0.0, %v9845
      %v9847 = vpop.f32.mrf.mxu0
      %v9848 = vpop.f32.mrf.mxu0
      %v9849 = vadd.f32 0.0, %v9848
      %v9850 = vpop.f32.mrf.mxu0
      %9851 = vmatprep.mubr.bf16.mxu0 0
      %9852 = vmatmul.mubr.bf16.gmra.mxu0 %v9744
      %v9853 = vpop.f32.mrf.mxu0
      %v9854 = vadd.f32 0.0, %v9853
      %v9855 = vpop.f32.mrf.mxu0
      %v9856 = vpop.f32.mrf.mxu0
      %v9857 = vadd.f32 0.0, %v9856
      %v9858 = vpop.f32.mrf.mxu0
      %9859 = vmatprep.mubr.bf16.mxu0 0
      %9860 = vmatmul.mubr.bf16.gmra.mxu0 %v9747
      %v9861 = vpop.f32.mrf.mxu0
      %v9862 = vadd.f32 0.0, %v9861
      %v9863 = vpop.f32.mrf.mxu0
      %v9864 = vpop.f32.mrf.mxu0
      %v9865 = vadd.f32 0.0, %v9864
      %v9866 = vpop.f32.mrf.mxu0
      %9867 = vmatprep.mubr.bf16.mxu0 0
      %9868 = vmatmul.mubr.bf16.gmra.mxu0 %v9750
      %v9869 = vpop.f32.mrf.mxu0
      %v9870 = vadd.f32 0.0, %v9869
      %v9871 = vpop.f32.mrf.mxu0
      %v9872 = vpop.f32.mrf.mxu0
      %v9873 = vadd.f32 0.0, %v9872
      %v9874 = vpop.f32.mrf.mxu0
      %9875 = vmatprep.mubr.bf16.mxu0 0
      %9876 = vmatmul.mubr.bf16.gmra.mxu0 %v9753
      %v9877 = vpop.f32.mrf.mxu0
      %v9878 = vadd.f32 0.0, %v9877
      %v9879 = vpop.f32.mrf.mxu0
      %v9880 = vpop.f32.mrf.mxu0
      %v9881 = vadd.f32 0.0, %v9880
      %v9882 = vpop.f32.mrf.mxu0
      %9883 = vmatprep.mubr.bf16.mxu0 0
      %9884 = vmatmul.mubr.bf16.gmra.mxu0 %v9756
      %v9885 = vpop.f32.mrf.mxu0
      %v9886 = vadd.f32 0.0, %v9885
      %v9887 = vpop.f32.mrf.mxu0
      %v9888 = vpop.f32.mrf.mxu0
      %v9889 = vadd.f32 0.0, %v9888
      %v9890 = vpop.f32.mrf.mxu0
      %9891 = vmatprep.mubr.bf16.mxu0 0
      %9892 = vmatmul.mubr.bf16.gmra.mxu0 %v9759
      %v9893 = vpop.f32.mrf.mxu0
      %v9894 = vadd.f32 0.0, %v9893
      %v9895 = vpop.f32.mrf.mxu0
      %v9896 = vpop.f32.mrf.mxu0
      %v9897 = vadd.f32 0.0, %v9896
      %v9898 = vpop.f32.mrf.mxu0
      %9899 = vmatprep.mubr.bf16.mxu0 0
      %9900 = vmatmul.mubr.bf16.gmra.mxu0 %v9762
      %v9901 = vpop.f32.mrf.mxu0
      %v9902 = vadd.f32 0.0, %v9901
      %v9903 = vpop.f32.mrf.mxu0
      %v9904 = vpop.f32.mrf.mxu0
      %v9905 = vadd.f32 0.0, %v9904
      %v9906 = vpop.f32.mrf.mxu0
      %9907 = vmatprep.mubr.bf16.mxu0 0
      %9908 = vmatmul.mubr.bf16.gmra.mxu0 %v9765
      %v9909 = vpop.f32.mrf.mxu0
      %v9910 = vadd.f32 0.0, %v9909
      %v9911 = vpop.f32.mrf.mxu0
      %v9912 = vpop.f32.mrf.mxu0
      %v9913 = vadd.f32 0.0, %v9912
      %v9914 = vpop.f32.mrf.mxu0
      %9915 = vmatprep.mubr.bf16.mxu0 0
      %9916 = vmatmul.mubr.bf16.gmra.mxu0 %v9768
      %v9917 = vpop.f32.mrf.mxu0
      %v9918 = vadd.f32 0.0, %v9917
      %v9919 = vpop.f32.mrf.mxu0
      %v9920 = vpop.f32.mrf.mxu0
      %v9921 = vadd.f32 0.0, %v9920
      %v9922 = vpop.f32.mrf.mxu0
      %9923 = vmatprep.mubr.bf16.mxu0 0
      %9924 = vmatmul.mubr.bf16.gmra.mxu0 %v9771
      %v9925 = vpop.f32.mrf.mxu0
      %v9926 = vadd.f32 0.0, %v9925
      %v9927 = vpop.f32.mrf.mxu0
      %v9928 = vpop.f32.mrf.mxu0
      %v9929 = vadd.f32 0.0, %v9928
      %v9930 = vpop.f32.mrf.mxu0
      %9931 = vmatprep.mubr.bf16.mxu0 0
      %9932 = vmatmul.mubr.bf16.gmra.mxu0 %v9774
      %v9933 = vpop.f32.mrf.mxu0
      %v9934 = vadd.f32 0.0, %v9933
      %v9935 = vpop.f32.mrf.mxu0
      %v9936 = vpop.f32.mrf.mxu0
      %v9937 = vadd.f32 0.0, %v9936
      %v9938 = vpop.f32.mrf.mxu0
      %9939 = vdwg.mxu0
      %v9940 = vadd.f32 %v9581, %v9814
      %v9941 = vadd.f32 %v9582, %v9817
      %v9942 = vadd.f32 %v9583, %v9822
      %v9943 = vadd.f32 %v9584, %v9825
      %v9944 = vadd.f32 %v9585, %v9830
      %v9945 = vadd.f32 %v9586, %v9833
      %v9946 = vadd.f32 %v9587, %v9838
      %v9947 = vadd.f32 %v9588, %v9841
      %v9948 = vadd.f32 %v9589, %v9846
      %v9949 = vadd.f32 %v9590, %v9849
      %v9950 = vadd.f32 %v9591, %v9854
      %v9951 = vadd.f32 %v9592, %v9857
      %v9952 = vadd.f32 %v9593, %v9862
      %v9953 = vadd.f32 %v9594, %v9865
      %v9954 = vadd.f32 %v9595, %v9870
      %v9955 = vadd.f32 %v9596, %v9873
      %v9956 = vadd.f32 %v9597, %v9878
      %v9957 = vadd.f32 %v9598, %v9881
      %v9958 = vadd.f32 %v9599, %v9886
      %v9959 = vadd.f32 %v9600, %v9889
      %v9960 = vadd.f32 %v9601, %v9894
      %v9961 = vadd.f32 %v9602, %v9897
      %v9962 = vadd.f32 %v9603, %v9902
      %v9963 = vadd.f32 %v9604, %v9905
      %v9964 = vadd.f32 %v9605, %v9910
      %v9965 = vadd.f32 %v9606, %v9913
      %v9966 = vadd.f32 %v9607, %v9918
      %v9967 = vadd.f32 %v9608, %v9921
      %v9968 = vadd.f32 %v9609, %v9926
      %v9969 = vadd.f32 %v9610, %v9929
      %v9970 = vadd.f32 %v9611, %v9934
      %v9971 = vadd.f32 %v9612, %v9937
      %v9972 = vld [vmem:[%s9613] sm:$0xf]
      %v9973 = vld [vmem:[%s9613 + $0x4] sm:$0xf]
      %v9974 = vld [vmem:[%s9613 + $0x8] sm:$0x1]
      %v9975 = vld [vmem:[%s9613 + $0xc] sm:$0xf]
      %v9976 = vld [vmem:[%s9613 + $0x10] sm:$0xf]
      %v9977 = vld [vmem:[%s9613 + $0x14] sm:$0x1]
      %v9978 = vld [vmem:[%s9613 + $0x18] sm:$0xf]
      %v9979 = vld [vmem:[%s9613 + $0x1c] sm:$0xf]
      %v9980 = vld [vmem:[%s9613 + $0x20] sm:$0x1]
      %v9981 = vld [vmem:[%s9613 + $0x24] sm:$0xf]
      %v9982 = vld [vmem:[%s9613 + $0x28] sm:$0xf]
      %v9983 = vld [vmem:[%s9613 + $0x2c] sm:$0x1]
      %v9984 = vld [vmem:[%s9613 + $0x30] sm:$0xf]
      %v9985 = vld [vmem:[%s9613 + $0x34] sm:$0xf]
      %v9986 = vld [vmem:[%s9613 + $0x38] sm:$0x1]
      %v9987 = vld [vmem:[%s9613 + $0x3c] sm:$0xf]
      %v9988 = vld [vmem:[%s9613 + $0x40] sm:$0xf]
      %v9989 = vld [vmem:[%s9613 + $0x44] sm:$0x1]
      %v9990 = vld [vmem:[%s9613 + $0x48] sm:$0xf]
      %v9991 = vld [vmem:[%s9613 + $0x4c] sm:$0xf]
      %v9992 = vld [vmem:[%s9613 + $0x50] sm:$0x1]
      %v9993 = vld [vmem:[%s9613 + $0x54] sm:$0xf]
      %v9994 = vld [vmem:[%s9613 + $0x58] sm:$0xf]
      %v9995 = vld [vmem:[%s9613 + $0x5c] sm:$0x1]
      %v9996 = vld [vmem:[%s9613 + $0x60] sm:$0xf]
      %v9997 = vld [vmem:[%s9613 + $0x64] sm:$0xf]
      %v9998 = vld [vmem:[%s9613 + $0x68] sm:$0x1]
      %v9999 = vld [vmem:[%s9613 + $0x6c] sm:$0xf]
      %v10000 = vld [vmem:[%s9613 + $0x70] sm:$0xf]
      %v10001 = vld [vmem:[%s9613 + $0x74] sm:$0x1]
      %v10002 = vld [vmem:[%s9613 + $0x78] sm:$0xf]
      %v10003 = vld [vmem:[%s9613 + $0x7c] sm:$0xf]
      %v10004 = vld [vmem:[%s9613 + $0x80] sm:$0x1]
      %v10005 = vld [vmem:[%s9613 + $0x84] sm:$0xf]
      %v10006 = vld [vmem:[%s9613 + $0x88] sm:$0xf]
      %v10007 = vld [vmem:[%s9613 + $0x8c] sm:$0x1]
      %v10008 = vld [vmem:[%s9613 + $0x90] sm:$0xf]
      %v10009 = vld [vmem:[%s9613 + $0x94] sm:$0xf]
      %v10010 = vld [vmem:[%s9613 + $0x98] sm:$0x1]
      %v10011 = vld [vmem:[%s9613 + $0x9c] sm:$0xf]
      %v10012 = vld [vmem:[%s9613 + $0xa0] sm:$0xf]
      %v10013 = vld [vmem:[%s9613 + $0xa4] sm:$0x1]
      %v10014 = vld [vmem:[%s9613 + $0xa8] sm:$0xf]
      %v10015 = vld [vmem:[%s9613 + $0xac] sm:$0xf]
      %v10016 = vld [vmem:[%s9613 + $0xb0] sm:$0x1]
      %v10017 = vld [vmem:[%s9613 + $0xb4] sm:$0xf]
      %v10018 = vld [vmem:[%s9613 + $0xb8] sm:$0xf]
      %v10019 = vld [vmem:[%s9613 + $0xbc] sm:$0x1]
      %v10021 = vshrl.u32 %v9972, 16
      %v10023 = vrot.slane %v10021, 4
      %v10024 = vshll.u32 %v9972, 16
      %v10026 = vrot.slane %v10024, 5
      %v10027 = vor.u32 %v10023, %v10026
      %v10028 = vrot.slane %v10027, 4
      %v10030 = vshll.u32 %v9973, 16
      %v10032 = vrot.slane %v10030, 5
      %v10033 = vsel %vm964, %v10028, %v10032
      %v10034 = vshrl.u32 %v9973, 16
      %v10036 = vrot.slane %v10034, 4
      %v10037 = vor.u32 %v10036, %v10032
      %v10038 = vrot.slane %v10037, 4
      %v10040 = vshll.u32 %v9974, 16
      %v10042 = vrot.slane %v10040, 5
      %v10043 = vsel %vm964, %v10038, %v10042
      %v10045 = vshrl.u32 %v9975, 16
      %v10047 = vrot.slane %v10045, 4
      %v10048 = vshll.u32 %v9975, 16
      %v10050 = vrot.slane %v10048, 5
      %v10051 = vor.u32 %v10047, %v10050
      %v10052 = vrot.slane %v10051, 4
      %v10054 = vshll.u32 %v9976, 16
      %v10056 = vrot.slane %v10054, 5
      %v10057 = vsel %vm964, %v10052, %v10056
      %v10058 = vshrl.u32 %v9976, 16
      %v10060 = vrot.slane %v10058, 4
      %v10061 = vor.u32 %v10060, %v10056
      %v10062 = vrot.slane %v10061, 4
      %v10064 = vshll.u32 %v9977, 16
      %v10066 = vrot.slane %v10064, 5
      %v10067 = vsel %vm964, %v10062, %v10066
      %v10069 = vshrl.u32 %v9978, 16
      %v10071 = vrot.slane %v10069, 4
      %v10072 = vshll.u32 %v9978, 16
      %v10074 = vrot.slane %v10072, 5
      %v10075 = vor.u32 %v10071, %v10074
      %v10076 = vrot.slane %v10075, 4
      %v10078 = vshll.u32 %v9979, 16
      %v10080 = vrot.slane %v10078, 5
      %v10081 = vsel %vm964, %v10076, %v10080
      %v10082 = vshrl.u32 %v9979, 16
      %v10084 = vrot.slane %v10082, 4
      %v10085 = vor.u32 %v10084, %v10080
      %v10086 = vrot.slane %v10085, 4
      %v10088 = vshll.u32 %v9980, 16
      %v10090 = vrot.slane %v10088, 5
      %v10091 = vsel %vm964, %v10086, %v10090
      %v10093 = vshrl.u32 %v9981, 16
      %v10095 = vrot.slane %v10093, 4
      %v10096 = vshll.u32 %v9981, 16
      %v10098 = vrot.slane %v10096, 5
      %v10099 = vor.u32 %v10095, %v10098
      %v10100 = vrot.slane %v10099, 4
      %v10102 = vshll.u32 %v9982, 16
      %v10104 = vrot.slane %v10102, 5
      %v10105 = vsel %vm964, %v10100, %v10104
      %v10106 = vshrl.u32 %v9982, 16
      %v10108 = vrot.slane %v10106, 4
      %v10109 = vor.u32 %v10108, %v10104
      %v10110 = vrot.slane %v10109, 4
      %v10112 = vshll.u32 %v9983, 16
      %v10114 = vrot.slane %v10112, 5
      %v10115 = vsel %vm964, %v10110, %v10114
      %v10117 = vshrl.u32 %v9984, 16
      %v10119 = vrot.slane %v10117, 4
      %v10120 = vshll.u32 %v9984, 16
      %v10122 = vrot.slane %v10120, 5
      %v10123 = vor.u32 %v10119, %v10122
      %v10124 = vrot.slane %v10123, 4
      %v10126 = vshll.u32 %v9985, 16
      %v10128 = vrot.slane %v10126, 5
      %v10129 = vsel %vm964, %v10124, %v10128
      %v10130 = vshrl.u32 %v9985, 16
      %v10132 = vrot.slane %v10130, 4
      %v10133 = vor.u32 %v10132, %v10128
      %v10134 = vrot.slane %v10133, 4
      %v10136 = vshll.u32 %v9986, 16
      %v10138 = vrot.slane %v10136, 5
      %v10139 = vsel %vm964, %v10134, %v10138
      %v10141 = vshrl.u32 %v9987, 16
      %v10143 = vrot.slane %v10141, 4
      %v10144 = vshll.u32 %v9987, 16
      %v10146 = vrot.slane %v10144, 5
      %v10147 = vor.u32 %v10143, %v10146
      %v10148 = vrot.slane %v10147, 4
      %v10150 = vshll.u32 %v9988, 16
      %v10152 = vrot.slane %v10150, 5
      %v10153 = vsel %vm964, %v10148, %v10152
      %v10154 = vshrl.u32 %v9988, 16
      %v10156 = vrot.slane %v10154, 4
      %v10157 = vor.u32 %v10156, %v10152
      %v10158 = vrot.slane %v10157, 4
      %v10160 = vshll.u32 %v9989, 16
      %v10162 = vrot.slane %v10160, 5
      %v10163 = vsel %vm964, %v10158, %v10162
      %v10165 = vshrl.u32 %v9990, 16
      %v10167 = vrot.slane %v10165, 4
      %v10168 = vshll.u32 %v9990, 16
      %v10170 = vrot.slane %v10168, 5
      %v10171 = vor.u32 %v10167, %v10170
      %v10172 = vrot.slane %v10171, 4
      %v10174 = vshll.u32 %v9991, 16
      %v10176 = vrot.slane %v10174, 5
      %v10177 = vsel %vm964, %v10172, %v10176
      %v10178 = vshrl.u32 %v9991, 16
      %v10180 = vrot.slane %v10178, 4
      %v10181 = vor.u32 %v10180, %v10176
      %v10182 = vrot.slane %v10181, 4
      %v10184 = vshll.u32 %v9992, 16
      %v10186 = vrot.slane %v10184, 5
      %v10187 = vsel %vm964, %v10182, %v10186
      %v10189 = vshrl.u32 %v9993, 16
      %v10191 = vrot.slane %v10189, 4
      %v10192 = vshll.u32 %v9993, 16
      %v10194 = vrot.slane %v10192, 5
      %v10195 = vor.u32 %v10191, %v10194
      %v10196 = vrot.slane %v10195, 4
      %v10198 = vshll.u32 %v9994, 16
      %v10200 = vrot.slane %v10198, 5
      %v10201 = vsel %vm964, %v10196, %v10200
      %v10202 = vshrl.u32 %v9994, 16
      %v10204 = vrot.slane %v10202, 4
      %v10205 = vor.u32 %v10204, %v10200
      %v10206 = vrot.slane %v10205, 4
      %v10208 = vshll.u32 %v9995, 16
      %v10210 = vrot.slane %v10208, 5
      %v10211 = vsel %vm964, %v10206, %v10210
      %v10213 = vshrl.u32 %v9996, 16
      %v10215 = vrot.slane %v10213, 4
      %v10216 = vshll.u32 %v9996, 16
      %v10218 = vrot.slane %v10216, 5
      %v10219 = vor.u32 %v10215, %v10218
      %v10220 = vrot.slane %v10219, 4
      %v10222 = vshll.u32 %v9997, 16
      %v10224 = vrot.slane %v10222, 5
      %v10225 = vsel %vm964, %v10220, %v10224
      %v10226 = vshrl.u32 %v9997, 16
      %v10228 = vrot.slane %v10226, 4
      %v10229 = vor.u32 %v10228, %v10224
      %v10230 = vrot.slane %v10229, 4
      %v10232 = vshll.u32 %v9998, 16
      %v10234 = vrot.slane %v10232, 5
      %v10235 = vsel %vm964, %v10230, %v10234
      %v10237 = vshrl.u32 %v9999, 16
      %v10239 = vrot.slane %v10237, 4
      %v10240 = vshll.u32 %v9999, 16
      %v10242 = vrot.slane %v10240, 5
      %v10243 = vor.u32 %v10239, %v10242
      %v10244 = vrot.slane %v10243, 4
      %v10246 = vshll.u32 %v10000, 16
      %v10248 = vrot.slane %v10246, 5
      %v10249 = vsel %vm964, %v10244, %v10248
      %v10250 = vshrl.u32 %v10000, 16
      %v10252 = vrot.slane %v10250, 4
      %v10253 = vor.u32 %v10252, %v10248
      %v10254 = vrot.slane %v10253, 4
      %v10256 = vshll.u32 %v10001, 16
      %v10258 = vrot.slane %v10256, 5
      %v10259 = vsel %vm964, %v10254, %v10258
      %v10261 = vshrl.u32 %v10002, 16
      %v10263 = vrot.slane %v10261, 4
      %v10264 = vshll.u32 %v10002, 16
      %v10266 = vrot.slane %v10264, 5
      %v10267 = vor.u32 %v10263, %v10266
      %v10268 = vrot.slane %v10267, 4
      %v10270 = vshll.u32 %v10003, 16
      %v10272 = vrot.slane %v10270, 5
      %v10273 = vsel %vm964, %v10268, %v10272
      %v10274 = vshrl.u32 %v10003, 16
      %v10276 = vrot.slane %v10274, 4
      %v10277 = vor.u32 %v10276, %v10272
      %v10278 = vrot.slane %v10277, 4
      %v10280 = vshll.u32 %v10004, 16
      %v10282 = vrot.slane %v10280, 5
      %v10283 = vsel %vm964, %v10278, %v10282
      %v10285 = vshrl.u32 %v10005, 16
      %v10287 = vrot.slane %v10285, 4
      %v10288 = vshll.u32 %v10005, 16
      %v10290 = vrot.slane %v10288, 5
      %v10291 = vor.u32 %v10287, %v10290
      %v10292 = vrot.slane %v10291, 4
      %v10294 = vshll.u32 %v10006, 16
      %v10296 = vrot.slane %v10294, 5
      %v10297 = vsel %vm964, %v10292, %v10296
      %v10298 = vshrl.u32 %v10006, 16
      %v10300 = vrot.slane %v10298, 4
      %v10301 = vor.u32 %v10300, %v10296
      %v10302 = vrot.slane %v10301, 4
      %v10304 = vshll.u32 %v10007, 16
      %v10306 = vrot.slane %v10304, 5
      %v10307 = vsel %vm964, %v10302, %v10306
      %v10309 = vshrl.u32 %v10008, 16
      %v10311 = vrot.slane %v10309, 4
      %v10312 = vshll.u32 %v10008, 16
      %v10314 = vrot.slane %v10312, 5
      %v10315 = vor.u32 %v10311, %v10314
      %v10316 = vrot.slane %v10315, 4
      %v10318 = vshll.u32 %v10009, 16
      %v10320 = vrot.slane %v10318, 5
      %v10321 = vsel %vm964, %v10316, %v10320
      %v10322 = vshrl.u32 %v10009, 16
      %v10324 = vrot.slane %v10322, 4
      %v10325 = vor.u32 %v10324, %v10320
      %v10326 = vrot.slane %v10325, 4
      %v10328 = vshll.u32 %v10010, 16
      %v10330 = vrot.slane %v10328, 5
      %v10331 = vsel %vm964, %v10326, %v10330
      %v10333 = vshrl.u32 %v10011, 16
      %v10335 = vrot.slane %v10333, 4
      %v10336 = vshll.u32 %v10011, 16
      %v10338 = vrot.slane %v10336, 5
      %v10339 = vor.u32 %v10335, %v10338
      %v10340 = vrot.slane %v10339, 4
      %v10342 = vshll.u32 %v10012, 16
      %v10344 = vrot.slane %v10342, 5
      %v10345 = vsel %vm964, %v10340, %v10344
      %v10346 = vshrl.u32 %v10012, 16
      %v10348 = vrot.slane %v10346, 4
      %v10349 = vor.u32 %v10348, %v10344
      %v10350 = vrot.slane %v10349, 4
      %v10352 = vshll.u32 %v10013, 16
      %v10354 = vrot.slane %v10352, 5
      %v10355 = vsel %vm964, %v10350, %v10354
      %v10357 = vshrl.u32 %v10014, 16
      %v10359 = vrot.slane %v10357, 4
      %v10360 = vshll.u32 %v10014, 16
      %v10362 = vrot.slane %v10360, 5
      %v10363 = vor.u32 %v10359, %v10362
      %v10364 = vrot.slane %v10363, 4
      %v10366 = vshll.u32 %v10015, 16
      %v10368 = vrot.slane %v10366, 5
      %v10369 = vsel %vm964, %v10364, %v10368
      %v10370 = vshrl.u32 %v10015, 16
      %v10372 = vrot.slane %v10370, 4
      %v10373 = vor.u32 %v10372, %v10368
      %v10374 = vrot.slane %v10373, 4
      %v10376 = vshll.u32 %v10016, 16
      %v10378 = vrot.slane %v10376, 5
      %v10379 = vsel %vm964, %v10374, %v10378
      %v10381 = vshrl.u32 %v10017, 16
      %v10383 = vrot.slane %v10381, 4
      %v10384 = vshll.u32 %v10017, 16
      %v10386 = vrot.slane %v10384, 5
      %v10387 = vor.u32 %v10383, %v10386
      %v10388 = vrot.slane %v10387, 4
      %v10390 = vshll.u32 %v10018, 16
      %v10392 = vrot.slane %v10390, 5
      %v10393 = vsel %vm964, %v10388, %v10392
      %v10394 = vshrl.u32 %v10018, 16
      %v10396 = vrot.slane %v10394, 4
      %v10397 = vor.u32 %v10396, %v10392
      %v10398 = vrot.slane %v10397, 4
      %v10400 = vshll.u32 %v10019, 16
      %v10402 = vrot.slane %v10400, 5
      %v10403 = vsel %vm964, %v10398, %v10402
      %s10404 = scalar_lea.vmem %s5, 28
      %v10405 = vld [vmem:[%s10404] sm:$0xf]
      %v10406 = vunpack.c.l.b16 %v10033
      %v10407 = vunpack.c.l.b16 %v10043
      %v10408 = vunpack.c.l.b16 %v10057
      %v10409 = vunpack.c.l.b16 %v10067
      %v10410 = vunpack.c.l.b16 %v10081
      %v10411 = vunpack.c.l.b16 %v10091
      %v10412 = vunpack.c.l.b16 %v10105
      %v10413 = vunpack.c.l.b16 %v10115
      %v10414 = vunpack.c.l.b16 %v10129
      %v10415 = vunpack.c.l.b16 %v10139
      %v10416 = vunpack.c.l.b16 %v10153
      %v10417 = vunpack.c.l.b16 %v10163
      %v10418 = vunpack.c.l.b16 %v10177
      %v10419 = vunpack.c.l.b16 %v10187
      %v10420 = vunpack.c.l.b16 %v10201
      %v10421 = vunpack.c.l.b16 %v10211
      %v10422 = vunpack.c.l.b16 %v10225
      %v10423 = vunpack.c.l.b16 %v10235
      %v10424 = vunpack.c.l.b16 %v10249
      %v10425 = vunpack.c.l.b16 %v10259
      %v10426 = vunpack.c.l.b16 %v10273
      %v10427 = vunpack.c.l.b16 %v10283
      %v10428 = vunpack.c.l.b16 %v10297
      %v10429 = vunpack.c.l.b16 %v10307
      %v10430 = vunpack.c.l.b16 %v10321
      %v10431 = vunpack.c.l.b16 %v10331
      %v10432 = vunpack.c.l.b16 %v10345
      %v10433 = vunpack.c.l.b16 %v10355
      %v10434 = vunpack.c.l.b16 %v10369
      %v10435 = vunpack.c.l.b16 %v10379
      %v10436 = vunpack.c.l.b16 %v10393
      %v10437 = vunpack.c.l.b16 %v10403
      %v10438 = vpack.c.b16 %v10407, %v10406
      %v10439 = vpack.c.b16 %v10409, %v10408
      %v10440 = vpack.c.b16 %v10411, %v10410
      %v10441 = vpack.c.b16 %v10413, %v10412
      %v10442 = vpack.c.b16 %v10415, %v10414
      %v10443 = vpack.c.b16 %v10417, %v10416
      %v10444 = vpack.c.b16 %v10419, %v10418
      %v10445 = vpack.c.b16 %v10421, %v10420
      %v10446 = vpack.c.b16 %v10423, %v10422
      %v10447 = vpack.c.b16 %v10425, %v10424
      %v10448 = vpack.c.b16 %v10427, %v10426
      %v10449 = vpack.c.b16 %v10429, %v10428
      %v10450 = vpack.c.b16 %v10431, %v10430
      %v10451 = vpack.c.b16 %v10433, %v10432
      %v10452 = vpack.c.b16 %v10435, %v10434
      %v10453 = vpack.c.b16 %v10437, %v10436
      %v10455 = vsel %vm5474, %v10438, 0
      %v10458 = vsel %vm5474, %v10439, 0
      %v10461 = vsel %vm5474, %v10440, 0
      %v10464 = vsel %vm5474, %v10441, 0
      %v10467 = vsel %vm5474, %v10442, 0
      %v10470 = vsel %vm5474, %v10443, 0
      %v10473 = vsel %vm5474, %v10444, 0
      %v10476 = vsel %vm5474, %v10445, 0
      %v10479 = vsel %vm5474, %v10446, 0
      %v10482 = vsel %vm5474, %v10447, 0
      %v10485 = vsel %vm5474, %v10448, 0
      %v10488 = vsel %vm5474, %v10449, 0
      %v10491 = vsel %vm5474, %v10450, 0
      %v10494 = vsel %vm5474, %v10451, 0
      %v10497 = vsel %vm5474, %v10452, 0
      %v10500 = vsel %vm5474, %v10453, 0
      %v10503 = vsel %vm7148, %v10405, 0
      %10505 = vmatprep.subr.bf16.mxu0 0
      %10506 = vmatpush1.bf16.msra.mxu0 0
      %10507 = vmatprep.subr.bf16.mxu0 0
      %10508 = vmatpush1.bf16.msra.mxu0 0
      %10509 = vmatprep.subr.bf16.mxu0 0
      %10510 = vmatpush1.bf16.msra.mxu0 0
      %10511 = vmatprep.subr.bf16.mxu0 0
      %10512 = vmatpush1.bf16.msra.mxu0 0
      %10513 = vmatprep.subr.bf16.mxu0 0
      %10514 = vmatpush1.bf16.msra.mxu0 0
      %10515 = vmatprep.subr.bf16.mxu0 0
      %10516 = vmatpush1.bf16.msra.mxu0 0
      %10517 = vmatprep.subr.bf16.mxu0 0
      %10518 = vmatpush1.bf16.msra.mxu0 0
      %10519 = vmatprep.subr.bf16.mxu0 0
      %10520 = vmatpush1.bf16.msra.mxu0 %v10503
      %10521 = vmatprep.subr.bf16.mxu0 0
      %10522 = vmatpush2.bf16.msra.mxu0 0
      %10523 = vmatprep.subr.bf16.mxu0 0
      %10524 = vmatpush2.bf16.msra.mxu0 0
      %10525 = vmatprep.subr.bf16.mxu0 0
      %10526 = vmatpush2.bf16.msra.mxu0 0
      %10527 = vmatprep.subr.bf16.mxu0 0
      %10528 = vmatpush2.bf16.msra.mxu0 0
      %10529 = vmatprep.subr.bf16.mxu0 0
      %10530 = vmatpush2.bf16.msra.mxu0 0
      %10531 = vmatprep.subr.bf16.mxu0 0
      %10532 = vmatpush2.bf16.msra.mxu0 0
      %10533 = vmatprep.subr.bf16.mxu0 0
      %10534 = vmatpush2.bf16.msra.mxu0 0
      %10535 = vmatprep.subr.bf16.mxu0 0
      %10536 = vmatpush2.bf16.msra.mxu0 0
      %10537 = vmatprep.mubr.bf16.mxu0 0
      %10538 = vmatmul.mubr.bf16.gmra.mxu0 %v10455
      %v10539 = vpop.f32.mrf.mxu0
      %v10540 = vadd.f32 0.0, %v10539
      %v10541 = vpop.f32.mrf.mxu0
      %v10542 = vpop.f32.mrf.mxu0
      %v10543 = vadd.f32 0.0, %v10542
      %v10544 = vpop.f32.mrf.mxu0
      %10545 = vmatprep.mubr.bf16.mxu0 0
      %10546 = vmatmul.mubr.bf16.gmra.mxu0 %v10458
      %v10547 = vpop.f32.mrf.mxu0
      %v10548 = vadd.f32 0.0, %v10547
      %v10549 = vpop.f32.mrf.mxu0
      %v10550 = vpop.f32.mrf.mxu0
      %v10551 = vadd.f32 0.0, %v10550
      %v10552 = vpop.f32.mrf.mxu0
      %10553 = vmatprep.mubr.bf16.mxu0 0
      %10554 = vmatmul.mubr.bf16.gmra.mxu0 %v10461
      %v10555 = vpop.f32.mrf.mxu0
      %v10556 = vadd.f32 0.0, %v10555
      %v10557 = vpop.f32.mrf.mxu0
      %v10558 = vpop.f32.mrf.mxu0
      %v10559 = vadd.f32 0.0, %v10558
      %v10560 = vpop.f32.mrf.mxu0
      %10561 = vmatprep.mubr.bf16.mxu0 0
      %10562 = vmatmul.mubr.bf16.gmra.mxu0 %v10464
      %v10563 = vpop.f32.mrf.mxu0
      %v10564 = vadd.f32 0.0, %v10563
      %v10565 = vpop.f32.mrf.mxu0
      %v10566 = vpop.f32.mrf.mxu0
      %v10567 = vadd.f32 0.0, %v10566
      %v10568 = vpop.f32.mrf.mxu0
      %10569 = vmatprep.mubr.bf16.mxu0 0
      %10570 = vmatmul.mubr.bf16.gmra.mxu0 %v10467
      %v10571 = vpop.f32.mrf.mxu0
      %v10572 = vadd.f32 0.0, %v10571
      %v10573 = vpop.f32.mrf.mxu0
      %v10574 = vpop.f32.mrf.mxu0
      %v10575 = vadd.f32 0.0, %v10574
      %v10576 = vpop.f32.mrf.mxu0
      %10577 = vmatprep.mubr.bf16.mxu0 0
      %10578 = vmatmul.mubr.bf16.gmra.mxu0 %v10470
      %v10579 = vpop.f32.mrf.mxu0
      %v10580 = vadd.f32 0.0, %v10579
      %v10581 = vpop.f32.mrf.mxu0
      %v10582 = vpop.f32.mrf.mxu0
      %v10583 = vadd.f32 0.0, %v10582
      %v10584 = vpop.f32.mrf.mxu0
      %10585 = vmatprep.mubr.bf16.mxu0 0
      %10586 = vmatmul.mubr.bf16.gmra.mxu0 %v10473
      %v10587 = vpop.f32.mrf.mxu0
      %v10588 = vadd.f32 0.0, %v10587
      %v10589 = vpop.f32.mrf.mxu0
      %v10590 = vpop.f32.mrf.mxu0
      %v10591 = vadd.f32 0.0, %v10590
      %v10592 = vpop.f32.mrf.mxu0
      %10593 = vmatprep.mubr.bf16.mxu0 0
      %10594 = vmatmul.mubr.bf16.gmra.mxu0 %v10476
      %v10595 = vpop.f32.mrf.mxu0
      %v10596 = vadd.f32 0.0, %v10595
      %v10597 = vpop.f32.mrf.mxu0
      %v10598 = vpop.f32.mrf.mxu0
      %v10599 = vadd.f32 0.0, %v10598
      %v10600 = vpop.f32.mrf.mxu0
      %10601 = vmatprep.mubr.bf16.mxu0 0
      %10602 = vmatmul.mubr.bf16.gmra.mxu0 %v10479
      %v10603 = vpop.f32.mrf.mxu0
      %v10604 = vadd.f32 0.0, %v10603
      %v10605 = vpop.f32.mrf.mxu0
      %v10606 = vpop.f32.mrf.mxu0
      %v10607 = vadd.f32 0.0, %v10606
      %v10608 = vpop.f32.mrf.mxu0
      %10609 = vmatprep.mubr.bf16.mxu0 0
      %10610 = vmatmul.mubr.bf16.gmra.mxu0 %v10482
      %v10611 = vpop.f32.mrf.mxu0
      %v10612 = vadd.f32 0.0, %v10611
      %v10613 = vpop.f32.mrf.mxu0
      %v10614 = vpop.f32.mrf.mxu0
      %v10615 = vadd.f32 0.0, %v10614
      %v10616 = vpop.f32.mrf.mxu0
      %10617 = vmatprep.mubr.bf16.mxu0 0
      %10618 = vmatmul.mubr.bf16.gmra.mxu0 %v10485
      %v10619 = vpop.f32.mrf.mxu0
      %v10620 = vadd.f32 0.0, %v10619
      %v10621 = vpop.f32.mrf.mxu0
      %v10622 = vpop.f32.mrf.mxu0
      %v10623 = vadd.f32 0.0, %v10622
      %v10624 = vpop.f32.mrf.mxu0
      %10625 = vmatprep.mubr.bf16.mxu0 0
      %10626 = vmatmul.mubr.bf16.gmra.mxu0 %v10488
      %v10627 = vpop.f32.mrf.mxu0
      %v10628 = vadd.f32 0.0, %v10627
      %v10629 = vpop.f32.mrf.mxu0
      %v10630 = vpop.f32.mrf.mxu0
      %v10631 = vadd.f32 0.0, %v10630
      %v10632 = vpop.f32.mrf.mxu0
      %10633 = vmatprep.mubr.bf16.mxu0 0
      %10634 = vmatmul.mubr.bf16.gmra.mxu0 %v10491
      %v10635 = vpop.f32.mrf.mxu0
      %v10636 = vadd.f32 0.0, %v10635
      %v10637 = vpop.f32.mrf.mxu0
      %v10638 = vpop.f32.mrf.mxu0
      %v10639 = vadd.f32 0.0, %v10638
      %v10640 = vpop.f32.mrf.mxu0
      %10641 = vmatprep.mubr.bf16.mxu0 0
      %10642 = vmatmul.mubr.bf16.gmra.mxu0 %v10494
      %v10643 = vpop.f32.mrf.mxu0
      %v10644 = vadd.f32 0.0, %v10643
      %v10645 = vpop.f32.mrf.mxu0
      %v10646 = vpop.f32.mrf.mxu0
      %v10647 = vadd.f32 0.0, %v10646
      %v10648 = vpop.f32.mrf.mxu0
      %10649 = vmatprep.mubr.bf16.mxu0 0
      %10650 = vmatmul.mubr.bf16.gmra.mxu0 %v10497
      %v10651 = vpop.f32.mrf.mxu0
      %v10652 = vadd.f32 0.0, %v10651
      %v10653 = vpop.f32.mrf.mxu0
      %v10654 = vpop.f32.mrf.mxu0
      %v10655 = vadd.f32 0.0, %v10654
      %v10656 = vpop.f32.mrf.mxu0
      %10657 = vmatprep.mubr.bf16.mxu0 0
      %10658 = vmatmul.mubr.bf16.gmra.mxu0 %v10500
      %v10659 = vpop.f32.mrf.mxu0
      %v10660 = vadd.f32 0.0, %v10659
      %v10661 = vpop.f32.mrf.mxu0
      %v10662 = vpop.f32.mrf.mxu0
      %v10663 = vadd.f32 0.0, %v10662
      %v10664 = vpop.f32.mrf.mxu0
      %10665 = vdwg.mxu0
      %v10666 = vadd.f32 %v9940, %v10540
      %v10667 = vadd.f32 %v9941, %v10543
      %v10668 = vadd.f32 %v9942, %v10548
      %v10669 = vadd.f32 %v9943, %v10551
      %v10670 = vadd.f32 %v9944, %v10556
      %v10671 = vadd.f32 %v9945, %v10559
      %v10672 = vadd.f32 %v9946, %v10564
      %v10673 = vadd.f32 %v9947, %v10567
      %v10674 = vadd.f32 %v9948, %v10572
      %v10675 = vadd.f32 %v9949, %v10575
      %v10676 = vadd.f32 %v9950, %v10580
      %v10677 = vadd.f32 %v9951, %v10583
      %v10678 = vadd.f32 %v9952, %v10588
      %v10679 = vadd.f32 %v9953, %v10591
      %v10680 = vadd.f32 %v9954, %v10596
      %v10681 = vadd.f32 %v9955, %v10599
      %v10682 = vadd.f32 %v9956, %v10604
      %v10683 = vadd.f32 %v9957, %v10607
      %v10684 = vadd.f32 %v9958, %v10612
      %v10685 = vadd.f32 %v9959, %v10615
      %v10686 = vadd.f32 %v9960, %v10620
      %v10687 = vadd.f32 %v9961, %v10623
      %v10688 = vadd.f32 %v9962, %v10628
      %v10689 = vadd.f32 %v9963, %v10631
      %v10690 = vadd.f32 %v9964, %v10636
      %v10691 = vadd.f32 %v9965, %v10639
      %v10692 = vadd.f32 %v9966, %v10644
      %v10693 = vadd.f32 %v9967, %v10647
      %v10694 = vadd.f32 %v9968, %v10652
      %v10695 = vadd.f32 %v9969, %v10655
      %v10696 = vadd.f32 %v9970, %v10660
      %v10697 = vadd.f32 %v9971, %v10663
      %v10698 = vld [vmem:[%s9613] sm:$0xe]
      %v10699 = vld [vmem:[%s9613 + $0xc] sm:$0xe]
      %v10700 = vld [vmem:[%s9613 + $0x18] sm:$0xe]
      %v10701 = vld [vmem:[%s9613 + $0x24] sm:$0xe]
      %v10702 = vld [vmem:[%s9613 + $0x30] sm:$0xe]
      %v10703 = vld [vmem:[%s9613 + $0x3c] sm:$0xe]
      %v10704 = vld [vmem:[%s9613 + $0x48] sm:$0xe]
      %v10705 = vld [vmem:[%s9613 + $0x54] sm:$0xe]
      %v10706 = vld [vmem:[%s9613 + $0x60] sm:$0xe]
      %v10707 = vld [vmem:[%s9613 + $0x6c] sm:$0xe]
      %v10708 = vld [vmem:[%s9613 + $0x78] sm:$0xe]
      %v10709 = vld [vmem:[%s9613 + $0x84] sm:$0xe]
      %v10710 = vld [vmem:[%s9613 + $0x90] sm:$0xe]
      %v10711 = vld [vmem:[%s9613 + $0x9c] sm:$0xe]
      %v10712 = vld [vmem:[%s9613 + $0xa8] sm:$0xe]
      %v10713 = vld [vmem:[%s9613 + $0xb4] sm:$0xe]
      %v10762 = vrot.slane %v10698, 5
      %v10763 = vrot.slane %v10762, 4
      %v10764 = vrot.slane %v9973, 5
      %v10765 = vsel %vm1955, %v10763, %v10764
      %v10766 = vrot.slane %v10764, 4
      %v10767 = vrot.slane %v9974, 5
      %v10768 = vsel %vm1955, %v10766, %v10767
      %v10769 = vrot.slane %v10699, 5
      %v10770 = vrot.slane %v10769, 4
      %v10771 = vrot.slane %v9976, 5
      %v10772 = vsel %vm1955, %v10770, %v10771
      %v10773 = vrot.slane %v10771, 4
      %v10774 = vrot.slane %v9977, 5
      %v10775 = vsel %vm1955, %v10773, %v10774
      %v10776 = vrot.slane %v10700, 5
      %v10777 = vrot.slane %v10776, 4
      %v10778 = vrot.slane %v9979, 5
      %v10779 = vsel %vm1955, %v10777, %v10778
      %v10780 = vrot.slane %v10778, 4
      %v10781 = vrot.slane %v9980, 5
      %v10782 = vsel %vm1955, %v10780, %v10781
      %v10783 = vrot.slane %v10701, 5
      %v10784 = vrot.slane %v10783, 4
      %v10785 = vrot.slane %v9982, 5
      %v10786 = vsel %vm1955, %v10784, %v10785
      %v10787 = vrot.slane %v10785, 4
      %v10788 = vrot.slane %v9983, 5
      %v10789 = vsel %vm1955, %v10787, %v10788
      %v10790 = vrot.slane %v10702, 5
      %v10791 = vrot.slane %v10790, 4
      %v10792 = vrot.slane %v9985, 5
      %v10793 = vsel %vm1955, %v10791, %v10792
      %v10794 = vrot.slane %v10792, 4
      %v10795 = vrot.slane %v9986, 5
      %v10796 = vsel %vm1955, %v10794, %v10795
      %v10797 = vrot.slane %v10703, 5
      %v10798 = vrot.slane %v10797, 4
      %v10799 = vrot.slane %v9988, 5
      %v10800 = vsel %vm1955, %v10798, %v10799
      %v10801 = vrot.slane %v10799, 4
      %v10802 = vrot.slane %v9989, 5
      %v10803 = vsel %vm1955, %v10801, %v10802
      %v10804 = vrot.slane %v10704, 5
      %v10805 = vrot.slane %v10804, 4
      %v10806 = vrot.slane %v9991, 5
      %v10807 = vsel %vm1955, %v10805, %v10806
      %v10808 = vrot.slane %v10806, 4
      %v10809 = vrot.slane %v9992, 5
      %v10810 = vsel %vm1955, %v10808, %v10809
      %v10811 = vrot.slane %v10705, 5
      %v10812 = vrot.slane %v10811, 4
      %v10813 = vrot.slane %v9994, 5
      %v10814 = vsel %vm1955, %v10812, %v10813
      %v10815 = vrot.slane %v10813, 4
      %v10816 = vrot.slane %v9995, 5
      %v10817 = vsel %vm1955, %v10815, %v10816
      %v10818 = vrot.slane %v10706, 5
      %v10819 = vrot.slane %v10818, 4
      %v10820 = vrot.slane %v9997, 5
      %v10821 = vsel %vm1955, %v10819, %v10820
      %v10822 = vrot.slane %v10820, 4
      %v10823 = vrot.slane %v9998, 5
      %v10824 = vsel %vm1955, %v10822, %v10823
      %v10825 = vrot.slane %v10707, 5
      %v10826 = vrot.slane %v10825, 4
      %v10827 = vrot.slane %v10000, 5
      %v10828 = vsel %vm1955, %v10826, %v10827
      %v10829 = vrot.slane %v10827, 4
      %v10830 = vrot.slane %v10001, 5
      %v10831 = vsel %vm1955, %v10829, %v10830
      %v10832 = vrot.slane %v10708, 5
      %v10833 = vrot.slane %v10832, 4
      %v10834 = vrot.slane %v10003, 5
      %v10835 = vsel %vm1955, %v10833, %v10834
      %v10836 = vrot.slane %v10834, 4
      %v10837 = vrot.slane %v10004, 5
      %v10838 = vsel %vm1955, %v10836, %v10837
      %v10839 = vrot.slane %v10709, 5
      %v10840 = vrot.slane %v10839, 4
      %v10841 = vrot.slane %v10006, 5
      %v10842 = vsel %vm1955, %v10840, %v10841
      %v10843 = vrot.slane %v10841, 4
      %v10844 = vrot.slane %v10007, 5
      %v10845 = vsel %vm1955, %v10843, %v10844
      %v10846 = vrot.slane %v10710, 5
      %v10847 = vrot.slane %v10846, 4
      %v10848 = vrot.slane %v10009, 5
      %v10849 = vsel %vm1955, %v10847, %v10848
      %v10850 = vrot.slane %v10848, 4
      %v10851 = vrot.slane %v10010, 5
      %v10852 = vsel %vm1955, %v10850, %v10851
      %v10853 = vrot.slane %v10711, 5
      %v10854 = vrot.slane %v10853, 4
      %v10855 = vrot.slane %v10012, 5
      %v10856 = vsel %vm1955, %v10854, %v10855
      %v10857 = vrot.slane %v10855, 4
      %v10858 = vrot.slane %v10013, 5
      %v10859 = vsel %vm1955, %v10857, %v10858
      %v10860 = vrot.slane %v10712, 5
      %v10861 = vrot.slane %v10860, 4
      %v10862 = vrot.slane %v10015, 5
      %v10863 = vsel %vm1955, %v10861, %v10862
      %v10864 = vrot.slane %v10862, 4
      %v10865 = vrot.slane %v10016, 5
      %v10866 = vsel %vm1955, %v10864, %v10865
      %v10867 = vrot.slane %v10713, 5
      %v10868 = vrot.slane %v10867, 4
      %v10869 = vrot.slane %v10018, 5
      %v10870 = vsel %vm1955, %v10868, %v10869
      %v10871 = vrot.slane %v10869, 4
      %v10872 = vrot.slane %v10019, 5
      %v10873 = vsel %vm1955, %v10871, %v10872
      %s10874 = scalar_lea.vmem %s5, 32
      %v10875 = vld [vmem:[%s10874] sm:$0xf]
      %v10876 = vunpack.c.l.b16 %v10765
      %v10877 = vunpack.c.l.b16 %v10768
      %v10878 = vunpack.c.l.b16 %v10772
      %v10879 = vunpack.c.l.b16 %v10775
      %v10880 = vunpack.c.l.b16 %v10779
      %v10881 = vunpack.c.l.b16 %v10782
      %v10882 = vunpack.c.l.b16 %v10786
      %v10883 = vunpack.c.l.b16 %v10789
      %v10884 = vunpack.c.l.b16 %v10793
      %v10885 = vunpack.c.l.b16 %v10796
      %v10886 = vunpack.c.l.b16 %v10800
      %v10887 = vunpack.c.l.b16 %v10803
      %v10888 = vunpack.c.l.b16 %v10807
      %v10889 = vunpack.c.l.b16 %v10810
      %v10890 = vunpack.c.l.b16 %v10814
      %v10891 = vunpack.c.l.b16 %v10817
      %v10892 = vunpack.c.l.b16 %v10821
      %v10893 = vunpack.c.l.b16 %v10824
      %v10894 = vunpack.c.l.b16 %v10828
      %v10895 = vunpack.c.l.b16 %v10831
      %v10896 = vunpack.c.l.b16 %v10835
      %v10897 = vunpack.c.l.b16 %v10838
      %v10898 = vunpack.c.l.b16 %v10842
      %v10899 = vunpack.c.l.b16 %v10845
      %v10900 = vunpack.c.l.b16 %v10849
      %v10901 = vunpack.c.l.b16 %v10852
      %v10902 = vunpack.c.l.b16 %v10856
      %v10903 = vunpack.c.l.b16 %v10859
      %v10904 = vunpack.c.l.b16 %v10863
      %v10905 = vunpack.c.l.b16 %v10866
      %v10906 = vunpack.c.l.b16 %v10870
      %v10907 = vunpack.c.l.b16 %v10873
      %v10908 = vpack.c.b16 %v10877, %v10876
      %v10909 = vpack.c.b16 %v10879, %v10878
      %v10910 = vpack.c.b16 %v10881, %v10880
      %v10911 = vpack.c.b16 %v10883, %v10882
      %v10912 = vpack.c.b16 %v10885, %v10884
      %v10913 = vpack.c.b16 %v10887, %v10886
      %v10914 = vpack.c.b16 %v10889, %v10888
      %v10915 = vpack.c.b16 %v10891, %v10890
      %v10916 = vpack.c.b16 %v10893, %v10892
      %v10917 = vpack.c.b16 %v10895, %v10894
      %v10918 = vpack.c.b16 %v10897, %v10896
      %v10919 = vpack.c.b16 %v10899, %v10898
      %v10920 = vpack.c.b16 %v10901, %v10900
      %v10921 = vpack.c.b16 %v10903, %v10902
      %v10922 = vpack.c.b16 %v10905, %v10904
      %v10923 = vpack.c.b16 %v10907, %v10906
      %v10925 = vsel %vm5474, %v10908, 0
      %v10928 = vsel %vm5474, %v10909, 0
      %v10931 = vsel %vm5474, %v10910, 0
      %v10934 = vsel %vm5474, %v10911, 0
      %v10937 = vsel %vm5474, %v10912, 0
      %v10940 = vsel %vm5474, %v10913, 0
      %v10943 = vsel %vm5474, %v10914, 0
      %v10946 = vsel %vm5474, %v10915, 0
      %v10949 = vsel %vm5474, %v10916, 0
      %v10952 = vsel %vm5474, %v10917, 0
      %v10955 = vsel %vm5474, %v10918, 0
      %v10958 = vsel %vm5474, %v10919, 0
      %v10961 = vsel %vm5474, %v10920, 0
      %v10964 = vsel %vm5474, %v10921, 0
      %v10967 = vsel %vm5474, %v10922, 0
      %v10970 = vsel %vm5474, %v10923, 0
      %v10973 = vsel %vm7148, %v10875, 0
      %10975 = vmatprep.subr.bf16.mxu0 0
      %10976 = vmatpush1.bf16.msra.mxu0 0
      %10977 = vmatprep.subr.bf16.mxu0 0
      %10978 = vmatpush1.bf16.msra.mxu0 0
      %10979 = vmatprep.subr.bf16.mxu0 0
      %10980 = vmatpush1.bf16.msra.mxu0 0
      %10981 = vmatprep.subr.bf16.mxu0 0
      %10982 = vmatpush1.bf16.msra.mxu0 0
      %10983 = vmatprep.subr.bf16.mxu0 0
      %10984 = vmatpush1.bf16.msra.mxu0 0
      %10985 = vmatprep.subr.bf16.mxu0 0
      %10986 = vmatpush1.bf16.msra.mxu0 0
      %10987 = vmatprep.subr.bf16.mxu0 0
      %10988 = vmatpush1.bf16.msra.mxu0 0
      %10989 = vmatprep.subr.bf16.mxu0 0
      %10990 = vmatpush1.bf16.msra.mxu0 %v10973
      %10991 = vmatprep.subr.bf16.mxu0 0
      %10992 = vmatpush2.bf16.msra.mxu0 0
      %10993 = vmatprep.subr.bf16.mxu0 0
      %10994 = vmatpush2.bf16.msra.mxu0 0
      %10995 = vmatprep.subr.bf16.mxu0 0
      %10996 = vmatpush2.bf16.msra.mxu0 0
      %10997 = vmatprep.subr.bf16.mxu0 0
      %10998 = vmatpush2.bf16.msra.mxu0 0
      %10999 = vmatprep.subr.bf16.mxu0 0
      %11000 = vmatpush2.bf16.msra.mxu0 0
      %11001 = vmatprep.subr.bf16.mxu0 0
      %11002 = vmatpush2.bf16.msra.mxu0 0
      %11003 = vmatprep.subr.bf16.mxu0 0
      %11004 = vmatpush2.bf16.msra.mxu0 0
      %11005 = vmatprep.subr.bf16.mxu0 0
      %11006 = vmatpush2.bf16.msra.mxu0 0
      %11007 = vmatprep.mubr.bf16.mxu0 0
      %11008 = vmatmul.mubr.bf16.gmra.mxu0 %v10925
      %v11009 = vpop.f32.mrf.mxu0
      %v11010 = vadd.f32 0.0, %v11009
      %v11011 = vpop.f32.mrf.mxu0
      %v11012 = vpop.f32.mrf.mxu0
      %v11013 = vadd.f32 0.0, %v11012
      %v11014 = vpop.f32.mrf.mxu0
      %11015 = vmatprep.mubr.bf16.mxu0 0
      %11016 = vmatmul.mubr.bf16.gmra.mxu0 %v10928
      %v11017 = vpop.f32.mrf.mxu0
      %v11018 = vadd.f32 0.0, %v11017
      %v11019 = vpop.f32.mrf.mxu0
      %v11020 = vpop.f32.mrf.mxu0
      %v11021 = vadd.f32 0.0, %v11020
      %v11022 = vpop.f32.mrf.mxu0
      %11023 = vmatprep.mubr.bf16.mxu0 0
      %11024 = vmatmul.mubr.bf16.gmra.mxu0 %v10931
      %v11025 = vpop.f32.mrf.mxu0
      %v11026 = vadd.f32 0.0, %v11025
      %v11027 = vpop.f32.mrf.mxu0
      %v11028 = vpop.f32.mrf.mxu0
      %v11029 = vadd.f32 0.0, %v11028
      %v11030 = vpop.f32.mrf.mxu0
      %11031 = vmatprep.mubr.bf16.mxu0 0
      %11032 = vmatmul.mubr.bf16.gmra.mxu0 %v10934
      %v11033 = vpop.f32.mrf.mxu0
      %v11034 = vadd.f32 0.0, %v11033
      %v11035 = vpop.f32.mrf.mxu0
      %v11036 = vpop.f32.mrf.mxu0
      %v11037 = vadd.f32 0.0, %v11036
      %v11038 = vpop.f32.mrf.mxu0
      %11039 = vmatprep.mubr.bf16.mxu0 0
      %11040 = vmatmul.mubr.bf16.gmra.mxu0 %v10937
      %v11041 = vpop.f32.mrf.mxu0
      %v11042 = vadd.f32 0.0, %v11041
      %v11043 = vpop.f32.mrf.mxu0
      %v11044 = vpop.f32.mrf.mxu0
      %v11045 = vadd.f32 0.0, %v11044
      %v11046 = vpop.f32.mrf.mxu0
      %11047 = vmatprep.mubr.bf16.mxu0 0
      %11048 = vmatmul.mubr.bf16.gmra.mxu0 %v10940
      %v11049 = vpop.f32.mrf.mxu0
      %v11050 = vadd.f32 0.0, %v11049
      %v11051 = vpop.f32.mrf.mxu0
      %v11052 = vpop.f32.mrf.mxu0
      %v11053 = vadd.f32 0.0, %v11052
      %v11054 = vpop.f32.mrf.mxu0
      %11055 = vmatprep.mubr.bf16.mxu0 0
      %11056 = vmatmul.mubr.bf16.gmra.mxu0 %v10943
      %v11057 = vpop.f32.mrf.mxu0
      %v11058 = vadd.f32 0.0, %v11057
      %v11059 = vpop.f32.mrf.mxu0
      %v11060 = vpop.f32.mrf.mxu0
      %v11061 = vadd.f32 0.0, %v11060
      %v11062 = vpop.f32.mrf.mxu0
      %11063 = vmatprep.mubr.bf16.mxu0 0
      %11064 = vmatmul.mubr.bf16.gmra.mxu0 %v10946
      %v11065 = vpop.f32.mrf.mxu0
      %v11066 = vadd.f32 0.0, %v11065
      %v11067 = vpop.f32.mrf.mxu0
      %v11068 = vpop.f32.mrf.mxu0
      %v11069 = vadd.f32 0.0, %v11068
      %v11070 = vpop.f32.mrf.mxu0
      %11071 = vmatprep.mubr.bf16.mxu0 0
      %11072 = vmatmul.mubr.bf16.gmra.mxu0 %v10949
      %v11073 = vpop.f32.mrf.mxu0
      %v11074 = vadd.f32 0.0, %v11073
      %v11075 = vpop.f32.mrf.mxu0
      %v11076 = vpop.f32.mrf.mxu0
      %v11077 = vadd.f32 0.0, %v11076
      %v11078 = vpop.f32.mrf.mxu0
      %11079 = vmatprep.mubr.bf16.mxu0 0
      %11080 = vmatmul.mubr.bf16.gmra.mxu0 %v10952
      %v11081 = vpop.f32.mrf.mxu0
      %v11082 = vadd.f32 0.0, %v11081
      %v11083 = vpop.f32.mrf.mxu0
      %v11084 = vpop.f32.mrf.mxu0
      %v11085 = vadd.f32 0.0, %v11084
      %v11086 = vpop.f32.mrf.mxu0
      %11087 = vmatprep.mubr.bf16.mxu0 0
      %11088 = vmatmul.mubr.bf16.gmra.mxu0 %v10955
      %v11089 = vpop.f32.mrf.mxu0
      %v11090 = vadd.f32 0.0, %v11089
      %v11091 = vpop.f32.mrf.mxu0
      %v11092 = vpop.f32.mrf.mxu0
      %v11093 = vadd.f32 0.0, %v11092
      %v11094 = vpop.f32.mrf.mxu0
      %11095 = vmatprep.mubr.bf16.mxu0 0
      %11096 = vmatmul.mubr.bf16.gmra.mxu0 %v10958
      %v11097 = vpop.f32.mrf.mxu0
      %v11098 = vadd.f32 0.0, %v11097
      %v11099 = vpop.f32.mrf.mxu0
      %v11100 = vpop.f32.mrf.mxu0
      %v11101 = vadd.f32 0.0, %v11100
      %v11102 = vpop.f32.mrf.mxu0
      %11103 = vmatprep.mubr.bf16.mxu0 0
      %11104 = vmatmul.mubr.bf16.gmra.mxu0 %v10961
      %v11105 = vpop.f32.mrf.mxu0
      %v11106 = vadd.f32 0.0, %v11105
      %v11107 = vpop.f32.mrf.mxu0
      %v11108 = vpop.f32.mrf.mxu0
      %v11109 = vadd.f32 0.0, %v11108
      %v11110 = vpop.f32.mrf.mxu0
      %11111 = vmatprep.mubr.bf16.mxu0 0
      %11112 = vmatmul.mubr.bf16.gmra.mxu0 %v10964
      %v11113 = vpop.f32.mrf.mxu0
      %v11114 = vadd.f32 0.0, %v11113
      %v11115 = vpop.f32.mrf.mxu0
      %v11116 = vpop.f32.mrf.mxu0
      %v11117 = vadd.f32 0.0, %v11116
      %v11118 = vpop.f32.mrf.mxu0
      %11119 = vmatprep.mubr.bf16.mxu0 0
      %11120 = vmatmul.mubr.bf16.gmra.mxu0 %v10967
      %v11121 = vpop.f32.mrf.mxu0
      %v11122 = vadd.f32 0.0, %v11121
      %v11123 = vpop.f32.mrf.mxu0
      %v11124 = vpop.f32.mrf.mxu0
      %v11125 = vadd.f32 0.0, %v11124
      %v11126 = vpop.f32.mrf.mxu0
      %11127 = vmatprep.mubr.bf16.mxu0 0
      %11128 = vmatmul.mubr.bf16.gmra.mxu0 %v10970
      %v11129 = vpop.f32.mrf.mxu0
      %v11130 = vadd.f32 0.0, %v11129
      %v11131 = vpop.f32.mrf.mxu0
      %v11132 = vpop.f32.mrf.mxu0
      %v11133 = vadd.f32 0.0, %v11132
      %v11134 = vpop.f32.mrf.mxu0
      %11135 = vdwg.mxu0
      %v11136 = vadd.f32 %v10666, %v11010
      %v11137 = vadd.f32 %v10667, %v11013
      %v11138 = vadd.f32 %v10668, %v11018
      %v11139 = vadd.f32 %v10669, %v11021
      %v11140 = vadd.f32 %v10670, %v11026
      %v11141 = vadd.f32 %v10671, %v11029
      %v11142 = vadd.f32 %v10672, %v11034
      %v11143 = vadd.f32 %v10673, %v11037
      %v11144 = vadd.f32 %v10674, %v11042
      %v11145 = vadd.f32 %v10675, %v11045
      %v11146 = vadd.f32 %v10676, %v11050
      %v11147 = vadd.f32 %v10677, %v11053
      %v11148 = vadd.f32 %v10678, %v11058
      %v11149 = vadd.f32 %v10679, %v11061
      %v11150 = vadd.f32 %v10680, %v11066
      %v11151 = vadd.f32 %v10681, %v11069
      %v11152 = vadd.f32 %v10682, %v11074
      %v11153 = vadd.f32 %v10683, %v11077
      %v11154 = vadd.f32 %v10684, %v11082
      %v11155 = vadd.f32 %v10685, %v11085
      %v11156 = vadd.f32 %v10686, %v11090
      %v11157 = vadd.f32 %v10687, %v11093
      %v11158 = vadd.f32 %v10688, %v11098
      %v11159 = vadd.f32 %v10689, %v11101
      %v11160 = vadd.f32 %v10690, %v11106
      %v11161 = vadd.f32 %v10691, %v11109
      %v11162 = vadd.f32 %v10692, %v11114
      %v11163 = vadd.f32 %v10693, %v11117
      %v11164 = vadd.f32 %v10694, %v11122
      %v11165 = vadd.f32 %v10695, %v11125
      %v11166 = vadd.f32 %v10696, %v11130
      %v11167 = vadd.f32 %v10697, %v11133
      %v11168 = vld [vmem:[%s6] sm:$0x1]
      %v11169 = vld [vmem:[%s7] sm:$0x1]
      %v11170 = vld [vmem:[%s8] sm:$0xff]
      %v11171 = vsel %vm5474, %v11136, 0.0
      %v11172 = vsel %vm5474, %v11137, 0.0
      %v11173 = vadd.f32 %v11171, %v11172
      %v11174 = vsel %vm5474, %v11138, 0.0
      %v11175 = vadd.f32 %v11173, %v11174
      %v11176 = vsel %vm5474, %v11139, 0.0
      %v11177 = vadd.f32 %v11175, %v11176
      %v11178 = vsel %vm5474, %v11140, 0.0
      %v11179 = vadd.f32 %v11177, %v11178
      %v11180 = vsel %vm5474, %v11141, 0.0
      %v11181 = vadd.f32 %v11179, %v11180
      %v11182 = vsel %vm5474, %v11142, 0.0
      %v11183 = vadd.f32 %v11181, %v11182
      %v11184 = vsel %vm5474, %v11143, 0.0
      %v11185 = vadd.f32 %v11183, %v11184
      %v11186 = vsel %vm5474, %v11144, 0.0
      %v11187 = vadd.f32 %v11185, %v11186
      %v11188 = vsel %vm5474, %v11145, 0.0
      %v11189 = vadd.f32 %v11187, %v11188
      %v11190 = vsel %vm5474, %v11146, 0.0
      %v11191 = vadd.f32 %v11189, %v11190
      %v11192 = vsel %vm5474, %v11147, 0.0
      %v11193 = vadd.f32 %v11191, %v11192
      %v11194 = vsel %vm5474, %v11148, 0.0
      %v11195 = vadd.f32 %v11193, %v11194
      %v11196 = vsel %vm5474, %v11149, 0.0
      %v11197 = vadd.f32 %v11195, %v11196
      %v11198 = vsel %vm5474, %v11150, 0.0
      %v11199 = vadd.f32 %v11197, %v11198
      %v11200 = vsel %vm5474, %v11151, 0.0
      %v11201 = vadd.f32 %v11199, %v11200
      %v11202 = vsel %vm5474, %v11152, 0.0
      %v11203 = vadd.f32 %v11201, %v11202
      %v11204 = vsel %vm5474, %v11153, 0.0
      %v11205 = vadd.f32 %v11203, %v11204
      %v11206 = vsel %vm5474, %v11154, 0.0
      %v11207 = vadd.f32 %v11205, %v11206
      %v11208 = vsel %vm5474, %v11155, 0.0
      %v11209 = vadd.f32 %v11207, %v11208
      %v11210 = vsel %vm5474, %v11156, 0.0
      %v11211 = vadd.f32 %v11209, %v11210
      %v11212 = vsel %vm5474, %v11157, 0.0
      %v11213 = vadd.f32 %v11211, %v11212
      %v11214 = vsel %vm5474, %v11158, 0.0
      %v11215 = vadd.f32 %v11213, %v11214
      %v11216 = vsel %vm5474, %v11159, 0.0
      %v11217 = vadd.f32 %v11215, %v11216
      %v11218 = vsel %vm5474, %v11160, 0.0
      %v11219 = vadd.f32 %v11217, %v11218
      %v11220 = vsel %vm5474, %v11161, 0.0
      %v11221 = vadd.f32 %v11219, %v11220
      %v11222 = vsel %vm5474, %v11162, 0.0
      %v11223 = vadd.f32 %v11221, %v11222
      %v11224 = vsel %vm5474, %v11163, 0.0
      %v11225 = vadd.f32 %v11223, %v11224
      %v11226 = vsel %vm5474, %v11164, 0.0
      %v11227 = vadd.f32 %v11225, %v11226
      %v11228 = vsel %vm5474, %v11165, 0.0
      %v11229 = vadd.f32 %v11227, %v11228
      %v11230 = vsel %vm5474, %v11166, 0.0
      %v11231 = vadd.f32 %v11229, %v11230
      %v11232 = vsel %vm5474, %v11167, 0.0
      %v11233 = vadd.f32 %v11231, %v11232
      %v11234 = vrot.slane %v11233, 4
      %v11235 = vadd.f32 %v11233, %v11234
      %v11236 = vrot.slane %v11235, 2
      %v11237 = vadd.f32 %v11235, %v11236
      %v11238 = vrot.slane %v11237, 1
      %v11239 = vadd.f32 %v11237, %v11238
      %v11240 = vmul.f32 %v11136, %v11136
      %v11241 = vmul.f32 %v11137, %v11137
      %v11242 = vmul.f32 %v11138, %v11138
      %v11243 = vmul.f32 %v11139, %v11139
      %v11244 = vmul.f32 %v11140, %v11140
      %v11245 = vmul.f32 %v11141, %v11141
      %v11246 = vmul.f32 %v11142, %v11142
      %v11247 = vmul.f32 %v11143, %v11143
      %v11248 = vmul.f32 %v11144, %v11144
      %v11249 = vmul.f32 %v11145, %v11145
      %v11250 = vmul.f32 %v11146, %v11146
      %v11251 = vmul.f32 %v11147, %v11147
      %v11252 = vmul.f32 %v11148, %v11148
      %v11253 = vmul.f32 %v11149, %v11149
      %v11254 = vmul.f32 %v11150, %v11150
      %v11255 = vmul.f32 %v11151, %v11151
      %v11256 = vmul.f32 %v11152, %v11152
      %v11257 = vmul.f32 %v11153, %v11153
      %v11258 = vmul.f32 %v11154, %v11154
      %v11259 = vmul.f32 %v11155, %v11155
      %v11260 = vmul.f32 %v11156, %v11156
      %v11261 = vmul.f32 %v11157, %v11157
      %v11262 = vmul.f32 %v11158, %v11158
      %v11263 = vmul.f32 %v11159, %v11159
      %v11264 = vmul.f32 %v11160, %v11160
      %v11265 = vmul.f32 %v11161, %v11161
      %v11266 = vmul.f32 %v11162, %v11162
      %v11267 = vmul.f32 %v11163, %v11163
      %v11268 = vmul.f32 %v11164, %v11164
      %v11269 = vmul.f32 %v11165, %v11165
      %v11270 = vmul.f32 %v11166, %v11166
      %v11271 = vmul.f32 %v11167, %v11167
      %v11272 = vsel %vm5474, %v11240, 0.0
      %v11273 = vsel %vm5474, %v11241, 0.0
      %v11274 = vadd.f32 %v11272, %v11273
      %v11275 = vsel %vm5474, %v11242, 0.0
      %v11276 = vadd.f32 %v11274, %v11275
      %v11277 = vsel %vm5474, %v11243, 0.0
      %v11278 = vadd.f32 %v11276, %v11277
      %v11279 = vsel %vm5474, %v11244, 0.0
      %v11280 = vadd.f32 %v11278, %v11279
      %v11281 = vsel %vm5474, %v11245, 0.0
      %v11282 = vadd.f32 %v11280, %v11281
      %v11283 = vsel %vm5474, %v11246, 0.0
      %v11284 = vadd.f32 %v11282, %v11283
      %v11285 = vsel %vm5474, %v11247, 0.0
      %v11286 = vadd.f32 %v11284, %v11285
      %v11287 = vsel %vm5474, %v11248, 0.0
      %v11288 = vadd.f32 %v11286, %v11287
      %v11289 = vsel %vm5474, %v11249, 0.0
      %v11290 = vadd.f32 %v11288, %v11289
      %v11291 = vsel %vm5474, %v11250, 0.0
      %v11292 = vadd.f32 %v11290, %v11291
      %v11293 = vsel %vm5474, %v11251, 0.0
      %v11294 = vadd.f32 %v11292, %v11293
      %v11295 = vsel %vm5474, %v11252, 0.0
      %v11296 = vadd.f32 %v11294, %v11295
      %v11297 = vsel %vm5474, %v11253, 0.0
      %v11298 = vadd.f32 %v11296, %v11297
      %v11299 = vsel %vm5474, %v11254, 0.0
      %v11300 = vadd.f32 %v11298, %v11299
      %v11301 = vsel %vm5474, %v11255, 0.0
      %v11302 = vadd.f32 %v11300, %v11301
      %v11303 = vsel %vm5474, %v11256, 0.0
      %v11304 = vadd.f32 %v11302, %v11303
      %v11305 = vsel %vm5474, %v11257, 0.0
      %v11306 = vadd.f32 %v11304, %v11305
      %v11307 = vsel %vm5474, %v11258, 0.0
      %v11308 = vadd.f32 %v11306, %v11307
      %v11309 = vsel %vm5474, %v11259, 0.0
      %v11310 = vadd.f32 %v11308, %v11309
      %v11311 = vsel %vm5474, %v11260, 0.0
      %v11312 = vadd.f32 %v11310, %v11311
      %v11313 = vsel %vm5474, %v11261, 0.0
      %v11314 = vadd.f32 %v11312, %v11313
      %v11315 = vsel %vm5474, %v11262, 0.0
      %v11316 = vadd.f32 %v11314, %v11315
      %v11317 = vsel %vm5474, %v11263, 0.0
      %v11318 = vadd.f32 %v11316, %v11317
      %v11319 = vsel %vm5474, %v11264, 0.0
      %v11320 = vadd.f32 %v11318, %v11319
      %v11321 = vsel %vm5474, %v11265, 0.0
      %v11322 = vadd.f32 %v11320, %v11321
      %v11323 = vsel %vm5474, %v11266, 0.0
      %v11324 = vadd.f32 %v11322, %v11323
      %v11325 = vsel %vm5474, %v11267, 0.0
      %v11326 = vadd.f32 %v11324, %v11325
      %v11327 = vsel %vm5474, %v11268, 0.0
      %v11328 = vadd.f32 %v11326, %v11327
      %v11329 = vsel %vm5474, %v11269, 0.0
      %v11330 = vadd.f32 %v11328, %v11329
      %v11331 = vsel %vm5474, %v11270, 0.0
      %v11332 = vadd.f32 %v11330, %v11331
      %v11333 = vsel %vm5474, %v11271, 0.0
      %v11334 = vadd.f32 %v11332, %v11333
      %v11335 = vrot.slane %v11334, 4
      %v11336 = vadd.f32 %v11334, %v11335
      %v11337 = vrot.slane %v11336, 2
      %v11338 = vadd.f32 %v11336, %v11337
      %v11339 = vrot.slane %v11338, 1
      %v11340 = vadd.f32 %v11338, %v11339
      %v11342 = vsel %vm5474, %v11239, 0
      %11344 = vmatprep.subr.mxu0 0.0
      %11345 = vmatpush1.msra.mxu0 0.0
      %11346 = vmatprep.subr.mxu0 0.0
      %11347 = vmatpush1.msra.mxu0 0.0
      %11348 = vmatprep.subr.mxu0 0.0
      %11349 = vmatpush1.msra.mxu0 0.0
      %11350 = vmatprep.subr.mxu0 0.0
      %11351 = vmatpush1.msra.mxu0 0.0
      %11352 = vmatprep.subr.mxu0 0.0
      %11353 = vmatpush1.msra.mxu0 0.0
      %11354 = vmatprep.subr.mxu0 0.0
      %11355 = vmatpush1.msra.mxu0 0.0
      %11356 = vmatprep.subr.mxu0 0.0
      %11357 = vmatpush1.msra.mxu0 0.0
      %11358 = vmatprep.subr.mxu0 0.0
      %11359 = vmatpush1.msra.mxu0 0.0
      %11360 = vmatprep.subr.mxu0 0.0
      %11361 = vmatpush1.msra.mxu0 0.0
      %11362 = vmatprep.subr.mxu0 0.0
      %11363 = vmatpush1.msra.mxu0 0.0
      %11364 = vmatprep.subr.mxu0 0.0
      %11365 = vmatpush1.msra.mxu0 0.0
      %11366 = vmatprep.subr.mxu0 0.0
      %11367 = vmatpush1.msra.mxu0 0.0
      %11368 = vmatprep.subr.mxu0 0.0
      %11369 = vmatpush1.msra.mxu0 0.0
      %11370 = vmatprep.subr.mxu0 0.0
      %11371 = vmatpush1.msra.mxu0 0.0
      %11372 = vmatprep.subr.mxu0 0.0
      %11373 = vmatpush1.msra.mxu0 0.0
      %11374 = vmatprep.subr.mxu0 0.0
      %11375 = vmatpush1.msra.mxu0 %v11170
      %11376 = vmatprep.subr.mxu0 0.0
      %11377 = vmatpush2.msra.mxu0 0.0
      %11378 = vmatprep.subr.mxu0 0.0
      %11379 = vmatpush2.msra.mxu0 0.0
      %11380 = vmatprep.subr.mxu0 0.0
      %11381 = vmatpush2.msra.mxu0 0.0
      %11382 = vmatprep.subr.mxu0 0.0
      %11383 = vmatpush2.msra.mxu0 0.0
      %11384 = vmatprep.subr.mxu0 0.0
      %11385 = vmatpush2.msra.mxu0 0.0
      %11386 = vmatprep.subr.mxu0 0.0
      %11387 = vmatpush2.msra.mxu0 0.0
      %11388 = vmatprep.subr.mxu0 0.0
      %11389 = vmatpush2.msra.mxu0 0.0
      %11390 = vmatprep.subr.mxu0 0.0
      %11391 = vmatpush2.msra.mxu0 0.0
      %11392 = vmatprep.subr.mxu0 0.0
      %11393 = vmatpush2.msra.mxu0 0.0
      %11394 = vmatprep.subr.mxu0 0.0
      %11395 = vmatpush2.msra.mxu0 0.0
      %11396 = vmatprep.subr.mxu0 0.0
      %11397 = vmatpush2.msra.mxu0 0.0
      %11398 = vmatprep.subr.mxu0 0.0
      %11399 = vmatpush2.msra.mxu0 0.0
      %11400 = vmatprep.subr.mxu0 0.0
      %11401 = vmatpush2.msra.mxu0 0.0
      %11402 = vmatprep.subr.mxu0 0.0
      %11403 = vmatpush2.msra.mxu0 0.0
      %11404 = vmatprep.subr.mxu0 0.0
      %11405 = vmatpush2.msra.mxu0 0.0
      %11406 = vmatprep.subr.mxu0 0.0
      %11407 = vmatpush2.msra.mxu0 0.0
      %11408 = vmatprep.mubr.f32.mxu0 0.0
      %11409 = vmatmul.mubr.f32.gmra.mxu0 %v11342
      %v11410 = vpop.f32.mrf.mxu0
      %v11411 = vadd.f32 0.0, %v11410
      %v11412 = vpop.f32.mrf.mxu0
      %11413 = vdwg.mxu0
      %v11415 = vsel %vm5474, %v11340, 0
      %11417 = vmatprep.subr.mxu0 0.0
      %11418 = vmatpush1.msra.mxu0 0.0
      %11419 = vmatprep.subr.mxu0 0.0
      %11420 = vmatpush1.msra.mxu0 0.0
      %11421 = vmatprep.subr.mxu0 0.0
      %11422 = vmatpush1.msra.mxu0 0.0
      %11423 = vmatprep.subr.mxu0 0.0
      %11424 = vmatpush1.msra.mxu0 0.0
      %11425 = vmatprep.subr.mxu0 0.0
      %11426 = vmatpush1.msra.mxu0 0.0
      %11427 = vmatprep.subr.mxu0 0.0
      %11428 = vmatpush1.msra.mxu0 0.0
      %11429 = vmatprep.subr.mxu0 0.0
      %11430 = vmatpush1.msra.mxu0 0.0
      %11431 = vmatprep.subr.mxu0 0.0
      %11432 = vmatpush1.msra.mxu0 0.0
      %11433 = vmatprep.subr.mxu0 0.0
      %11434 = vmatpush1.msra.mxu0 0.0
      %11435 = vmatprep.subr.mxu0 0.0
      %11436 = vmatpush1.msra.mxu0 0.0
      %11437 = vmatprep.subr.mxu0 0.0
      %11438 = vmatpush1.msra.mxu0 0.0
      %11439 = vmatprep.subr.mxu0 0.0
      %11440 = vmatpush1.msra.mxu0 0.0
      %11441 = vmatprep.subr.mxu0 0.0
      %11442 = vmatpush1.msra.mxu0 0.0
      %11443 = vmatprep.subr.mxu0 0.0
      %11444 = vmatpush1.msra.mxu0 0.0
      %11445 = vmatprep.subr.mxu0 0.0
      %11446 = vmatpush1.msra.mxu0 0.0
      %11447 = vmatprep.subr.mxu0 0.0
      %11448 = vmatpush1.msra.mxu0 %v11170
      %11449 = vmatprep.subr.mxu0 0.0
      %11450 = vmatpush2.msra.mxu0 0.0
      %11451 = vmatprep.subr.mxu0 0.0
      %11452 = vmatpush2.msra.mxu0 0.0
      %11453 = vmatprep.subr.mxu0 0.0
      %11454 = vmatpush2.msra.mxu0 0.0
      %11455 = vmatprep.subr.mxu0 0.0
      %11456 = vmatpush2.msra.mxu0 0.0
      %11457 = vmatprep.subr.mxu0 0.0
      %11458 = vmatpush2.msra.mxu0 0.0
      %11459 = vmatprep.subr.mxu0 0.0
      %11460 = vmatpush2.msra.mxu0 0.0
      %11461 = vmatprep.subr.mxu0 0.0
      %11462 = vmatpush2.msra.mxu0 0.0
      %11463 = vmatprep.subr.mxu0 0.0
      %11464 = vmatpush2.msra.mxu0 0.0
      %11465 = vmatprep.subr.mxu0 0.0
      %11466 = vmatpush2.msra.mxu0 0.0
      %11467 = vmatprep.subr.mxu0 0.0
      %11468 = vmatpush2.msra.mxu0 0.0
      %11469 = vmatprep.subr.mxu0 0.0
      %11470 = vmatpush2.msra.mxu0 0.0
      %11471 = vmatprep.subr.mxu0 0.0
      %11472 = vmatpush2.msra.mxu0 0.0
      %11473 = vmatprep.subr.mxu0 0.0
      %11474 = vmatpush2.msra.mxu0 0.0
      %11475 = vmatprep.subr.mxu0 0.0
      %11476 = vmatpush2.msra.mxu0 0.0
      %11477 = vmatprep.subr.mxu0 0.0
      %11478 = vmatpush2.msra.mxu0 0.0
      %11479 = vmatprep.subr.mxu0 0.0
      %11480 = vmatpush2.msra.mxu0 0.0
      %11481 = vmatprep.mubr.f32.mxu0 0.0
      %11482 = vmatmul.mubr.f32.gmra.mxu0 %v11415
      %v11483 = vpop.f32.mrf.mxu0
      %v11484 = vadd.f32 0.0, %v11483
      %v11485 = vpop.f32.mrf.mxu0
      %11486 = vdwg.mxu0
      %v11487 = vmul.f32 %v11411, %v5791
      %v11488 = vmul.f32 %v11484, %v5791
      %v11489 = vmul.f32 %v11487, %v11487
      %v11490 = vsub.f32 %v11488, %v11489
      %v11491 = vadd.f32 %v11490, 1e-05
      %v11492 = vrsqrt.pop %v11491
      %v11493 = vlaneseq
      %v11494 = vshrl.u32 %v11493, 7
      %v11495 = vsub.s32 0, %v11494
      %v11496 = vrot.slane %v11487, %v11495
      %v11497 = vsub.f32 %v11136, %v11496
      %v11498 = vsub.f32 %v11137, %v11496
      %v11499 = vsub.f32 %v11138, %v11496
      %v11500 = vsub.f32 %v11139, %v11496
      %v11501 = vsub.f32 %v11140, %v11496
      %v11502 = vsub.f32 %v11141, %v11496
      %v11503 = vsub.f32 %v11142, %v11496
      %v11504 = vsub.f32 %v11143, %v11496
      %v11505 = vsub.f32 %v11144, %v11496
      %v11506 = vsub.f32 %v11145, %v11496
      %v11507 = vsub.f32 %v11146, %v11496
      %v11508 = vsub.f32 %v11147, %v11496
      %v11509 = vsub.f32 %v11148, %v11496
      %v11510 = vsub.f32 %v11149, %v11496
      %v11511 = vsub.f32 %v11150, %v11496
      %v11512 = vsub.f32 %v11151, %v11496
      %v11513 = vsub.f32 %v11152, %v11496
      %v11514 = vsub.f32 %v11153, %v11496
      %v11515 = vsub.f32 %v11154, %v11496
      %v11516 = vsub.f32 %v11155, %v11496
      %v11517 = vsub.f32 %v11156, %v11496
      %v11518 = vsub.f32 %v11157, %v11496
      %v11519 = vsub.f32 %v11158, %v11496
      %v11520 = vsub.f32 %v11159, %v11496
      %v11521 = vsub.f32 %v11160, %v11496
      %v11522 = vsub.f32 %v11161, %v11496
      %v11523 = vsub.f32 %v11162, %v11496
      %v11524 = vsub.f32 %v11163, %v11496
      %v11525 = vsub.f32 %v11164, %v11496
      %v11526 = vsub.f32 %v11165, %v11496
      %v11527 = vsub.f32 %v11166, %v11496
      %v11528 = vsub.f32 %v11167, %v11496
      %v11529 = vlaneseq
      %v11530 = vshrl.u32 %v11529, 7
      %v11531 = vsub.s32 0, %v11530
      %v11532 = vrot.slane %v11492, %v11531
      %v11533 = vmul.f32 %v11497, %v11532
      %v11534 = vmul.f32 %v11498, %v11532
      %v11535 = vmul.f32 %v11499, %v11532
      %v11536 = vmul.f32 %v11500, %v11532
      %v11537 = vmul.f32 %v11501, %v11532
      %v11538 = vmul.f32 %v11502, %v11532
      %v11539 = vmul.f32 %v11503, %v11532
      %v11540 = vmul.f32 %v11504, %v11532
      %v11541 = vmul.f32 %v11505, %v11532
      %v11542 = vmul.f32 %v11506, %v11532
      %v11543 = vmul.f32 %v11507, %v11532
      %v11544 = vmul.f32 %v11508, %v11532
      %v11545 = vmul.f32 %v11509, %v11532
      %v11546 = vmul.f32 %v11510, %v11532
      %v11547 = vmul.f32 %v11511, %v11532
      %v11548 = vmul.f32 %v11512, %v11532
      %v11549 = vmul.f32 %v11513, %v11532
      %v11550 = vmul.f32 %v11514, %v11532
      %v11551 = vmul.f32 %v11515, %v11532
      %v11552 = vmul.f32 %v11516, %v11532
      %v11553 = vmul.f32 %v11517, %v11532
      %v11554 = vmul.f32 %v11518, %v11532
      %v11555 = vmul.f32 %v11519, %v11532
      %v11556 = vmul.f32 %v11520, %v11532
      %v11557 = vmul.f32 %v11521, %v11532
      %v11558 = vmul.f32 %v11522, %v11532
      %v11559 = vmul.f32 %v11523, %v11532
      %v11560 = vmul.f32 %v11524, %v11532
      %v11561 = vmul.f32 %v11525, %v11532
      %v11562 = vmul.f32 %v11526, %v11532
      %v11563 = vmul.f32 %v11527, %v11532
      %v11564 = vmul.f32 %v11528, %v11532
      %v11566 = vlaneseq
      %v11567 = vshrl.u32 %v11566, 7
      %v11568 = vsub.s32 0, %v11567
      %v11569 = vrot.slane %v11168, %v11568
      %v11571 = vmul.f32 %v11533, %v11569
      %v11572 = vmul.f32 %v11534, %v11569
      %v11573 = vmul.f32 %v11535, %v11569
      %v11574 = vmul.f32 %v11536, %v11569
      %v11575 = vmul.f32 %v11537, %v11569
      %v11576 = vmul.f32 %v11538, %v11569
      %v11577 = vmul.f32 %v11539, %v11569
      %v11578 = vmul.f32 %v11540, %v11569
      %v11579 = vmul.f32 %v11541, %v11569
      %v11580 = vmul.f32 %v11542, %v11569
      %v11581 = vmul.f32 %v11543, %v11569
      %v11582 = vmul.f32 %v11544, %v11569
      %v11583 = vmul.f32 %v11545, %v11569
      %v11584 = vmul.f32 %v11546, %v11569
      %v11585 = vmul.f32 %v11547, %v11569
      %v11586 = vmul.f32 %v11548, %v11569
      %v11587 = vmul.f32 %v11549, %v11569
      %v11588 = vmul.f32 %v11550, %v11569
      %v11589 = vmul.f32 %v11551, %v11569
      %v11590 = vmul.f32 %v11552, %v11569
      %v11591 = vmul.f32 %v11553, %v11569
      %v11592 = vmul.f32 %v11554, %v11569
      %v11593 = vmul.f32 %v11555, %v11569
      %v11594 = vmul.f32 %v11556, %v11569
      %v11595 = vmul.f32 %v11557, %v11569
      %v11596 = vmul.f32 %v11558, %v11569
      %v11597 = vmul.f32 %v11559, %v11569
      %v11598 = vmul.f32 %v11560, %v11569
      %v11599 = vmul.f32 %v11561, %v11569
      %v11600 = vmul.f32 %v11562, %v11569
      %v11601 = vmul.f32 %v11563, %v11569
      %v11602 = vmul.f32 %v11564, %v11569
      %v11604 = vlaneseq
      %v11605 = vshrl.u32 %v11604, 7
      %v11606 = vsub.s32 0, %v11605
      %v11607 = vrot.slane %v11169, %v11606
      %v11609 = vadd.f32 %v11571, %v11607
      %v11610 = vadd.f32 %v11572, %v11607
      %v11611 = vadd.f32 %v11573, %v11607
      %v11612 = vadd.f32 %v11574, %v11607
      %v11613 = vadd.f32 %v11575, %v11607
      %v11614 = vadd.f32 %v11576, %v11607
      %v11615 = vadd.f32 %v11577, %v11607
      %v11616 = vadd.f32 %v11578, %v11607
      %v11617 = vadd.f32 %v11579, %v11607
      %v11618 = vadd.f32 %v11580, %v11607
      %v11619 = vadd.f32 %v11581, %v11607
      %v11620 = vadd.f32 %v11582, %v11607
      %v11621 = vadd.f32 %v11583, %v11607
      %v11622 = vadd.f32 %v11584, %v11607
      %v11623 = vadd.f32 %v11585, %v11607
      %v11624 = vadd.f32 %v11586, %v11607
      %v11625 = vadd.f32 %v11587, %v11607
      %v11626 = vadd.f32 %v11588, %v11607
      %v11627 = vadd.f32 %v11589, %v11607
      %v11628 = vadd.f32 %v11590, %v11607
      %v11629 = vadd.f32 %v11591, %v11607
      %v11630 = vadd.f32 %v11592, %v11607
      %v11631 = vadd.f32 %v11593, %v11607
      %v11632 = vadd.f32 %v11594, %v11607
      %v11633 = vadd.f32 %v11595, %v11607
      %v11634 = vadd.f32 %v11596, %v11607
      %v11635 = vadd.f32 %v11597, %v11607
      %v11636 = vadd.f32 %v11598, %v11607
      %v11637 = vadd.f32 %v11599, %v11607
      %v11638 = vadd.f32 %v11600, %v11607
      %v11639 = vadd.f32 %v11601, %v11607
      %v11640 = vadd.f32 %v11602, %v11607
      %v11641 = vmax.f32 %v11609, 0.0
      %v11642 = vmax.f32 %v11610, 0.0
      %v11643 = vmax.f32 %v11611, 0.0
      %v11644 = vmax.f32 %v11612, 0.0
      %v11645 = vmax.f32 %v11613, 0.0
      %v11646 = vmax.f32 %v11614, 0.0
      %v11647 = vmax.f32 %v11615, 0.0
      %v11648 = vmax.f32 %v11616, 0.0
      %v11649 = vmax.f32 %v11617, 0.0
      %v11650 = vmax.f32 %v11618, 0.0
      %v11651 = vmax.f32 %v11619, 0.0
      %v11652 = vmax.f32 %v11620, 0.0
      %v11653 = vmax.f32 %v11621, 0.0
      %v11654 = vmax.f32 %v11622, 0.0
      %v11655 = vmax.f32 %v11623, 0.0
      %v11656 = vmax.f32 %v11624, 0.0
      %v11657 = vmax.f32 %v11625, 0.0
      %v11658 = vmax.f32 %v11626, 0.0
      %v11659 = vmax.f32 %v11627, 0.0
      %v11660 = vmax.f32 %v11628, 0.0
      %v11661 = vmax.f32 %v11629, 0.0
      %v11662 = vmax.f32 %v11630, 0.0
      %v11663 = vmax.f32 %v11631, 0.0
      %v11664 = vmax.f32 %v11632, 0.0
      %v11665 = vmax.f32 %v11633, 0.0
      %v11666 = vmax.f32 %v11634, 0.0
      %v11667 = vmax.f32 %v11635, 0.0
      %v11668 = vmax.f32 %v11636, 0.0
      %v11669 = vmax.f32 %v11637, 0.0
      %v11670 = vmax.f32 %v11638, 0.0
      %v11671 = vmax.f32 %v11639, 0.0
      %v11672 = vmax.f32 %v11640, 0.0
      %11673 = vst.msk [vmem:[%s332] sm:$0xff] %vm5474, %v11641
      %11674 = vst.msk [vmem:[%s332 + $0x8] sm:$0xff] %vm5474, %v11642
      %11675 = vst.msk [vmem:[%s332 + $0x10] sm:$0xff] %vm5474, %v11643
      %11676 = vst.msk [vmem:[%s332 + $0x18] sm:$0xff] %vm5474, %v11644
      %11677 = vst.msk [vmem:[%s332 + $0x20] sm:$0xff] %vm5474, %v11645
      %11678 = vst.msk [vmem:[%s332 + $0x28] sm:$0xff] %vm5474, %v11646
      %11679 = vst.msk [vmem:[%s332 + $0x30] sm:$0xff] %vm5474, %v11647
      %11680 = vst.msk [vmem:[%s332 + $0x38] sm:$0xff] %vm5474, %v11648
      %11681 = vst.msk [vmem:[%s332 + $0x40] sm:$0xff] %vm5474, %v11649
      %11682 = vst.msk [vmem:[%s332 + $0x48] sm:$0xff] %vm5474, %v11650
      %11683 = vst.msk [vmem:[%s332 + $0x50] sm:$0xff] %vm5474, %v11651
      %11684 = vst.msk [vmem:[%s332 + $0x58] sm:$0xff] %vm5474, %v11652
      %11685 = vst.msk [vmem:[%s332 + $0x60] sm:$0xff] %vm5474, %v11653
      %11686 = vst.msk [vmem:[%s332 + $0x68] sm:$0xff] %vm5474, %v11654
      %11687 = vst.msk [vmem:[%s332 + $0x70] sm:$0xff] %vm5474, %v11655
      %11688 = vst.msk [vmem:[%s332 + $0x78] sm:$0xff] %vm5474, %v11656
      %11689 = vst.msk [vmem:[%s332 + $0x80] sm:$0xff] %vm5474, %v11657
      %11690 = vst.msk [vmem:[%s332 + $0x88] sm:$0xff] %vm5474, %v11658
      %11691 = vst.msk [vmem:[%s332 + $0x90] sm:$0xff] %vm5474, %v11659
      %11692 = vst.msk [vmem:[%s332 + $0x98] sm:$0xff] %vm5474, %v11660
      %11693 = vst.msk [vmem:[%s332 + $0xa0] sm:$0xff] %vm5474, %v11661
      %11694 = vst.msk [vmem:[%s332 + $0xa8] sm:$0xff] %vm5474, %v11662
      %11695 = vst.msk [vmem:[%s332 + $0xb0] sm:$0xff] %vm5474, %v11663
      %11696 = vst.msk [vmem:[%s332 + $0xb8] sm:$0xff] %vm5474, %v11664
      %11697 = vst.msk [vmem:[%s332 + $0xc0] sm:$0xff] %vm5474, %v11665
      %11698 = vst.msk [vmem:[%s332 + $0xc8] sm:$0xff] %vm5474, %v11666
      %11699 = vst.msk [vmem:[%s332 + $0xd0] sm:$0xff] %vm5474, %v11667
      %11700 = vst.msk [vmem:[%s332 + $0xd8] sm:$0xff] %vm5474, %v11668
      %11701 = vst.msk [vmem:[%s332 + $0xe0] sm:$0xff] %vm5474, %v11669
      %11702 = vst.msk [vmem:[%s332 + $0xe8] sm:$0xff] %vm5474, %v11670
      %11703 = vst.msk [vmem:[%s332 + $0xf0] sm:$0xff] %vm5474, %v11671
      %11704 = vst.msk [vmem:[%s332 + $0xf8] sm:$0xff] %vm5474, %v11672
      %p11705 = scmp.lt.s32.totalorder %s20, 1
      %s11706 = scalar_select %p11705, %s20, 1
      %s11707 = smul.addr %s11706, 32
      %s11708 = smul.addr %s11707, 8
      %s11709 = scalar_lea.vmem %s9, %s11708
      // Predicated region
      $region57: #{tpu_custom_call.1} parent=55 // pred_check
        %p11710 = pneg %p232
      $region58: #{tpu_custom_call.1} parent=55 // pred_check_branch
        %11712 = sbr.rel (%p11710) target = $region60
      $region59: #{tpu_custom_call.1} parent=55 // pred_region
        _
      $region60: #{tpu_custom_call.1} parent=55 // pred_fallthru
        _
    $region56: #{tpu_custom_call.1} parent=5 // pred_fallthru
      _
    %p11713 = scmp.le.s32.totalorder 2, %s15
    // Predicated region
    $region61: #{tpu_custom_call.1} parent=5 // pred_check
      %p11714 = pneg %p11713
    $region62: #{tpu_custom_call.1} parent=5 // pred_check_branch
      %11716 = sbr.rel (%p11714) target = $region64
    $region63: #{tpu_custom_call.1} parent=5 // pred_region
      %s11717 = ssub.s32 %s15, 2
      // Predicated region
      $region65: #{tpu_custom_call.1} parent=63 // pred_check
        %p11718 = pneg %p238
      $region66: #{tpu_custom_call.1} parent=63 // pred_check_branch
        %11720 = sbr.rel (%p11718) target = $region68
      $region67: #{tpu_custom_call.1} parent=63 // pred_region
        %p11721 = scmp.lt.s32.totalorder %s21, 1
        %s11722 = scalar_select %p11721, %s21, 1
        %s11723 = smul.addr %s11722, 32
        %s11724 = smul.addr %s11723, 8
        %s11725 = scalar_lea.vmem %s9, %s11724
      $region68: #{tpu_custom_call.1} parent=63 // pred_fallthru
        _
    $region64: #{tpu_custom_call.1} parent=5 // pred_fallthru
      _
  $region6: #{tpu_custom_call.1} parent=0 // loop_footer
    %s19 = sadd.s32 1, %s15
  $region7: #{tpu_custom_call.1} parent=0 // loop_footer_branch
    %14 = sbr.rel target = $region3
  $region8: #{tpu_custom_call.1} parent=0 // loop_exit
    _

</llo_original>
